<compile_context>
chip_gen: v5e
topology: v5e:2x2
jax: 0.10.0
libtpu: 0.0.40
codegen_flags: <defaults>
</compile_context>

<pallas_src>
import math

import jax
import jax.numpy as jnp
from jax.experimental import pallas as pl
from jax.experimental.pallas import tpu as pltpu

LANE = 128
SUBLANE = 8


def _round_up(x, m):
    return ((x + m - 1) // m) * m


# ------------------------ generation-aware VMEM sizing ------------------------

def _vmem_limits():
    """Pick VMEM budget / limits from the actual chip (128 MiB v5e/v6e vs 64 MiB v7x)."""
    try:
        cap = int(pltpu.get_tpu_info().vmem_capacity_bytes)
    except Exception:
        cap = 64 * 1024 * 1024                       # conservative fallback
    if cap >= 96 * 1024 * 1024:                       # v5e / v6e: 128 MiB physical
        return {"budget": 72 * 2**20, "lstm_limit": 104 * 2**20, "fc_limit": 64 * 2**20}
    # v7x-class (64 MiB physical): leave headroom for compiler-internal scratch
    return {"budget": 36 * 2**20, "lstm_limit": 48 * 2**20, "fc_limit": 32 * 2**20}


def _choose_time_chunk(T, Bp, feat_in, Hp, budget):
    """Largest divisor of T whose streamed blocks + scratch fit `budget`.

    Only block heights that are legal bf16 tiles ((Tt*Bp) % 16 == 0) are
    considered; with the per-chip budgets this reaches Tt*Bp >= 256 (the MXU
    systolic width) whenever T permits.  Falls back to a single full-extent
    chunk (exempt from the tiling rule) if no legal divisor exists.
    """
    per_t = Bp * (
        2 * 2 * feat_in * 2      # x blocks: 2 dirs, double-buffered, bf16
        + 2 * 2 * Hp * 2         # output blocks: 2 dirs, double-buffered, bf16
        + 2 * 4 * Hp * 4         # f32 xproj scratch, 2 dirs
    )
    fixed = (2 * 2 * (4 * Hp * feat_in + 4 * Hp * Hp) * 2   # dbl-buffered bf16 weights
             + 4 * Bp * Hp * 4)                              # h/c state scratch
    t_cap = max(1, (budget - fixed) // max(per_t, 1))
    t_cap = min(t_cap, 32, T)    # recurrence is fully unrolled -> keep code size sane
    best = None
    for cand in range(1, t_cap + 1):
        if T % cand == 0 and (cand * Bp) % 16 == 0:
            best = cand          # largest legal divisor <= cap wins
    if best is None:
        best = T                 # single full-extent chunk
    return best


# --------------------- fused bidirectional LSTM layer ------------------------

def _make_bilstm_kernel(n_streams):
    """Fused fwd+rev LSTM kernel over `n_streams` input streams.

    Input refs : xs_fwd[0..n), xs_rev[0..n), wih_f[0..n), wih_r[0..n),
                 whh_f, whh_r, bias_f, bias_r
    Output refs: hs_f, hs_r   (blk, Hp) bf16 blocks
    Scratch    : xpf, xpr (blk, 4Hp) f32; hf, cf, hr, cr (Bp, Hp) f32
    """
    n = n_streams

    def kernel(*args):
        xs_f = args[0:n]
        xs_r = args[n:2 * n]
        wih_f = args[2 * n:3 * n]
        wih_r = args[3 * n:4 * n]
        whh_f_ref, whh_r_ref, bias_f_ref, bias_r_ref = args[4 * n:4 * n + 4]
        hf_out_ref, hr_out_ref = args[4 * n + 4:4 * n + 6]
        xpf_sc, xpr_sc, hf_sc, cf_sc, hr_sc, cr_sc = args[4 * n + 6:]

        Bp, Hp = hf_sc.shape
        blk = xpf_sc.shape[0]
        Tt = blk // Bp

        @pl.when(pl.program_id(0) == 0)
        def _init():
            hf_sc[...] = jnp.zeros_like(hf_sc)
            cf_sc[...] = jnp.zeros_like(cf_sc)
            hr_sc[...] = jnp.zeros_like(hr_sc)
            cr_sc[...] = jnp.zeros_like(cr_sc)

        def xproj(xs, wih, bias_ref):
            acc = jax.lax.dot_general(
                xs[0][...], wih[0][...], (((1,), (1,)), ((), ())),
                preferred_element_type=jnp.float32)
            for s in range(1, n):
                acc = acc + jax.lax.dot_general(
                    xs[s][...], wih[s][...], (((1,), (1,)), ((), ())),
                    preferred_element_type=jnp.float32)
            return acc + bias_ref[...]

        # Whole-chunk input projections: fat MXU matmuls, xproj stays in VMEM.
        xpf_sc[...] = xproj(xs_f, wih_f, bias_f_ref)
        xpr_sc[...] = xproj(xs_r, wih_r, bias_r_ref)

        whh_f = whh_f_ref[...]
        whh_r = whh_r_ref[...]

        def cell(gates_x, h, c, whh):
            # TODO(synk): keep the recurrent LHS in f32 if bf16 drift matters at
            # very long T; bf16 keeps the tiny per-step matmul on the MXU fast path.
            gates = gates_x + jax.lax.dot_general(
                h.astype(jnp.bfloat16), whh, (((1,), (1,)), ((), ())),
                preferred_element_type=jnp.float32)
            i = jax.nn.sigmoid(gates[:, 0 * Hp:1 * Hp])   # lane-aligned gate slices
            f = jax.nn.sigmoid(gates[:, 1 * Hp:2 * Hp])
            g = jnp.tanh(gates[:, 2 * Hp:3 * Hp])
            o = jax.nn.sigmoid(gates[:, 3 * Hp:4 * Hp])
            c_new = f * c + i * g
            h_new = o * jnp.tanh(c_new)
            return h_new, c_new

        # Carry the running state in registers for the chunk; write scratch once.
        h_f, c_f = hf_sc[...], cf_sc[...]
        h_r, c_r = hr_sc[...], cr_sc[...]
        for t in range(Tt):                     # static offsets -> aligned slices
            rf = t * Bp                         # forward walks the chunk front-to-back
            h_f, c_f = cell(xpf_sc[rf:rf + Bp, :], h_f, c_f, whh_f)
            hf_out_ref[rf:rf + Bp, :] = h_f.astype(hf_out_ref.dtype)

            rr = (Tt - 1 - t) * Bp              # reverse walks it back-to-front
            h_r, c_r = cell(xpr_sc[rr:rr + Bp, :], h_r, c_r, whh_r)
            hr_out_ref[rr:rr + Bp, :] = h_r.astype(hr_out_ref.dtype)
        hf_sc[...], cf_sc[...] = h_f, c_f
        hr_sc[...], cr_sc[...] = h_r, c_r

    return kernel


def _bilstm_layer(streams, lp, T, Bp, Tt, vmem_limit_bytes):
    """One bidirectional LSTM layer over `streams` (tuple of (T*Bp, Dk) bf16).

    Returns (hs_fwd, hs_rev), each (T*Bp, Hp) bf16 in original time order.
    """
    n = len(streams)
    Hp = lp["whh_f"].shape[1]
    nT = T // Tt
    blk = Tt * Bp
    feat = [s.shape[1] for s in streams]

    in_specs = (
        [pl.BlockSpec((blk, feat[s]), lambda i: (i, 0)) for s in range(n)]            # fwd stream
        + [pl.BlockSpec((blk, feat[s]), lambda i: (nT - 1 - i, 0)) for s in range(n)]  # rev stream
        + [pl.BlockSpec((4 * Hp, feat[s]), lambda i: (0, 0)) for s in range(n)]        # wih fwd
        + [pl.BlockSpec((4 * Hp, feat[s]), lambda i: (0, 0)) for s in range(n)]        # wih rev
        + [
            pl.BlockSpec((4 * Hp, Hp), lambda i: (0, 0)),
            pl.BlockSpec((4 * Hp, Hp), lambda i: (0, 0)),
            pl.BlockSpec((1, 4 * Hp), lambda i: (0, 0)),
            pl.BlockSpec((1, 4 * Hp), lambda i: (0, 0)),
        ]
    )
    args = (list(streams) + list(streams)
            + list(lp["wih_f"]) + list(lp["wih_r"])
            + [lp["whh_f"], lp["whh_r"], lp["b_f"], lp["b_r"]])

    hs_f, hs_r = pl.pallas_call(
        _make_bilstm_kernel(n),
        out_shape=(jax.ShapeDtypeStruct((T * Bp, Hp), jnp.bfloat16),
                   jax.ShapeDtypeStruct((T * Bp, Hp), jnp.bfloat16)),
        grid_spec=pltpu.PrefetchScalarGridSpec(
            num_scalar_prefetch=0,
            grid=(nT,),
            in_specs=in_specs,
            out_specs=(
                pl.BlockSpec((blk, Hp), lambda i: (i, 0)),
                pl.BlockSpec((blk, Hp), lambda i: (nT - 1 - i, 0)),
            ),
            scratch_shapes=[
                pltpu.VMEM((blk, 4 * Hp), jnp.float32),   # xproj fwd
                pltpu.VMEM((blk, 4 * Hp), jnp.float32),   # xproj rev
                pltpu.VMEM((Bp, Hp), jnp.float32),        # h fwd (persists across chunks)
                pltpu.VMEM((Bp, Hp), jnp.float32),        # c fwd
                pltpu.VMEM((Bp, Hp), jnp.float32),        # h rev
                pltpu.VMEM((Bp, Hp), jnp.float32),        # c rev
            ],
        ),
        compiler_params=pltpu.CompilerParams(
            dimension_semantics=("arbitrary",),   # serial recurrence carried in scratch
            vmem_limit_bytes=vmem_limit_bytes,
        ),
    )(*args)
    return hs_f, hs_r


# ------------------------------ linear (fc) ----------------------------------

def _linear2_kernel(xa_ref, xb_ref, wa_ref, wb_ref, b_ref, o_ref):
    acc = jax.lax.dot_general(xa_ref[...], wa_ref[...], (((1,), (1,)), ((), ())),
                              preferred_element_type=jnp.float32)
    acc = acc + jax.lax.dot_general(xb_ref[...], wb_ref[...], (((1,), (1,)), ((), ())),
                                    preferred_element_type=jnp.float32)
    # Kept f32 to preserve module semantics; cast to bf16 here to halve the fc
    # HBM writeback if downstream tolerates bf16 logits.
    o_ref[...] = acc + b_ref[...]


def _pick_m_tile(M):
    for c in (512, 256, 128, 64, 32, 16):
        if M % c == 0:
            return c
    return M   # full-extent block (exempt from tile divisibility)


def _linear2(xa, xb, wa, wb, b, vmem_limit_bytes):
    """y = xa @ wa.T + xb @ wb.T + b  -- the fc over the two direction streams."""
    M, Ka = xa.shape
    Kb = xb.shape[1]
    N = wa.shape[0]
    mt = _pick_m_tile(M)
    return pl.pallas_call(
        _linear2_kernel,
        out_shape=jax.ShapeDtypeStruct((M, N), jnp.float32),
        grid_spec=pltpu.PrefetchScalarGridSpec(
            num_scalar_prefetch=0,
            grid=(M // mt,),
            in_specs=[
                pl.BlockSpec((mt, Ka), lambda i: (i, 0)),
                pl.BlockSpec((mt, Kb), lambda i: (i, 0)),
                pl.BlockSpec((N, Ka), lambda i: (0, 0)),
                pl.BlockSpec((N, Kb), lambda i: (0, 0)),
                pl.BlockSpec((1, N), lambda i: (0, 0)),
            ],
            out_specs=pl.BlockSpec((mt, N), lambda i: (i, 0)),
        ),
        compiler_params=pltpu.CompilerParams(
            dimension_semantics=("parallel",),    # shards across TCs on megacore parts
            vmem_limit_bytes=vmem_limit_bytes,
        ),
    )(xa, xb, wa, wb, b.reshape(1, N))


# ----------------------- parameter init & preparation ------------------------

def init_params(key, input_dim, hidden_dim, output_dim, num_layers=2):
    """Deterministic init mirroring nn.LSTM / nn.Linear parameter shapes."""
    k = 1.0 / math.sqrt(hidden_dim)

    def u(sub, shape):
        return jax.random.uniform(sub, shape, jnp.float32, -k, k)

    params = {}
    idx = 0
    for layer in range(num_layers):
        in_size = input_dim if layer == 0 else 2 * hidden_dim
        for d in ("fwd", "rev"):
            params[f"l{layer}_{d}"] = {
                "w_ih": u(jax.random.fold_in(key, idx + 0), (4 * hidden_dim, in_size)),
                "w_hh": u(jax.random.fold_in(key, idx + 1), (4 * hidden_dim, hidden_dim)),
                "b_ih": u(jax.random.fold_in(key, idx + 2), (4 * hidden_dim,)),
                "b_hh": u(jax.random.fold_in(key, idx + 3), (4 * hidden_dim,)),
            }
            idx += 4
    params["fc_w"] = u(jax.random.fold_in(key, idx), (output_dim, 2 * hidden_dim))
    params["fc_b"] = u(jax.random.fold_in(key, idx + 1), (output_dim,))
    return params


def _scatter_gate_rows(w, H, Hp):
    """(4H, ...) -> (4Hp, ...): gate block g moves to rows [g*Hp, g*Hp+H)."""
    out = jnp.zeros((4 * Hp,) + w.shape[1:], w.dtype)
    for g in range(4):
        out = out.at[g * Hp:g * Hp + H].set(w[g * H:(g + 1) * H])
    return out


def prepare_params(params, num_layers=None):
    """One-time (outside jit) padding / gate scatter / bf16 casts / stream split."""
    if num_layers is None:
        num_layers = sum(1 for k in params if k.startswith("l") and k.endswith("_fwd"))
    H = params["l0_fwd"]["w_hh"].shape[1]
    D = params["l0_fwd"]["w_ih"].shape[1]
    O = params["fc_w"].shape[0]
    Hp = _round_up(H, LANE)
    Dp = _round_up(D, LANE)
    Op = _round_up(O, LANE)

    prepped = {"layers": []}
    for layer in range(num_layers):
        lp = {}
        for d, tag in (("fwd", "f"), ("rev", "r")):
            p = params[f"l{layer}_{d}"]
            w_ih = _scatter_gate_rows(p["w_ih"], H, Hp)
            if layer == 0:
                wih_streams = [jnp.zeros((4 * Hp, Dp), w_ih.dtype).at[:, :D].set(w_ih)]
            else:
                # input = (fwd Hp-stream, rev Hp-stream): real cols at [0:H] of each
                wa = jnp.zeros((4 * Hp, Hp), w_ih.dtype).at[:, :H].set(w_ih[:, 0:H])
                wb = jnp.zeros((4 * Hp, Hp), w_ih.dtype).at[:, :H].set(w_ih[:, H:2 * H])
                wih_streams = [wa, wb]
            w_hh = _scatter_gate_rows(p["w_hh"], H, Hp)
            w_hh = jnp.pad(w_hh, ((0, 0), (0, Hp - H)))
            bias = _scatter_gate_rows((p["b_ih"] + p["b_hh"])[:, None], H, Hp)[:, 0]
            lp[f"wih_{tag}"] = [w.astype(jnp.bfloat16) for w in wih_streams]
            lp[f"whh_{tag}"] = w_hh.astype(jnp.bfloat16)
            lp[f"b_{tag}"] = bias.reshape(1, 4 * Hp).astype(jnp.float32)
        prepped["layers"].append(lp)

    fc_wa = jnp.zeros((Op, Hp), jnp.float32).at[:O, :H].set(params["fc_w"][:, 0:H])
    fc_wb = jnp.zeros((Op, Hp), jnp.float32).at[:O, :H].set(params["fc_w"][:, H:2 * H])
    prepped["fc_wa"] = fc_wa.astype(jnp.bfloat16)
    prepped["fc_wb"] = fc_wb.astype(jnp.bfloat16)
    prepped["fc_b"] = jnp.zeros((Op,), jnp.float32).at[:O].set(params["fc_b"])
    return prepped


# ------------------------------- model glue ----------------------------------

def transcription_forward(prepped, x, *, output_dim, time_chunk=None):
    """x: (B, T, input_dim) f32 -> (B, T, output_dim) f32, matching PyTorch semantics."""
    B, T, D = x.shape
    layers = prepped["layers"]
    Hp = layers[0]["whh_f"].shape[1]
    Dp = layers[0]["wih_f"][0].shape[1]
    Op = prepped["fc_wa"].shape[0]

    Bp = _round_up(B, SUBLANE)
    lim = _vmem_limits()
    feat_in = max(Dp, 2 * Hp)

    if time_chunk is None:
        if Bp % 16 != 0 and not any(
                T % c == 0 and (c * Bp) % 16 == 0 for c in range(1, min(T, 32) + 1)):
            Bp = _round_up(B, 16)   # make every chunk height a legal bf16 tile multiple
        Tt = _choose_time_chunk(T, Bp, feat_in, Hp, lim["budget"])
    else:
        Tt = time_chunk
    assert T % Tt == 0, "time_chunk must divide T"
    assert (Tt * Bp) % 16 == 0 or Tt == T, (
        "chunk height must be a bf16 tile multiple (or one full-extent chunk)")

    # (B, T, D) f32 -> time-major, lane/sublane-padded (T*Bp, Dp) bf16
    xp = jnp.zeros((T, Bp, Dp), jnp.bfloat16)
    xp = xp.at[:, :B, :D].set(jnp.transpose(x, (1, 0, 2)).astype(jnp.bfloat16))
    streams = (xp.reshape(T * Bp, Dp),)

    for lp in layers:
        streams = _bilstm_layer(streams, lp, T, Bp, Tt, lim["lstm_limit"])

    y = _linear2(streams[0], streams[1], prepped["fc_wa"], prepped["fc_wb"],
                 prepped["fc_b"], lim["fc_limit"])
    y = y.reshape(T, Bp, Op)
    return jnp.transpose(y[:, :B, :output_dim], (1, 0, 2))


# ------------------------- pure-JAX reference check ---------------------------

def ref_forward(params, x, num_layers=2):
    B, T, _ = x.shape

    def run_dir(xs, p):
        H = p["w_hh"].shape[1]

        def step(carry, xt):
            h, c = carry
            gates = xt @ p["w_ih"].T + p["b_ih"] + p["b_hh"] + h @ p["w_hh"].T
            i, f, g, o = jnp.split(gates, 4, axis=-1)
            c = jax.nn.sigmoid(f) * c + jax.nn.sigmoid(i) * jnp.tanh(g)
            h = jax.nn.sigmoid(o) * jnp.tanh(c)
            return (h, c), h

        h0 = jnp.zeros((B, H), jnp.float32)
        _, hs = jax.lax.scan(step, (h0, h0), xs)
        return hs

    h_seq = jnp.transpose(x, (1, 0, 2)).astype(jnp.float32)
    for layer in range(num_layers):
        fwd = run_dir(h_seq, params[f"l{layer}_fwd"])
        rev = run_dir(h_seq[::-1], params[f"l{layer}_rev"])[::-1]
        h_seq = jnp.concatenate([fwd, rev], axis=-1)
    y = h_seq @ params["fc_w"].T + params["fc_b"]
    return jnp.transpose(y, (1, 0, 2))


if __name__ == "__main__":
    key = jax.random.PRNGKey(0)
    B, T, input_dim, hidden_dim, output_dim = 2, 8, 16, 32, 8

    params = init_params(jax.random.fold_in(key, 123), input_dim, hidden_dim, output_dim)
    x = jax.random.normal(jax.random.fold_in(key, 7), (B, T, input_dim), jnp.float32)

    prepped = prepare_params(params)          # one-time weight prep, outside jit
    fwd = jax.jit(transcription_forward, static_argnames=("output_dim", "time_chunk"))

    # Chunked path: grid=(2,) exercises the carried-state streaming recurrence.
    out = jax.block_until_ready(fwd(prepped, x, output_dim=output_dim, time_chunk=4))
    # Auto-chunk path (single full chunk at this tiny T).
    out_auto = jax.block_until_ready(fwd(prepped, x, output_dim=output_dim))

    ref = jax.block_until_ready(ref_forward(params, x))

    assert out.shape == (B, T, output_dim), out.shape
    err = float(jnp.max(jnp.abs(out - ref)))
    err_auto = float(jnp.max(jnp.abs(out_auto - ref)))
    assert err < 5e-2, f"max |err| (chunked) = {err}"        # bf16 MXU operands, f32 accum
    assert err_auto < 5e-2, f"max |err| (auto) = {err_auto}"
    print("KERNEL_OK")
</pallas_src>

<mosaic_0001>
module attributes {stable_mosaic.version = 11 : i64} {
  func.func @kernel(%arg0: i32, %arg1: memref<32x128xbf16, #tpu.memory_space<vmem>>, %arg2: memref<32x128xbf16, #tpu.memory_space<vmem>>, %arg3: memref<512x128xbf16, #tpu.memory_space<vmem>>, %arg4: memref<512x128xbf16, #tpu.memory_space<vmem>>, %arg5: memref<512x128xbf16, #tpu.memory_space<vmem>>, %arg6: memref<512x128xbf16, #tpu.memory_space<vmem>>, %arg7: memref<1x512xf32, #tpu.memory_space<vmem>>, %arg8: memref<1x512xf32, #tpu.memory_space<vmem>>, %arg9: memref<32x128xbf16, #tpu.memory_space<vmem>>, %arg10: memref<32x128xbf16, #tpu.memory_space<vmem>>, %arg11: memref<32x512xf32, #tpu.memory_space<vmem>>, %arg12: memref<32x512xf32, #tpu.memory_space<vmem>>, %arg13: memref<8x128xf32, #tpu.memory_space<vmem>>, %arg14: memref<8x128xf32, #tpu.memory_space<vmem>>, %arg15: memref<8x128xf32, #tpu.memory_space<vmem>>, %arg16: memref<8x128xf32, #tpu.memory_space<vmem>>) attributes {dimension_semantics = [#tpu.dimension_semantics<arbitrary>], iteration_bounds = array<i64: 2>, scalar_prefetch = 0 : i64, scratch_operands = 6 : i64, tpu.core_type = #tpu.core_type<tc>, window_params = [{transform_indices = @transform_0, window_bounds = array<i64: 32, 128>}, {transform_indices = @transform_1, window_bounds = array<i64: 32, 128>}, {pipeline_mode = #tpu.pipeline_mode<synchronous>, transform_indices = @transform_2, window_bounds = array<i64: 512, 128>}, {pipeline_mode = #tpu.pipeline_mode<synchronous>, transform_indices = @transform_3, window_bounds = array<i64: 512, 128>}, {pipeline_mode = #tpu.pipeline_mode<synchronous>, transform_indices = @transform_4, window_bounds = array<i64: 512, 128>}, {pipeline_mode = #tpu.pipeline_mode<synchronous>, transform_indices = @transform_5, window_bounds = array<i64: 512, 128>}, {pipeline_mode = #tpu.pipeline_mode<synchronous>, transform_indices = @transform_6, window_bounds = array<i64: 1, 512>}, {pipeline_mode = #tpu.pipeline_mode<synchronous>, transform_indices = @transform_7, window_bounds = array<i64: 1, 512>}, {transform_indices = @transform_8, window_bounds = array<i64: 32, 128>}, {transform_indices = @transform_9, window_bounds = array<i64: 32, 128>}]} {
    %c0_i32 = arith.constant 0 : i32
    %0 = arith.cmpi eq, %arg0, %c0_i32 : i32
    %1 = arith.extui %0 : i1 to i32
    %c0_i32_0 = arith.constant 0 : i32
    %2 = arith.cmpi ne, %1, %c0_i32_0 : i32
    scf.if %2 {
      %cst_98 = arith.constant 0.000000e+00 : f32
      %275 = vector.broadcast %cst_98 : f32 to vector<8x128xf32>
      %c0_99 = arith.constant 0 : index
      %c0_100 = arith.constant 0 : index
      %276 = vector.load %arg13[%c0_99, %c0_100] : memref<8x128xf32, #tpu.memory_space<vmem>>, vector<8x128xf32>
      tpu.vector_store %arg13[%c0_99, %c0_100], %275 {strides = array<i32>} : memref<8x128xf32, #tpu.memory_space<vmem>>, vector<8x128xf32>,
      %cst_101 = arith.constant 0.000000e+00 : f32
      %277 = vector.broadcast %cst_101 : f32 to vector<8x128xf32>
      %c0_102 = arith.constant 0 : index
      %c0_103 = arith.constant 0 : index
      %278 = vector.load %arg14[%c0_102, %c0_103] : memref<8x128xf32, #tpu.memory_space<vmem>>, vector<8x128xf32>
      tpu.vector_store %arg14[%c0_102, %c0_103], %277 {strides = array<i32>} : memref<8x128xf32, #tpu.memory_space<vmem>>, vector<8x128xf32>,
      %cst_104 = arith.constant 0.000000e+00 : f32
      %279 = vector.broadcast %cst_104 : f32 to vector<8x128xf32>
      %c0_105 = arith.constant 0 : index
      %c0_106 = arith.constant 0 : index
      %280 = vector.load %arg15[%c0_105, %c0_106] : memref<8x128xf32, #tpu.memory_space<vmem>>, vector<8x128xf32>
      tpu.vector_store %arg15[%c0_105, %c0_106], %279 {strides = array<i32>} : memref<8x128xf32, #tpu.memory_space<vmem>>, vector<8x128xf32>,
      %cst_107 = arith.constant 0.000000e+00 : f32
      %281 = vector.broadcast %cst_107 : f32 to vector<8x128xf32>
      %c0_108 = arith.constant 0 : index
      %c0_109 = arith.constant 0 : index
      %282 = vector.load %arg16[%c0_108, %c0_109] : memref<8x128xf32, #tpu.memory_space<vmem>>, vector<8x128xf32>
      tpu.vector_store %arg16[%c0_108, %c0_109], %281 {strides = array<i32>} : memref<8x128xf32, #tpu.memory_space<vmem>>, vector<8x128xf32>,
    } else {
    }
    %c0 = arith.constant 0 : index
    %c0_1 = arith.constant 0 : index
    %3 = vector.load %arg1[%c0, %c0_1] : memref<32x128xbf16, #tpu.memory_space<vmem>>, vector<32x128xbf16>
    %c0_2 = arith.constant 0 : index
    %c0_3 = arith.constant 0 : index
    %4 = vector.load %arg3[%c0_2, %c0_3] : memref<512x128xbf16, #tpu.memory_space<vmem>>, vector<512x128xbf16>
    %cst = arith.constant dense<0.000000e+00> : vector<32x512xf32>
    %5 = tpu.matmul %3, %4, %cst {dimension_numbers = #tpu.dot_dimension_numbers<[1], [1], [0], [0], [0, 0, 1, 0], [], []>} : vector<32x128xbf16>, vector<512x128xbf16>, vector<32x512xf32> -> vector<32x512xf32>
    %c0_4 = arith.constant 0 : index
    %c0_5 = arith.constant 0 : index
    %6 = vector.load %arg7[%c0_4, %c0_5] : memref<1x512xf32, #tpu.memory_space<vmem>>, vector<1x512xf32>
    %7 = vector.broadcast %6 : vector<1x512xf32> to vector<32x512xf32>
    %8 = arith.addf %5, %7 : vector<32x512xf32>
    %c0_6 = arith.constant 0 : index
    %c0_7 = arith.constant 0 : index
    %9 = vector.load %arg11[%c0_6, %c0_7] : memref<32x512xf32, #tpu.memory_space<vmem>>, vector<32x512xf32>
    tpu.vector_store %arg11[%c0_6, %c0_7], %8 {strides = array<i32>} : memref<32x512xf32, #tpu.memory_space<vmem>>, vector<32x512xf32>,
    %c0_8 = arith.constant 0 : index
    %c0_9 = arith.constant 0 : index
    %10 = vector.load %arg2[%c0_8, %c0_9] : memref<32x128xbf16, #tpu.memory_space<vmem>>, vector<32x128xbf16>
    %c0_10 = arith.constant 0 : index
    %c0_11 = arith.constant 0 : index
    %11 = vector.load %arg4[%c0_10, %c0_11] : memref<512x128xbf16, #tpu.memory_space<vmem>>, vector<512x128xbf16>
    %cst_12 = arith.constant dense<0.000000e+00> : vector<32x512xf32>
    %12 = tpu.matmul %10, %11, %cst_12 {dimension_numbers = #tpu.dot_dimension_numbers<[1], [1], [0], [0], [0, 0, 1, 0], [], []>} : vector<32x128xbf16>, vector<512x128xbf16>, vector<32x512xf32> -> vector<32x512xf32>
    %c0_13 = arith.constant 0 : index
    %c0_14 = arith.constant 0 : index
    %13 = vector.load %arg8[%c0_13, %c0_14] : memref<1x512xf32, #tpu.memory_space<vmem>>, vector<1x512xf32>
    %14 = vector.broadcast %13 : vector<1x512xf32> to vector<32x512xf32>
    %15 = arith.addf %12, %14 : vector<32x512xf32>
    %c0_15 = arith.constant 0 : index
    %c0_16 = arith.constant 0 : index
    %16 = vector.load %arg12[%c0_15, %c0_16] : memref<32x512xf32, #tpu.memory_space<vmem>>, vector<32x512xf32>
    tpu.vector_store %arg12[%c0_15, %c0_16], %15 {strides = array<i32>} : memref<32x512xf32, #tpu.memory_space<vmem>>, vector<32x512xf32>,
    %c0_17 = arith.constant 0 : index
    %c0_18 = arith.constant 0 : index
    %17 = vector.load %arg5[%c0_17, %c0_18] : memref<512x128xbf16, #tpu.memory_space<vmem>>, vector<512x128xbf16>
    %c0_19 = arith.constant 0 : index
    %c0_20 = arith.constant 0 : index
    %18 = vector.load %arg6[%c0_19, %c0_20] : memref<512x128xbf16, #tpu.memory_space<vmem>>, vector<512x128xbf16>
    %c0_21 = arith.constant 0 : index
    %c0_22 = arith.constant 0 : index
    %19 = vector.load %arg13[%c0_21, %c0_22] : memref<8x128xf32, #tpu.memory_space<vmem>>, vector<8x128xf32>
    %c0_23 = arith.constant 0 : index
    %c0_24 = arith.constant 0 : index
    %20 = vector.load %arg14[%c0_23, %c0_24] : memref<8x128xf32, #tpu.memory_space<vmem>>, vector<8x128xf32>
    %c0_25 = arith.constant 0 : index
    %c0_26 = arith.constant 0 : index
    %21 = vector.load %arg15[%c0_25, %c0_26] : memref<8x128xf32, #tpu.memory_space<vmem>>, vector<8x128xf32>
    %c0_27 = arith.constant 0 : index
    %c0_28 = arith.constant 0 : index
    %22 = vector.load %arg16[%c0_27, %c0_28] : memref<8x128xf32, #tpu.memory_space<vmem>>, vector<8x128xf32>
    %c0_29 = arith.constant 0 : index
    %c0_30 = arith.constant 0 : index
    %23 = vector.load %arg11[%c0_29, %c0_30] : memref<32x512xf32, #tpu.memory_space<vmem>>, vector<8x512xf32>
    %24 = arith.truncf %19 : vector<8x128xf32> to vector<8x128xbf16>
    %cst_31 = arith.constant dense<0.000000e+00> : vector<8x512xf32>
    %25 = tpu.matmul %24, %17, %cst_31 {dimension_numbers = #tpu.dot_dimension_numbers<[1], [1], [0], [0], [0, 0, 1, 0], [], []>} : vector<8x128xbf16>, vector<512x128xbf16>, vector<8x512xf32> -> vector<8x512xf32>
    %26 = arith.addf %23, %25 : vector<8x512xf32>
    %27 = vector.extract_strided_slice %26 {offsets = [0, 0], sizes = [8, 128], strides = [1, 1]} : vector<8x512xf32> to vector<8x128xf32>
    %28 = arith.negf %27 : vector<8x128xf32>
    %29 = math.exp %28 : vector<8x128xf32>
    %cst_32 = arith.constant 1.000000e+00 : f32
    %30 = vector.broadcast %cst_32 : f32 to vector<8x128xf32>
    %31 = arith.addf %30, %29 : vector<8x128xf32>
    %32 = arith.divf %30, %31 : vector<8x128xf32>
    %33 = vector.extract_strided_slice %26 {offsets = [0, 128], sizes = [8, 128], strides = [1, 1]} : vector<8x512xf32> to vector<8x128xf32>
    %34 = arith.negf %33 : vector<8x128xf32>
    %35 = math.exp %34 : vector<8x128xf32>
    %cst_33 = arith.constant 1.000000e+00 : f32
    %36 = vector.broadcast %cst_33 : f32 to vector<8x128xf32>
    %37 = arith.addf %36, %35 : vector<8x128xf32>
    %38 = arith.divf %36, %37 : vector<8x128xf32>
    %39 = vector.extract_strided_slice %26 {offsets = [0, 256], sizes = [8, 128], strides = [1, 1]} : vector<8x512xf32> to vector<8x128xf32>
    %40 = math.tanh %39 : vector<8x128xf32>
    %41 = vector.extract_strided_slice %26 {offsets = [0, 384], sizes = [8, 128], strides = [1, 1]} : vector<8x512xf32> to vector<8x128xf32>
    %42 = arith.negf %41 : vector<8x128xf32>
    %43 = math.exp %42 : vector<8x128xf32>
    %cst_34 = arith.constant 1.000000e+00 : f32
    %44 = vector.broadcast %cst_34 : f32 to vector<8x128xf32>
    %45 = arith.addf %44, %43 : vector<8x128xf32>
    %46 = arith.divf %44, %45 : vector<8x128xf32>
    %47 = arith.mulf %38, %20 : vector<8x128xf32>
    %48 = arith.mulf %32, %40 : vector<8x128xf32>
    %49 = arith.addf %47, %48 : vector<8x128xf32>
    %50 = math.tanh %49 : vector<8x128xf32>
    %51 = arith.mulf %46, %50 : vector<8x128xf32>
    %52 = arith.truncf %51 : vector<8x128xf32> to vector<8x128xbf16>
    %c0_35 = arith.constant 0 : index
    %c0_36 = arith.constant 0 : index
    %53 = vector.load %arg9[%c0_35, %c0_36] : memref<32x128xbf16, #tpu.memory_space<vmem>>, vector<8x128xbf16>
    tpu.vector_store %arg9[%c0_35, %c0_36], %52 {strides = array<i32>} : memref<32x128xbf16, #tpu.memory_space<vmem>>, vector<8x128xbf16>,
    %c24 = arith.constant 24 : index
    %c0_37 = arith.constant 0 : index
    %54 = vector.load %arg12[%c24, %c0_37] : memref<32x512xf32, #tpu.memory_space<vmem>>, vector<8x512xf32>
    %55 = arith.truncf %21 : vector<8x128xf32> to vector<8x128xbf16>
    %cst_38 = arith.constant dense<0.000000e+00> : vector<8x512xf32>
    %56 = tpu.matmul %55, %18, %cst_38 {dimension_numbers = #tpu.dot_dimension_numbers<[1], [1], [0], [0], [0, 0, 1, 0], [], []>} : vector<8x128xbf16>, vector<512x128xbf16>, vector<8x512xf32> -> vector<8x512xf32>
    %57 = arith.addf %54, %56 : vector<8x512xf32>
    %58 = vector.extract_strided_slice %57 {offsets = [0, 0], sizes = [8, 128], strides = [1, 1]} : vector<8x512xf32> to vector<8x128xf32>
    %59 = arith.negf %58 : vector<8x128xf32>
    %60 = math.exp %59 : vector<8x128xf32>
    %cst_39 = arith.constant 1.000000e+00 : f32
    %61 = vector.broadcast %cst_39 : f32 to vector<8x128xf32>
    %62 = arith.addf %61, %60 : vector<8x128xf32>
    %63 = arith.divf %61, %62 : vector<8x128xf32>
    %64 = vector.extract_strided_slice %57 {offsets = [0, 128], sizes = [8, 128], strides = [1, 1]} : vector<8x512xf32> to vector<8x128xf32>
    %65 = arith.negf %64 : vector<8x128xf32>
    %66 = math.exp %65 : vector<8x128xf32>
    %cst_40 = arith.constant 1.000000e+00 : f32
    %67 = vector.broadcast %cst_40 : f32 to vector<8x128xf32>
    %68 = arith.addf %67, %66 : vector<8x128xf32>
    %69 = arith.divf %67, %68 : vector<8x128xf32>
    %70 = vector.extract_strided_slice %57 {offsets = [0, 256], sizes = [8, 128], strides = [1, 1]} : vector<8x512xf32> to vector<8x128xf32>
    %71 = math.tanh %70 : vector<8x128xf32>
    %72 = vector.extract_strided_slice %57 {offsets = [0, 384], sizes = [8, 128], strides = [1, 1]} : vector<8x512xf32> to vector<8x128xf32>
    %73 = arith.negf %72 : vector<8x128xf32>
    %74 = math.exp %73 : vector<8x128xf32>
    %cst_41 = arith.constant 1.000000e+00 : f32
    %75 = vector.broadcast %cst_41 : f32 to vector<8x128xf32>
    %76 = arith.addf %75, %74 : vector<8x128xf32>
    %77 = arith.divf %75, %76 : vector<8x128xf32>
    %78 = arith.mulf %69, %22 : vector<8x128xf32>
    %79 = arith.mulf %63, %71 : vector<8x128xf32>
    %80 = arith.addf %78, %79 : vector<8x128xf32>
    %81 = math.tanh %80 : vector<8x128xf32>
    %82 = arith.mulf %77, %81 : vector<8x128xf32>
    %83 = arith.truncf %82 : vector<8x128xf32> to vector<8x128xbf16>
    %c24_42 = arith.constant 24 : index
    %c0_43 = arith.constant 0 : index
    %84 = vector.load %arg10[%c24_42, %c0_43] : memref<32x128xbf16, #tpu.memory_space<vmem>>, vector<8x128xbf16>
    tpu.vector_store %arg10[%c24_42, %c0_43], %83 {strides = array<i32>} : memref<32x128xbf16, #tpu.memory_space<vmem>>, vector<8x128xbf16>,
    %c8 = arith.constant 8 : index
    %c0_44 = arith.constant 0 : index
    %85 = vector.load %arg11[%c8, %c0_44] : memref<32x512xf32, #tpu.memory_space<vmem>>, vector<8x512xf32>
    %86 = arith.truncf %51 : vector<8x128xf32> to vector<8x128xbf16>
    %cst_45 = arith.constant dense<0.000000e+00> : vector<8x512xf32>
    %87 = tpu.matmul %86, %17, %cst_45 {dimension_numbers = #tpu.dot_dimension_numbers<[1], [1], [0], [0], [0, 0, 1, 0], [], []>} : vector<8x128xbf16>, vector<512x128xbf16>, vector<8x512xf32> -> vector<8x512xf32>
    %88 = arith.addf %85, %87 : vector<8x512xf32>
    %89 = vector.extract_strided_slice %88 {offsets = [0, 0], sizes = [8, 128], strides = [1, 1]} : vector<8x512xf32> to vector<8x128xf32>
    %90 = arith.negf %89 : vector<8x128xf32>
    %91 = math.exp %90 : vector<8x128xf32>
    %cst_46 = arith.constant 1.000000e+00 : f32
    %92 = vector.broadcast %cst_46 : f32 to vector<8x128xf32>
    %93 = arith.addf %92, %91 : vector<8x128xf32>
    %94 = arith.divf %92, %93 : vector<8x128xf32>
    %95 = vector.extract_strided_slice %88 {offsets = [0, 128], sizes = [8, 128], strides = [1, 1]} : vector<8x512xf32> to vector<8x128xf32>
    %96 = arith.negf %95 : vector<8x128xf32>
    %97 = math.exp %96 : vector<8x128xf32>
    %cst_47 = arith.constant 1.000000e+00 : f32
    %98 = vector.broadcast %cst_47 : f32 to vector<8x128xf32>
    %99 = arith.addf %98, %97 : vector<8x128xf32>
    %100 = arith.divf %98, %99 : vector<8x128xf32>
    %101 = vector.extract_strided_slice %88 {offsets = [0, 256], sizes = [8, 128], strides = [1, 1]} : vector<8x512xf32> to vector<8x128xf32>
    %102 = math.tanh %101 : vector<8x128xf32>
    %103 = vector.extract_strided_slice %88 {offsets = [0, 384], sizes = [8, 128], strides = [1, 1]} : vector<8x512xf32> to vector<8x128xf32>
    %104 = arith.negf %103 : vector<8x128xf32>
    %105 = math.exp %104 : vector<8x128xf32>
    %cst_48 = arith.constant 1.000000e+00 : f32
    %106 = vector.broadcast %cst_48 : f32 to vector<8x128xf32>
    %107 = arith.addf %106, %105 : vector<8x128xf32>
    %108 = arith.divf %106, %107 : vector<8x128xf32>
    %109 = arith.mulf %100, %49 : vector<8x128xf32>
    %110 = arith.mulf %94, %102 : vector<8x128xf32>
    %111 = arith.addf %109, %110 : vector<8x128xf32>
    %112 = math.tanh %111 : vector<8x128xf32>
    %113 = arith.mulf %108, %112 : vector<8x128xf32>
    %114 = arith.truncf %113 : vector<8x128xf32> to vector<8x128xbf16>
    %c8_49 = arith.constant 8 : index
    %c0_50 = arith.constant 0 : index
    %115 = vector.load %arg9[%c8_49, %c0_50] : memref<32x128xbf16, #tpu.memory_space<vmem>>, vector<8x128xbf16>
    tpu.vector_store %arg9[%c8_49, %c0_50], %114 {strides = array<i32>} : memref<32x128xbf16, #tpu.memory_space<vmem>>, vector<8x128xbf16>,
    %c16 = arith.constant 16 : index
    %c0_51 = arith.constant 0 : index
    %116 = vector.load %arg12[%c16, %c0_51] : memref<32x512xf32, #tpu.memory_space<vmem>>, vector<8x512xf32>
    %117 = arith.truncf %82 : vector<8x128xf32> to vector<8x128xbf16>
    %cst_52 = arith.constant dense<0.000000e+00> : vector<8x512xf32>
    %118 = tpu.matmul %117, %18, %cst_52 {dimension_numbers = #tpu.dot_dimension_numbers<[1], [1], [0], [0], [0, 0, 1, 0], [], []>} : vector<8x128xbf16>, vector<512x128xbf16>, vector<8x512xf32> -> vector<8x512xf32>
    %119 = arith.addf %116, %118 : vector<8x512xf32>
    %120 = vector.extract_strided_slice %119 {offsets = [0, 0], sizes = [8, 128], strides = [1, 1]} : vector<8x512xf32> to vector<8x128xf32>
    %121 = arith.negf %120 : vector<8x128xf32>
    %122 = math.exp %121 : vector<8x128xf32>
    %cst_53 = arith.constant 1.000000e+00 : f32
    %123 = vector.broadcast %cst_53 : f32 to vector<8x128xf32>
    %124 = arith.addf %123, %122 : vector<8x128xf32>
    %125 = arith.divf %123, %124 : vector<8x128xf32>
    %126 = vector.extract_strided_slice %119 {offsets = [0, 128], sizes = [8, 128], strides = [1, 1]} : vector<8x512xf32> to vector<8x128xf32>
    %127 = arith.negf %126 : vector<8x128xf32>
    %128 = math.exp %127 : vector<8x128xf32>
    %cst_54 = arith.constant 1.000000e+00 : f32
    %129 = vector.broadcast %cst_54 : f32 to vector<8x128xf32>
    %130 = arith.addf %129, %128 : vector<8x128xf32>
    %131 = arith.divf %129, %130 : vector<8x128xf32>
    %132 = vector.extract_strided_slice %119 {offsets = [0, 256], sizes = [8, 128], strides = [1, 1]} : vector<8x512xf32> to vector<8x128xf32>
    %133 = math.tanh %132 : vector<8x128xf32>
    %134 = vector.extract_strided_slice %119 {offsets = [0, 384], sizes = [8, 128], strides = [1, 1]} : vector<8x512xf32> to vector<8x128xf32>
    %135 = arith.negf %134 : vector<8x128xf32>
    %136 = math.exp %135 : vector<8x128xf32>
    %cst_55 = arith.constant 1.000000e+00 : f32
    %137 = vector.broadcast %cst_55 : f32 to vector<8x128xf32>
    %138 = arith.addf %137, %136 : vector<8x128xf32>
    %139 = arith.divf %137, %138 : vector<8x128xf32>
    %140 = arith.mulf %131, %80 : vector<8x128xf32>
    %141 = arith.mulf %125, %133 : vector<8x128xf32>
    %142 = arith.addf %140, %141 : vector<8x128xf32>
    %143 = math.tanh %142 : vector<8x128xf32>
    %144 = arith.mulf %139, %143 : vector<8x128xf32>
    %145 = arith.truncf %144 : vector<8x128xf32> to vector<8x128xbf16>
    %c16_56 = arith.constant 16 : index
    %c0_57 = arith.constant 0 : index
    %146 = vector.load %arg10[%c16_56, %c0_57] : memref<32x128xbf16, #tpu.memory_space<vmem>>, vector<8x128xbf16>
    tpu.vector_store %arg10[%c16_56, %c0_57], %145 {strides = array<i32>} : memref<32x128xbf16, #tpu.memory_space<vmem>>, vector<8x128xbf16>,
    %c16_58 = arith.constant 16 : index
    %c0_59 = arith.constant 0 : index
    %147 = vector.load %arg11[%c16_58, %c0_59] : memref<32x512xf32, #tpu.memory_space<vmem>>, vector<8x512xf32>
    %148 = arith.truncf %113 : vector<8x128xf32> to vector<8x128xbf16>
    %cst_60 = arith.constant dense<0.000000e+00> : vector<8x512xf32>
    %149 = tpu.matmul %148, %17, %cst_60 {dimension_numbers = #tpu.dot_dimension_numbers<[1], [1], [0], [0], [0, 0, 1, 0], [], []>} : vector<8x128xbf16>, vector<512x128xbf16>, vector<8x512xf32> -> vector<8x512xf32>
    %150 = arith.addf %147, %149 : vector<8x512xf32>
    %151 = vector.extract_strided_slice %150 {offsets = [0, 0], sizes = [8, 128], strides = [1, 1]} : vector<8x512xf32> to vector<8x128xf32>
    %152 = arith.negf %151 : vector<8x128xf32>
    %153 = math.exp %152 : vector<8x128xf32>
    %cst_61 = arith.constant 1.000000e+00 : f32
    %154 = vector.broadcast %cst_61 : f32 to vector<8x128xf32>
    %155 = arith.addf %154, %153 : vector<8x128xf32>
    %156 = arith.divf %154, %155 : vector<8x128xf32>
    %157 = vector.extract_strided_slice %150 {offsets = [0, 128], sizes = [8, 128], strides = [1, 1]} : vector<8x512xf32> to vector<8x128xf32>
    %158 = arith.negf %157 : vector<8x128xf32>
    %159 = math.exp %158 : vector<8x128xf32>
    %cst_62 = arith.constant 1.000000e+00 : f32
    %160 = vector.broadcast %cst_62 : f32 to vector<8x128xf32>
    %161 = arith.addf %160, %159 : vector<8x128xf32>
    %162 = arith.divf %160, %161 : vector<8x128xf32>
    %163 = vector.extract_strided_slice %150 {offsets = [0, 256], sizes = [8, 128], strides = [1, 1]} : vector<8x512xf32> to vector<8x128xf32>
    %164 = math.tanh %163 : vector<8x128xf32>
    %165 = vector.extract_strided_slice %150 {offsets = [0, 384], sizes = [8, 128], strides = [1, 1]} : vector<8x512xf32> to vector<8x128xf32>
    %166 = arith.negf %165 : vector<8x128xf32>
    %167 = math.exp %166 : vector<8x128xf32>
    %cst_63 = arith.constant 1.000000e+00 : f32
    %168 = vector.broadcast %cst_63 : f32 to vector<8x128xf32>
    %169 = arith.addf %168, %167 : vector<8x128xf32>
    %170 = arith.divf %168, %169 : vector<8x128xf32>
    %171 = arith.mulf %162, %111 : vector<8x128xf32>
    %172 = arith.mulf %156, %164 : vector<8x128xf32>
    %173 = arith.addf %171, %172 : vector<8x128xf32>
    %174 = math.tanh %173 : vector<8x128xf32>
    %175 = arith.mulf %170, %174 : vector<8x128xf32>
    %176 = arith.truncf %175 : vector<8x128xf32> to vector<8x128xbf16>
    %c16_64 = arith.constant 16 : index
    %c0_65 = arith.constant 0 : index
    %177 = vector.load %arg9[%c16_64, %c0_65] : memref<32x128xbf16, #tpu.memory_space<vmem>>, vector<8x128xbf16>
    tpu.vector_store %arg9[%c16_64, %c0_65], %176 {strides = array<i32>} : memref<32x128xbf16, #tpu.memory_space<vmem>>, vector<8x128xbf16>,
    %c8_66 = arith.constant 8 : index
    %c0_67 = arith.constant 0 : index
    %178 = vector.load %arg12[%c8_66, %c0_67] : memref<32x512xf32, #tpu.memory_space<vmem>>, vector<8x512xf32>
    %179 = arith.truncf %144 : vector<8x128xf32> to vector<8x128xbf16>
    %cst_68 = arith.constant dense<0.000000e+00> : vector<8x512xf32>
    %180 = tpu.matmul %179, %18, %cst_68 {dimension_numbers = #tpu.dot_dimension_numbers<[1], [1], [0], [0], [0, 0, 1, 0], [], []>} : vector<8x128xbf16>, vector<512x128xbf16>, vector<8x512xf32> -> vector<8x512xf32>
    %181 = arith.addf %178, %180 : vector<8x512xf32>
    %182 = vector.extract_strided_slice %181 {offsets = [0, 0], sizes = [8, 128], strides = [1, 1]} : vector<8x512xf32> to vector<8x128xf32>
    %183 = arith.negf %182 : vector<8x128xf32>
    %184 = math.exp %183 : vector<8x128xf32>
    %cst_69 = arith.constant 1.000000e+00 : f32
    %185 = vector.broadcast %cst_69 : f32 to vector<8x128xf32>
    %186 = arith.addf %185, %184 : vector<8x128xf32>
    %187 = arith.divf %185, %186 : vector<8x128xf32>
    %188 = vector.extract_strided_slice %181 {offsets = [0, 128], sizes = [8, 128], strides = [1, 1]} : vector<8x512xf32> to vector<8x128xf32>
    %189 = arith.negf %188 : vector<8x128xf32>
    %190 = math.exp %189 : vector<8x128xf32>
    %cst_70 = arith.constant 1.000000e+00 : f32
    %191 = vector.broadcast %cst_70 : f32 to vector<8x128xf32>
    %192 = arith.addf %191, %190 : vector<8x128xf32>
    %193 = arith.divf %191, %192 : vector<8x128xf32>
    %194 = vector.extract_strided_slice %181 {offsets = [0, 256], sizes = [8, 128], strides = [1, 1]} : vector<8x512xf32> to vector<8x128xf32>
    %195 = math.tanh %194 : vector<8x128xf32>
    %196 = vector.extract_strided_slice %181 {offsets = [0, 384], sizes = [8, 128], strides = [1, 1]} : vector<8x512xf32> to vector<8x128xf32>
    %197 = arith.negf %196 : vector<8x128xf32>
    %198 = math.exp %197 : vector<8x128xf32>
    %cst_71 = arith.constant 1.000000e+00 : f32
    %199 = vector.broadcast %cst_71 : f32 to vector<8x128xf32>
    %200 = arith.addf %199, %198 : vector<8x128xf32>
    %201 = arith.divf %199, %200 : vector<8x128xf32>
    %202 = arith.mulf %193, %142 : vector<8x128xf32>
    %203 = arith.mulf %187, %195 : vector<8x128xf32>
    %204 = arith.addf %202, %203 : vector<8x128xf32>
    %205 = math.tanh %204 : vector<8x128xf32>
    %206 = arith.mulf %201, %205 : vector<8x128xf32>
    %207 = arith.truncf %206 : vector<8x128xf32> to vector<8x128xbf16>
    %c8_72 = arith.constant 8 : index
    %c0_73 = arith.constant 0 : index
    %208 = vector.load %arg10[%c8_72, %c0_73] : memref<32x128xbf16, #tpu.memory_space<vmem>>, vector<8x128xbf16>
    tpu.vector_store %arg10[%c8_72, %c0_73], %207 {strides = array<i32>} : memref<32x128xbf16, #tpu.memory_space<vmem>>, vector<8x128xbf16>,
    %c24_74 = arith.constant 24 : index
    %c0_75 = arith.constant 0 : index
    %209 = vector.load %arg11[%c24_74, %c0_75] : memref<32x512xf32, #tpu.memory_space<vmem>>, vector<8x512xf32>
    %210 = arith.truncf %175 : vector<8x128xf32> to vector<8x128xbf16>
    %cst_76 = arith.constant dense<0.000000e+00> : vector<8x512xf32>
    %211 = tpu.matmul %210, %17, %cst_76 {dimension_numbers = #tpu.dot_dimension_numbers<[1], [1], [0], [0], [0, 0, 1, 0], [], []>} : vector<8x128xbf16>, vector<512x128xbf16>, vector<8x512xf32> -> vector<8x512xf32>
    %212 = arith.addf %209, %211 : vector<8x512xf32>
    %213 = vector.extract_strided_slice %212 {offsets = [0, 0], sizes = [8, 128], strides = [1, 1]} : vector<8x512xf32> to vector<8x128xf32>
    %214 = arith.negf %213 : vector<8x128xf32>
    %215 = math.exp %214 : vector<8x128xf32>
    %cst_77 = arith.constant 1.000000e+00 : f32
    %216 = vector.broadcast %cst_77 : f32 to vector<8x128xf32>
    %217 = arith.addf %216, %215 : vector<8x128xf32>
    %218 = arith.divf %216, %217 : vector<8x128xf32>
    %219 = vector.extract_strided_slice %212 {offsets = [0, 128], sizes = [8, 128], strides = [1, 1]} : vector<8x512xf32> to vector<8x128xf32>
    %220 = arith.negf %219 : vector<8x128xf32>
    %221 = math.exp %220 : vector<8x128xf32>
    %cst_78 = arith.constant 1.000000e+00 : f32
    %222 = vector.broadcast %cst_78 : f32 to vector<8x128xf32>
    %223 = arith.addf %222, %221 : vector<8x128xf32>
    %224 = arith.divf %222, %223 : vector<8x128xf32>
    %225 = vector.extract_strided_slice %212 {offsets = [0, 256], sizes = [8, 128], strides = [1, 1]} : vector<8x512xf32> to vector<8x128xf32>
    %226 = math.tanh %225 : vector<8x128xf32>
    %227 = vector.extract_strided_slice %212 {offsets = [0, 384], sizes = [8, 128], strides = [1, 1]} : vector<8x512xf32> to vector<8x128xf32>
    %228 = arith.negf %227 : vector<8x128xf32>
    %229 = math.exp %228 : vector<8x128xf32>
    %cst_79 = arith.constant 1.000000e+00 : f32
    %230 = vector.broadcast %cst_79 : f32 to vector<8x128xf32>
    %231 = arith.addf %230, %229 : vector<8x128xf32>
    %232 = arith.divf %230, %231 : vector<8x128xf32>
    %233 = arith.mulf %224, %173 : vector<8x128xf32>
    %234 = arith.mulf %218, %226 : vector<8x128xf32>
    %235 = arith.addf %233, %234 : vector<8x128xf32>
    %236 = math.tanh %235 : vector<8x128xf32>
    %237 = arith.mulf %232, %236 : vector<8x128xf32>
    %238 = arith.truncf %237 : vector<8x128xf32> to vector<8x128xbf16>
    %c24_80 = arith.constant 24 : index
    %c0_81 = arith.constant 0 : index
    %239 = vector.load %arg9[%c24_80, %c0_81] : memref<32x128xbf16, #tpu.memory_space<vmem>>, vector<8x128xbf16>
    tpu.vector_store %arg9[%c24_80, %c0_81], %238 {strides = array<i32>} : memref<32x128xbf16, #tpu.memory_space<vmem>>, vector<8x128xbf16>,
    %c0_82 = arith.constant 0 : index
    %c0_83 = arith.constant 0 : index
    %240 = vector.load %arg12[%c0_82, %c0_83] : memref<32x512xf32, #tpu.memory_space<vmem>>, vector<8x512xf32>
    %241 = arith.truncf %206 : vector<8x128xf32> to vector<8x128xbf16>
    %cst_84 = arith.constant dense<0.000000e+00> : vector<8x512xf32>
    %242 = tpu.matmul %241, %18, %cst_84 {dimension_numbers = #tpu.dot_dimension_numbers<[1], [1], [0], [0], [0, 0, 1, 0], [], []>} : vector<8x128xbf16>, vector<512x128xbf16>, vector<8x512xf32> -> vector<8x512xf32>
    %243 = arith.addf %240, %242 : vector<8x512xf32>
    %244 = vector.extract_strided_slice %243 {offsets = [0, 0], sizes = [8, 128], strides = [1, 1]} : vector<8x512xf32> to vector<8x128xf32>
    %245 = arith.negf %244 : vector<8x128xf32>
    %246 = math.exp %245 : vector<8x128xf32>
    %cst_85 = arith.constant 1.000000e+00 : f32
    %247 = vector.broadcast %cst_85 : f32 to vector<8x128xf32>
    %248 = arith.addf %247, %246 : vector<8x128xf32>
    %249 = arith.divf %247, %248 : vector<8x128xf32>
    %250 = vector.extract_strided_slice %243 {offsets = [0, 128], sizes = [8, 128], strides = [1, 1]} : vector<8x512xf32> to vector<8x128xf32>
    %251 = arith.negf %250 : vector<8x128xf32>
    %252 = math.exp %251 : vector<8x128xf32>
    %cst_86 = arith.constant 1.000000e+00 : f32
    %253 = vector.broadcast %cst_86 : f32 to vector<8x128xf32>
    %254 = arith.addf %253, %252 : vector<8x128xf32>
    %255 = arith.divf %253, %254 : vector<8x128xf32>
    %256 = vector.extract_strided_slice %243 {offsets = [0, 256], sizes = [8, 128], strides = [1, 1]} : vector<8x512xf32> to vector<8x128xf32>
    %257 = math.tanh %256 : vector<8x128xf32>
    %258 = vector.extract_strided_slice %243 {offsets = [0, 384], sizes = [8, 128], strides = [1, 1]} : vector<8x512xf32> to vector<8x128xf32>
    %259 = arith.negf %258 : vector<8x128xf32>
    %260 = math.exp %259 : vector<8x128xf32>
    %cst_87 = arith.constant 1.000000e+00 : f32
    %261 = vector.broadcast %cst_87 : f32 to vector<8x128xf32>
    %262 = arith.addf %261, %260 : vector<8x128xf32>
    %263 = arith.divf %261, %262 : vector<8x128xf32>
    %264 = arith.mulf %255, %204 : vector<8x128xf32>
    %265 = arith.mulf %249, %257 : vector<8x128xf32>
    %266 = arith.addf %264, %265 : vector<8x128xf32>
    %267 = math.tanh %266 : vector<8x128xf32>
    %268 = arith.mulf %263, %267 : vector<8x128xf32>
    %269 = arith.truncf %268 : vector<8x128xf32> to vector<8x128xbf16>
    %c0_88 = arith.constant 0 : index
    %c0_89 = arith.constant 0 : index
    %270 = vector.load %arg10[%c0_88, %c0_89] : memref<32x128xbf16, #tpu.memory_space<vmem>>, vector<8x128xbf16>
    tpu.vector_store %arg10[%c0_88, %c0_89], %269 {strides = array<i32>} : memref<32x128xbf16, #tpu.memory_space<vmem>>, vector<8x128xbf16>,
    %c0_90 = arith.constant 0 : index
    %c0_91 = arith.constant 0 : index
    %271 = vector.load %arg13[%c0_90, %c0_91] : memref<8x128xf32, #tpu.memory_space<vmem>>, vector<8x128xf32>
    tpu.vector_store %arg13[%c0_90, %c0_91], %237 {strides = array<i32>} : memref<8x128xf32, #tpu.memory_space<vmem>>, vector<8x128xf32>,
    %c0_92 = arith.constant 0 : index
    %c0_93 = arith.constant 0 : index
    %272 = vector.load %arg14[%c0_92, %c0_93] : memref<8x128xf32, #tpu.memory_space<vmem>>, vector<8x128xf32>
    tpu.vector_store %arg14[%c0_92, %c0_93], %235 {strides = array<i32>} : memref<8x128xf32, #tpu.memory_space<vmem>>, vector<8x128xf32>,
    %c0_94 = arith.constant 0 : index
    %c0_95 = arith.constant 0 : index
    %273 = vector.load %arg15[%c0_94, %c0_95] : memref<8x128xf32, #tpu.memory_space<vmem>>, vector<8x128xf32>
    tpu.vector_store %arg15[%c0_94, %c0_95], %268 {strides = array<i32>} : memref<8x128xf32, #tpu.memory_space<vmem>>, vector<8x128xf32>,
    %c0_96 = arith.constant 0 : index
    %c0_97 = arith.constant 0 : index
    %274 = vector.load %arg16[%c0_96, %c0_97] : memref<8x128xf32, #tpu.memory_space<vmem>>, vector<8x128xf32>
    tpu.vector_store %arg16[%c0_96, %c0_97], %266 {strides = array<i32>} : memref<8x128xf32, #tpu.memory_space<vmem>>, vector<8x128xf32>,
    return
  }
  func.func @transform_0(%arg0: i32) -> (i32, i32) {
    %c0_i32 = arith.constant 0 : i32
    %c0_i32_0 = arith.constant 0 : i32
    return %arg0, %c0_i32 : i32, i32
  }
  func.func @transform_1(%arg0: i32) -> (i32, i32) {
    %c1_i32 = arith.constant 1 : i32
    %0 = arith.subi %c1_i32, %arg0 : i32
    %c0_i32 = arith.constant 0 : i32
    %c0_i32_0 = arith.constant 0 : i32
    return %0, %c0_i32 : i32, i32
  }
  func.func @transform_2(%arg0: i32) -> (i32, i32) {
    %c0_i32 = arith.constant 0 : i32
    %c0_i32_0 = arith.constant 0 : i32
    %c0_i32_1 = arith.constant 0 : i32
    return %c0_i32, %c0_i32_0 : i32, i32
  }
  func.func @transform_3(%arg0: i32) -> (i32, i32) {
    %c0_i32 = arith.constant 0 : i32
    %c0_i32_0 = arith.constant 0 : i32
    %c0_i32_1 = arith.constant 0 : i32
    return %c0_i32, %c0_i32_0 : i32, i32
  }
  func.func @transform_4(%arg0: i32) -> (i32, i32) {
    %c0_i32 = arith.constant 0 : i32
    %c0_i32_0 = arith.constant 0 : i32
    %c0_i32_1 = arith.constant 0 : i32
    return %c0_i32, %c0_i32_0 : i32, i32
  }
  func.func @transform_5(%arg0: i32) -> (i32, i32) {
    %c0_i32 = arith.constant 0 : i32
    %c0_i32_0 = arith.constant 0 : i32
    %c0_i32_1 = arith.constant 0 : i32
    return %c0_i32, %c0_i32_0 : i32, i32
  }
  func.func @transform_6(%arg0: i32) -> (i32, i32) {
    %c0_i32 = arith.constant 0 : i32
    %c0_i32_0 = arith.constant 0 : i32
    %c0_i32_1 = arith.constant 0 : i32
    return %c0_i32, %c0_i32_0 : i32, i32
  }
  func.func @transform_7(%arg0: i32) -> (i32, i32) {
    %c0_i32 = arith.constant 0 : i32
    %c0_i32_0 = arith.constant 0 : i32
    %c0_i32_1 = arith.constant 0 : i32
    return %c0_i32, %c0_i32_0 : i32, i32
  }
  func.func @transform_8(%arg0: i32) -> (i32, i32) {
    %c0_i32 = arith.constant 0 : i32
    %c0_i32_0 = arith.constant 0 : i32
    return %arg0, %c0_i32 : i32, i32
  }
  func.func @transform_9(%arg0: i32) -> (i32, i32) {
    %c1_i32 = arith.constant 1 : i32
    %0 = arith.subi %c1_i32, %arg0 : i32
    %c0_i32 = arith.constant 0 : i32
    %c0_i32_0 = arith.constant 0 : i32
    return %0, %c0_i32 : i32, i32
  }
}

module attributes {stable_mosaic.version = 11 : i64} {
  func.func @kernel(%arg0: i32, %arg1: memref<32x128xbf16, #tpu.memory_space<vmem>>, %arg2: memref<32x128xbf16, #tpu.memory_space<vmem>>, %arg3: memref<32x128xbf16, #tpu.memory_space<vmem>>, %arg4: memref<32x128xbf16, #tpu.memory_space<vmem>>, %arg5: memref<512x128xbf16, #tpu.memory_space<vmem>>, %arg6: memref<512x128xbf16, #tpu.memory_space<vmem>>, %arg7: memref<512x128xbf16, #tpu.memory_space<vmem>>, %arg8: memref<512x128xbf16, #tpu.memory_space<vmem>>, %arg9: memref<512x128xbf16, #tpu.memory_space<vmem>>, %arg10: memref<512x128xbf16, #tpu.memory_space<vmem>>, %arg11: memref<1x512xf32, #tpu.memory_space<vmem>>, %arg12: memref<1x512xf32, #tpu.memory_space<vmem>>, %arg13: memref<32x128xbf16, #tpu.memory_space<vmem>>, %arg14: memref<32x128xbf16, #tpu.memory_space<vmem>>, %arg15: memref<32x512xf32, #tpu.memory_space<vmem>>, %arg16: memref<32x512xf32, #tpu.memory_space<vmem>>, %arg17: memref<8x128xf32, #tpu.memory_space<vmem>>, %arg18: memref<8x128xf32, #tpu.memory_space<vmem>>, %arg19: memref<8x128xf32, #tpu.memory_space<vmem>>, %arg20: memref<8x128xf32, #tpu.memory_space<vmem>>) attributes {dimension_semantics = [#tpu.dimension_semantics<arbitrary>], iteration_bounds = array<i64: 2>, scalar_prefetch = 0 : i64, scratch_operands = 6 : i64, tpu.core_type = #tpu.core_type<tc>, window_params = [{transform_indices = @transform_0, window_bounds = array<i64: 32, 128>}, {transform_indices = @transform_1, window_bounds = array<i64: 32, 128>}, {transform_indices = @transform_2, window_bounds = array<i64: 32, 128>}, {transform_indices = @transform_3, window_bounds = array<i64: 32, 128>}, {pipeline_mode = #tpu.pipeline_mode<synchronous>, transform_indices = @transform_4, window_bounds = array<i64: 512, 128>}, {pipeline_mode = #tpu.pipeline_mode<synchronous>, transform_indices = @transform_5, window_bounds = array<i64: 512, 128>}, {pipeline_mode = #tpu.pipeline_mode<synchronous>, transform_indices = @transform_6, window_bounds = array<i64: 512, 128>}, {pipeline_mode = #tpu.pipeline_mode<synchronous>, transform_indices = @transform_7, window_bounds = array<i64: 512, 128>}, {pipeline_mode = #tpu.pipeline_mode<synchronous>, transform_indices = @transform_8, window_bounds = array<i64: 512, 128>}, {pipeline_mode = #tpu.pipeline_mode<synchronous>, transform_indices = @transform_9, window_bounds = array<i64: 512, 128>}, {pipeline_mode = #tpu.pipeline_mode<synchronous>, transform_indices = @transform_10, window_bounds = array<i64: 1, 512>}, {pipeline_mode = #tpu.pipeline_mode<synchronous>, transform_indices = @transform_11, window_bounds = array<i64: 1, 512>}, {transform_indices = @transform_12, window_bounds = array<i64: 32, 128>}, {transform_indices = @transform_13, window_bounds = array<i64: 32, 128>}]} {
    %c0_i32 = arith.constant 0 : i32
    %0 = arith.cmpi eq, %arg0, %c0_i32 : i32
    %1 = arith.extui %0 : i1 to i32
    %c0_i32_0 = arith.constant 0 : i32
    %2 = arith.cmpi ne, %1, %c0_i32_0 : i32
    scf.if %2 {
      %cst_108 = arith.constant 0.000000e+00 : f32
      %283 = vector.broadcast %cst_108 : f32 to vector<8x128xf32>
      %c0_109 = arith.constant 0 : index
      %c0_110 = arith.constant 0 : index
      %284 = vector.load %arg17[%c0_109, %c0_110] : memref<8x128xf32, #tpu.memory_space<vmem>>, vector<8x128xf32>
      tpu.vector_store %arg17[%c0_109, %c0_110], %283 {strides = array<i32>} : memref<8x128xf32, #tpu.memory_space<vmem>>, vector<8x128xf32>,
      %cst_111 = arith.constant 0.000000e+00 : f32
      %285 = vector.broadcast %cst_111 : f32 to vector<8x128xf32>
      %c0_112 = arith.constant 0 : index
      %c0_113 = arith.constant 0 : index
      %286 = vector.load %arg18[%c0_112, %c0_113] : memref<8x128xf32, #tpu.memory_space<vmem>>, vector<8x128xf32>
      tpu.vector_store %arg18[%c0_112, %c0_113], %285 {strides = array<i32>} : memref<8x128xf32, #tpu.memory_space<vmem>>, vector<8x128xf32>,
      %cst_114 = arith.constant 0.000000e+00 : f32
      %287 = vector.broadcast %cst_114 : f32 to vector<8x128xf32>
      %c0_115 = arith.constant 0 : index
      %c0_116 = arith.constant 0 : index
      %288 = vector.load %arg19[%c0_115, %c0_116] : memref<8x128xf32, #tpu.memory_space<vmem>>, vector<8x128xf32>
      tpu.vector_store %arg19[%c0_115, %c0_116], %287 {strides = array<i32>} : memref<8x128xf32, #tpu.memory_space<vmem>>, vector<8x128xf32>,
      %cst_117 = arith.constant 0.000000e+00 : f32
      %289 = vector.broadcast %cst_117 : f32 to vector<8x128xf32>
      %c0_118 = arith.constant 0 : index
      %c0_119 = arith.constant 0 : index
      %290 = vector.load %arg20[%c0_118, %c0_119] : memref<8x128xf32, #tpu.memory_space<vmem>>, vector<8x128xf32>
      tpu.vector_store %arg20[%c0_118, %c0_119], %289 {strides = array<i32>} : memref<8x128xf32, #tpu.memory_space<vmem>>, vector<8x128xf32>,
    } else {
    }
    %c0 = arith.constant 0 : index
    %c0_1 = arith.constant 0 : index
    %3 = vector.load %arg1[%c0, %c0_1] : memref<32x128xbf16, #tpu.memory_space<vmem>>, vector<32x128xbf16>
    %c0_2 = arith.constant 0 : index
    %c0_3 = arith.constant 0 : index
    %4 = vector.load %arg5[%c0_2, %c0_3] : memref<512x128xbf16, #tpu.memory_space<vmem>>, vector<512x128xbf16>
    %cst = arith.constant dense<0.000000e+00> : vector<32x512xf32>
    %5 = tpu.matmul %3, %4, %cst {dimension_numbers = #tpu.dot_dimension_numbers<[1], [1], [0], [0], [0, 0, 1, 0], [], []>} : vector<32x128xbf16>, vector<512x128xbf16>, vector<32x512xf32> -> vector<32x512xf32>
    %c0_4 = arith.constant 0 : index
    %c0_5 = arith.constant 0 : index
    %6 = vector.load %arg2[%c0_4, %c0_5] : memref<32x128xbf16, #tpu.memory_space<vmem>>, vector<32x128xbf16>
    %c0_6 = arith.constant 0 : index
    %c0_7 = arith.constant 0 : index
    %7 = vector.load %arg6[%c0_6, %c0_7] : memref<512x128xbf16, #tpu.memory_space<vmem>>, vector<512x128xbf16>
    %cst_8 = arith.constant dense<0.000000e+00> : vector<32x512xf32>
    %8 = tpu.matmul %6, %7, %cst_8 {dimension_numbers = #tpu.dot_dimension_numbers<[1], [1], [0], [0], [0, 0, 1, 0], [], []>} : vector<32x128xbf16>, vector<512x128xbf16>, vector<32x512xf32> -> vector<32x512xf32>
    %9 = arith.addf %5, %8 : vector<32x512xf32>
    %c0_9 = arith.constant 0 : index
    %c0_10 = arith.constant 0 : index
    %10 = vector.load %arg11[%c0_9, %c0_10] : memref<1x512xf32, #tpu.memory_space<vmem>>, vector<1x512xf32>
    %11 = vector.broadcast %10 : vector<1x512xf32> to vector<32x512xf32>
    %12 = arith.addf %9, %11 : vector<32x512xf32>
    %c0_11 = arith.constant 0 : index
    %c0_12 = arith.constant 0 : index
    %13 = vector.load %arg15[%c0_11, %c0_12] : memref<32x512xf32, #tpu.memory_space<vmem>>, vector<32x512xf32>
    tpu.vector_store %arg15[%c0_11, %c0_12], %12 {strides = array<i32>} : memref<32x512xf32, #tpu.memory_space<vmem>>, vector<32x512xf32>,
    %c0_13 = arith.constant 0 : index
    %c0_14 = arith.constant 0 : index
    %14 = vector.load %arg3[%c0_13, %c0_14] : memref<32x128xbf16, #tpu.memory_space<vmem>>, vector<32x128xbf16>
    %c0_15 = arith.constant 0 : index
    %c0_16 = arith.constant 0 : index
    %15 = vector.load %arg7[%c0_15, %c0_16] : memref<512x128xbf16, #tpu.memory_space<vmem>>, vector<512x128xbf16>
    %cst_17 = arith.constant dense<0.000000e+00> : vector<32x512xf32>
    %16 = tpu.matmul %14, %15, %cst_17 {dimension_numbers = #tpu.dot_dimension_numbers<[1], [1], [0], [0], [0, 0, 1, 0], [], []>} : vector<32x128xbf16>, vector<512x128xbf16>, vector<32x512xf32> -> vector<32x512xf32>
    %c0_18 = arith.constant 0 : index
    %c0_19 = arith.constant 0 : index
    %17 = vector.load %arg4[%c0_18, %c0_19] : memref<32x128xbf16, #tpu.memory_space<vmem>>, vector<32x128xbf16>
    %c0_20 = arith.constant 0 : index
    %c0_21 = arith.constant 0 : index
    %18 = vector.load %arg8[%c0_20, %c0_21] : memref<512x128xbf16, #tpu.memory_space<vmem>>, vector<512x128xbf16>
    %cst_22 = arith.constant dense<0.000000e+00> : vector<32x512xf32>
    %19 = tpu.matmul %17, %18, %cst_22 {dimension_numbers = #tpu.dot_dimension_numbers<[1], [1], [0], [0], [0, 0, 1, 0], [], []>} : vector<32x128xbf16>, vector<512x128xbf16>, vector<32x512xf32> -> vector<32x512xf32>
    %20 = arith.addf %16, %19 : vector<32x512xf32>
    %c0_23 = arith.constant 0 : index
    %c0_24 = arith.constant 0 : index
    %21 = vector.load %arg12[%c0_23, %c0_24] : memref<1x512xf32, #tpu.memory_space<vmem>>, vector<1x512xf32>
    %22 = vector.broadcast %21 : vector<1x512xf32> to vector<32x512xf32>
    %23 = arith.addf %20, %22 : vector<32x512xf32>
    %c0_25 = arith.constant 0 : index
    %c0_26 = arith.constant 0 : index
    %24 = vector.load %arg16[%c0_25, %c0_26] : memref<32x512xf32, #tpu.memory_space<vmem>>, vector<32x512xf32>
    tpu.vector_store %arg16[%c0_25, %c0_26], %23 {strides = array<i32>} : memref<32x512xf32, #tpu.memory_space<vmem>>, vector<32x512xf32>,
    %c0_27 = arith.constant 0 : index
    %c0_28 = arith.constant 0 : index
    %25 = vector.load %arg9[%c0_27, %c0_28] : memref<512x128xbf16, #tpu.memory_space<vmem>>, vector<512x128xbf16>
    %c0_29 = arith.constant 0 : index
    %c0_30 = arith.constant 0 : index
    %26 = vector.load %arg10[%c0_29, %c0_30] : memref<512x128xbf16, #tpu.memory_space<vmem>>, vector<512x128xbf16>
    %c0_31 = arith.constant 0 : index
    %c0_32 = arith.constant 0 : index
    %27 = vector.load %arg17[%c0_31, %c0_32] : memref<8x128xf32, #tpu.memory_space<vmem>>, vector<8x128xf32>
    %c0_33 = arith.constant 0 : index
    %c0_34 = arith.constant 0 : index
    %28 = vector.load %arg18[%c0_33, %c0_34] : memref<8x128xf32, #tpu.memory_space<vmem>>, vector<8x128xf32>
    %c0_35 = arith.constant 0 : index
    %c0_36 = arith.constant 0 : index
    %29 = vector.load %arg19[%c0_35, %c0_36] : memref<8x128xf32, #tpu.memory_space<vmem>>, vector<8x128xf32>
    %c0_37 = arith.constant 0 : index
    %c0_38 = arith.constant 0 : index
    %30 = vector.load %arg20[%c0_37, %c0_38] : memref<8x128xf32, #tpu.memory_space<vmem>>, vector<8x128xf32>
    %c0_39 = arith.constant 0 : index
    %c0_40 = arith.constant 0 : index
    %31 = vector.load %arg15[%c0_39, %c0_40] : memref<32x512xf32, #tpu.memory_space<vmem>>, vector<8x512xf32>
    %32 = arith.truncf %27 : vector<8x128xf32> to vector<8x128xbf16>
    %cst_41 = arith.constant dense<0.000000e+00> : vector<8x512xf32>
    %33 = tpu.matmul %32, %25, %cst_41 {dimension_numbers = #tpu.dot_dimension_numbers<[1], [1], [0], [0], [0, 0, 1, 0], [], []>} : vector<8x128xbf16>, vector<512x128xbf16>, vector<8x512xf32> -> vector<8x512xf32>
    %34 = arith.addf %31, %33 : vector<8x512xf32>
    %35 = vector.extract_strided_slice %34 {offsets = [0, 0], sizes = [8, 128], strides = [1, 1]} : vector<8x512xf32> to vector<8x128xf32>
    %36 = arith.negf %35 : vector<8x128xf32>
    %37 = math.exp %36 : vector<8x128xf32>
    %cst_42 = arith.constant 1.000000e+00 : f32
    %38 = vector.broadcast %cst_42 : f32 to vector<8x128xf32>
    %39 = arith.addf %38, %37 : vector<8x128xf32>
    %40 = arith.divf %38, %39 : vector<8x128xf32>
    %41 = vector.extract_strided_slice %34 {offsets = [0, 128], sizes = [8, 128], strides = [1, 1]} : vector<8x512xf32> to vector<8x128xf32>
    %42 = arith.negf %41 : vector<8x128xf32>
    %43 = math.exp %42 : vector<8x128xf32>
    %cst_43 = arith.constant 1.000000e+00 : f32
    %44 = vector.broadcast %cst_43 : f32 to vector<8x128xf32>
    %45 = arith.addf %44, %43 : vector<8x128xf32>
    %46 = arith.divf %44, %45 : vector<8x128xf32>
    %47 = vector.extract_strided_slice %34 {offsets = [0, 256], sizes = [8, 128], strides = [1, 1]} : vector<8x512xf32> to vector<8x128xf32>
    %48 = math.tanh %47 : vector<8x128xf32>
    %49 = vector.extract_strided_slice %34 {offsets = [0, 384], sizes = [8, 128], strides = [1, 1]} : vector<8x512xf32> to vector<8x128xf32>
    %50 = arith.negf %49 : vector<8x128xf32>
    %51 = math.exp %50 : vector<8x128xf32>
    %cst_44 = arith.constant 1.000000e+00 : f32
    %52 = vector.broadcast %cst_44 : f32 to vector<8x128xf32>
    %53 = arith.addf %52, %51 : vector<8x128xf32>
    %54 = arith.divf %52, %53 : vector<8x128xf32>
    %55 = arith.mulf %46, %28 : vector<8x128xf32>
    %56 = arith.mulf %40, %48 : vector<8x128xf32>
    %57 = arith.addf %55, %56 : vector<8x128xf32>
    %58 = math.tanh %57 : vector<8x128xf32>
    %59 = arith.mulf %54, %58 : vector<8x128xf32>
    %60 = arith.truncf %59 : vector<8x128xf32> to vector<8x128xbf16>
    %c0_45 = arith.constant 0 : index
    %c0_46 = arith.constant 0 : index
    %61 = vector.load %arg13[%c0_45, %c0_46] : memref<32x128xbf16, #tpu.memory_space<vmem>>, vector<8x128xbf16>
    tpu.vector_store %arg13[%c0_45, %c0_46], %60 {strides = array<i32>} : memref<32x128xbf16, #tpu.memory_space<vmem>>, vector<8x128xbf16>,
    %c24 = arith.constant 24 : index
    %c0_47 = arith.constant 0 : index
    %62 = vector.load %arg16[%c24, %c0_47] : memref<32x512xf32, #tpu.memory_space<vmem>>, vector<8x512xf32>
    %63 = arith.truncf %29 : vector<8x128xf32> to vector<8x128xbf16>
    %cst_48 = arith.constant dense<0.000000e+00> : vector<8x512xf32>
    %64 = tpu.matmul %63, %26, %cst_48 {dimension_numbers = #tpu.dot_dimension_numbers<[1], [1], [0], [0], [0, 0, 1, 0], [], []>} : vector<8x128xbf16>, vector<512x128xbf16>, vector<8x512xf32> -> vector<8x512xf32>
    %65 = arith.addf %62, %64 : vector<8x512xf32>
    %66 = vector.extract_strided_slice %65 {offsets = [0, 0], sizes = [8, 128], strides = [1, 1]} : vector<8x512xf32> to vector<8x128xf32>
    %67 = arith.negf %66 : vector<8x128xf32>
    %68 = math.exp %67 : vector<8x128xf32>
    %cst_49 = arith.constant 1.000000e+00 : f32
    %69 = vector.broadcast %cst_49 : f32 to vector<8x128xf32>
    %70 = arith.addf %69, %68 : vector<8x128xf32>
    %71 = arith.divf %69, %70 : vector<8x128xf32>
    %72 = vector.extract_strided_slice %65 {offsets = [0, 128], sizes = [8, 128], strides = [1, 1]} : vector<8x512xf32> to vector<8x128xf32>
    %73 = arith.negf %72 : vector<8x128xf32>
    %74 = math.exp %73 : vector<8x128xf32>
    %cst_50 = arith.constant 1.000000e+00 : f32
    %75 = vector.broadcast %cst_50 : f32 to vector<8x128xf32>
    %76 = arith.addf %75, %74 : vector<8x128xf32>
    %77 = arith.divf %75, %76 : vector<8x128xf32>
    %78 = vector.extract_strided_slice %65 {offsets = [0, 256], sizes = [8, 128], strides = [1, 1]} : vector<8x512xf32> to vector<8x128xf32>
    %79 = math.tanh %78 : vector<8x128xf32>
    %80 = vector.extract_strided_slice %65 {offsets = [0, 384], sizes = [8, 128], strides = [1, 1]} : vector<8x512xf32> to vector<8x128xf32>
    %81 = arith.negf %80 : vector<8x128xf32>
    %82 = math.exp %81 : vector<8x128xf32>
    %cst_51 = arith.constant 1.000000e+00 : f32
    %83 = vector.broadcast %cst_51 : f32 to vector<8x128xf32>
    %84 = arith.addf %83, %82 : vector<8x128xf32>
    %85 = arith.divf %83, %84 : vector<8x128xf32>
    %86 = arith.mulf %77, %30 : vector<8x128xf32>
    %87 = arith.mulf %71, %79 : vector<8x128xf32>
    %88 = arith.addf %86, %87 : vector<8x128xf32>
    %89 = math.tanh %88 : vector<8x128xf32>
    %90 = arith.mulf %85, %89 : vector<8x128xf32>
    %91 = arith.truncf %90 : vector<8x128xf32> to vector<8x128xbf16>
    %c24_52 = arith.constant 24 : index
    %c0_53 = arith.constant 0 : index
    %92 = vector.load %arg14[%c24_52, %c0_53] : memref<32x128xbf16, #tpu.memory_space<vmem>>, vector<8x128xbf16>
    tpu.vector_store %arg14[%c24_52, %c0_53], %91 {strides = array<i32>} : memref<32x128xbf16, #tpu.memory_space<vmem>>, vector<8x128xbf16>,
    %c8 = arith.constant 8 : index
    %c0_54 = arith.constant 0 : index
    %93 = vector.load %arg15[%c8, %c0_54] : memref<32x512xf32, #tpu.memory_space<vmem>>, vector<8x512xf32>
    %94 = arith.truncf %59 : vector<8x128xf32> to vector<8x128xbf16>
    %cst_55 = arith.constant dense<0.000000e+00> : vector<8x512xf32>
    %95 = tpu.matmul %94, %25, %cst_55 {dimension_numbers = #tpu.dot_dimension_numbers<[1], [1], [0], [0], [0, 0, 1, 0], [], []>} : vector<8x128xbf16>, vector<512x128xbf16>, vector<8x512xf32> -> vector<8x512xf32>
    %96 = arith.addf %93, %95 : vector<8x512xf32>
    %97 = vector.extract_strided_slice %96 {offsets = [0, 0], sizes = [8, 128], strides = [1, 1]} : vector<8x512xf32> to vector<8x128xf32>
    %98 = arith.negf %97 : vector<8x128xf32>
    %99 = math.exp %98 : vector<8x128xf32>
    %cst_56 = arith.constant 1.000000e+00 : f32
    %100 = vector.broadcast %cst_56 : f32 to vector<8x128xf32>
    %101 = arith.addf %100, %99 : vector<8x128xf32>
    %102 = arith.divf %100, %101 : vector<8x128xf32>
    %103 = vector.extract_strided_slice %96 {offsets = [0, 128], sizes = [8, 128], strides = [1, 1]} : vector<8x512xf32> to vector<8x128xf32>
    %104 = arith.negf %103 : vector<8x128xf32>
    %105 = math.exp %104 : vector<8x128xf32>
    %cst_57 = arith.constant 1.000000e+00 : f32
    %106 = vector.broadcast %cst_57 : f32 to vector<8x128xf32>
    %107 = arith.addf %106, %105 : vector<8x128xf32>
    %108 = arith.divf %106, %107 : vector<8x128xf32>
    %109 = vector.extract_strided_slice %96 {offsets = [0, 256], sizes = [8, 128], strides = [1, 1]} : vector<8x512xf32> to vector<8x128xf32>
    %110 = math.tanh %109 : vector<8x128xf32>
    %111 = vector.extract_strided_slice %96 {offsets = [0, 384], sizes = [8, 128], strides = [1, 1]} : vector<8x512xf32> to vector<8x128xf32>
    %112 = arith.negf %111 : vector<8x128xf32>
    %113 = math.exp %112 : vector<8x128xf32>
    %cst_58 = arith.constant 1.000000e+00 : f32
    %114 = vector.broadcast %cst_58 : f32 to vector<8x128xf32>
    %115 = arith.addf %114, %113 : vector<8x128xf32>
    %116 = arith.divf %114, %115 : vector<8x128xf32>
    %117 = arith.mulf %108, %57 : vector<8x128xf32>
    %118 = arith.mulf %102, %110 : vector<8x128xf32>
    %119 = arith.addf %117, %118 : vector<8x128xf32>
    %120 = math.tanh %119 : vector<8x128xf32>
    %121 = arith.mulf %116, %120 : vector<8x128xf32>
    %122 = arith.truncf %121 : vector<8x128xf32> to vector<8x128xbf16>
    %c8_59 = arith.constant 8 : index
    %c0_60 = arith.constant 0 : index
    %123 = vector.load %arg13[%c8_59, %c0_60] : memref<32x128xbf16, #tpu.memory_space<vmem>>, vector<8x128xbf16>
    tpu.vector_store %arg13[%c8_59, %c0_60], %122 {strides = array<i32>} : memref<32x128xbf16, #tpu.memory_space<vmem>>, vector<8x128xbf16>,
    %c16 = arith.constant 16 : index
    %c0_61 = arith.constant 0 : index
    %124 = vector.load %arg16[%c16, %c0_61] : memref<32x512xf32, #tpu.memory_space<vmem>>, vector<8x512xf32>
    %125 = arith.truncf %90 : vector<8x128xf32> to vector<8x128xbf16>
    %cst_62 = arith.constant dense<0.000000e+00> : vector<8x512xf32>
    %126 = tpu.matmul %125, %26, %cst_62 {dimension_numbers = #tpu.dot_dimension_numbers<[1], [1], [0], [0], [0, 0, 1, 0], [], []>} : vector<8x128xbf16>, vector<512x128xbf16>, vector<8x512xf32> -> vector<8x512xf32>
    %127 = arith.addf %124, %126 : vector<8x512xf32>
    %128 = vector.extract_strided_slice %127 {offsets = [0, 0], sizes = [8, 128], strides = [1, 1]} : vector<8x512xf32> to vector<8x128xf32>
    %129 = arith.negf %128 : vector<8x128xf32>
    %130 = math.exp %129 : vector<8x128xf32>
    %cst_63 = arith.constant 1.000000e+00 : f32
    %131 = vector.broadcast %cst_63 : f32 to vector<8x128xf32>
    %132 = arith.addf %131, %130 : vector<8x128xf32>
    %133 = arith.divf %131, %132 : vector<8x128xf32>
    %134 = vector.extract_strided_slice %127 {offsets = [0, 128], sizes = [8, 128], strides = [1, 1]} : vector<8x512xf32> to vector<8x128xf32>
    %135 = arith.negf %134 : vector<8x128xf32>
    %136 = math.exp %135 : vector<8x128xf32>
    %cst_64 = arith.constant 1.000000e+00 : f32
    %137 = vector.broadcast %cst_64 : f32 to vector<8x128xf32>
    %138 = arith.addf %137, %136 : vector<8x128xf32>
    %139 = arith.divf %137, %138 : vector<8x128xf32>
    %140 = vector.extract_strided_slice %127 {offsets = [0, 256], sizes = [8, 128], strides = [1, 1]} : vector<8x512xf32> to vector<8x128xf32>
    %141 = math.tanh %140 : vector<8x128xf32>
    %142 = vector.extract_strided_slice %127 {offsets = [0, 384], sizes = [8, 128], strides = [1, 1]} : vector<8x512xf32> to vector<8x128xf32>
    %143 = arith.negf %142 : vector<8x128xf32>
    %144 = math.exp %143 : vector<8x128xf32>
    %cst_65 = arith.constant 1.000000e+00 : f32
    %145 = vector.broadcast %cst_65 : f32 to vector<8x128xf32>
    %146 = arith.addf %145, %144 : vector<8x128xf32>
    %147 = arith.divf %145, %146 : vector<8x128xf32>
    %148 = arith.mulf %139, %88 : vector<8x128xf32>
    %149 = arith.mulf %133, %141 : vector<8x128xf32>
    %150 = arith.addf %148, %149 : vector<8x128xf32>
    %151 = math.tanh %150 : vector<8x128xf32>
    %152 = arith.mulf %147, %151 : vector<8x128xf32>
    %153 = arith.truncf %152 : vector<8x128xf32> to vector<8x128xbf16>
    %c16_66 = arith.constant 16 : index
    %c0_67 = arith.constant 0 : index
    %154 = vector.load %arg14[%c16_66, %c0_67] : memref<32x128xbf16, #tpu.memory_space<vmem>>, vector<8x128xbf16>
    tpu.vector_store %arg14[%c16_66, %c0_67], %153 {strides = array<i32>} : memref<32x128xbf16, #tpu.memory_space<vmem>>, vector<8x128xbf16>,
    %c16_68 = arith.constant 16 : index
    %c0_69 = arith.constant 0 : index
    %155 = vector.load %arg15[%c16_68, %c0_69] : memref<32x512xf32, #tpu.memory_space<vmem>>, vector<8x512xf32>
    %156 = arith.truncf %121 : vector<8x128xf32> to vector<8x128xbf16>
    %cst_70 = arith.constant dense<0.000000e+00> : vector<8x512xf32>
    %157 = tpu.matmul %156, %25, %cst_70 {dimension_numbers = #tpu.dot_dimension_numbers<[1], [1], [0], [0], [0, 0, 1, 0], [], []>} : vector<8x128xbf16>, vector<512x128xbf16>, vector<8x512xf32> -> vector<8x512xf32>
    %158 = arith.addf %155, %157 : vector<8x512xf32>
    %159 = vector.extract_strided_slice %158 {offsets = [0, 0], sizes = [8, 128], strides = [1, 1]} : vector<8x512xf32> to vector<8x128xf32>
    %160 = arith.negf %159 : vector<8x128xf32>
    %161 = math.exp %160 : vector<8x128xf32>
    %cst_71 = arith.constant 1.000000e+00 : f32
    %162 = vector.broadcast %cst_71 : f32 to vector<8x128xf32>
    %163 = arith.addf %162, %161 : vector<8x128xf32>
    %164 = arith.divf %162, %163 : vector<8x128xf32>
    %165 = vector.extract_strided_slice %158 {offsets = [0, 128], sizes = [8, 128], strides = [1, 1]} : vector<8x512xf32> to vector<8x128xf32>
    %166 = arith.negf %165 : vector<8x128xf32>
    %167 = math.exp %166 : vector<8x128xf32>
    %cst_72 = arith.constant 1.000000e+00 : f32
    %168 = vector.broadcast %cst_72 : f32 to vector<8x128xf32>
    %169 = arith.addf %168, %167 : vector<8x128xf32>
    %170 = arith.divf %168, %169 : vector<8x128xf32>
    %171 = vector.extract_strided_slice %158 {offsets = [0, 256], sizes = [8, 128], strides = [1, 1]} : vector<8x512xf32> to vector<8x128xf32>
    %172 = math.tanh %171 : vector<8x128xf32>
    %173 = vector.extract_strided_slice %158 {offsets = [0, 384], sizes = [8, 128], strides = [1, 1]} : vector<8x512xf32> to vector<8x128xf32>
    %174 = arith.negf %173 : vector<8x128xf32>
    %175 = math.exp %174 : vector<8x128xf32>
    %cst_73 = arith.constant 1.000000e+00 : f32
    %176 = vector.broadcast %cst_73 : f32 to vector<8x128xf32>
    %177 = arith.addf %176, %175 : vector<8x128xf32>
    %178 = arith.divf %176, %177 : vector<8x128xf32>
    %179 = arith.mulf %170, %119 : vector<8x128xf32>
    %180 = arith.mulf %164, %172 : vector<8x128xf32>
    %181 = arith.addf %179, %180 : vector<8x128xf32>
    %182 = math.tanh %181 : vector<8x128xf32>
    %183 = arith.mulf %178, %182 : vector<8x128xf32>
    %184 = arith.truncf %183 : vector<8x128xf32> to vector<8x128xbf16>
    %c16_74 = arith.constant 16 : index
    %c0_75 = arith.constant 0 : index
    %185 = vector.load %arg13[%c16_74, %c0_75] : memref<32x128xbf16, #tpu.memory_space<vmem>>, vector<8x128xbf16>
    tpu.vector_store %arg13[%c16_74, %c0_75], %184 {strides = array<i32>} : memref<32x128xbf16, #tpu.memory_space<vmem>>, vector<8x128xbf16>,
    %c8_76 = arith.constant 8 : index
    %c0_77 = arith.constant 0 : index
    %186 = vector.load %arg16[%c8_76, %c0_77] : memref<32x512xf32, #tpu.memory_space<vmem>>, vector<8x512xf32>
    %187 = arith.truncf %152 : vector<8x128xf32> to vector<8x128xbf16>
    %cst_78 = arith.constant dense<0.000000e+00> : vector<8x512xf32>
    %188 = tpu.matmul %187, %26, %cst_78 {dimension_numbers = #tpu.dot_dimension_numbers<[1], [1], [0], [0], [0, 0, 1, 0], [], []>} : vector<8x128xbf16>, vector<512x128xbf16>, vector<8x512xf32> -> vector<8x512xf32>
    %189 = arith.addf %186, %188 : vector<8x512xf32>
    %190 = vector.extract_strided_slice %189 {offsets = [0, 0], sizes = [8, 128], strides = [1, 1]} : vector<8x512xf32> to vector<8x128xf32>
    %191 = arith.negf %190 : vector<8x128xf32>
    %192 = math.exp %191 : vector<8x128xf32>
    %cst_79 = arith.constant 1.000000e+00 : f32
    %193 = vector.broadcast %cst_79 : f32 to vector<8x128xf32>
    %194 = arith.addf %193, %192 : vector<8x128xf32>
    %195 = arith.divf %193, %194 : vector<8x128xf32>
    %196 = vector.extract_strided_slice %189 {offsets = [0, 128], sizes = [8, 128], strides = [1, 1]} : vector<8x512xf32> to vector<8x128xf32>
    %197 = arith.negf %196 : vector<8x128xf32>
    %198 = math.exp %197 : vector<8x128xf32>
    %cst_80 = arith.constant 1.000000e+00 : f32
    %199 = vector.broadcast %cst_80 : f32 to vector<8x128xf32>
    %200 = arith.addf %199, %198 : vector<8x128xf32>
    %201 = arith.divf %199, %200 : vector<8x128xf32>
    %202 = vector.extract_strided_slice %189 {offsets = [0, 256], sizes = [8, 128], strides = [1, 1]} : vector<8x512xf32> to vector<8x128xf32>
    %203 = math.tanh %202 : vector<8x128xf32>
    %204 = vector.extract_strided_slice %189 {offsets = [0, 384], sizes = [8, 128], strides = [1, 1]} : vector<8x512xf32> to vector<8x128xf32>
    %205 = arith.negf %204 : vector<8x128xf32>
    %206 = math.exp %205 : vector<8x128xf32>
    %cst_81 = arith.constant 1.000000e+00 : f32
    %207 = vector.broadcast %cst_81 : f32 to vector<8x128xf32>
    %208 = arith.addf %207, %206 : vector<8x128xf32>
    %209 = arith.divf %207, %208 : vector<8x128xf32>
    %210 = arith.mulf %201, %150 : vector<8x128xf32>
    %211 = arith.mulf %195, %203 : vector<8x128xf32>
    %212 = arith.addf %210, %211 : vector<8x128xf32>
    %213 = math.tanh %212 : vector<8x128xf32>
    %214 = arith.mulf %209, %213 : vector<8x128xf32>
    %215 = arith.truncf %214 : vector<8x128xf32> to vector<8x128xbf16>
    %c8_82 = arith.constant 8 : index
    %c0_83 = arith.constant 0 : index
    %216 = vector.load %arg14[%c8_82, %c0_83] : memref<32x128xbf16, #tpu.memory_space<vmem>>, vector<8x128xbf16>
    tpu.vector_store %arg14[%c8_82, %c0_83], %215 {strides = array<i32>} : memref<32x128xbf16, #tpu.memory_space<vmem>>, vector<8x128xbf16>,
    %c24_84 = arith.constant 24 : index
    %c0_85 = arith.constant 0 : index
    %217 = vector.load %arg15[%c24_84, %c0_85] : memref<32x512xf32, #tpu.memory_space<vmem>>, vector<8x512xf32>
    %218 = arith.truncf %183 : vector<8x128xf32> to vector<8x128xbf16>
    %cst_86 = arith.constant dense<0.000000e+00> : vector<8x512xf32>
    %219 = tpu.matmul %218, %25, %cst_86 {dimension_numbers = #tpu.dot_dimension_numbers<[1], [1], [0], [0], [0, 0, 1, 0], [], []>} : vector<8x128xbf16>, vector<512x128xbf16>, vector<8x512xf32> -> vector<8x512xf32>
    %220 = arith.addf %217, %219 : vector<8x512xf32>
    %221 = vector.extract_strided_slice %220 {offsets = [0, 0], sizes = [8, 128], strides = [1, 1]} : vector<8x512xf32> to vector<8x128xf32>
    %222 = arith.negf %221 : vector<8x128xf32>
    %223 = math.exp %222 : vector<8x128xf32>
    %cst_87 = arith.constant 1.000000e+00 : f32
    %224 = vector.broadcast %cst_87 : f32 to vector<8x128xf32>
    %225 = arith.addf %224, %223 : vector<8x128xf32>
    %226 = arith.divf %224, %225 : vector<8x128xf32>
    %227 = vector.extract_strided_slice %220 {offsets = [0, 128], sizes = [8, 128], strides = [1, 1]} : vector<8x512xf32> to vector<8x128xf32>
    %228 = arith.negf %227 : vector<8x128xf32>
    %229 = math.exp %228 : vector<8x128xf32>
    %cst_88 = arith.constant 1.000000e+00 : f32
    %230 = vector.broadcast %cst_88 : f32 to vector<8x128xf32>
    %231 = arith.addf %230, %229 : vector<8x128xf32>
    %232 = arith.divf %230, %231 : vector<8x128xf32>
    %233 = vector.extract_strided_slice %220 {offsets = [0, 256], sizes = [8, 128], strides = [1, 1]} : vector<8x512xf32> to vector<8x128xf32>
    %234 = math.tanh %233 : vector<8x128xf32>
    %235 = vector.extract_strided_slice %220 {offsets = [0, 384], sizes = [8, 128], strides = [1, 1]} : vector<8x512xf32> to vector<8x128xf32>
    %236 = arith.negf %235 : vector<8x128xf32>
    %237 = math.exp %236 : vector<8x128xf32>
    %cst_89 = arith.constant 1.000000e+00 : f32
    %238 = vector.broadcast %cst_89 : f32 to vector<8x128xf32>
    %239 = arith.addf %238, %237 : vector<8x128xf32>
    %240 = arith.divf %238, %239 : vector<8x128xf32>
    %241 = arith.mulf %232, %181 : vector<8x128xf32>
    %242 = arith.mulf %226, %234 : vector<8x128xf32>
    %243 = arith.addf %241, %242 : vector<8x128xf32>
    %244 = math.tanh %243 : vector<8x128xf32>
    %245 = arith.mulf %240, %244 : vector<8x128xf32>
    %246 = arith.truncf %245 : vector<8x128xf32> to vector<8x128xbf16>
    %c24_90 = arith.constant 24 : index
    %c0_91 = arith.constant 0 : index
    %247 = vector.load %arg13[%c24_90, %c0_91] : memref<32x128xbf16, #tpu.memory_space<vmem>>, vector<8x128xbf16>
    tpu.vector_store %arg13[%c24_90, %c0_91], %246 {strides = array<i32>} : memref<32x128xbf16, #tpu.memory_space<vmem>>, vector<8x128xbf16>,
    %c0_92 = arith.constant 0 : index
    %c0_93 = arith.constant 0 : index
    %248 = vector.load %arg16[%c0_92, %c0_93] : memref<32x512xf32, #tpu.memory_space<vmem>>, vector<8x512xf32>
    %249 = arith.truncf %214 : vector<8x128xf32> to vector<8x128xbf16>
    %cst_94 = arith.constant dense<0.000000e+00> : vector<8x512xf32>
    %250 = tpu.matmul %249, %26, %cst_94 {dimension_numbers = #tpu.dot_dimension_numbers<[1], [1], [0], [0], [0, 0, 1, 0], [], []>} : vector<8x128xbf16>, vector<512x128xbf16>, vector<8x512xf32> -> vector<8x512xf32>
    %251 = arith.addf %248, %250 : vector<8x512xf32>
    %252 = vector.extract_strided_slice %251 {offsets = [0, 0], sizes = [8, 128], strides = [1, 1]} : vector<8x512xf32> to vector<8x128xf32>
    %253 = arith.negf %252 : vector<8x128xf32>
    %254 = math.exp %253 : vector<8x128xf32>
    %cst_95 = arith.constant 1.000000e+00 : f32
    %255 = vector.broadcast %cst_95 : f32 to vector<8x128xf32>
    %256 = arith.addf %255, %254 : vector<8x128xf32>
    %257 = arith.divf %255, %256 : vector<8x128xf32>
    %258 = vector.extract_strided_slice %251 {offsets = [0, 128], sizes = [8, 128], strides = [1, 1]} : vector<8x512xf32> to vector<8x128xf32>
    %259 = arith.negf %258 : vector<8x128xf32>
    %260 = math.exp %259 : vector<8x128xf32>
    %cst_96 = arith.constant 1.000000e+00 : f32
    %261 = vector.broadcast %cst_96 : f32 to vector<8x128xf32>
    %262 = arith.addf %261, %260 : vector<8x128xf32>
    %263 = arith.divf %261, %262 : vector<8x128xf32>
    %264 = vector.extract_strided_slice %251 {offsets = [0, 256], sizes = [8, 128], strides = [1, 1]} : vector<8x512xf32> to vector<8x128xf32>
    %265 = math.tanh %264 : vector<8x128xf32>
    %266 = vector.extract_strided_slice %251 {offsets = [0, 384], sizes = [8, 128], strides = [1, 1]} : vector<8x512xf32> to vector<8x128xf32>
    %267 = arith.negf %266 : vector<8x128xf32>
    %268 = math.exp %267 : vector<8x128xf32>
    %cst_97 = arith.constant 1.000000e+00 : f32
    %269 = vector.broadcast %cst_97 : f32 to vector<8x128xf32>
    %270 = arith.addf %269, %268 : vector<8x128xf32>
    %271 = arith.divf %269, %270 : vector<8x128xf32>
    %272 = arith.mulf %263, %212 : vector<8x128xf32>
    %273 = arith.mulf %257, %265 : vector<8x128xf32>
    %274 = arith.addf %272, %273 : vector<8x128xf32>
    %275 = math.tanh %274 : vector<8x128xf32>
    %276 = arith.mulf %271, %275 : vector<8x128xf32>
    %277 = arith.truncf %276 : vector<8x128xf32> to vector<8x128xbf16>
    %c0_98 = arith.constant 0 : index
    %c0_99 = arith.constant 0 : index
    %278 = vector.load %arg14[%c0_98, %c0_99] : memref<32x128xbf16, #tpu.memory_space<vmem>>, vector<8x128xbf16>
    tpu.vector_store %arg14[%c0_98, %c0_99], %277 {strides = array<i32>} : memref<32x128xbf16, #tpu.memory_space<vmem>>, vector<8x128xbf16>,
    %c0_100 = arith.constant 0 : index
    %c0_101 = arith.constant 0 : index
    %279 = vector.load %arg17[%c0_100, %c0_101] : memref<8x128xf32, #tpu.memory_space<vmem>>, vector<8x128xf32>
    tpu.vector_store %arg17[%c0_100, %c0_101], %245 {strides = array<i32>} : memref<8x128xf32, #tpu.memory_space<vmem>>, vector<8x128xf32>,
    %c0_102 = arith.constant 0 : index
    %c0_103 = arith.constant 0 : index
    %280 = vector.load %arg18[%c0_102, %c0_103] : memref<8x128xf32, #tpu.memory_space<vmem>>, vector<8x128xf32>
    tpu.vector_store %arg18[%c0_102, %c0_103], %243 {strides = array<i32>} : memref<8x128xf32, #tpu.memory_space<vmem>>, vector<8x128xf32>,
    %c0_104 = arith.constant 0 : index
    %c0_105 = arith.constant 0 : index
    %281 = vector.load %arg19[%c0_104, %c0_105] : memref<8x128xf32, #tpu.memory_space<vmem>>, vector<8x128xf32>
    tpu.vector_store %arg19[%c0_104, %c0_105], %276 {strides = array<i32>} : memref<8x128xf32, #tpu.memory_space<vmem>>, vector<8x128xf32>,
    %c0_106 = arith.constant 0 : index
    %c0_107 = arith.constant 0 : index
    %282 = vector.load %arg20[%c0_106, %c0_107] : memref<8x128xf32, #tpu.memory_space<vmem>>, vector<8x128xf32>
    tpu.vector_store %arg20[%c0_106, %c0_107], %274 {strides = array<i32>} : memref<8x128xf32, #tpu.memory_space<vmem>>, vector<8x128xf32>,
    return
  }
  func.func @transform_0(%arg0: i32) -> (i32, i32) {
    %c0_i32 = arith.constant 0 : i32
    %c0_i32_0 = arith.constant 0 : i32
    return %arg0, %c0_i32 : i32, i32
  }
  func.func @transform_1(%arg0: i32) -> (i32, i32) {
    %c0_i32 = arith.constant 0 : i32
    %c0_i32_0 = arith.constant 0 : i32
    return %arg0, %c0_i32 : i32, i32
  }
  func.func @transform_2(%arg0: i32) -> (i32, i32) {
    %c1_i32 = arith.constant 1 : i32
    %0 = arith.subi %c1_i32, %arg0 : i32
    %c0_i32 = arith.constant 0 : i32
    %c0_i32_0 = arith.constant 0 : i32
    return %0, %c0_i32 : i32, i32
  }
  func.func @transform_3(%arg0: i32) -> (i32, i32) {
    %c1_i32 = arith.constant 1 : i32
    %0 = arith.subi %c1_i32, %arg0 : i32
    %c0_i32 = arith.constant 0 : i32
    %c0_i32_0 = arith.constant 0 : i32
    return %0, %c0_i32 : i32, i32
  }
  func.func @transform_4(%arg0: i32) -> (i32, i32) {
    %c0_i32 = arith.constant 0 : i32
    %c0_i32_0 = arith.constant 0 : i32
    %c0_i32_1 = arith.constant 0 : i32
    return %c0_i32, %c0_i32_0 : i32, i32
  }
  func.func @transform_5(%arg0: i32) -> (i32, i32) {
    %c0_i32 = arith.constant 0 : i32
    %c0_i32_0 = arith.constant 0 : i32
    %c0_i32_1 = arith.constant 0 : i32
    return %c0_i32, %c0_i32_0 : i32, i32
  }
  func.func @transform_6(%arg0: i32) -> (i32, i32) {
    %c0_i32 = arith.constant 0 : i32
    %c0_i32_0 = arith.constant 0 : i32
    %c0_i32_1 = arith.constant 0 : i32
    return %c0_i32, %c0_i32_0 : i32, i32
  }
  func.func @transform_7(%arg0: i32) -> (i32, i32) {
    %c0_i32 = arith.constant 0 : i32
    %c0_i32_0 = arith.constant 0 : i32
    %c0_i32_1 = arith.constant 0 : i32
    return %c0_i32, %c0_i32_0 : i32, i32
  }
  func.func @transform_8(%arg0: i32) -> (i32, i32) {
    %c0_i32 = arith.constant 0 : i32
    %c0_i32_0 = arith.constant 0 : i32
    %c0_i32_1 = arith.constant 0 : i32
    return %c0_i32, %c0_i32_0 : i32, i32
  }
  func.func @transform_9(%arg0: i32) -> (i32, i32) {
    %c0_i32 = arith.constant 0 : i32
    %c0_i32_0 = arith.constant 0 : i32
    %c0_i32_1 = arith.constant 0 : i32
    return %c0_i32, %c0_i32_0 : i32, i32
  }
  func.func @transform_10(%arg0: i32) -> (i32, i32) {
    %c0_i32 = arith.constant 0 : i32
    %c0_i32_0 = arith.constant 0 : i32
    %c0_i32_1 = arith.constant 0 : i32
    return %c0_i32, %c0_i32_0 : i32, i32
  }
  func.func @transform_11(%arg0: i32) -> (i32, i32) {
    %c0_i32 = arith.constant 0 : i32
    %c0_i32_0 = arith.constant 0 : i32
    %c0_i32_1 = arith.constant 0 : i32
    return %c0_i32, %c0_i32_0 : i32, i32
  }
  func.func @transform_12(%arg0: i32) -> (i32, i32) {
    %c0_i32 = arith.constant 0 : i32
    %c0_i32_0 = arith.constant 0 : i32
    return %arg0, %c0_i32 : i32, i32
  }
  func.func @transform_13(%arg0: i32) -> (i32, i32) {
    %c1_i32 = arith.constant 1 : i32
    %0 = arith.subi %c1_i32, %arg0 : i32
    %c0_i32 = arith.constant 0 : i32
    %c0_i32_0 = arith.constant 0 : i32
    return %0, %c0_i32 : i32, i32
  }
}

module attributes {stable_mosaic.version = 11 : i64} {
  func.func @_linear2_kernel(%arg0: i32, %arg1: memref<64x128xbf16, #tpu.memory_space<vmem>>, %arg2: memref<64x128xbf16, #tpu.memory_space<vmem>>, %arg3: memref<128x128xbf16, #tpu.memory_space<vmem>>, %arg4: memref<128x128xbf16, #tpu.memory_space<vmem>>, %arg5: memref<1x128xf32, #tpu.memory_space<vmem>>, %arg6: memref<64x128xf32, #tpu.memory_space<vmem>>) attributes {dimension_semantics = [#tpu.dimension_semantics<parallel>], iteration_bounds = array<i64: 1>, scalar_prefetch = 0 : i64, scratch_operands = 0 : i64, tpu.core_type = #tpu.core_type<tc>, window_params = [{transform_indices = @transform_0, window_bounds = array<i64: 64, 128>}, {transform_indices = @transform_1, window_bounds = array<i64: 64, 128>}, {pipeline_mode = #tpu.pipeline_mode<synchronous>, transform_indices = @transform_2, window_bounds = array<i64: 128, 128>}, {pipeline_mode = #tpu.pipeline_mode<synchronous>, transform_indices = @transform_3, window_bounds = array<i64: 128, 128>}, {pipeline_mode = #tpu.pipeline_mode<synchronous>, transform_indices = @transform_4, window_bounds = array<i64: 1, 128>}, {transform_indices = @transform_5, window_bounds = array<i64: 64, 128>}]} {
    %c0 = arith.constant 0 : index
    %c0_0 = arith.constant 0 : index
    %0 = vector.load %arg1[%c0, %c0_0] : memref<64x128xbf16, #tpu.memory_space<vmem>>, vector<64x128xbf16>
    %c0_1 = arith.constant 0 : index
    %c0_2 = arith.constant 0 : index
    %1 = vector.load %arg3[%c0_1, %c0_2] : memref<128x128xbf16, #tpu.memory_space<vmem>>, vector<128x128xbf16>
    %cst = arith.constant dense<0.000000e+00> : vector<64x128xf32>
    %2 = tpu.matmul %0, %1, %cst {dimension_numbers = #tpu.dot_dimension_numbers<[1], [1], [0], [0], [0, 0, 1, 0], [], []>} : vector<64x128xbf16>, vector<128x128xbf16>, vector<64x128xf32> -> vector<64x128xf32>
    %c0_3 = arith.constant 0 : index
    %c0_4 = arith.constant 0 : index
    %3 = vector.load %arg2[%c0_3, %c0_4] : memref<64x128xbf16, #tpu.memory_space<vmem>>, vector<64x128xbf16>
    %c0_5 = arith.constant 0 : index
    %c0_6 = arith.constant 0 : index
    %4 = vector.load %arg4[%c0_5, %c0_6] : memref<128x128xbf16, #tpu.memory_space<vmem>>, vector<128x128xbf16>
    %cst_7 = arith.constant dense<0.000000e+00> : vector<64x128xf32>
    %5 = tpu.matmul %3, %4, %cst_7 {dimension_numbers = #tpu.dot_dimension_numbers<[1], [1], [0], [0], [0, 0, 1, 0], [], []>} : vector<64x128xbf16>, vector<128x128xbf16>, vector<64x128xf32> -> vector<64x128xf32>
    %6 = arith.addf %2, %5 : vector<64x128xf32>
    %c0_8 = arith.constant 0 : index
    %c0_9 = arith.constant 0 : index
    %7 = vector.load %arg5[%c0_8, %c0_9] : memref<1x128xf32, #tpu.memory_space<vmem>>, vector<1x128xf32>
    %8 = vector.broadcast %7 : vector<1x128xf32> to vector<64x128xf32>
    %9 = arith.addf %6, %8 : vector<64x128xf32>
    %c0_10 = arith.constant 0 : index
    %c0_11 = arith.constant 0 : index
    %10 = vector.load %arg6[%c0_10, %c0_11] : memref<64x128xf32, #tpu.memory_space<vmem>>, vector<64x128xf32>
    tpu.vector_store %arg6[%c0_10, %c0_11], %9 {strides = array<i32>} : memref<64x128xf32, #tpu.memory_space<vmem>>, vector<64x128xf32>,
    return
  }
  func.func @transform_0(%arg0: i32) -> (i32, i32) {
    %c0_i32 = arith.constant 0 : i32
    %c0_i32_0 = arith.constant 0 : i32
    return %arg0, %c0_i32 : i32, i32
  }
  func.func @transform_1(%arg0: i32) -> (i32, i32) {
    %c0_i32 = arith.constant 0 : i32
    %c0_i32_0 = arith.constant 0 : i32
    return %arg0, %c0_i32 : i32, i32
  }
  func.func @transform_2(%arg0: i32) -> (i32, i32) {
    %c0_i32 = arith.constant 0 : i32
    %c0_i32_0 = arith.constant 0 : i32
    %c0_i32_1 = arith.constant 0 : i32
    return %c0_i32, %c0_i32_0 : i32, i32
  }
  func.func @transform_3(%arg0: i32) -> (i32, i32) {
    %c0_i32 = arith.constant 0 : i32
    %c0_i32_0 = arith.constant 0 : i32
    %c0_i32_1 = arith.constant 0 : i32
    return %c0_i32, %c0_i32_0 : i32, i32
  }
  func.func @transform_4(%arg0: i32) -> (i32, i32) {
    %c0_i32 = arith.constant 0 : i32
    %c0_i32_0 = arith.constant 0 : i32
    %c0_i32_1 = arith.constant 0 : i32
    return %c0_i32, %c0_i32_0 : i32, i32
  }
  func.func @transform_5(%arg0: i32) -> (i32, i32) {
    %c0_i32 = arith.constant 0 : i32
    %c0_i32_0 = arith.constant 0 : i32
    return %arg0, %c0_i32 : i32, i32
  }
}

</mosaic_0001>

<llo_original>
// kernel: transcription_forward.5
$region0: #{transcription_forward.5}
  #allocation0 [shape = 'u32[]', space=smem, size = 0x4, offset = 0x4, fixed_abs, tag = 'smem constant byte address 0x4 - core index']
  #allocation1 [shape = 'u32[72,128]{1,0:T(1,128)}', space=vmem, size = 0x9000, scoped, tag = 'internal scratch']
  %s0 = inlined_call_operand.vmem [shape: bf16[64,128], index: 0, kind: input, shape index: {}]
  %s1 = inlined_call_operand.vmem [shape: bf16[64,128], index: 1, kind: input, shape index: {}]
  %s2 = inlined_call_operand.vmem [shape: bf16[128,128], index: 2, kind: input, shape index: {}]
  %s3 = inlined_call_operand.hbm [shape: bf16[128,128], index: 3, kind: input, shape index: {}]
  %s4 = inlined_call_operand.vmem [shape: f32[1,128], index: 4, kind: input, shape index: {}]
  %s5 = inlined_call_operand.vmem [shape: f32[64,128], index: 5, kind: output, shape index: {}]
  %s6 = sld [smem:[#allocation0]]
  $region34: #{transcription_forward.5} parent=0
    _
  %s8 = ssub.s32 1, %s6
  %s9 = scalar_select 0, %s8, %s6
  $region1: #{transcription_forward.5} parent=0
    #allocation2 [shape = 'u8[32768]{0}', space=vmem, size = 0x8000, scoped, tag = 'input window, operand 3, single buffered']
    #allocation3 [shape = 's32[1]{0}', space=sflag, size = 0x4, scoped, tag = 'scoped memory for transcription_forward.5']
    %10 = vsyncpa [#allocation3], 0
    // Predicated region
    $region2: #{transcription_forward.5} parent=1 // pred_check
      _
    $region3: #{transcription_forward.5} parent=1 // pred_check_branch
      %12 = sbr.rel (0) target = $region5
    $region4: #{transcription_forward.5} parent=1 // pred_region
      _
    $region5: #{transcription_forward.5} parent=1 // pred_fallthru
      _
    // Predicated region
    $region6: #{transcription_forward.5} parent=1 // pred_check
      _
    $region7: #{transcription_forward.5} parent=1 // pred_check_branch
      %14 = sbr.rel (0) target = $region9
    $region8: #{transcription_forward.5} parent=1 // pred_region
      _
    $region9: #{transcription_forward.5} parent=1 // pred_fallthru
      _
    // Predicated region
    $region10: #{transcription_forward.5} parent=1 // pred_check
      _
    $region11: #{transcription_forward.5} parent=1 // pred_check_branch
      %16 = sbr.rel (0) target = $region13
    $region12: #{transcription_forward.5} parent=1 // pred_region
      _
    $region13: #{transcription_forward.5} parent=1 // pred_fallthru
      _
    // Predicated region
    $region14: #{transcription_forward.5} parent=1 // pred_check
      _
    $region15: #{transcription_forward.5} parent=1 // pred_check_branch
      %18 = sbr.rel (0) target = $region17
    $region16: #{transcription_forward.5} parent=1 // pred_region
      %20 = vsyncadd [#allocation3], 0
      %s21 = sshll.u32 %s3, 4
      %s22 = int_to_ptr.hbm [resolvable:$true] %s21
      %s23 = sshll.u32 [#allocation2], 4
      %s24 = int_to_ptr.vmem [resolvable:$true] %s23
      %29 = dma.hbm_to_vmem [thread:$0]  %s22, 1024, %s24, [#allocation3], 64, 64, 4
    $region17: #{transcription_forward.5} parent=1 // pred_fallthru
      _
    // Predicated region
    $region18: #{transcription_forward.5} parent=1 // pred_check
      _
    $region19: #{transcription_forward.5} parent=1 // pred_check_branch
      %31 = sbr.rel (0) target = $region21
    $region20: #{transcription_forward.5} parent=1 // pred_region
      _
    $region21: #{transcription_forward.5} parent=1 // pred_fallthru
      _
    // Predicated region
    $region22: #{transcription_forward.5} parent=1 // pred_check
      _
    $region23: #{transcription_forward.5} parent=1 // pred_check_branch
      %33 = sbr.rel (0) target = $region25
    $region24: #{transcription_forward.5} parent=1 // pred_region
      %35 = dma.done [#allocation3], 1024
    $region25: #{transcription_forward.5} parent=1 // pred_fallthru
      _
    %v36 = vld [vmem:[%s0] sm:$0xf]
    %v37 = vld [vmem:[%s0 + $0x4] sm:$0xf]
    %v38 = vld [vmem:[%s0 + $0x8] sm:$0xf]
    %v39 = vld [vmem:[%s0 + $0xc] sm:$0xf]
    %v40 = vld [vmem:[%s0 + $0x10] sm:$0xf]
    %v41 = vld [vmem:[%s0 + $0x14] sm:$0xf]
    %v42 = vld [vmem:[%s0 + $0x18] sm:$0xf]
    %v43 = vld [vmem:[%s0 + $0x1c] sm:$0xf]
    %v44 = vld [vmem:[%s2] sm:$0xf]
    %v45 = vld [vmem:[%s2 + $0x4] sm:$0xf]
    %v46 = vld [vmem:[%s2 + $0x8] sm:$0xf]
    %v47 = vld [vmem:[%s2 + $0xc] sm:$0xf]
    %v48 = vld [vmem:[%s2 + $0x10] sm:$0xf]
    %v49 = vld [vmem:[%s2 + $0x14] sm:$0xf]
    %v50 = vld [vmem:[%s2 + $0x18] sm:$0xf]
    %v51 = vld [vmem:[%s2 + $0x1c] sm:$0xf]
    %v52 = vld [vmem:[%s2 + $0x20] sm:$0xf]
    %v53 = vld [vmem:[%s2 + $0x24] sm:$0xf]
    %v54 = vld [vmem:[%s2 + $0x28] sm:$0xf]
    %v55 = vld [vmem:[%s2 + $0x2c] sm:$0xf]
    %v56 = vld [vmem:[%s2 + $0x30] sm:$0xf]
    %v57 = vld [vmem:[%s2 + $0x34] sm:$0xf]
    %v58 = vld [vmem:[%s2 + $0x38] sm:$0xf]
    %v59 = vld [vmem:[%s2 + $0x3c] sm:$0xf]
    %v60 = vld [vmem:[%s1] sm:$0xf]
    %v61 = vld [vmem:[%s1 + $0x4] sm:$0xf]
    %v62 = vld [vmem:[%s1 + $0x8] sm:$0xf]
    %v63 = vld [vmem:[%s1 + $0xc] sm:$0xf]
    %v64 = vld [vmem:[%s1 + $0x10] sm:$0xf]
    %v65 = vld [vmem:[%s1 + $0x14] sm:$0xf]
    %v66 = vld [vmem:[%s1 + $0x18] sm:$0xf]
    %v67 = vld [vmem:[%s1 + $0x1c] sm:$0xf]
    %v68 = vld [vmem:[#allocation2] sm:$0xf]
    %v69 = vld [vmem:[#allocation2 + $0x4] sm:$0xf]
    %v70 = vld [vmem:[#allocation2 + $0x8] sm:$0xf]
    %v71 = vld [vmem:[#allocation2 + $0xc] sm:$0xf]
    %v72 = vld [vmem:[#allocation2 + $0x10] sm:$0xf]
    %v73 = vld [vmem:[#allocation2 + $0x14] sm:$0xf]
    %v74 = vld [vmem:[#allocation2 + $0x18] sm:$0xf]
    %v75 = vld [vmem:[#allocation2 + $0x1c] sm:$0xf]
    %v76 = vld [vmem:[#allocation2 + $0x20] sm:$0xf]
    %v77 = vld [vmem:[#allocation2 + $0x24] sm:$0xf]
    %v78 = vld [vmem:[#allocation2 + $0x28] sm:$0xf]
    %v79 = vld [vmem:[#allocation2 + $0x2c] sm:$0xf]
    %v80 = vld [vmem:[#allocation2 + $0x30] sm:$0xf]
    %v81 = vld [vmem:[#allocation2 + $0x34] sm:$0xf]
    %v82 = vld [vmem:[#allocation2 + $0x38] sm:$0xf]
    %v83 = vld [vmem:[#allocation2 + $0x3c] sm:$0xf]
    %v92 = vunpack.c.l.b16 %v60
    %v93 = vunpack.c.l.b16 %v61
    %v94 = vunpack.c.l.b16 %v62
    %v95 = vunpack.c.l.b16 %v63
    %v96 = vunpack.c.l.b16 %v64
    %v97 = vunpack.c.l.b16 %v65
    %v98 = vunpack.c.l.b16 %v66
    %v99 = vunpack.c.l.b16 %v67
    %v100 = vpack.c.b16 %v93, %v92
    %v101 = vpack.c.b16 %v95, %v94
    %v102 = vpack.c.b16 %v97, %v96
    %v103 = vpack.c.b16 %v99, %v98
    %v124 = vunpack.c.l.b16 %v68
    %v125 = vunpack.c.l.b16 %v69
    %v126 = vunpack.c.l.b16 %v70
    %v127 = vunpack.c.l.b16 %v71
    %v128 = vunpack.c.l.b16 %v72
    %v129 = vunpack.c.l.b16 %v73
    %v130 = vunpack.c.l.b16 %v74
    %v131 = vunpack.c.l.b16 %v75
    %v132 = vunpack.c.l.b16 %v76
    %v133 = vunpack.c.l.b16 %v77
    %v134 = vunpack.c.l.b16 %v78
    %v135 = vunpack.c.l.b16 %v79
    %v136 = vunpack.c.l.b16 %v80
    %v137 = vunpack.c.l.b16 %v81
    %v138 = vunpack.c.l.b16 %v82
    %v139 = vunpack.c.l.b16 %v83
    %v140 = vpack.c.b16 %v125, %v124
    %v141 = vpack.c.b16 %v127, %v126
    %v142 = vpack.c.b16 %v129, %v128
    %v143 = vpack.c.b16 %v131, %v130
    %v144 = vpack.c.b16 %v133, %v132
    %v145 = vpack.c.b16 %v135, %v134
    %v146 = vpack.c.b16 %v137, %v136
    %v147 = vpack.c.b16 %v139, %v138
    %156 = vmatpush.bf16.xpose.msra.mxu0 %v147
    %157 = vmatpush.bf16.xpose.msra.mxu0 %v146
    %158 = vmatpush.bf16.xpose.msra.mxu0 %v145
    %159 = vmatpush.bf16.xpose.msra.mxu0 %v144
    %160 = vmatpush.bf16.xpose.msra.mxu0 %v143
    %161 = vmatpush.bf16.xpose.msra.mxu0 %v142
    %162 = vmatpush.bf16.xpose.msra.mxu0 %v141
    %163 = vmatpush.bf16.xpose.msra.mxu0 %v140
    %164 = vmatmul.bf16.gmra.mxu0 %v100
    %v165 = vpop.f32.mrf.mxu0
    %v166 = vadd.f32 0.0, %v165
    %v167 = vpop.f32.mrf.mxu0
    %v168 = vadd.f32 0.0, %v167
    %169 = vmatmul.bf16.gmra.mxu0 %v101
    %v170 = vpop.f32.mrf.mxu0
    %v171 = vadd.f32 0.0, %v170
    %v172 = vpop.f32.mrf.mxu0
    %v173 = vadd.f32 0.0, %v172
    %174 = vmatmul.bf16.gmra.mxu0 %v102
    %v175 = vpop.f32.mrf.mxu0
    %v176 = vadd.f32 0.0, %v175
    %v177 = vpop.f32.mrf.mxu0
    %v178 = vadd.f32 0.0, %v177
    %179 = vmatmul.bf16.gmra.mxu0 %v103
    %v180 = vpop.f32.mrf.mxu0
    %v181 = vadd.f32 0.0, %v180
    %v182 = vpop.f32.mrf.mxu0
    %v183 = vadd.f32 0.0, %v182
    %184 = vdwg.mxu0
    %v193 = vunpack.c.l.b16 %v36
    %v194 = vunpack.c.l.b16 %v37
    %v195 = vunpack.c.l.b16 %v38
    %v196 = vunpack.c.l.b16 %v39
    %v197 = vunpack.c.l.b16 %v40
    %v198 = vunpack.c.l.b16 %v41
    %v199 = vunpack.c.l.b16 %v42
    %v200 = vunpack.c.l.b16 %v43
    %v201 = vpack.c.b16 %v194, %v193
    %v202 = vpack.c.b16 %v196, %v195
    %v203 = vpack.c.b16 %v198, %v197
    %v204 = vpack.c.b16 %v200, %v199
    %v225 = vunpack.c.l.b16 %v44
    %v226 = vunpack.c.l.b16 %v45
    %v227 = vunpack.c.l.b16 %v46
    %v228 = vunpack.c.l.b16 %v47
    %v229 = vunpack.c.l.b16 %v48
    %v230 = vunpack.c.l.b16 %v49
    %v231 = vunpack.c.l.b16 %v50
    %v232 = vunpack.c.l.b16 %v51
    %v233 = vunpack.c.l.b16 %v52
    %v234 = vunpack.c.l.b16 %v53
    %v235 = vunpack.c.l.b16 %v54
    %v236 = vunpack.c.l.b16 %v55
    %v237 = vunpack.c.l.b16 %v56
    %v238 = vunpack.c.l.b16 %v57
    %v239 = vunpack.c.l.b16 %v58
    %v240 = vunpack.c.l.b16 %v59
    %v241 = vpack.c.b16 %v226, %v225
    %v242 = vpack.c.b16 %v228, %v227
    %v243 = vpack.c.b16 %v230, %v229
    %v244 = vpack.c.b16 %v232, %v231
    %v245 = vpack.c.b16 %v234, %v233
    %v246 = vpack.c.b16 %v236, %v235
    %v247 = vpack.c.b16 %v238, %v237
    %v248 = vpack.c.b16 %v240, %v239
    %257 = vmatpush.bf16.xpose.msra.mxu0 %v248
    %258 = vmatpush.bf16.xpose.msra.mxu0 %v247
    %259 = vmatpush.bf16.xpose.msra.mxu0 %v246
    %260 = vmatpush.bf16.xpose.msra.mxu0 %v245
    %261 = vmatpush.bf16.xpose.msra.mxu0 %v244
    %262 = vmatpush.bf16.xpose.msra.mxu0 %v243
    %263 = vmatpush.bf16.xpose.msra.mxu0 %v242
    %264 = vmatpush.bf16.xpose.msra.mxu0 %v241
    %265 = vmatmul.bf16.gmra.mxu0 %v201
    %v266 = vpop.f32.mrf.mxu0
    %v267 = vadd.f32 %v166, %v266
    %v268 = vpop.f32.mrf.mxu0
    %v269 = vadd.f32 %v168, %v268
    %270 = vmatmul.bf16.gmra.mxu0 %v202
    %v271 = vpop.f32.mrf.mxu0
    %v272 = vadd.f32 %v171, %v271
    %v273 = vpop.f32.mrf.mxu0
    %v274 = vadd.f32 %v173, %v273
    %275 = vmatmul.bf16.gmra.mxu0 %v203
    %v276 = vpop.f32.mrf.mxu0
    %v277 = vadd.f32 %v176, %v276
    %v278 = vpop.f32.mrf.mxu0
    %v279 = vadd.f32 %v178, %v278
    %280 = vmatmul.bf16.gmra.mxu0 %v204
    %v281 = vpop.f32.mrf.mxu0
    %v282 = vadd.f32 %v181, %v281
    %v283 = vpop.f32.mrf.mxu0
    %v284 = vadd.f32 %v183, %v283
    %285 = vdwg.mxu0
    %v286 = vld [vmem:[%s4] sm:$0x1]
    %v288 = vperm.slane %v286, 0
    %v290 = vadd.f32 %v267, %v288
    %v291 = vadd.f32 %v269, %v288
    %v292 = vadd.f32 %v272, %v288
    %v293 = vadd.f32 %v274, %v288
    %v294 = vadd.f32 %v277, %v288
    %v295 = vadd.f32 %v279, %v288
    %v296 = vadd.f32 %v282, %v288
    %v297 = vadd.f32 %v284, %v288
    %298 = vst [vmem:[%s5] sm:$0xff] %v290
    %299 = vst [vmem:[%s5 + $0x8] sm:$0xff] %v291
    %300 = vst [vmem:[%s5 + $0x10] sm:$0xff] %v292
    %301 = vst [vmem:[%s5 + $0x18] sm:$0xff] %v293
    %302 = vst [vmem:[%s5 + $0x20] sm:$0xff] %v294
    %303 = vst [vmem:[%s5 + $0x28] sm:$0xff] %v295
    %304 = vst [vmem:[%s5 + $0x30] sm:$0xff] %v296
    %305 = vst [vmem:[%s5 + $0x38] sm:$0xff] %v297
    // Predicated region
    $region26: #{transcription_forward.5} parent=1 // pred_check
      _
    $region27: #{transcription_forward.5} parent=1 // pred_check_branch
      %307 = sbr.rel (0) target = $region29
    $region28: #{transcription_forward.5} parent=1 // pred_region
      _
    $region29: #{transcription_forward.5} parent=1 // pred_fallthru
      _
    // Predicated region
    $region30: #{transcription_forward.5} parent=1 // pred_check
      _
    $region31: #{transcription_forward.5} parent=1 // pred_check_branch
      %309 = sbr.rel (0) target = $region33
    $region32: #{transcription_forward.5} parent=1 // pred_region
      _
    $region33: #{transcription_forward.5} parent=1 // pred_fallthru
      _
    %310 = vsyncpa [#allocation3], 1

// kernel: transcription_forward.3
$region0: #{transcription_forward.3}
  #allocation0 [shape = 'u32[]', space=smem, size = 0x4, offset = 0x4, fixed_abs, tag = 'smem constant byte address 0x4 - core index']
  #allocation1 [shape = 'u32[72,128]{1,0:T(1,128)}', space=vmem, size = 0x9000, scoped, tag = 'internal scratch']
  #allocation2 [shape = 'f32[32,512]{1,0:T(8,128)}', space=vmem, size = 0x10000, scoped, tag = 'scratch operand']
  #allocation3 [shape = 'f32[32,512]{1,0:T(8,128)}', space=vmem, size = 0x10000, scoped, tag = 'scratch operand']
  #allocation4 [shape = 'f32[8,128]{1,0:T(8,128)}', space=vmem, size = 0x1000, scoped, tag = 'scratch operand']
  #allocation5 [shape = 'f32[8,128]{1,0:T(8,128)}', space=vmem, size = 0x1000, scoped, tag = 'scratch operand']
  #allocation6 [shape = 'f32[8,128]{1,0:T(8,128)}', space=vmem, size = 0x1000, scoped, tag = 'scratch operand']
  #allocation7 [shape = 'f32[8,128]{1,0:T(8,128)}', space=vmem, size = 0x1000, scoped, tag = 'scratch operand']
  %s0 = inlined_call_operand.vmem [shape: bf16[64,128], index: 0, kind: input, shape index: {}, may-alias: {0,1}]
  %s1 = inlined_call_operand.vmem [shape: bf16[64,128], index: 1, kind: input, shape index: {}, may-alias: {0,1}]
  %s2 = inlined_call_operand.hbm [shape: bf16[512,128], index: 2, kind: input, shape index: {}]
  %s3 = inlined_call_operand.hbm [shape: bf16[512,128], index: 3, kind: input, shape index: {}]
  %s4 = inlined_call_operand.hbm [shape: bf16[512,128], index: 4, kind: input, shape index: {}]
  %s5 = inlined_call_operand.hbm [shape: bf16[512,128], index: 5, kind: input, shape index: {}]
  %s6 = inlined_call_operand.vmem [shape: f32[1,512], index: 6, kind: input, shape index: {}]
  %s7 = inlined_call_operand.vmem [shape: f32[1,512], index: 7, kind: input, shape index: {}]
  %s8 = inlined_call_operand.vmem [shape: bf16[64,128], index: 8, kind: output, shape index: {0}]
  %s9 = inlined_call_operand.vmem [shape: bf16[64,128], index: 9, kind: output, shape index: {1}]
  %10 = xla_tuple %s8, %s9
  %s11 = sld [smem:[#allocation0]]
  $region93: #{transcription_forward.3} parent=0
    _
  %s13 = ssub.s32 1, %s11
  %s14 = scalar_select 0, %s13, %s11
  $region1: #{transcription_forward.3} parent=0
    #allocation8 [shape = 'u8[131072]{0}', space=vmem, size = 0x20000, scoped, tag = 'input window, operand 2, single buffered']
    #allocation9 [shape = 's32[2]{0}', space=sflag, size = 0x8, scoped, tag = 'scoped memory for transcription_forward.3']
    #allocation10 [shape = 'u8[131072]{0}', space=vmem, size = 0x20000, scoped, tag = 'input window, operand 3, single buffered']
    #allocation11 [shape = 's32[1]{0}', space=sflag, size = 0x4, scoped, tag = 'scoped memory for transcription_forward.3']
    #allocation12 [shape = 'u8[131072]{0}', space=vmem, size = 0x20000, scoped, tag = 'input window, operand 4, single buffered']
    #allocation13 [shape = 'u8[131072]{0}', space=vmem, size = 0x20000, scoped, tag = 'input window, operand 5, single buffered']
    #allocation14 [shape = 's32[1]{0}', space=sflag, size = 0x4, scoped, tag = 'scoped memory for transcription_forward.3']
    %15 = vsyncpa [#allocation9], 0
    %16 = vsyncpa [#allocation11], 0
    %17 = vsyncpa [#allocation14], 0
    loop: start=0, step=1, limit=4
    $region2: #{transcription_forward.3} parent=1 // loop_pre_header
      _
    $region3: #{transcription_forward.3} parent=1 // loop_header
      %s19 = sphi 0, %s23
      %p20 = scmp.ge.s32.totalorder %s19, 4
      %s29 = sphi 0, %s31
      %s32 = sphi 0, %s29
      %s33 = sphi 0, %s32
      %s49 = sphi 0, %s33
      %s57 = sphi 0, %s59
      %s60 = sphi 0, %s57
      %s61 = sphi 0, %s60
      %s77 = sphi 0, %s61
      %s81 = sphi 0, %s81
      %s83 = sphi 0, %s81
      %s84 = sphi 0, %s83
      %s98 = sphi 0, %s84
      %s102 = sphi 0, %s102
      %s104 = sphi 0, %s102
      %s105 = sphi 0, %s104
      %s119 = sphi 0, %s105
      %s123 = sphi 0, %s123
      %s125 = sphi 0, %s123
      %s126 = sphi 0, %s125
      %s140 = sphi 0, %s126
      %s144 = sphi 0, %s144
      %s146 = sphi 0, %s144
      %s147 = sphi 0, %s146
      %s161 = sphi 0, %s147
      %s165 = sphi 0, %s165
      %s167 = sphi 0, %s165
      %s168 = sphi 0, %s167
      %s182 = sphi 0, %s168
      %s186 = sphi 0, %s186
      %s188 = sphi 0, %s186
      %s189 = sphi 0, %s188
      %s203 = sphi 0, %s189
      %s209 = sphi 0, %s211
      %s212 = sphi 0, %s209
      %s213 = sphi 0, %s212
      %s229 = sphi 0, %s213
      %s237 = sphi 0, %s239
      %s240 = sphi 0, %s237
      %s241 = sphi 0, %s240
      %s257 = sphi 0, %s241
    $region4: #{transcription_forward.3} parent=1 // loop_header_branch
      %22 = sbr.rel (%p20) target = $region8
    $region5: #{transcription_forward.3} parent=1 // loop_body
      %s24 = ssub.s32 %s19, 1
      %s25 = ssub.s32 %s19, 2
      %s26 = sadd.s32 %s19, 1
      %s27 = ssub.s32 %s19, %s26
      %p28 = scmp.eq.s32.totalorder %s27, 0
      %s30 = sadd.s32 %s29, 1
      %s31 = scalar_select %p28, %s29, %s30
      %p34 = pneg %p28
      %p35 = scmp.eq.s32.totalorder %s19, 1
      %p36 = por %p34, %p35
      %p37 = scmp.ne.s32.totalorder %s29, %s32
      %p38 = scmp.eq.s32.totalorder %s19, 0
      %p39 = por %p37, %p38
      %p40 = scmp.ne.s32.totalorder %s29, %s32
      %p41 = scmp.eq.s32.totalorder %s24, 1
      %p42 = por %p40, %p41
      %p43 = scmp.ne.s32.totalorder %s32, %s33
      %p44 = scmp.eq.s32.totalorder %s24, 0
      %p45 = por %p43, %p44
      %p46 = scmp.ne.s32.totalorder %s32, %s33
      %p47 = scmp.eq.s32.totalorder %s25, 1
      %p48 = por %p46, %p47
      %p50 = scmp.ne.s32.totalorder %s33, %s49
      %p51 = scmp.eq.s32.totalorder %s25, 0
      %p52 = por %p50, %p51
      %s53 = ssub.s32 1, %s19
      %s54 = ssub.s32 1, %s26
      %s55 = ssub.s32 %s53, %s54
      %p56 = scmp.eq.s32.totalorder %s55, 0
      %s58 = sadd.s32 %s57, 1
      %s59 = scalar_select %p56, %s57, %s58
      %p62 = pneg %p56
      %p63 = scmp.eq.s32.totalorder %s19, 1
      %p64 = por %p62, %p63
      %p65 = scmp.ne.s32.totalorder %s57, %s60
      %p66 = scmp.eq.s32.totalorder %s19, 0
      %p67 = por %p65, %p66
      %p68 = scmp.ne.s32.totalorder %s57, %s60
      %p69 = scmp.eq.s32.totalorder %s24, 1
      %p70 = por %p68, %p69
      %p71 = scmp.ne.s32.totalorder %s60, %s61
      %p72 = scmp.eq.s32.totalorder %s24, 0
      %p73 = por %p71, %p72
      %p74 = scmp.ne.s32.totalorder %s60, %s61
      %p75 = scmp.eq.s32.totalorder %s25, 1
      %p76 = por %p74, %p75
      %p78 = scmp.ne.s32.totalorder %s61, %s77
      %p79 = scmp.eq.s32.totalorder %s25, 0
      %p80 = por %p78, %p79
      %s82 = sadd.s32 %s81, 1
      %p85 = scmp.eq.s32.totalorder %s19, 1
      %p86 = scmp.ne.s32.totalorder %s81, %s83
      %p87 = scmp.eq.s32.totalorder %s19, 0
      %p88 = por %p86, %p87
      %p89 = scmp.ne.s32.totalorder %s81, %s83
      %p90 = scmp.eq.s32.totalorder %s24, 1
      %p91 = por %p89, %p90
      %p92 = scmp.ne.s32.totalorder %s83, %s84
      %p93 = scmp.eq.s32.totalorder %s24, 0
      %p94 = por %p92, %p93
      %p95 = scmp.ne.s32.totalorder %s83, %s84
      %p96 = scmp.eq.s32.totalorder %s25, 1
      %p97 = por %p95, %p96
      %p99 = scmp.ne.s32.totalorder %s84, %s98
      %p100 = scmp.eq.s32.totalorder %s25, 0
      %p101 = por %p99, %p100
      %s103 = sadd.s32 %s102, 1
      %p106 = scmp.eq.s32.totalorder %s19, 1
      %p107 = scmp.ne.s32.totalorder %s102, %s104
      %p108 = scmp.eq.s32.totalorder %s19, 0
      %p109 = por %p107, %p108
      %p110 = scmp.ne.s32.totalorder %s102, %s104
      %p111 = scmp.eq.s32.totalorder %s24, 1
      %p112 = por %p110, %p111
      %p113 = scmp.ne.s32.totalorder %s104, %s105
      %p114 = scmp.eq.s32.totalorder %s24, 0
      %p115 = por %p113, %p114
      %p116 = scmp.ne.s32.totalorder %s104, %s105
      %p117 = scmp.eq.s32.totalorder %s25, 1
      %p118 = por %p116, %p117
      %p120 = scmp.ne.s32.totalorder %s105, %s119
      %p121 = scmp.eq.s32.totalorder %s25, 0
      %p122 = por %p120, %p121
      %s124 = sadd.s32 %s123, 1
      %p127 = scmp.eq.s32.totalorder %s19, 1
      %p128 = scmp.ne.s32.totalorder %s123, %s125
      %p129 = scmp.eq.s32.totalorder %s19, 0
      %p130 = por %p128, %p129
      %p131 = scmp.ne.s32.totalorder %s123, %s125
      %p132 = scmp.eq.s32.totalorder %s24, 1
      %p133 = por %p131, %p132
      %p134 = scmp.ne.s32.totalorder %s125, %s126
      %p135 = scmp.eq.s32.totalorder %s24, 0
      %p136 = por %p134, %p135
      %p137 = scmp.ne.s32.totalorder %s125, %s126
      %p138 = scmp.eq.s32.totalorder %s25, 1
      %p139 = por %p137, %p138
      %p141 = scmp.ne.s32.totalorder %s126, %s140
      %p142 = scmp.eq.s32.totalorder %s25, 0
      %p143 = por %p141, %p142
      %s145 = sadd.s32 %s144, 1
      %p148 = scmp.eq.s32.totalorder %s19, 1
      %p149 = scmp.ne.s32.totalorder %s144, %s146
      %p150 = scmp.eq.s32.totalorder %s19, 0
      %p151 = por %p149, %p150
      %p152 = scmp.ne.s32.totalorder %s144, %s146
      %p153 = scmp.eq.s32.totalorder %s24, 1
      %p154 = por %p152, %p153
      %p155 = scmp.ne.s32.totalorder %s146, %s147
      %p156 = scmp.eq.s32.totalorder %s24, 0
      %p157 = por %p155, %p156
      %p158 = scmp.ne.s32.totalorder %s146, %s147
      %p159 = scmp.eq.s32.totalorder %s25, 1
      %p160 = por %p158, %p159
      %p162 = scmp.ne.s32.totalorder %s147, %s161
      %p163 = scmp.eq.s32.totalorder %s25, 0
      %p164 = por %p162, %p163
      %s166 = sadd.s32 %s165, 1
      %p169 = scmp.eq.s32.totalorder %s19, 1
      %p170 = scmp.ne.s32.totalorder %s165, %s167
      %p171 = scmp.eq.s32.totalorder %s19, 0
      %p172 = por %p170, %p171
      %p173 = scmp.ne.s32.totalorder %s165, %s167
      %p174 = scmp.eq.s32.totalorder %s24, 1
      %p175 = por %p173, %p174
      %p176 = scmp.ne.s32.totalorder %s167, %s168
      %p177 = scmp.eq.s32.totalorder %s24, 0
      %p178 = por %p176, %p177
      %p179 = scmp.ne.s32.totalorder %s167, %s168
      %p180 = scmp.eq.s32.totalorder %s25, 1
      %p181 = por %p179, %p180
      %p183 = scmp.ne.s32.totalorder %s168, %s182
      %p184 = scmp.eq.s32.totalorder %s25, 0
      %p185 = por %p183, %p184
      %s187 = sadd.s32 %s186, 1
      %p190 = scmp.eq.s32.totalorder %s19, 1
      %p191 = scmp.ne.s32.totalorder %s186, %s188
      %p192 = scmp.eq.s32.totalorder %s19, 0
      %p193 = por %p191, %p192
      %p194 = scmp.ne.s32.totalorder %s186, %s188
      %p195 = scmp.eq.s32.totalorder %s24, 1
      %p196 = por %p194, %p195
      %p197 = scmp.ne.s32.totalorder %s188, %s189
      %p198 = scmp.eq.s32.totalorder %s24, 0
      %p199 = por %p197, %p198
      %p200 = scmp.ne.s32.totalorder %s188, %s189
      %p201 = scmp.eq.s32.totalorder %s25, 1
      %p202 = por %p200, %p201
      %p204 = scmp.ne.s32.totalorder %s189, %s203
      %p205 = scmp.eq.s32.totalorder %s25, 0
      %p206 = por %p204, %p205
      %s207 = ssub.s32 %s19, %s26
      %p208 = scmp.eq.s32.totalorder %s207, 0
      %s210 = sadd.s32 %s209, 1
      %s211 = scalar_select %p208, %s209, %s210
      %p214 = pneg %p208
      %p215 = scmp.eq.s32.totalorder %s19, 1
      %p216 = por %p214, %p215
      %p217 = scmp.ne.s32.totalorder %s209, %s212
      %p218 = scmp.eq.s32.totalorder %s19, 0
      %p219 = por %p217, %p218
      %p220 = scmp.ne.s32.totalorder %s209, %s212
      %p221 = scmp.eq.s32.totalorder %s24, 1
      %p222 = por %p220, %p221
      %p223 = scmp.ne.s32.totalorder %s212, %s213
      %p224 = scmp.eq.s32.totalorder %s24, 0
      %p225 = por %p223, %p224
      %p226 = scmp.ne.s32.totalorder %s212, %s213
      %p227 = scmp.eq.s32.totalorder %s25, 1
      %p228 = por %p226, %p227
      %p230 = scmp.ne.s32.totalorder %s213, %s229
      %p231 = scmp.eq.s32.totalorder %s25, 0
      %p232 = por %p230, %p231
      %s233 = ssub.s32 1, %s19
      %s234 = ssub.s32 1, %s26
      %s235 = ssub.s32 %s233, %s234
      %p236 = scmp.eq.s32.totalorder %s235, 0
      %s238 = sadd.s32 %s237, 1
      %s239 = scalar_select %p236, %s237, %s238
      %p242 = pneg %p236
      %p243 = scmp.eq.s32.totalorder %s19, 1
      %p244 = por %p242, %p243
      %p245 = scmp.ne.s32.totalorder %s237, %s240
      %p246 = scmp.eq.s32.totalorder %s19, 0
      %p247 = por %p245, %p246
      %p248 = scmp.ne.s32.totalorder %s237, %s240
      %p249 = scmp.eq.s32.totalorder %s24, 1
      %p250 = por %p248, %p249
      %p251 = scmp.ne.s32.totalorder %s240, %s241
      %p252 = scmp.eq.s32.totalorder %s24, 0
      %p253 = por %p251, %p252
      %p254 = scmp.ne.s32.totalorder %s240, %s241
      %p255 = scmp.eq.s32.totalorder %s25, 1
      %p256 = por %p254, %p255
      %p258 = scmp.ne.s32.totalorder %s241, %s257
      %p259 = scmp.eq.s32.totalorder %s25, 0
      %p260 = por %p258, %p259
      %p261 = scmp.le.s32.totalorder 1, %s19
      %p262 = scmp.lt.s32.totalorder %s19, 3
      %p263 = pnand %p261, %p262
      %p264 = pneg %p263
      // Predicated region
      $region9: #{transcription_forward.3} parent=5 // pred_check
        _
      $region10: #{transcription_forward.3} parent=5 // pred_check_branch
        %266 = sbr.rel (%p263) target = $region12
      $region11: #{transcription_forward.3} parent=5 // pred_region
        %s267 = ssub.s32 %s19, 1
        // Predicated region
        $region13: #{transcription_forward.3} parent=11 // pred_check
          %p268 = pneg %p94
        $region14: #{transcription_forward.3} parent=11 // pred_check_branch
          %270 = sbr.rel (%p268) target = $region16
        $region15: #{transcription_forward.3} parent=11 // pred_region
          %272 = vsyncadd [#allocation9], 0
          %s273 = sshll.u32 %s2, 4
          %s274 = int_to_ptr.hbm [resolvable:$true] %s273
          %s275 = sshll.u32 [#allocation8], 4
          %s276 = int_to_ptr.vmem [resolvable:$true] %s275
          %281 = dma.hbm_to_vmem [thread:$0]  %s274, 4096, %s276, [#allocation9], 64, 64, 4
        $region16: #{transcription_forward.3} parent=11 // pred_fallthru
          _
        // Predicated region
        $region17: #{transcription_forward.3} parent=11 // pred_check
          %p282 = pneg %p115
        $region18: #{transcription_forward.3} parent=11 // pred_check_branch
          %284 = sbr.rel (%p282) target = $region20
        $region19: #{transcription_forward.3} parent=11 // pred_region
          %286 = vsyncadd [#allocation11], 0
          %s287 = sshll.u32 %s3, 4
          %s288 = int_to_ptr.hbm [resolvable:$true] %s287
          %s289 = sshll.u32 [#allocation10], 4
          %s290 = int_to_ptr.vmem [resolvable:$true] %s289
          %295 = dma.hbm_to_vmem [thread:$0]  %s288, 4096, %s290, [#allocation11], 64, 64, 4
        $region20: #{transcription_forward.3} parent=11 // pred_fallthru
          _
        // Predicated region
        $region21: #{transcription_forward.3} parent=11 // pred_check
          %p296 = pneg %p136
        $region22: #{transcription_forward.3} parent=11 // pred_check_branch
          %298 = sbr.rel (%p296) target = $region24
        $region23: #{transcription_forward.3} parent=11 // pred_region
          %300 = vsyncadd [#allocation11], 0
          %s301 = sshll.u32 %s4, 4
          %s302 = int_to_ptr.hbm [resolvable:$true] %s301
          %s303 = sshll.u32 [#allocation12], 4
          %s304 = int_to_ptr.vmem [resolvable:$true] %s303
          %309 = dma.hbm_to_vmem [thread:$0]  %s302, 4096, %s304, [#allocation11], 64, 64, 4
        $region24: #{transcription_forward.3} parent=11 // pred_fallthru
          _
        // Predicated region
        $region25: #{transcription_forward.3} parent=11 // pred_check
          %p310 = pneg %p157
        $region26: #{transcription_forward.3} parent=11 // pred_check_branch
          %312 = sbr.rel (%p310) target = $region28
        $region27: #{transcription_forward.3} parent=11 // pred_region
          %314 = vsyncadd [#allocation14], 0
          %s315 = sshll.u32 %s5, 4
          %s316 = int_to_ptr.hbm [resolvable:$true] %s315
          %s317 = sshll.u32 [#allocation13], 4
          %s318 = int_to_ptr.vmem [resolvable:$true] %s317
          %323 = dma.hbm_to_vmem [thread:$0]  %s316, 4096, %s318, [#allocation14], 64, 64, 4
        $region28: #{transcription_forward.3} parent=11 // pred_fallthru
          _
        // Predicated region
        $region29: #{transcription_forward.3} parent=11 // pred_check
          %p324 = pneg %p178
        $region30: #{transcription_forward.3} parent=11 // pred_check_branch
          %326 = sbr.rel (%p324) target = $region32
        $region31: #{transcription_forward.3} parent=11 // pred_region
          _
        $region32: #{transcription_forward.3} parent=11 // pred_fallthru
          _
        // Predicated region
        $region33: #{transcription_forward.3} parent=11 // pred_check
          %p327 = pneg %p199
        $region34: #{transcription_forward.3} parent=11 // pred_check_branch
          %329 = sbr.rel (%p327) target = $region36
        $region35: #{transcription_forward.3} parent=11 // pred_region
          _
        $region36: #{transcription_forward.3} parent=11 // pred_fallthru
          _
      $region12: #{transcription_forward.3} parent=5 // pred_fallthru
        _
      %p330 = scmp.lt.s32.totalorder %s19, 2
      // Predicated region
      $region37: #{transcription_forward.3} parent=5 // pred_check
        %p331 = pneg %p330
      $region38: #{transcription_forward.3} parent=5 // pred_check_branch
        %333 = sbr.rel (%p331) target = $region40
      $region39: #{transcription_forward.3} parent=5 // pred_region
        // Predicated region
        $region41: #{transcription_forward.3} parent=39 // pred_check
          %p334 = pneg %p39
        $region42: #{transcription_forward.3} parent=39 // pred_check_branch
          %336 = sbr.rel (%p334) target = $region44
        $region43: #{transcription_forward.3} parent=39 // pred_region
          %s337 = smul.u32 4, %s19
          %p338 = scmp.lt.s32.totalorder %s337, 7
          %s339 = scalar_select %p338, %s337, 7
          %s340 = smul.addr %s339, 4
          %s341 = scalar_lea.vmem %s0, %s340
          %s342 = smul.u32 4, %s19
        $region44: #{transcription_forward.3} parent=39 // pred_fallthru
          _
        // Predicated region
        $region45: #{transcription_forward.3} parent=39 // pred_check
          %p343 = pneg %p67
        $region46: #{transcription_forward.3} parent=39 // pred_check_branch
          %345 = sbr.rel (%p343) target = $region48
        $region47: #{transcription_forward.3} parent=39 // pred_region
          %s346 = ssub.s32 1, %s19
          %s347 = smul.u32 4, %s346
          %p348 = scmp.lt.s32.totalorder %s347, 7
          %s349 = scalar_select %p348, %s347, 7
          %s350 = smul.addr %s349, 4
          %s351 = scalar_lea.vmem %s1, %s350
          %s352 = ssub.s32 1, %s19
          %s353 = smul.u32 4, %s352
        $region48: #{transcription_forward.3} parent=39 // pred_fallthru
          _
      $region40: #{transcription_forward.3} parent=5 // pred_fallthru
        _
      %p354 = scmp.le.s32.totalorder 1, %s19
      %p355 = scmp.lt.s32.totalorder %s19, 3
      %p356 = pnand %p354, %p355
      %p357 = pneg %p356
      // Predicated region
      $region49: #{transcription_forward.3} parent=5 // pred_check
        _
      $region50: #{transcription_forward.3} parent=5 // pred_check_branch
        %359 = sbr.rel (%p356) target = $region52
      $region51: #{transcription_forward.3} parent=5 // pred_region
        %s360 = ssub.s32 %s19, 1
        // Predicated region
        $region53: #{transcription_forward.3} parent=51 // pred_check
          %p361 = pneg %p94
        $region54: #{transcription_forward.3} parent=51 // pred_check_branch
          %363 = sbr.rel (%p361) target = $region56
        $region55: #{transcription_forward.3} parent=51 // pred_region
          %365 = dma.done [#allocation9], 4096
        $region56: #{transcription_forward.3} parent=51 // pred_fallthru
          _
        // Predicated region
        $region57: #{transcription_forward.3} parent=51 // pred_check
          %p366 = pneg %p115
        $region58: #{transcription_forward.3} parent=51 // pred_check_branch
          %368 = sbr.rel (%p366) target = $region60
        $region59: #{transcription_forward.3} parent=51 // pred_region
          %370 = dma.done [#allocation11], 4096
        $region60: #{transcription_forward.3} parent=51 // pred_fallthru
          _
        // Predicated region
        $region61: #{transcription_forward.3} parent=51 // pred_check
          %p371 = pneg %p136
        $region62: #{transcription_forward.3} parent=51 // pred_check_branch
          %373 = sbr.rel (%p371) target = $region64
        $region63: #{transcription_forward.3} parent=51 // pred_region
          %375 = dma.done [#allocation11], 4096
        $region64: #{transcription_forward.3} parent=51 // pred_fallthru
          _
        // Predicated region
        $region65: #{transcription_forward.3} parent=51 // pred_check
          %p376 = pneg %p157
        $region66: #{transcription_forward.3} parent=51 // pred_check_branch
          %378 = sbr.rel (%p376) target = $region68
        $region67: #{transcription_forward.3} parent=51 // pred_region
          %380 = dma.done [#allocation14], 4096
        $region68: #{transcription_forward.3} parent=51 // pred_fallthru
          _
        %s381 = smul.u32 4, %s24
        %p382 = scmp.lt.s32.totalorder %s381, 7
        %s383 = scalar_select %p382, %s381, 7
        %s384 = smul.addr %s383, 4
        %s385 = scalar_lea.vmem %s0, %s384
        %p386 = pneg %p45
        %p387 = pneg %p42
        %s388 = ssub.s32 1, %s24
        %s389 = smul.u32 4, %s388
        %p390 = scmp.lt.s32.totalorder %s389, 7
        %s391 = scalar_select %p390, %s389, 7
        %s392 = smul.addr %s391, 4
        %s393 = scalar_lea.vmem %s1, %s392
        %p394 = pneg %p73
        %p395 = pneg %p70
        %p396 = pneg %p94
        %p397 = pneg %p91
        %p398 = pneg %p115
        %p399 = pneg %p112
        %p400 = pneg %p136
        %p401 = pneg %p133
        %p402 = pneg %p157
        %p403 = pneg %p154
        %p404 = pneg %p178
        %p405 = pneg %p175
        %p406 = pneg %p199
        %p407 = pneg %p196
        %p408 = pneg %p225
        %p409 = pneg %p222
        %s410 = smul.u32 4, %s24
        %p411 = scmp.lt.s32.totalorder %s410, 7
        %s412 = scalar_select %p411, %s410, 7
        %s413 = smul.addr %s412, 4
        %s414 = scalar_lea.vmem %s8, %s413
        %p415 = pneg %p253
        %p416 = pneg %p250
        %s417 = ssub.s32 1, %s24
        %s418 = smul.u32 4, %s417
        %p419 = scmp.lt.s32.totalorder %s418, 7
        %s420 = scalar_select %p419, %s418, 7
        %s421 = smul.addr %s420, 4
        %s422 = scalar_lea.vmem %s9, %s421
        %s423 = smul.u32 4, %s24
        %p424 = scmp.lt.s32.totalorder %s423, 7
        %s425 = scalar_select %p424, %s423, 7
        %s426 = smul.addr %s425, 4
        %s427 = scalar_lea.vmem %s0, %s426
        %s428 = smul.u32 4, %s24
        %s429 = ssub.s32 1, %s24
        %s430 = smul.u32 4, %s429
        %p431 = scmp.lt.s32.totalorder %s430, 7
        %s432 = scalar_select %p431, %s430, 7
        %s433 = smul.addr %s432, 4
        %s434 = scalar_lea.vmem %s1, %s433
        %s435 = ssub.s32 1, %s24
        %s436 = smul.u32 4, %s435
        %s437 = smul.u32 4, %s24
        %p438 = scmp.lt.s32.totalorder %s437, 7
        %s439 = scalar_select %p438, %s437, 7
        %s440 = smul.addr %s439, 4
        %s441 = scalar_lea.vmem %s8, %s440
        %s442 = smul.u32 4, %s24
        %s443 = ssub.s32 1, %s24
        %s444 = smul.u32 4, %s443
        %p445 = scmp.lt.s32.totalorder %s444, 7
        %s446 = scalar_select %p445, %s444, 7
        %s447 = smul.addr %s446, 4
        %s448 = scalar_lea.vmem %s9, %s447
        %s449 = ssub.s32 1, %s24
        %s450 = smul.u32 4, %s449
        %p451 = scmp.eq.s32.totalorder %s24, 0
        // Predicated region
        $region69: #{transcription_forward.3} parent=51 // pred_check
          %p452 = pneg %p451
        $region70: #{transcription_forward.3} parent=51 // pred_check_branch
          %454 = sbr.rel (%p452) target = $region72
        $region71: #{transcription_forward.3} parent=51 // pred_region
          %455 = vst [vmem:[#allocation4] sm:$0xff] 0.0
          %456 = vst [vmem:[#allocation5] sm:$0xff] 0.0
          %457 = vst [vmem:[#allocation6] sm:$0xff] 0.0
          %458 = vst [vmem:[#allocation7] sm:$0xff] 0.0
        $region72: #{transcription_forward.3} parent=51 // pred_fallthru
          _
        %v459 = vld [vmem:[%s427] sm:$0xf]
        %v460 = vld [vmem:[%s427 + $0x4] sm:$0xf]
        %v461 = vld [vmem:[%s427 + $0x8] sm:$0xf]
        %v462 = vld [vmem:[%s427 + $0xc] sm:$0xf]
        %v463 = vld [vmem:[#allocation8] sm:$0xf]
        %v464 = vld [vmem:[#allocation8 + $0x4] sm:$0xf]
        %v465 = vld [vmem:[#allocation8 + $0x8] sm:$0xf]
        %v466 = vld [vmem:[#allocation8 + $0xc] sm:$0xf]
        %v467 = vld [vmem:[#allocation8 + $0x10] sm:$0xf]
        %v468 = vld [vmem:[#allocation8 + $0x14] sm:$0xf]
        %v469 = vld [vmem:[#allocation8 + $0x18] sm:$0xf]
        %v470 = vld [vmem:[#allocation8 + $0x1c] sm:$0xf]
        %v471 = vld [vmem:[#allocation8 + $0x20] sm:$0xf]
        %v472 = vld [vmem:[#allocation8 + $0x24] sm:$0xf]
        %v473 = vld [vmem:[#allocation8 + $0x28] sm:$0xf]
        %v474 = vld [vmem:[#allocation8 + $0x2c] sm:$0xf]
        %v475 = vld [vmem:[#allocation8 + $0x30] sm:$0xf]
        %v476 = vld [vmem:[#allocation8 + $0x34] sm:$0xf]
        %v477 = vld [vmem:[#allocation8 + $0x38] sm:$0xf]
        %v478 = vld [vmem:[#allocation8 + $0x3c] sm:$0xf]
        %v479 = vld [vmem:[#allocation8 + $0x40] sm:$0xf]
        %v480 = vld [vmem:[#allocation8 + $0x44] sm:$0xf]
        %v481 = vld [vmem:[#allocation8 + $0x48] sm:$0xf]
        %v482 = vld [vmem:[#allocation8 + $0x4c] sm:$0xf]
        %v483 = vld [vmem:[#allocation8 + $0x50] sm:$0xf]
        %v484 = vld [vmem:[#allocation8 + $0x54] sm:$0xf]
        %v485 = vld [vmem:[#allocation8 + $0x58] sm:$0xf]
        %v486 = vld [vmem:[#allocation8 + $0x5c] sm:$0xf]
        %v487 = vld [vmem:[#allocation8 + $0x60] sm:$0xf]
        %v488 = vld [vmem:[#allocation8 + $0x64] sm:$0xf]
        %v489 = vld [vmem:[#allocation8 + $0x68] sm:$0xf]
        %v490 = vld [vmem:[#allocation8 + $0x6c] sm:$0xf]
        %v491 = vld [vmem:[#allocation8 + $0x70] sm:$0xf]
        %v492 = vld [vmem:[#allocation8 + $0x74] sm:$0xf]
        %v493 = vld [vmem:[#allocation8 + $0x78] sm:$0xf]
        %v494 = vld [vmem:[#allocation8 + $0x7c] sm:$0xf]
        %v495 = vld [vmem:[#allocation8 + $0x80] sm:$0xf]
        %v496 = vld [vmem:[#allocation8 + $0x84] sm:$0xf]
        %v497 = vld [vmem:[#allocation8 + $0x88] sm:$0xf]
        %v498 = vld [vmem:[#allocation8 + $0x8c] sm:$0xf]
        %v499 = vld [vmem:[#allocation8 + $0x90] sm:$0xf]
        %v500 = vld [vmem:[#allocation8 + $0x94] sm:$0xf]
        %v501 = vld [vmem:[#allocation8 + $0x98] sm:$0xf]
        %v502 = vld [vmem:[#allocation8 + $0x9c] sm:$0xf]
        %v503 = vld [vmem:[#allocation8 + $0xa0] sm:$0xf]
        %v504 = vld [vmem:[#allocation8 + $0xa4] sm:$0xf]
        %v505 = vld [vmem:[#allocation8 + $0xa8] sm:$0xf]
        %v506 = vld [vmem:[#allocation8 + $0xac] sm:$0xf]
        %v507 = vld [vmem:[#allocation8 + $0xb0] sm:$0xf]
        %v508 = vld [vmem:[#allocation8 + $0xb4] sm:$0xf]
        %v509 = vld [vmem:[#allocation8 + $0xb8] sm:$0xf]
        %v510 = vld [vmem:[#allocation8 + $0xbc] sm:$0xf]
        %v511 = vld [vmem:[#allocation8 + $0xc0] sm:$0xf]
        %v512 = vld [vmem:[#allocation8 + $0xc4] sm:$0xf]
        %v513 = vld [vmem:[#allocation8 + $0xc8] sm:$0xf]
        %v514 = vld [vmem:[#allocation8 + $0xcc] sm:$0xf]
        %v515 = vld [vmem:[#allocation8 + $0xd0] sm:$0xf]
        %v516 = vld [vmem:[#allocation8 + $0xd4] sm:$0xf]
        %v517 = vld [vmem:[#allocation8 + $0xd8] sm:$0xf]
        %v518 = vld [vmem:[#allocation8 + $0xdc] sm:$0xf]
        %v519 = vld [vmem:[#allocation8 + $0xe0] sm:$0xf]
        %v520 = vld [vmem:[#allocation8 + $0xe4] sm:$0xf]
        %v521 = vld [vmem:[#allocation8 + $0xe8] sm:$0xf]
        %v522 = vld [vmem:[#allocation8 + $0xec] sm:$0xf]
        %v523 = vld [vmem:[#allocation8 + $0xf0] sm:$0xf]
        %v524 = vld [vmem:[#allocation8 + $0xf4] sm:$0xf]
        %v525 = vld [vmem:[#allocation8 + $0xf8] sm:$0xf]
        %v526 = vld [vmem:[#allocation8 + $0xfc] sm:$0xf]
        %v527 = vld [vmem:[%s6] sm:$0xf]
        %v529 = vperm.slane %v527, 0
        %v530 = vperm.slane %v527, 1
        %v531 = vperm.slane %v527, 2
        %v532 = vperm.slane %v527, 3
        %v541 = vunpack.c.l.b16 %v459
        %v542 = vunpack.c.l.b16 %v460
        %v543 = vunpack.c.l.b16 %v461
        %v544 = vunpack.c.l.b16 %v462
        %v545 = vpack.c.b16 %v542, %v541
        %v546 = vpack.c.b16 %v544, %v543
        %v613 = vunpack.c.l.b16 %v463
        %v614 = vunpack.c.l.b16 %v464
        %v615 = vunpack.c.l.b16 %v465
        %v616 = vunpack.c.l.b16 %v466
        %v617 = vunpack.c.l.b16 %v467
        %v618 = vunpack.c.l.b16 %v468
        %v619 = vunpack.c.l.b16 %v469
        %v620 = vunpack.c.l.b16 %v470
        %v621 = vunpack.c.l.b16 %v471
        %v622 = vunpack.c.l.b16 %v472
        %v623 = vunpack.c.l.b16 %v473
        %v624 = vunpack.c.l.b16 %v474
        %v625 = vunpack.c.l.b16 %v475
        %v626 = vunpack.c.l.b16 %v476
        %v627 = vunpack.c.l.b16 %v477
        %v628 = vunpack.c.l.b16 %v478
        %v629 = vunpack.c.l.b16 %v479
        %v630 = vunpack.c.l.b16 %v480
        %v631 = vunpack.c.l.b16 %v481
        %v632 = vunpack.c.l.b16 %v482
        %v633 = vunpack.c.l.b16 %v483
        %v634 = vunpack.c.l.b16 %v484
        %v635 = vunpack.c.l.b16 %v485
        %v636 = vunpack.c.l.b16 %v486
        %v637 = vunpack.c.l.b16 %v487
        %v638 = vunpack.c.l.b16 %v488
        %v639 = vunpack.c.l.b16 %v489
        %v640 = vunpack.c.l.b16 %v490
        %v641 = vunpack.c.l.b16 %v491
        %v642 = vunpack.c.l.b16 %v492
        %v643 = vunpack.c.l.b16 %v493
        %v644 = vunpack.c.l.b16 %v494
        %v645 = vunpack.c.l.b16 %v495
        %v646 = vunpack.c.l.b16 %v496
        %v647 = vunpack.c.l.b16 %v497
        %v648 = vunpack.c.l.b16 %v498
        %v649 = vunpack.c.l.b16 %v499
        %v650 = vunpack.c.l.b16 %v500
        %v651 = vunpack.c.l.b16 %v501
        %v652 = vunpack.c.l.b16 %v502
        %v653 = vunpack.c.l.b16 %v503
        %v654 = vunpack.c.l.b16 %v504
        %v655 = vunpack.c.l.b16 %v505
        %v656 = vunpack.c.l.b16 %v506
        %v657 = vunpack.c.l.b16 %v507
        %v658 = vunpack.c.l.b16 %v508
        %v659 = vunpack.c.l.b16 %v509
        %v660 = vunpack.c.l.b16 %v510
        %v661 = vunpack.c.l.b16 %v511
        %v662 = vunpack.c.l.b16 %v512
        %v663 = vunpack.c.l.b16 %v513
        %v664 = vunpack.c.l.b16 %v514
        %v665 = vunpack.c.l.b16 %v515
        %v666 = vunpack.c.l.b16 %v516
        %v667 = vunpack.c.l.b16 %v517
        %v668 = vunpack.c.l.b16 %v518
        %v669 = vunpack.c.l.b16 %v519
        %v670 = vunpack.c.l.b16 %v520
        %v671 = vunpack.c.l.b16 %v521
        %v672 = vunpack.c.l.b16 %v522
        %v673 = vunpack.c.l.b16 %v523
        %v674 = vunpack.c.l.b16 %v524
        %v675 = vunpack.c.l.b16 %v525
        %v676 = vunpack.c.l.b16 %v526
        %v677 = vpack.c.b16 %v614, %v613
        %v678 = vpack.c.b16 %v616, %v615
        %v679 = vpack.c.b16 %v618, %v617
        %v680 = vpack.c.b16 %v620, %v619
        %v681 = vpack.c.b16 %v622, %v621
        %v682 = vpack.c.b16 %v624, %v623
        %v683 = vpack.c.b16 %v626, %v625
        %v684 = vpack.c.b16 %v628, %v627
        %v685 = vpack.c.b16 %v630, %v629
        %v686 = vpack.c.b16 %v632, %v631
        %v687 = vpack.c.b16 %v634, %v633
        %v688 = vpack.c.b16 %v636, %v635
        %v689 = vpack.c.b16 %v638, %v637
        %v690 = vpack.c.b16 %v640, %v639
        %v691 = vpack.c.b16 %v642, %v641
        %v692 = vpack.c.b16 %v644, %v643
        %v693 = vpack.c.b16 %v646, %v645
        %v694 = vpack.c.b16 %v648, %v647
        %v695 = vpack.c.b16 %v650, %v649
        %v696 = vpack.c.b16 %v652, %v651
        %v697 = vpack.c.b16 %v654, %v653
        %v698 = vpack.c.b16 %v656, %v655
        %v699 = vpack.c.b16 %v658, %v657
        %v700 = vpack.c.b16 %v660, %v659
        %v701 = vpack.c.b16 %v662, %v661
        %v702 = vpack.c.b16 %v664, %v663
        %v703 = vpack.c.b16 %v666, %v665
        %v704 = vpack.c.b16 %v668, %v667
        %v705 = vpack.c.b16 %v670, %v669
        %v706 = vpack.c.b16 %v672, %v671
        %v707 = vpack.c.b16 %v674, %v673
        %v708 = vpack.c.b16 %v676, %v675
        %741 = vmatpush.bf16.xpose.msra.mxu0 %v684
        %742 = vmatpush.bf16.xpose.msra.mxu0 %v683
        %743 = vmatpush.bf16.xpose.msra.mxu0 %v682
        %744 = vmatpush.bf16.xpose.msra.mxu0 %v681
        %745 = vmatpush.bf16.xpose.msra.mxu0 %v680
        %746 = vmatpush.bf16.xpose.msra.mxu0 %v679
        %747 = vmatpush.bf16.xpose.msra.mxu0 %v678
        %748 = vmatpush.bf16.xpose.msra.mxu0 %v677
        %749 = vmatmul.bf16.gmra.mxu0 %v545
        %v750 = vpop.f32.mrf.mxu0
        %v751 = vadd.f32 %v529, %v750
        %v752 = vpop.f32.mrf.mxu0
        %v753 = vadd.f32 %v529, %v752
        %754 = vmatmul.bf16.gmra.mxu0 %v546
        %v755 = vpop.f32.mrf.mxu0
        %v756 = vadd.f32 %v529, %v755
        %v757 = vpop.f32.mrf.mxu0
        %v758 = vadd.f32 %v529, %v757
        %759 = vdwg.mxu0
        %760 = vmatpush.bf16.xpose.msra.mxu0 %v692
        %761 = vmatpush.bf16.xpose.msra.mxu0 %v691
        %762 = vmatpush.bf16.xpose.msra.mxu0 %v690
        %763 = vmatpush.bf16.xpose.msra.mxu0 %v689
        %764 = vmatpush.bf16.xpose.msra.mxu0 %v688
        %765 = vmatpush.bf16.xpose.msra.mxu0 %v687
        %766 = vmatpush.bf16.xpose.msra.mxu0 %v686
        %767 = vmatpush.bf16.xpose.msra.mxu0 %v685
        %768 = vmatmul.bf16.gmra.mxu0 %v545
        %v769 = vpop.f32.mrf.mxu0
        %v770 = vadd.f32 %v530, %v769
        %v771 = vpop.f32.mrf.mxu0
        %v772 = vadd.f32 %v530, %v771
        %773 = vmatmul.bf16.gmra.mxu0 %v546
        %v774 = vpop.f32.mrf.mxu0
        %v775 = vadd.f32 %v530, %v774
        %v776 = vpop.f32.mrf.mxu0
        %v777 = vadd.f32 %v530, %v776
        %778 = vdwg.mxu0
        %779 = vmatpush.bf16.xpose.msra.mxu0 %v700
        %780 = vmatpush.bf16.xpose.msra.mxu0 %v699
        %781 = vmatpush.bf16.xpose.msra.mxu0 %v698
        %782 = vmatpush.bf16.xpose.msra.mxu0 %v697
        %783 = vmatpush.bf16.xpose.msra.mxu0 %v696
        %784 = vmatpush.bf16.xpose.msra.mxu0 %v695
        %785 = vmatpush.bf16.xpose.msra.mxu0 %v694
        %786 = vmatpush.bf16.xpose.msra.mxu0 %v693
        %787 = vmatmul.bf16.gmra.mxu0 %v545
        %v788 = vpop.f32.mrf.mxu0
        %v789 = vadd.f32 %v531, %v788
        %v790 = vpop.f32.mrf.mxu0
        %v791 = vadd.f32 %v531, %v790
        %792 = vmatmul.bf16.gmra.mxu0 %v546
        %v793 = vpop.f32.mrf.mxu0
        %v794 = vadd.f32 %v531, %v793
        %v795 = vpop.f32.mrf.mxu0
        %v796 = vadd.f32 %v531, %v795
        %797 = vdwg.mxu0
        %798 = vmatpush.bf16.xpose.msra.mxu0 %v708
        %799 = vmatpush.bf16.xpose.msra.mxu0 %v707
        %800 = vmatpush.bf16.xpose.msra.mxu0 %v706
        %801 = vmatpush.bf16.xpose.msra.mxu0 %v705
        %802 = vmatpush.bf16.xpose.msra.mxu0 %v704
        %803 = vmatpush.bf16.xpose.msra.mxu0 %v703
        %804 = vmatpush.bf16.xpose.msra.mxu0 %v702
        %805 = vmatpush.bf16.xpose.msra.mxu0 %v701
        %806 = vmatmul.bf16.gmra.mxu0 %v545
        %v807 = vpop.f32.mrf.mxu0
        %v808 = vadd.f32 %v532, %v807
        %v809 = vpop.f32.mrf.mxu0
        %v810 = vadd.f32 %v532, %v809
        %811 = vmatmul.bf16.gmra.mxu0 %v546
        %v812 = vpop.f32.mrf.mxu0
        %v813 = vadd.f32 %v532, %v812
        %v814 = vpop.f32.mrf.mxu0
        %v815 = vadd.f32 %v532, %v814
        %816 = vdwg.mxu0
        %817 = vst [vmem:[#allocation2] sm:$0xff] %v751
        %818 = vst [vmem:[#allocation2 + $0x8] sm:$0xff] %v770
        %819 = vst [vmem:[#allocation2 + $0x10] sm:$0xff] %v789
        %820 = vst [vmem:[#allocation2 + $0x18] sm:$0xff] %v808
        %821 = vst [vmem:[#allocation2 + $0x20] sm:$0xff] %v753
        %822 = vst [vmem:[#allocation2 + $0x28] sm:$0xff] %v772
        %823 = vst [vmem:[#allocation2 + $0x30] sm:$0xff] %v791
        %824 = vst [vmem:[#allocation2 + $0x38] sm:$0xff] %v810
        %825 = vst [vmem:[#allocation2 + $0x40] sm:$0xff] %v756
        %826 = vst [vmem:[#allocation2 + $0x48] sm:$0xff] %v775
        %827 = vst [vmem:[#allocation2 + $0x50] sm:$0xff] %v794
        %828 = vst [vmem:[#allocation2 + $0x58] sm:$0xff] %v813
        %829 = vst [vmem:[#allocation2 + $0x60] sm:$0xff] %v758
        %830 = vst [vmem:[#allocation2 + $0x68] sm:$0xff] %v777
        %831 = vst [vmem:[#allocation2 + $0x70] sm:$0xff] %v796
        %832 = vst [vmem:[#allocation2 + $0x78] sm:$0xff] %v815
        %v833 = vld [vmem:[%s434] sm:$0xf]
        %v834 = vld [vmem:[%s434 + $0x4] sm:$0xf]
        %v835 = vld [vmem:[%s434 + $0x8] sm:$0xf]
        %v836 = vld [vmem:[%s434 + $0xc] sm:$0xf]
        %v837 = vld [vmem:[#allocation10] sm:$0xf]
        %v838 = vld [vmem:[#allocation10 + $0x4] sm:$0xf]
        %v839 = vld [vmem:[#allocation10 + $0x8] sm:$0xf]
        %v840 = vld [vmem:[#allocation10 + $0xc] sm:$0xf]
        %v841 = vld [vmem:[#allocation10 + $0x10] sm:$0xf]
        %v842 = vld [vmem:[#allocation10 + $0x14] sm:$0xf]
        %v843 = vld [vmem:[#allocation10 + $0x18] sm:$0xf]
        %v844 = vld [vmem:[#allocation10 + $0x1c] sm:$0xf]
        %v845 = vld [vmem:[#allocation10 + $0x20] sm:$0xf]
        %v846 = vld [vmem:[#allocation10 + $0x24] sm:$0xf]
        %v847 = vld [vmem:[#allocation10 + $0x28] sm:$0xf]
        %v848 = vld [vmem:[#allocation10 + $0x2c] sm:$0xf]
        %v849 = vld [vmem:[#allocation10 + $0x30] sm:$0xf]
        %v850 = vld [vmem:[#allocation10 + $0x34] sm:$0xf]
        %v851 = vld [vmem:[#allocation10 + $0x38] sm:$0xf]
        %v852 = vld [vmem:[#allocation10 + $0x3c] sm:$0xf]
        %v853 = vld [vmem:[#allocation10 + $0x40] sm:$0xf]
        %v854 = vld [vmem:[#allocation10 + $0x44] sm:$0xf]
        %v855 = vld [vmem:[#allocation10 + $0x48] sm:$0xf]
        %v856 = vld [vmem:[#allocation10 + $0x4c] sm:$0xf]
        %v857 = vld [vmem:[#allocation10 + $0x50] sm:$0xf]
        %v858 = vld [vmem:[#allocation10 + $0x54] sm:$0xf]
        %v859 = vld [vmem:[#allocation10 + $0x58] sm:$0xf]
        %v860 = vld [vmem:[#allocation10 + $0x5c] sm:$0xf]
        %v861 = vld [vmem:[#allocation10 + $0x60] sm:$0xf]
        %v862 = vld [vmem:[#allocation10 + $0x64] sm:$0xf]
        %v863 = vld [vmem:[#allocation10 + $0x68] sm:$0xf]
        %v864 = vld [vmem:[#allocation10 + $0x6c] sm:$0xf]
        %v865 = vld [vmem:[#allocation10 + $0x70] sm:$0xf]
        %v866 = vld [vmem:[#allocation10 + $0x74] sm:$0xf]
        %v867 = vld [vmem:[#allocation10 + $0x78] sm:$0xf]
        %v868 = vld [vmem:[#allocation10 + $0x7c] sm:$0xf]
        %v869 = vld [vmem:[#allocation10 + $0x80] sm:$0xf]
        %v870 = vld [vmem:[#allocation10 + $0x84] sm:$0xf]
        %v871 = vld [vmem:[#allocation10 + $0x88] sm:$0xf]
        %v872 = vld [vmem:[#allocation10 + $0x8c] sm:$0xf]
        %v873 = vld [vmem:[#allocation10 + $0x90] sm:$0xf]
        %v874 = vld [vmem:[#allocation10 + $0x94] sm:$0xf]
        %v875 = vld [vmem:[#allocation10 + $0x98] sm:$0xf]
        %v876 = vld [vmem:[#allocation10 + $0x9c] sm:$0xf]
        %v877 = vld [vmem:[#allocation10 + $0xa0] sm:$0xf]
        %v878 = vld [vmem:[#allocation10 + $0xa4] sm:$0xf]
        %v879 = vld [vmem:[#allocation10 + $0xa8] sm:$0xf]
        %v880 = vld [vmem:[#allocation10 + $0xac] sm:$0xf]
        %v881 = vld [vmem:[#allocation10 + $0xb0] sm:$0xf]
        %v882 = vld [vmem:[#allocation10 + $0xb4] sm:$0xf]
        %v883 = vld [vmem:[#allocation10 + $0xb8] sm:$0xf]
        %v884 = vld [vmem:[#allocation10 + $0xbc] sm:$0xf]
        %v885 = vld [vmem:[#allocation10 + $0xc0] sm:$0xf]
        %v886 = vld [vmem:[#allocation10 + $0xc4] sm:$0xf]
        %v887 = vld [vmem:[#allocation10 + $0xc8] sm:$0xf]
        %v888 = vld [vmem:[#allocation10 + $0xcc] sm:$0xf]
        %v889 = vld [vmem:[#allocation10 + $0xd0] sm:$0xf]
        %v890 = vld [vmem:[#allocation10 + $0xd4] sm:$0xf]
        %v891 = vld [vmem:[#allocation10 + $0xd8] sm:$0xf]
        %v892 = vld [vmem:[#allocation10 + $0xdc] sm:$0xf]
        %v893 = vld [vmem:[#allocation10 + $0xe0] sm:$0xf]
        %v894 = vld [vmem:[#allocation10 + $0xe4] sm:$0xf]
        %v895 = vld [vmem:[#allocation10 + $0xe8] sm:$0xf]
        %v896 = vld [vmem:[#allocation10 + $0xec] sm:$0xf]
        %v897 = vld [vmem:[#allocation10 + $0xf0] sm:$0xf]
        %v898 = vld [vmem:[#allocation10 + $0xf4] sm:$0xf]
        %v899 = vld [vmem:[#allocation10 + $0xf8] sm:$0xf]
        %v900 = vld [vmem:[#allocation10 + $0xfc] sm:$0xf]
        %v901 = vld [vmem:[%s7] sm:$0xf]
        %v903 = vperm.slane %v901, 0
        %v904 = vperm.slane %v901, 1
        %v905 = vperm.slane %v901, 2
        %v906 = vperm.slane %v901, 3
        %v915 = vunpack.c.l.b16 %v833
        %v916 = vunpack.c.l.b16 %v834
        %v917 = vunpack.c.l.b16 %v835
        %v918 = vunpack.c.l.b16 %v836
        %v919 = vpack.c.b16 %v916, %v915
        %v920 = vpack.c.b16 %v918, %v917
        %v987 = vunpack.c.l.b16 %v837
        %v988 = vunpack.c.l.b16 %v838
        %v989 = vunpack.c.l.b16 %v839
        %v990 = vunpack.c.l.b16 %v840
        %v991 = vunpack.c.l.b16 %v841
        %v992 = vunpack.c.l.b16 %v842
        %v993 = vunpack.c.l.b16 %v843
        %v994 = vunpack.c.l.b16 %v844
        %v995 = vunpack.c.l.b16 %v845
        %v996 = vunpack.c.l.b16 %v846
        %v997 = vunpack.c.l.b16 %v847
        %v998 = vunpack.c.l.b16 %v848
        %v999 = vunpack.c.l.b16 %v849
        %v1000 = vunpack.c.l.b16 %v850
        %v1001 = vunpack.c.l.b16 %v851
        %v1002 = vunpack.c.l.b16 %v852
        %v1003 = vunpack.c.l.b16 %v853
        %v1004 = vunpack.c.l.b16 %v854
        %v1005 = vunpack.c.l.b16 %v855
        %v1006 = vunpack.c.l.b16 %v856
        %v1007 = vunpack.c.l.b16 %v857
        %v1008 = vunpack.c.l.b16 %v858
        %v1009 = vunpack.c.l.b16 %v859
        %v1010 = vunpack.c.l.b16 %v860
        %v1011 = vunpack.c.l.b16 %v861
        %v1012 = vunpack.c.l.b16 %v862
        %v1013 = vunpack.c.l.b16 %v863
        %v1014 = vunpack.c.l.b16 %v864
        %v1015 = vunpack.c.l.b16 %v865
        %v1016 = vunpack.c.l.b16 %v866
        %v1017 = vunpack.c.l.b16 %v867
        %v1018 = vunpack.c.l.b16 %v868
        %v1019 = vunpack.c.l.b16 %v869
        %v1020 = vunpack.c.l.b16 %v870
        %v1021 = vunpack.c.l.b16 %v871
        %v1022 = vunpack.c.l.b16 %v872
        %v1023 = vunpack.c.l.b16 %v873
        %v1024 = vunpack.c.l.b16 %v874
        %v1025 = vunpack.c.l.b16 %v875
        %v1026 = vunpack.c.l.b16 %v876
        %v1027 = vunpack.c.l.b16 %v877
        %v1028 = vunpack.c.l.b16 %v878
        %v1029 = vunpack.c.l.b16 %v879
        %v1030 = vunpack.c.l.b16 %v880
        %v1031 = vunpack.c.l.b16 %v881
        %v1032 = vunpack.c.l.b16 %v882
        %v1033 = vunpack.c.l.b16 %v883
        %v1034 = vunpack.c.l.b16 %v884
        %v1035 = vunpack.c.l.b16 %v885
        %v1036 = vunpack.c.l.b16 %v886
        %v1037 = vunpack.c.l.b16 %v887
        %v1038 = vunpack.c.l.b16 %v888
        %v1039 = vunpack.c.l.b16 %v889
        %v1040 = vunpack.c.l.b16 %v890
        %v1041 = vunpack.c.l.b16 %v891
        %v1042 = vunpack.c.l.b16 %v892
        %v1043 = vunpack.c.l.b16 %v893
        %v1044 = vunpack.c.l.b16 %v894
        %v1045 = vunpack.c.l.b16 %v895
        %v1046 = vunpack.c.l.b16 %v896
        %v1047 = vunpack.c.l.b16 %v897
        %v1048 = vunpack.c.l.b16 %v898
        %v1049 = vunpack.c.l.b16 %v899
        %v1050 = vunpack.c.l.b16 %v900
        %v1051 = vpack.c.b16 %v988, %v987
        %v1052 = vpack.c.b16 %v990, %v989
        %v1053 = vpack.c.b16 %v992, %v991
        %v1054 = vpack.c.b16 %v994, %v993
        %v1055 = vpack.c.b16 %v996, %v995
        %v1056 = vpack.c.b16 %v998, %v997
        %v1057 = vpack.c.b16 %v1000, %v999
        %v1058 = vpack.c.b16 %v1002, %v1001
        %v1059 = vpack.c.b16 %v1004, %v1003
        %v1060 = vpack.c.b16 %v1006, %v1005
        %v1061 = vpack.c.b16 %v1008, %v1007
        %v1062 = vpack.c.b16 %v1010, %v1009
        %v1063 = vpack.c.b16 %v1012, %v1011
        %v1064 = vpack.c.b16 %v1014, %v1013
        %v1065 = vpack.c.b16 %v1016, %v1015
        %v1066 = vpack.c.b16 %v1018, %v1017
        %v1067 = vpack.c.b16 %v1020, %v1019
        %v1068 = vpack.c.b16 %v1022, %v1021
        %v1069 = vpack.c.b16 %v1024, %v1023
        %v1070 = vpack.c.b16 %v1026, %v1025
        %v1071 = vpack.c.b16 %v1028, %v1027
        %v1072 = vpack.c.b16 %v1030, %v1029
        %v1073 = vpack.c.b16 %v1032, %v1031
        %v1074 = vpack.c.b16 %v1034, %v1033
        %v1075 = vpack.c.b16 %v1036, %v1035
        %v1076 = vpack.c.b16 %v1038, %v1037
        %v1077 = vpack.c.b16 %v1040, %v1039
        %v1078 = vpack.c.b16 %v1042, %v1041
        %v1079 = vpack.c.b16 %v1044, %v1043
        %v1080 = vpack.c.b16 %v1046, %v1045
        %v1081 = vpack.c.b16 %v1048, %v1047
        %v1082 = vpack.c.b16 %v1050, %v1049
        %1115 = vmatpush.bf16.xpose.msra.mxu0 %v1058
        %1116 = vmatpush.bf16.xpose.msra.mxu0 %v1057
        %1117 = vmatpush.bf16.xpose.msra.mxu0 %v1056
        %1118 = vmatpush.bf16.xpose.msra.mxu0 %v1055
        %1119 = vmatpush.bf16.xpose.msra.mxu0 %v1054
        %1120 = vmatpush.bf16.xpose.msra.mxu0 %v1053
        %1121 = vmatpush.bf16.xpose.msra.mxu0 %v1052
        %1122 = vmatpush.bf16.xpose.msra.mxu0 %v1051
        %1123 = vmatmul.bf16.gmra.mxu0 %v919
        %v1124 = vpop.f32.mrf.mxu0
        %v1125 = vadd.f32 %v903, %v1124
        %v1126 = vpop.f32.mrf.mxu0
        %v1127 = vadd.f32 %v903, %v1126
        %1128 = vmatmul.bf16.gmra.mxu0 %v920
        %v1129 = vpop.f32.mrf.mxu0
        %v1130 = vadd.f32 %v903, %v1129
        %v1131 = vpop.f32.mrf.mxu0
        %v1132 = vadd.f32 %v903, %v1131
        %1133 = vdwg.mxu0
        %1134 = vmatpush.bf16.xpose.msra.mxu0 %v1066
        %1135 = vmatpush.bf16.xpose.msra.mxu0 %v1065
        %1136 = vmatpush.bf16.xpose.msra.mxu0 %v1064
        %1137 = vmatpush.bf16.xpose.msra.mxu0 %v1063
        %1138 = vmatpush.bf16.xpose.msra.mxu0 %v1062
        %1139 = vmatpush.bf16.xpose.msra.mxu0 %v1061
        %1140 = vmatpush.bf16.xpose.msra.mxu0 %v1060
        %1141 = vmatpush.bf16.xpose.msra.mxu0 %v1059
        %1142 = vmatmul.bf16.gmra.mxu0 %v919
        %v1143 = vpop.f32.mrf.mxu0
        %v1144 = vadd.f32 %v904, %v1143
        %v1145 = vpop.f32.mrf.mxu0
        %v1146 = vadd.f32 %v904, %v1145
        %1147 = vmatmul.bf16.gmra.mxu0 %v920
        %v1148 = vpop.f32.mrf.mxu0
        %v1149 = vadd.f32 %v904, %v1148
        %v1150 = vpop.f32.mrf.mxu0
        %v1151 = vadd.f32 %v904, %v1150
        %1152 = vdwg.mxu0
        %1153 = vmatpush.bf16.xpose.msra.mxu0 %v1074
        %1154 = vmatpush.bf16.xpose.msra.mxu0 %v1073
        %1155 = vmatpush.bf16.xpose.msra.mxu0 %v1072
        %1156 = vmatpush.bf16.xpose.msra.mxu0 %v1071
        %1157 = vmatpush.bf16.xpose.msra.mxu0 %v1070
        %1158 = vmatpush.bf16.xpose.msra.mxu0 %v1069
        %1159 = vmatpush.bf16.xpose.msra.mxu0 %v1068
        %1160 = vmatpush.bf16.xpose.msra.mxu0 %v1067
        %1161 = vmatmul.bf16.gmra.mxu0 %v919
        %v1162 = vpop.f32.mrf.mxu0
        %v1163 = vadd.f32 %v905, %v1162
        %v1164 = vpop.f32.mrf.mxu0
        %v1165 = vadd.f32 %v905, %v1164
        %1166 = vmatmul.bf16.gmra.mxu0 %v920
        %v1167 = vpop.f32.mrf.mxu0
        %v1168 = vadd.f32 %v905, %v1167
        %v1169 = vpop.f32.mrf.mxu0
        %v1170 = vadd.f32 %v905, %v1169
        %1171 = vdwg.mxu0
        %1172 = vmatpush.bf16.xpose.msra.mxu0 %v1082
        %1173 = vmatpush.bf16.xpose.msra.mxu0 %v1081
        %1174 = vmatpush.bf16.xpose.msra.mxu0 %v1080
        %1175 = vmatpush.bf16.xpose.msra.mxu0 %v1079
        %1176 = vmatpush.bf16.xpose.msra.mxu0 %v1078
        %1177 = vmatpush.bf16.xpose.msra.mxu0 %v1077
        %1178 = vmatpush.bf16.xpose.msra.mxu0 %v1076
        %1179 = vmatpush.bf16.xpose.msra.mxu0 %v1075
        %1180 = vmatmul.bf16.gmra.mxu0 %v919
        %v1181 = vpop.f32.mrf.mxu0
        %v1182 = vadd.f32 %v906, %v1181
        %v1183 = vpop.f32.mrf.mxu0
        %v1184 = vadd.f32 %v906, %v1183
        %1185 = vmatmul.bf16.gmra.mxu0 %v920
        %v1186 = vpop.f32.mrf.mxu0
        %v1187 = vadd.f32 %v906, %v1186
        %v1188 = vpop.f32.mrf.mxu0
        %v1189 = vadd.f32 %v906, %v1188
        %1190 = vdwg.mxu0
        %1191 = vst [vmem:[#allocation3] sm:$0xff] %v1125
        %1192 = vst [vmem:[#allocation3 + $0x8] sm:$0xff] %v1144
        %1193 = vst [vmem:[#allocation3 + $0x10] sm:$0xff] %v1163
        %1194 = vst [vmem:[#allocation3 + $0x18] sm:$0xff] %v1182
        %1195 = vst [vmem:[#allocation3 + $0x20] sm:$0xff] %v1127
        %1196 = vst [vmem:[#allocation3 + $0x28] sm:$0xff] %v1146
        %1197 = vst [vmem:[#allocation3 + $0x30] sm:$0xff] %v1165
        %1198 = vst [vmem:[#allocation3 + $0x38] sm:$0xff] %v1184
        %1199 = vst [vmem:[#allocation3 + $0x40] sm:$0xff] %v1130
        %1200 = vst [vmem:[#allocation3 + $0x48] sm:$0xff] %v1149
        %1201 = vst [vmem:[#allocation3 + $0x50] sm:$0xff] %v1168
        %1202 = vst [vmem:[#allocation3 + $0x58] sm:$0xff] %v1187
        %1203 = vst [vmem:[#allocation3 + $0x60] sm:$0xff] %v1132
        %1204 = vst [vmem:[#allocation3 + $0x68] sm:$0xff] %v1151
        %1205 = vst [vmem:[#allocation3 + $0x70] sm:$0xff] %v1170
        %1206 = vst [vmem:[#allocation3 + $0x78] sm:$0xff] %v1189
        %v1207 = vld [vmem:[#allocation12] sm:$0xf]
        %v1208 = vld [vmem:[#allocation12 + $0x4] sm:$0xf]
        %v1209 = vld [vmem:[#allocation12 + $0x8] sm:$0xf]
        %v1210 = vld [vmem:[#allocation12 + $0xc] sm:$0xf]
        %v1211 = vld [vmem:[#allocation12 + $0x10] sm:$0xf]
        %v1212 = vld [vmem:[#allocation12 + $0x14] sm:$0xf]
        %v1213 = vld [vmem:[#allocation12 + $0x18] sm:$0xf]
        %v1214 = vld [vmem:[#allocation12 + $0x1c] sm:$0xf]
        %v1215 = vld [vmem:[#allocation12 + $0x20] sm:$0xf]
        %v1216 = vld [vmem:[#allocation12 + $0x24] sm:$0xf]
        %v1217 = vld [vmem:[#allocation12 + $0x28] sm:$0xf]
        %v1218 = vld [vmem:[#allocation12 + $0x2c] sm:$0xf]
        %v1219 = vld [vmem:[#allocation12 + $0x30] sm:$0xf]
        %v1220 = vld [vmem:[#allocation12 + $0x34] sm:$0xf]
        %v1221 = vld [vmem:[#allocation12 + $0x38] sm:$0xf]
        %v1222 = vld [vmem:[#allocation12 + $0x3c] sm:$0xf]
        %v1223 = vld [vmem:[#allocation12 + $0x40] sm:$0xf]
        %v1224 = vld [vmem:[#allocation12 + $0x44] sm:$0xf]
        %v1225 = vld [vmem:[#allocation12 + $0x48] sm:$0xf]
        %v1226 = vld [vmem:[#allocation12 + $0x4c] sm:$0xf]
        %v1227 = vld [vmem:[#allocation12 + $0x50] sm:$0xf]
        %v1228 = vld [vmem:[#allocation12 + $0x54] sm:$0xf]
        %v1229 = vld [vmem:[#allocation12 + $0x58] sm:$0xf]
        %v1230 = vld [vmem:[#allocation12 + $0x5c] sm:$0xf]
        %v1231 = vld [vmem:[#allocation12 + $0x60] sm:$0xf]
        %v1232 = vld [vmem:[#allocation12 + $0x64] sm:$0xf]
        %v1233 = vld [vmem:[#allocation12 + $0x68] sm:$0xf]
        %v1234 = vld [vmem:[#allocation12 + $0x6c] sm:$0xf]
        %v1235 = vld [vmem:[#allocation12 + $0x70] sm:$0xf]
        %v1236 = vld [vmem:[#allocation12 + $0x74] sm:$0xf]
        %v1237 = vld [vmem:[#allocation12 + $0x78] sm:$0xf]
        %v1238 = vld [vmem:[#allocation12 + $0x7c] sm:$0xf]
        %v1239 = vld [vmem:[#allocation12 + $0x80] sm:$0xf]
        %v1240 = vld [vmem:[#allocation12 + $0x84] sm:$0xf]
        %v1241 = vld [vmem:[#allocation12 + $0x88] sm:$0xf]
        %v1242 = vld [vmem:[#allocation12 + $0x8c] sm:$0xf]
        %v1243 = vld [vmem:[#allocation12 + $0x90] sm:$0xf]
        %v1244 = vld [vmem:[#allocation12 + $0x94] sm:$0xf]
        %v1245 = vld [vmem:[#allocation12 + $0x98] sm:$0xf]
        %v1246 = vld [vmem:[#allocation12 + $0x9c] sm:$0xf]
        %v1247 = vld [vmem:[#allocation12 + $0xa0] sm:$0xf]
        %v1248 = vld [vmem:[#allocation12 + $0xa4] sm:$0xf]
        %v1249 = vld [vmem:[#allocation12 + $0xa8] sm:$0xf]
        %v1250 = vld [vmem:[#allocation12 + $0xac] sm:$0xf]
        %v1251 = vld [vmem:[#allocation12 + $0xb0] sm:$0xf]
        %v1252 = vld [vmem:[#allocation12 + $0xb4] sm:$0xf]
        %v1253 = vld [vmem:[#allocation12 + $0xb8] sm:$0xf]
        %v1254 = vld [vmem:[#allocation12 + $0xbc] sm:$0xf]
        %v1255 = vld [vmem:[#allocation12 + $0xc0] sm:$0xf]
        %v1256 = vld [vmem:[#allocation12 + $0xc4] sm:$0xf]
        %v1257 = vld [vmem:[#allocation12 + $0xc8] sm:$0xf]
        %v1258 = vld [vmem:[#allocation12 + $0xcc] sm:$0xf]
        %v1259 = vld [vmem:[#allocation12 + $0xd0] sm:$0xf]
        %v1260 = vld [vmem:[#allocation12 + $0xd4] sm:$0xf]
        %v1261 = vld [vmem:[#allocation12 + $0xd8] sm:$0xf]
        %v1262 = vld [vmem:[#allocation12 + $0xdc] sm:$0xf]
        %v1263 = vld [vmem:[#allocation12 + $0xe0] sm:$0xf]
        %v1264 = vld [vmem:[#allocation12 + $0xe4] sm:$0xf]
        %v1265 = vld [vmem:[#allocation12 + $0xe8] sm:$0xf]
        %v1266 = vld [vmem:[#allocation12 + $0xec] sm:$0xf]
        %v1267 = vld [vmem:[#allocation12 + $0xf0] sm:$0xf]
        %v1268 = vld [vmem:[#allocation12 + $0xf4] sm:$0xf]
        %v1269 = vld [vmem:[#allocation12 + $0xf8] sm:$0xf]
        %v1270 = vld [vmem:[#allocation12 + $0xfc] sm:$0xf]
        %v1271 = vld [vmem:[#allocation13] sm:$0xf]
        %v1272 = vld [vmem:[#allocation13 + $0x4] sm:$0xf]
        %v1273 = vld [vmem:[#allocation13 + $0x8] sm:$0xf]
        %v1274 = vld [vmem:[#allocation13 + $0xc] sm:$0xf]
        %v1275 = vld [vmem:[#allocation13 + $0x10] sm:$0xf]
        %v1276 = vld [vmem:[#allocation13 + $0x14] sm:$0xf]
        %v1277 = vld [vmem:[#allocation13 + $0x18] sm:$0xf]
        %v1278 = vld [vmem:[#allocation13 + $0x1c] sm:$0xf]
        %v1279 = vld [vmem:[#allocation13 + $0x20] sm:$0xf]
        %v1280 = vld [vmem:[#allocation13 + $0x24] sm:$0xf]
        %v1281 = vld [vmem:[#allocation13 + $0x28] sm:$0xf]
        %v1282 = vld [vmem:[#allocation13 + $0x2c] sm:$0xf]
        %v1283 = vld [vmem:[#allocation13 + $0x30] sm:$0xf]
        %v1284 = vld [vmem:[#allocation13 + $0x34] sm:$0xf]
        %v1285 = vld [vmem:[#allocation13 + $0x38] sm:$0xf]
        %v1286 = vld [vmem:[#allocation13 + $0x3c] sm:$0xf]
        %v1287 = vld [vmem:[#allocation13 + $0x40] sm:$0xf]
        %v1288 = vld [vmem:[#allocation13 + $0x44] sm:$0xf]
        %v1289 = vld [vmem:[#allocation13 + $0x48] sm:$0xf]
        %v1290 = vld [vmem:[#allocation13 + $0x4c] sm:$0xf]
        %v1291 = vld [vmem:[#allocation13 + $0x50] sm:$0xf]
        %v1292 = vld [vmem:[#allocation13 + $0x54] sm:$0xf]
        %v1293 = vld [vmem:[#allocation13 + $0x58] sm:$0xf]
        %v1294 = vld [vmem:[#allocation13 + $0x5c] sm:$0xf]
        %v1295 = vld [vmem:[#allocation13 + $0x60] sm:$0xf]
        %v1296 = vld [vmem:[#allocation13 + $0x64] sm:$0xf]
        %v1297 = vld [vmem:[#allocation13 + $0x68] sm:$0xf]
        %v1298 = vld [vmem:[#allocation13 + $0x6c] sm:$0xf]
        %v1299 = vld [vmem:[#allocation13 + $0x70] sm:$0xf]
        %v1300 = vld [vmem:[#allocation13 + $0x74] sm:$0xf]
        %v1301 = vld [vmem:[#allocation13 + $0x78] sm:$0xf]
        %v1302 = vld [vmem:[#allocation13 + $0x7c] sm:$0xf]
        %v1303 = vld [vmem:[#allocation13 + $0x80] sm:$0xf]
        %v1304 = vld [vmem:[#allocation13 + $0x84] sm:$0xf]
        %v1305 = vld [vmem:[#allocation13 + $0x88] sm:$0xf]
        %v1306 = vld [vmem:[#allocation13 + $0x8c] sm:$0xf]
        %v1307 = vld [vmem:[#allocation13 + $0x90] sm:$0xf]
        %v1308 = vld [vmem:[#allocation13 + $0x94] sm:$0xf]
        %v1309 = vld [vmem:[#allocation13 + $0x98] sm:$0xf]
        %v1310 = vld [vmem:[#allocation13 + $0x9c] sm:$0xf]
        %v1311 = vld [vmem:[#allocation13 + $0xa0] sm:$0xf]
        %v1312 = vld [vmem:[#allocation13 + $0xa4] sm:$0xf]
        %v1313 = vld [vmem:[#allocation13 + $0xa8] sm:$0xf]
        %v1314 = vld [vmem:[#allocation13 + $0xac] sm:$0xf]
        %v1315 = vld [vmem:[#allocation13 + $0xb0] sm:$0xf]
        %v1316 = vld [vmem:[#allocation13 + $0xb4] sm:$0xf]
        %v1317 = vld [vmem:[#allocation13 + $0xb8] sm:$0xf]
        %v1318 = vld [vmem:[#allocation13 + $0xbc] sm:$0xf]
        %v1319 = vld [vmem:[#allocation13 + $0xc0] sm:$0xf]
        %v1320 = vld [vmem:[#allocation13 + $0xc4] sm:$0xf]
        %v1321 = vld [vmem:[#allocation13 + $0xc8] sm:$0xf]
        %v1322 = vld [vmem:[#allocation13 + $0xcc] sm:$0xf]
        %v1323 = vld [vmem:[#allocation13 + $0xd0] sm:$0xf]
        %v1324 = vld [vmem:[#allocation13 + $0xd4] sm:$0xf]
        %v1325 = vld [vmem:[#allocation13 + $0xd8] sm:$0xf]
        %v1326 = vld [vmem:[#allocation13 + $0xdc] sm:$0xf]
        %v1327 = vld [vmem:[#allocation13 + $0xe0] sm:$0xf]
        %v1328 = vld [vmem:[#allocation13 + $0xe4] sm:$0xf]
        %v1329 = vld [vmem:[#allocation13 + $0xe8] sm:$0xf]
        %v1330 = vld [vmem:[#allocation13 + $0xec] sm:$0xf]
        %v1331 = vld [vmem:[#allocation13 + $0xf0] sm:$0xf]
        %v1332 = vld [vmem:[#allocation13 + $0xf4] sm:$0xf]
        %v1333 = vld [vmem:[#allocation13 + $0xf8] sm:$0xf]
        %v1334 = vld [vmem:[#allocation13 + $0xfc] sm:$0xf]
        %v1335 = vld [vmem:[#allocation4] sm:$0xff]
        %v1336 = vld [vmem:[#allocation5] sm:$0xff]
        %v1337 = vld [vmem:[#allocation6] sm:$0xff]
        %v1338 = vld [vmem:[#allocation7] sm:$0xff]
        %v1339 = vld [vmem:[#allocation2] sm:$0xff]
        %v1340 = vld [vmem:[#allocation2 + $0x8] sm:$0xff]
        %v1341 = vld [vmem:[#allocation2 + $0x10] sm:$0xff]
        %v1342 = vld [vmem:[#allocation2 + $0x18] sm:$0xff]
        %v1343 = vpack.c.bf16 %v1335, %v1335
        %v1408 = vunpack.c.l.b16 %v1207
        %v1409 = vunpack.c.l.b16 %v1208
        %v1410 = vunpack.c.l.b16 %v1209
        %v1411 = vunpack.c.l.b16 %v1210
        %v1412 = vunpack.c.l.b16 %v1211
        %v1413 = vunpack.c.l.b16 %v1212
        %v1414 = vunpack.c.l.b16 %v1213
        %v1415 = vunpack.c.l.b16 %v1214
        %v1416 = vunpack.c.l.b16 %v1215
        %v1417 = vunpack.c.l.b16 %v1216
        %v1418 = vunpack.c.l.b16 %v1217
        %v1419 = vunpack.c.l.b16 %v1218
        %v1420 = vunpack.c.l.b16 %v1219
        %v1421 = vunpack.c.l.b16 %v1220
        %v1422 = vunpack.c.l.b16 %v1221
        %v1423 = vunpack.c.l.b16 %v1222
        %v1424 = vunpack.c.l.b16 %v1223
        %v1425 = vunpack.c.l.b16 %v1224
        %v1426 = vunpack.c.l.b16 %v1225
        %v1427 = vunpack.c.l.b16 %v1226
        %v1428 = vunpack.c.l.b16 %v1227
        %v1429 = vunpack.c.l.b16 %v1228
        %v1430 = vunpack.c.l.b16 %v1229
        %v1431 = vunpack.c.l.b16 %v1230
        %v1432 = vunpack.c.l.b16 %v1231
        %v1433 = vunpack.c.l.b16 %v1232
        %v1434 = vunpack.c.l.b16 %v1233
        %v1435 = vunpack.c.l.b16 %v1234
        %v1436 = vunpack.c.l.b16 %v1235
        %v1437 = vunpack.c.l.b16 %v1236
        %v1438 = vunpack.c.l.b16 %v1237
        %v1439 = vunpack.c.l.b16 %v1238
        %v1440 = vunpack.c.l.b16 %v1239
        %v1441 = vunpack.c.l.b16 %v1240
        %v1442 = vunpack.c.l.b16 %v1241
        %v1443 = vunpack.c.l.b16 %v1242
        %v1444 = vunpack.c.l.b16 %v1243
        %v1445 = vunpack.c.l.b16 %v1244
        %v1446 = vunpack.c.l.b16 %v1245
        %v1447 = vunpack.c.l.b16 %v1246
        %v1448 = vunpack.c.l.b16 %v1247
        %v1449 = vunpack.c.l.b16 %v1248
        %v1450 = vunpack.c.l.b16 %v1249
        %v1451 = vunpack.c.l.b16 %v1250
        %v1452 = vunpack.c.l.b16 %v1251
        %v1453 = vunpack.c.l.b16 %v1252
        %v1454 = vunpack.c.l.b16 %v1253
        %v1455 = vunpack.c.l.b16 %v1254
        %v1456 = vunpack.c.l.b16 %v1255
        %v1457 = vunpack.c.l.b16 %v1256
        %v1458 = vunpack.c.l.b16 %v1257
        %v1459 = vunpack.c.l.b16 %v1258
        %v1460 = vunpack.c.l.b16 %v1259
        %v1461 = vunpack.c.l.b16 %v1260
        %v1462 = vunpack.c.l.b16 %v1261
        %v1463 = vunpack.c.l.b16 %v1262
        %v1464 = vunpack.c.l.b16 %v1263
        %v1465 = vunpack.c.l.b16 %v1264
        %v1466 = vunpack.c.l.b16 %v1265
        %v1467 = vunpack.c.l.b16 %v1266
        %v1468 = vunpack.c.l.b16 %v1267
        %v1469 = vunpack.c.l.b16 %v1268
        %v1470 = vunpack.c.l.b16 %v1269
        %v1471 = vunpack.c.l.b16 %v1270
        %v1472 = vpack.c.b16 %v1409, %v1408
        %v1473 = vpack.c.b16 %v1411, %v1410
        %v1474 = vpack.c.b16 %v1413, %v1412
        %v1475 = vpack.c.b16 %v1415, %v1414
        %v1476 = vpack.c.b16 %v1417, %v1416
        %v1477 = vpack.c.b16 %v1419, %v1418
        %v1478 = vpack.c.b16 %v1421, %v1420
        %v1479 = vpack.c.b16 %v1423, %v1422
        %v1480 = vpack.c.b16 %v1425, %v1424
        %v1481 = vpack.c.b16 %v1427, %v1426
        %v1482 = vpack.c.b16 %v1429, %v1428
        %v1483 = vpack.c.b16 %v1431, %v1430
        %v1484 = vpack.c.b16 %v1433, %v1432
        %v1485 = vpack.c.b16 %v1435, %v1434
        %v1486 = vpack.c.b16 %v1437, %v1436
        %v1487 = vpack.c.b16 %v1439, %v1438
        %v1488 = vpack.c.b16 %v1441, %v1440
        %v1489 = vpack.c.b16 %v1443, %v1442
        %v1490 = vpack.c.b16 %v1445, %v1444
        %v1491 = vpack.c.b16 %v1447, %v1446
        %v1492 = vpack.c.b16 %v1449, %v1448
        %v1493 = vpack.c.b16 %v1451, %v1450
        %v1494 = vpack.c.b16 %v1453, %v1452
        %v1495 = vpack.c.b16 %v1455, %v1454
        %v1496 = vpack.c.b16 %v1457, %v1456
        %v1497 = vpack.c.b16 %v1459, %v1458
        %v1498 = vpack.c.b16 %v1461, %v1460
        %v1499 = vpack.c.b16 %v1463, %v1462
        %v1500 = vpack.c.b16 %v1465, %v1464
        %v1501 = vpack.c.b16 %v1467, %v1466
        %v1502 = vpack.c.b16 %v1469, %v1468
        %v1503 = vpack.c.b16 %v1471, %v1470
        %1536 = vmatpush.bf16.xpose.msra.mxu0 %v1479
        %1537 = vmatpush.bf16.xpose.msra.mxu0 %v1478
        %1538 = vmatpush.bf16.xpose.msra.mxu0 %v1477
        %1539 = vmatpush.bf16.xpose.msra.mxu0 %v1476
        %1540 = vmatpush.bf16.xpose.msra.mxu0 %v1475
        %1541 = vmatpush.bf16.xpose.msra.mxu0 %v1474
        %1542 = vmatpush.bf16.xpose.msra.mxu0 %v1473
        %1543 = vmatpush.bf16.xpose.msra.mxu0 %v1472
        %1544 = vmatmul.bf16.gmra.mxu0 %v1343
        %v1545 = vpop.f32.mrf.mxu0
        %v1546 = vadd.f32 0.0, %v1545
        %v1547 = vpop.f32.mrf.mxu0
        %1548 = vdwg.mxu0
        %1549 = vmatpush.bf16.xpose.msra.mxu0 %v1487
        %1550 = vmatpush.bf16.xpose.msra.mxu0 %v1486
        %1551 = vmatpush.bf16.xpose.msra.mxu0 %v1485
        %1552 = vmatpush.bf16.xpose.msra.mxu0 %v1484
        %1553 = vmatpush.bf16.xpose.msra.mxu0 %v1483
        %1554 = vmatpush.bf16.xpose.msra.mxu0 %v1482
        %1555 = vmatpush.bf16.xpose.msra.mxu0 %v1481
        %1556 = vmatpush.bf16.xpose.msra.mxu0 %v1480
        %1557 = vmatmul.bf16.gmra.mxu0 %v1343
        %v1558 = vpop.f32.mrf.mxu0
        %v1559 = vadd.f32 0.0, %v1558
        %v1560 = vpop.f32.mrf.mxu0
        %1561 = vdwg.mxu0
        %1562 = vmatpush.bf16.xpose.msra.mxu0 %v1495
        %1563 = vmatpush.bf16.xpose.msra.mxu0 %v1494
        %1564 = vmatpush.bf16.xpose.msra.mxu0 %v1493
        %1565 = vmatpush.bf16.xpose.msra.mxu0 %v1492
        %1566 = vmatpush.bf16.xpose.msra.mxu0 %v1491
        %1567 = vmatpush.bf16.xpose.msra.mxu0 %v1490
        %1568 = vmatpush.bf16.xpose.msra.mxu0 %v1489
        %1569 = vmatpush.bf16.xpose.msra.mxu0 %v1488
        %1570 = vmatmul.bf16.gmra.mxu0 %v1343
        %v1571 = vpop.f32.mrf.mxu0
        %v1572 = vadd.f32 0.0, %v1571
        %v1573 = vpop.f32.mrf.mxu0
        %1574 = vdwg.mxu0
        %1575 = vmatpush.bf16.xpose.msra.mxu0 %v1503
        %1576 = vmatpush.bf16.xpose.msra.mxu0 %v1502
        %1577 = vmatpush.bf16.xpose.msra.mxu0 %v1501
        %1578 = vmatpush.bf16.xpose.msra.mxu0 %v1500
        %1579 = vmatpush.bf16.xpose.msra.mxu0 %v1499
        %1580 = vmatpush.bf16.xpose.msra.mxu0 %v1498
        %1581 = vmatpush.bf16.xpose.msra.mxu0 %v1497
        %1582 = vmatpush.bf16.xpose.msra.mxu0 %v1496
        %1583 = vmatmul.bf16.gmra.mxu0 %v1343
        %v1584 = vpop.f32.mrf.mxu0
        %v1585 = vadd.f32 0.0, %v1584
        %v1586 = vpop.f32.mrf.mxu0
        %1587 = vdwg.mxu0
        %v1588 = vadd.f32 %v1339, %v1546
        %v1589 = vadd.f32 %v1340, %v1559
        %v1590 = vadd.f32 %v1341, %v1572
        %v1591 = vadd.f32 %v1342, %v1585
        %v1592 = vxor.u32 %v1588, 2147483648
        %v1593 = vmul.f32 %v1592, 1.442695
        %v1594 = vpow.pop %v1593
        %v1595 = vadd.f32 %v1594, 1.0
        %v1596 = vrcp.pop %v1595
        %v1597 = vmul.f32 %v1595, %v1596
        %v1598 = vsub.f32 1.0, %v1597
        %v1599 = vmul.f32 %v1596, %v1598
        %v1600 = vadd.f32 %v1596, %v1599
        %vm1601 = vweird.f32 %v1595
        %vm1602 = vweird.f32 %v1596
        %vm1603 = vmor %vm1601, %vm1602
        %v1604 = vsel %vm1603, %v1596, %v1600
        %v1605 = vand.u32 2147483647, %v1595
        %vm1606 = vcmp.eq.f32.partialorder %v1605, 8.507059e+37
        %v1607 = vand.u32 %v1595, 2147483648
        %v1608 = vor.u32 1.1754944e-38, %v1607
        %v1609 = vsel %vm1606, %v1608, %v1604
        %v1610 = vmul.f32 1.0, %v1609
        %v1611 = vxor.u32 %v1589, 2147483648
        %v1612 = vmul.f32 %v1611, 1.442695
        %v1613 = vpow.pop %v1612
        %v1614 = vadd.f32 %v1613, 1.0
        %v1615 = vrcp.pop %v1614
        %v1616 = vmul.f32 %v1614, %v1615
        %v1617 = vsub.f32 1.0, %v1616
        %v1618 = vmul.f32 %v1615, %v1617
        %v1619 = vadd.f32 %v1615, %v1618
        %vm1620 = vweird.f32 %v1614
        %vm1621 = vweird.f32 %v1615
        %vm1622 = vmor %vm1620, %vm1621
        %v1623 = vsel %vm1622, %v1615, %v1619
        %v1624 = vand.u32 2147483647, %v1614
        %vm1625 = vcmp.eq.f32.partialorder %v1624, 8.507059e+37
        %v1626 = vand.u32 %v1614, 2147483648
        %v1627 = vor.u32 1.1754944e-38, %v1626
        %v1628 = vsel %vm1625, %v1627, %v1623
        %v1629 = vmul.f32 1.0, %v1628
        %v1630 = vtanh.pop %v1590
        %v1631 = vxor.u32 %v1591, 2147483648
        %v1632 = vmul.f32 %v1631, 1.442695
        %v1633 = vpow.pop %v1632
        %v1634 = vadd.f32 %v1633, 1.0
        %v1635 = vrcp.pop %v1634
        %v1636 = vmul.f32 %v1634, %v1635
        %v1637 = vsub.f32 1.0, %v1636
        %v1638 = vmul.f32 %v1635, %v1637
        %v1639 = vadd.f32 %v1635, %v1638
        %vm1640 = vweird.f32 %v1634
        %vm1641 = vweird.f32 %v1635
        %vm1642 = vmor %vm1640, %vm1641
        %v1643 = vsel %vm1642, %v1635, %v1639
        %v1644 = vand.u32 2147483647, %v1634
        %vm1645 = vcmp.eq.f32.partialorder %v1644, 8.507059e+37
        %v1646 = vand.u32 %v1634, 2147483648
        %v1647 = vor.u32 1.1754944e-38, %v1646
        %v1648 = vsel %vm1645, %v1647, %v1643
        %v1649 = vmul.f32 1.0, %v1648
        %v1650 = vmul.f32 %v1629, %v1336
        %v1651 = vmul.f32 %v1610, %v1630
        %v1652 = vadd.f32 %v1650, %v1651
        %v1653 = vtanh.pop %v1652
        %v1654 = vmul.f32 %v1649, %v1653
        %v1655 = vpack.c.bf16 %v1654, %v1654
        %1656 = vst [vmem:[%s441] sm:$0xf] %v1655
        %v1657 = vld [vmem:[#allocation3 + $0x60] sm:$0xff]
        %v1658 = vld [vmem:[#allocation3 + $0x68] sm:$0xff]
        %v1659 = vld [vmem:[#allocation3 + $0x70] sm:$0xff]
        %v1660 = vld [vmem:[#allocation3 + $0x78] sm:$0xff]
        %v1661 = vpack.c.bf16 %v1337, %v1337
        %v1726 = vunpack.c.l.b16 %v1271
        %v1727 = vunpack.c.l.b16 %v1272
        %v1728 = vunpack.c.l.b16 %v1273
        %v1729 = vunpack.c.l.b16 %v1274
        %v1730 = vunpack.c.l.b16 %v1275
        %v1731 = vunpack.c.l.b16 %v1276
        %v1732 = vunpack.c.l.b16 %v1277
        %v1733 = vunpack.c.l.b16 %v1278
        %v1734 = vunpack.c.l.b16 %v1279
        %v1735 = vunpack.c.l.b16 %v1280
        %v1736 = vunpack.c.l.b16 %v1281
        %v1737 = vunpack.c.l.b16 %v1282
        %v1738 = vunpack.c.l.b16 %v1283
        %v1739 = vunpack.c.l.b16 %v1284
        %v1740 = vunpack.c.l.b16 %v1285
        %v1741 = vunpack.c.l.b16 %v1286
        %v1742 = vunpack.c.l.b16 %v1287
        %v1743 = vunpack.c.l.b16 %v1288
        %v1744 = vunpack.c.l.b16 %v1289
        %v1745 = vunpack.c.l.b16 %v1290
        %v1746 = vunpack.c.l.b16 %v1291
        %v1747 = vunpack.c.l.b16 %v1292
        %v1748 = vunpack.c.l.b16 %v1293
        %v1749 = vunpack.c.l.b16 %v1294
        %v1750 = vunpack.c.l.b16 %v1295
        %v1751 = vunpack.c.l.b16 %v1296
        %v1752 = vunpack.c.l.b16 %v1297
        %v1753 = vunpack.c.l.b16 %v1298
        %v1754 = vunpack.c.l.b16 %v1299
        %v1755 = vunpack.c.l.b16 %v1300
        %v1756 = vunpack.c.l.b16 %v1301
        %v1757 = vunpack.c.l.b16 %v1302
        %v1758 = vunpack.c.l.b16 %v1303
        %v1759 = vunpack.c.l.b16 %v1304
        %v1760 = vunpack.c.l.b16 %v1305
        %v1761 = vunpack.c.l.b16 %v1306
        %v1762 = vunpack.c.l.b16 %v1307
        %v1763 = vunpack.c.l.b16 %v1308
        %v1764 = vunpack.c.l.b16 %v1309
        %v1765 = vunpack.c.l.b16 %v1310
        %v1766 = vunpack.c.l.b16 %v1311
        %v1767 = vunpack.c.l.b16 %v1312
        %v1768 = vunpack.c.l.b16 %v1313
        %v1769 = vunpack.c.l.b16 %v1314
        %v1770 = vunpack.c.l.b16 %v1315
        %v1771 = vunpack.c.l.b16 %v1316
        %v1772 = vunpack.c.l.b16 %v1317
        %v1773 = vunpack.c.l.b16 %v1318
        %v1774 = vunpack.c.l.b16 %v1319
        %v1775 = vunpack.c.l.b16 %v1320
        %v1776 = vunpack.c.l.b16 %v1321
        %v1777 = vunpack.c.l.b16 %v1322
        %v1778 = vunpack.c.l.b16 %v1323
        %v1779 = vunpack.c.l.b16 %v1324
        %v1780 = vunpack.c.l.b16 %v1325
        %v1781 = vunpack.c.l.b16 %v1326
        %v1782 = vunpack.c.l.b16 %v1327
        %v1783 = vunpack.c.l.b16 %v1328
        %v1784 = vunpack.c.l.b16 %v1329
        %v1785 = vunpack.c.l.b16 %v1330
        %v1786 = vunpack.c.l.b16 %v1331
        %v1787 = vunpack.c.l.b16 %v1332
        %v1788 = vunpack.c.l.b16 %v1333
        %v1789 = vunpack.c.l.b16 %v1334
        %v1790 = vpack.c.b16 %v1727, %v1726
        %v1791 = vpack.c.b16 %v1729, %v1728
        %v1792 = vpack.c.b16 %v1731, %v1730
        %v1793 = vpack.c.b16 %v1733, %v1732
        %v1794 = vpack.c.b16 %v1735, %v1734
        %v1795 = vpack.c.b16 %v1737, %v1736
        %v1796 = vpack.c.b16 %v1739, %v1738
        %v1797 = vpack.c.b16 %v1741, %v1740
        %v1798 = vpack.c.b16 %v1743, %v1742
        %v1799 = vpack.c.b16 %v1745, %v1744
        %v1800 = vpack.c.b16 %v1747, %v1746
        %v1801 = vpack.c.b16 %v1749, %v1748
        %v1802 = vpack.c.b16 %v1751, %v1750
        %v1803 = vpack.c.b16 %v1753, %v1752
        %v1804 = vpack.c.b16 %v1755, %v1754
        %v1805 = vpack.c.b16 %v1757, %v1756
        %v1806 = vpack.c.b16 %v1759, %v1758
        %v1807 = vpack.c.b16 %v1761, %v1760
        %v1808 = vpack.c.b16 %v1763, %v1762
        %v1809 = vpack.c.b16 %v1765, %v1764
        %v1810 = vpack.c.b16 %v1767, %v1766
        %v1811 = vpack.c.b16 %v1769, %v1768
        %v1812 = vpack.c.b16 %v1771, %v1770
        %v1813 = vpack.c.b16 %v1773, %v1772
        %v1814 = vpack.c.b16 %v1775, %v1774
        %v1815 = vpack.c.b16 %v1777, %v1776
        %v1816 = vpack.c.b16 %v1779, %v1778
        %v1817 = vpack.c.b16 %v1781, %v1780
        %v1818 = vpack.c.b16 %v1783, %v1782
        %v1819 = vpack.c.b16 %v1785, %v1784
        %v1820 = vpack.c.b16 %v1787, %v1786
        %v1821 = vpack.c.b16 %v1789, %v1788
        %1854 = vmatpush.bf16.xpose.msra.mxu0 %v1797
        %1855 = vmatpush.bf16.xpose.msra.mxu0 %v1796
        %1856 = vmatpush.bf16.xpose.msra.mxu0 %v1795
        %1857 = vmatpush.bf16.xpose.msra.mxu0 %v1794
        %1858 = vmatpush.bf16.xpose.msra.mxu0 %v1793
        %1859 = vmatpush.bf16.xpose.msra.mxu0 %v1792
        %1860 = vmatpush.bf16.xpose.msra.mxu0 %v1791
        %1861 = vmatpush.bf16.xpose.msra.mxu0 %v1790
        %1862 = vmatmul.bf16.gmra.mxu0 %v1661
        %v1863 = vpop.f32.mrf.mxu0
        %v1864 = vadd.f32 0.0, %v1863
        %v1865 = vpop.f32.mrf.mxu0
        %1866 = vdwg.mxu0
        %1867 = vmatpush.bf16.xpose.msra.mxu0 %v1805
        %1868 = vmatpush.bf16.xpose.msra.mxu0 %v1804
        %1869 = vmatpush.bf16.xpose.msra.mxu0 %v1803
        %1870 = vmatpush.bf16.xpose.msra.mxu0 %v1802
        %1871 = vmatpush.bf16.xpose.msra.mxu0 %v1801
        %1872 = vmatpush.bf16.xpose.msra.mxu0 %v1800
        %1873 = vmatpush.bf16.xpose.msra.mxu0 %v1799
        %1874 = vmatpush.bf16.xpose.msra.mxu0 %v1798
        %1875 = vmatmul.bf16.gmra.mxu0 %v1661
        %v1876 = vpop.f32.mrf.mxu0
        %v1877 = vadd.f32 0.0, %v1876
        %v1878 = vpop.f32.mrf.mxu0
        %1879 = vdwg.mxu0
        %1880 = vmatpush.bf16.xpose.msra.mxu0 %v1813
        %1881 = vmatpush.bf16.xpose.msra.mxu0 %v1812
        %1882 = vmatpush.bf16.xpose.msra.mxu0 %v1811
        %1883 = vmatpush.bf16.xpose.msra.mxu0 %v1810
        %1884 = vmatpush.bf16.xpose.msra.mxu0 %v1809
        %1885 = vmatpush.bf16.xpose.msra.mxu0 %v1808
        %1886 = vmatpush.bf16.xpose.msra.mxu0 %v1807
        %1887 = vmatpush.bf16.xpose.msra.mxu0 %v1806
        %1888 = vmatmul.bf16.gmra.mxu0 %v1661
        %v1889 = vpop.f32.mrf.mxu0
        %v1890 = vadd.f32 0.0, %v1889
        %v1891 = vpop.f32.mrf.mxu0
        %1892 = vdwg.mxu0
        %1893 = vmatpush.bf16.xpose.msra.mxu0 %v1821
        %1894 = vmatpush.bf16.xpose.msra.mxu0 %v1820
        %1895 = vmatpush.bf16.xpose.msra.mxu0 %v1819
        %1896 = vmatpush.bf16.xpose.msra.mxu0 %v1818
        %1897 = vmatpush.bf16.xpose.msra.mxu0 %v1817
        %1898 = vmatpush.bf16.xpose.msra.mxu0 %v1816
        %1899 = vmatpush.bf16.xpose.msra.mxu0 %v1815
        %1900 = vmatpush.bf16.xpose.msra.mxu0 %v1814
        %1901 = vmatmul.bf16.gmra.mxu0 %v1661
        %v1902 = vpop.f32.mrf.mxu0
        %v1903 = vadd.f32 0.0, %v1902
        %v1904 = vpop.f32.mrf.mxu0
        %1905 = vdwg.mxu0
        %v1906 = vadd.f32 %v1657, %v1864
        %v1907 = vadd.f32 %v1658, %v1877
        %v1908 = vadd.f32 %v1659, %v1890
        %v1909 = vadd.f32 %v1660, %v1903
        %v1910 = vxor.u32 %v1906, 2147483648
        %v1911 = vmul.f32 %v1910, 1.442695
        %v1912 = vpow.pop %v1911
        %v1913 = vadd.f32 %v1912, 1.0
        %v1914 = vrcp.pop %v1913
        %v1915 = vmul.f32 %v1913, %v1914
        %v1916 = vsub.f32 1.0, %v1915
        %v1917 = vmul.f32 %v1914, %v1916
        %v1918 = vadd.f32 %v1914, %v1917
        %vm1919 = vweird.f32 %v1913
        %vm1920 = vweird.f32 %v1914
        %vm1921 = vmor %vm1919, %vm1920
        %v1922 = vsel %vm1921, %v1914, %v1918
        %v1923 = vand.u32 2147483647, %v1913
        %vm1924 = vcmp.eq.f32.partialorder %v1923, 8.507059e+37
        %v1925 = vand.u32 %v1913, 2147483648
        %v1926 = vor.u32 1.1754944e-38, %v1925
        %v1927 = vsel %vm1924, %v1926, %v1922
        %v1928 = vmul.f32 1.0, %v1927
        %v1929 = vxor.u32 %v1907, 2147483648
        %v1930 = vmul.f32 %v1929, 1.442695
        %v1931 = vpow.pop %v1930
        %v1932 = vadd.f32 %v1931, 1.0
        %v1933 = vrcp.pop %v1932
        %v1934 = vmul.f32 %v1932, %v1933
        %v1935 = vsub.f32 1.0, %v1934
        %v1936 = vmul.f32 %v1933, %v1935
        %v1937 = vadd.f32 %v1933, %v1936
        %vm1938 = vweird.f32 %v1932
        %vm1939 = vweird.f32 %v1933
        %vm1940 = vmor %vm1938, %vm1939
        %v1941 = vsel %vm1940, %v1933, %v1937
        %v1942 = vand.u32 2147483647, %v1932
        %vm1943 = vcmp.eq.f32.partialorder %v1942, 8.507059e+37
        %v1944 = vand.u32 %v1932, 2147483648
        %v1945 = vor.u32 1.1754944e-38, %v1944
        %v1946 = vsel %vm1943, %v1945, %v1941
        %v1947 = vmul.f32 1.0, %v1946
        %v1948 = vtanh.pop %v1908
        %v1949 = vxor.u32 %v1909, 2147483648
        %v1950 = vmul.f32 %v1949, 1.442695
        %v1951 = vpow.pop %v1950
        %v1952 = vadd.f32 %v1951, 1.0
        %v1953 = vrcp.pop %v1952
        %v1954 = vmul.f32 %v1952, %v1953
        %v1955 = vsub.f32 1.0, %v1954
        %v1956 = vmul.f32 %v1953, %v1955
        %v1957 = vadd.f32 %v1953, %v1956
        %vm1958 = vweird.f32 %v1952
        %vm1959 = vweird.f32 %v1953
        %vm1960 = vmor %vm1958, %vm1959
        %v1961 = vsel %vm1960, %v1953, %v1957
        %v1962 = vand.u32 2147483647, %v1952
        %vm1963 = vcmp.eq.f32.partialorder %v1962, 8.507059e+37
        %v1964 = vand.u32 %v1952, 2147483648
        %v1965 = vor.u32 1.1754944e-38, %v1964
        %v1966 = vsel %vm1963, %v1965, %v1961
        %v1967 = vmul.f32 1.0, %v1966
        %v1968 = vmul.f32 %v1947, %v1338
        %v1969 = vmul.f32 %v1928, %v1948
        %v1970 = vadd.f32 %v1968, %v1969
        %v1971 = vtanh.pop %v1970
        %v1972 = vmul.f32 %v1967, %v1971
        %v1973 = vpack.c.bf16 %v1972, %v1972
        %1974 = vst [vmem:[%s448 + $0xc] sm:$0xf] %v1973
        %v1975 = vld [vmem:[#allocation2 + $0x20] sm:$0xff]
        %v1976 = vld [vmem:[#allocation2 + $0x28] sm:$0xff]
        %v1977 = vld [vmem:[#allocation2 + $0x30] sm:$0xff]
        %v1978 = vld [vmem:[#allocation2 + $0x38] sm:$0xff]
        %1979 = vmatpush.bf16.xpose.msra.mxu0 %v1479
        %1980 = vmatpush.bf16.xpose.msra.mxu0 %v1478
        %1981 = vmatpush.bf16.xpose.msra.mxu0 %v1477
        %1982 = vmatpush.bf16.xpose.msra.mxu0 %v1476
        %1983 = vmatpush.bf16.xpose.msra.mxu0 %v1475
        %1984 = vmatpush.bf16.xpose.msra.mxu0 %v1474
        %1985 = vmatpush.bf16.xpose.msra.mxu0 %v1473
        %1986 = vmatpush.bf16.xpose.msra.mxu0 %v1472
        %1987 = vmatmul.bf16.gmra.mxu0 %v1655
        %v1988 = vpop.f32.mrf.mxu0
        %v1989 = vadd.f32 0.0, %v1988
        %v1990 = vpop.f32.mrf.mxu0
        %1991 = vdwg.mxu0
        %1992 = vmatpush.bf16.xpose.msra.mxu0 %v1487
        %1993 = vmatpush.bf16.xpose.msra.mxu0 %v1486
        %1994 = vmatpush.bf16.xpose.msra.mxu0 %v1485
        %1995 = vmatpush.bf16.xpose.msra.mxu0 %v1484
        %1996 = vmatpush.bf16.xpose.msra.mxu0 %v1483
        %1997 = vmatpush.bf16.xpose.msra.mxu0 %v1482
        %1998 = vmatpush.bf16.xpose.msra.mxu0 %v1481
        %1999 = vmatpush.bf16.xpose.msra.mxu0 %v1480
        %2000 = vmatmul.bf16.gmra.mxu0 %v1655
        %v2001 = vpop.f32.mrf.mxu0
        %v2002 = vadd.f32 0.0, %v2001
        %v2003 = vpop.f32.mrf.mxu0
        %2004 = vdwg.mxu0
        %2005 = vmatpush.bf16.xpose.msra.mxu0 %v1495
        %2006 = vmatpush.bf16.xpose.msra.mxu0 %v1494
        %2007 = vmatpush.bf16.xpose.msra.mxu0 %v1493
        %2008 = vmatpush.bf16.xpose.msra.mxu0 %v1492
        %2009 = vmatpush.bf16.xpose.msra.mxu0 %v1491
        %2010 = vmatpush.bf16.xpose.msra.mxu0 %v1490
        %2011 = vmatpush.bf16.xpose.msra.mxu0 %v1489
        %2012 = vmatpush.bf16.xpose.msra.mxu0 %v1488
        %2013 = vmatmul.bf16.gmra.mxu0 %v1655
        %v2014 = vpop.f32.mrf.mxu0
        %v2015 = vadd.f32 0.0, %v2014
        %v2016 = vpop.f32.mrf.mxu0
        %2017 = vdwg.mxu0
        %2018 = vmatpush.bf16.xpose.msra.mxu0 %v1503
        %2019 = vmatpush.bf16.xpose.msra.mxu0 %v1502
        %2020 = vmatpush.bf16.xpose.msra.mxu0 %v1501
        %2021 = vmatpush.bf16.xpose.msra.mxu0 %v1500
        %2022 = vmatpush.bf16.xpose.msra.mxu0 %v1499
        %2023 = vmatpush.bf16.xpose.msra.mxu0 %v1498
        %2024 = vmatpush.bf16.xpose.msra.mxu0 %v1497
        %2025 = vmatpush.bf16.xpose.msra.mxu0 %v1496
        %2026 = vmatmul.bf16.gmra.mxu0 %v1655
        %v2027 = vpop.f32.mrf.mxu0
        %v2028 = vadd.f32 0.0, %v2027
        %v2029 = vpop.f32.mrf.mxu0
        %2030 = vdwg.mxu0
        %v2031 = vadd.f32 %v1975, %v1989
        %v2032 = vadd.f32 %v1976, %v2002
        %v2033 = vadd.f32 %v1977, %v2015
        %v2034 = vadd.f32 %v1978, %v2028
        %v2035 = vxor.u32 %v2031, 2147483648
        %v2036 = vmul.f32 %v2035, 1.442695
        %v2037 = vpow.pop %v2036
        %v2038 = vadd.f32 %v2037, 1.0
        %v2039 = vrcp.pop %v2038
        %v2040 = vmul.f32 %v2038, %v2039
        %v2041 = vsub.f32 1.0, %v2040
        %v2042 = vmul.f32 %v2039, %v2041
        %v2043 = vadd.f32 %v2039, %v2042
        %vm2044 = vweird.f32 %v2038
        %vm2045 = vweird.f32 %v2039
        %vm2046 = vmor %vm2044, %vm2045
        %v2047 = vsel %vm2046, %v2039, %v2043
        %v2048 = vand.u32 2147483647, %v2038
        %vm2049 = vcmp.eq.f32.partialorder %v2048, 8.507059e+37
        %v2050 = vand.u32 %v2038, 2147483648
        %v2051 = vor.u32 1.1754944e-38, %v2050
        %v2052 = vsel %vm2049, %v2051, %v2047
        %v2053 = vmul.f32 1.0, %v2052
        %v2054 = vxor.u32 %v2032, 2147483648
        %v2055 = vmul.f32 %v2054, 1.442695
        %v2056 = vpow.pop %v2055
        %v2057 = vadd.f32 %v2056, 1.0
        %v2058 = vrcp.pop %v2057
        %v2059 = vmul.f32 %v2057, %v2058
        %v2060 = vsub.f32 1.0, %v2059
        %v2061 = vmul.f32 %v2058, %v2060
        %v2062 = vadd.f32 %v2058, %v2061
        %vm2063 = vweird.f32 %v2057
        %vm2064 = vweird.f32 %v2058
        %vm2065 = vmor %vm2063, %vm2064
        %v2066 = vsel %vm2065, %v2058, %v2062
        %v2067 = vand.u32 2147483647, %v2057
        %vm2068 = vcmp.eq.f32.partialorder %v2067, 8.507059e+37
        %v2069 = vand.u32 %v2057, 2147483648
        %v2070 = vor.u32 1.1754944e-38, %v2069
        %v2071 = vsel %vm2068, %v2070, %v2066
        %v2072 = vmul.f32 1.0, %v2071
        %v2073 = vtanh.pop %v2033
        %v2074 = vxor.u32 %v2034, 2147483648
        %v2075 = vmul.f32 %v2074, 1.442695
        %v2076 = vpow.pop %v2075
        %v2077 = vadd.f32 %v2076, 1.0
        %v2078 = vrcp.pop %v2077
        %v2079 = vmul.f32 %v2077, %v2078
        %v2080 = vsub.f32 1.0, %v2079
        %v2081 = vmul.f32 %v2078, %v2080
        %v2082 = vadd.f32 %v2078, %v2081
        %vm2083 = vweird.f32 %v2077
        %vm2084 = vweird.f32 %v2078
        %vm2085 = vmor %vm2083, %vm2084
        %v2086 = vsel %vm2085, %v2078, %v2082
        %v2087 = vand.u32 2147483647, %v2077
        %vm2088 = vcmp.eq.f32.partialorder %v2087, 8.507059e+37
        %v2089 = vand.u32 %v2077, 2147483648
        %v2090 = vor.u32 1.1754944e-38, %v2089
        %v2091 = vsel %vm2088, %v2090, %v2086
        %v2092 = vmul.f32 1.0, %v2091
        %v2093 = vmul.f32 %v2072, %v1652
        %v2094 = vmul.f32 %v2053, %v2073
        %v2095 = vadd.f32 %v2093, %v2094
        %v2096 = vtanh.pop %v2095
        %v2097 = vmul.f32 %v2092, %v2096
        %v2098 = vpack.c.bf16 %v2097, %v2097
        %2099 = vst [vmem:[%s441 + $0x4] sm:$0xf] %v2098
        %v2100 = vld [vmem:[#allocation3 + $0x40] sm:$0xff]
        %v2101 = vld [vmem:[#allocation3 + $0x48] sm:$0xff]
        %v2102 = vld [vmem:[#allocation3 + $0x50] sm:$0xff]
        %v2103 = vld [vmem:[#allocation3 + $0x58] sm:$0xff]
        %2104 = vmatpush.bf16.xpose.msra.mxu0 %v1797
        %2105 = vmatpush.bf16.xpose.msra.mxu0 %v1796
        %2106 = vmatpush.bf16.xpose.msra.mxu0 %v1795
        %2107 = vmatpush.bf16.xpose.msra.mxu0 %v1794
        %2108 = vmatpush.bf16.xpose.msra.mxu0 %v1793
        %2109 = vmatpush.bf16.xpose.msra.mxu0 %v1792
        %2110 = vmatpush.bf16.xpose.msra.mxu0 %v1791
        %2111 = vmatpush.bf16.xpose.msra.mxu0 %v1790
        %2112 = vmatmul.bf16.gmra.mxu0 %v1973
        %v2113 = vpop.f32.mrf.mxu0
        %v2114 = vadd.f32 0.0, %v2113
        %v2115 = vpop.f32.mrf.mxu0
        %2116 = vdwg.mxu0
        %2117 = vmatpush.bf16.xpose.msra.mxu0 %v1805
        %2118 = vmatpush.bf16.xpose.msra.mxu0 %v1804
        %2119 = vmatpush.bf16.xpose.msra.mxu0 %v1803
        %2120 = vmatpush.bf16.xpose.msra.mxu0 %v1802
        %2121 = vmatpush.bf16.xpose.msra.mxu0 %v1801
        %2122 = vmatpush.bf16.xpose.msra.mxu0 %v1800
        %2123 = vmatpush.bf16.xpose.msra.mxu0 %v1799
        %2124 = vmatpush.bf16.xpose.msra.mxu0 %v1798
        %2125 = vmatmul.bf16.gmra.mxu0 %v1973
        %v2126 = vpop.f32.mrf.mxu0
        %v2127 = vadd.f32 0.0, %v2126
        %v2128 = vpop.f32.mrf.mxu0
        %2129 = vdwg.mxu0
        %2130 = vmatpush.bf16.xpose.msra.mxu0 %v1813
        %2131 = vmatpush.bf16.xpose.msra.mxu0 %v1812
        %2132 = vmatpush.bf16.xpose.msra.mxu0 %v1811
        %2133 = vmatpush.bf16.xpose.msra.mxu0 %v1810
        %2134 = vmatpush.bf16.xpose.msra.mxu0 %v1809
        %2135 = vmatpush.bf16.xpose.msra.mxu0 %v1808
        %2136 = vmatpush.bf16.xpose.msra.mxu0 %v1807
        %2137 = vmatpush.bf16.xpose.msra.mxu0 %v1806
        %2138 = vmatmul.bf16.gmra.mxu0 %v1973
        %v2139 = vpop.f32.mrf.mxu0
        %v2140 = vadd.f32 0.0, %v2139
        %v2141 = vpop.f32.mrf.mxu0
        %2142 = vdwg.mxu0
        %2143 = vmatpush.bf16.xpose.msra.mxu0 %v1821
        %2144 = vmatpush.bf16.xpose.msra.mxu0 %v1820
        %2145 = vmatpush.bf16.xpose.msra.mxu0 %v1819
        %2146 = vmatpush.bf16.xpose.msra.mxu0 %v1818
        %2147 = vmatpush.bf16.xpose.msra.mxu0 %v1817
        %2148 = vmatpush.bf16.xpose.msra.mxu0 %v1816
        %2149 = vmatpush.bf16.xpose.msra.mxu0 %v1815
        %2150 = vmatpush.bf16.xpose.msra.mxu0 %v1814
        %2151 = vmatmul.bf16.gmra.mxu0 %v1973
        %v2152 = vpop.f32.mrf.mxu0
        %v2153 = vadd.f32 0.0, %v2152
        %v2154 = vpop.f32.mrf.mxu0
        %2155 = vdwg.mxu0
        %v2156 = vadd.f32 %v2100, %v2114
        %v2157 = vadd.f32 %v2101, %v2127
        %v2158 = vadd.f32 %v2102, %v2140
        %v2159 = vadd.f32 %v2103, %v2153
        %v2160 = vxor.u32 %v2156, 2147483648
        %v2161 = vmul.f32 %v2160, 1.442695
        %v2162 = vpow.pop %v2161
        %v2163 = vadd.f32 %v2162, 1.0
        %v2164 = vrcp.pop %v2163
        %v2165 = vmul.f32 %v2163, %v2164
        %v2166 = vsub.f32 1.0, %v2165
        %v2167 = vmul.f32 %v2164, %v2166
        %v2168 = vadd.f32 %v2164, %v2167
        %vm2169 = vweird.f32 %v2163
        %vm2170 = vweird.f32 %v2164
        %vm2171 = vmor %vm2169, %vm2170
        %v2172 = vsel %vm2171, %v2164, %v2168
        %v2173 = vand.u32 2147483647, %v2163
        %vm2174 = vcmp.eq.f32.partialorder %v2173, 8.507059e+37
        %v2175 = vand.u32 %v2163, 2147483648
        %v2176 = vor.u32 1.1754944e-38, %v2175
        %v2177 = vsel %vm2174, %v2176, %v2172
        %v2178 = vmul.f32 1.0, %v2177
        %v2179 = vxor.u32 %v2157, 2147483648
        %v2180 = vmul.f32 %v2179, 1.442695
        %v2181 = vpow.pop %v2180
        %v2182 = vadd.f32 %v2181, 1.0
        %v2183 = vrcp.pop %v2182
        %v2184 = vmul.f32 %v2182, %v2183
        %v2185 = vsub.f32 1.0, %v2184
        %v2186 = vmul.f32 %v2183, %v2185
        %v2187 = vadd.f32 %v2183, %v2186
        %vm2188 = vweird.f32 %v2182
        %vm2189 = vweird.f32 %v2183
        %vm2190 = vmor %vm2188, %vm2189
        %v2191 = vsel %vm2190, %v2183, %v2187
        %v2192 = vand.u32 2147483647, %v2182
        %vm2193 = vcmp.eq.f32.partialorder %v2192, 8.507059e+37
        %v2194 = vand.u32 %v2182, 2147483648
        %v2195 = vor.u32 1.1754944e-38, %v2194
        %v2196 = vsel %vm2193, %v2195, %v2191
        %v2197 = vmul.f32 1.0, %v2196
        %v2198 = vtanh.pop %v2158
        %v2199 = vxor.u32 %v2159, 2147483648
        %v2200 = vmul.f32 %v2199, 1.442695
        %v2201 = vpow.pop %v2200
        %v2202 = vadd.f32 %v2201, 1.0
        %v2203 = vrcp.pop %v2202
        %v2204 = vmul.f32 %v2202, %v2203
        %v2205 = vsub.f32 1.0, %v2204
        %v2206 = vmul.f32 %v2203, %v2205
        %v2207 = vadd.f32 %v2203, %v2206
        %vm2208 = vweird.f32 %v2202
        %vm2209 = vweird.f32 %v2203
        %vm2210 = vmor %vm2208, %vm2209
        %v2211 = vsel %vm2210, %v2203, %v2207
        %v2212 = vand.u32 2147483647, %v2202
        %vm2213 = vcmp.eq.f32.partialorder %v2212, 8.507059e+37
        %v2214 = vand.u32 %v2202, 2147483648
        %v2215 = vor.u32 1.1754944e-38, %v2214
        %v2216 = vsel %vm2213, %v2215, %v2211
        %v2217 = vmul.f32 1.0, %v2216
        %v2218 = vmul.f32 %v2197, %v1970
        %v2219 = vmul.f32 %v2178, %v2198
        %v2220 = vadd.f32 %v2218, %v2219
        %v2221 = vtanh.pop %v2220
        %v2222 = vmul.f32 %v2217, %v2221
        %v2223 = vpack.c.bf16 %v2222, %v2222
        %2224 = vst [vmem:[%s448 + $0x8] sm:$0xf] %v2223
        %v2225 = vld [vmem:[#allocation2 + $0x40] sm:$0xff]
        %v2226 = vld [vmem:[#allocation2 + $0x48] sm:$0xff]
        %v2227 = vld [vmem:[#allocation2 + $0x50] sm:$0xff]
        %v2228 = vld [vmem:[#allocation2 + $0x58] sm:$0xff]
        %2229 = vmatpush.bf16.xpose.msra.mxu0 %v1479
        %2230 = vmatpush.bf16.xpose.msra.mxu0 %v1478
        %2231 = vmatpush.bf16.xpose.msra.mxu0 %v1477
        %2232 = vmatpush.bf16.xpose.msra.mxu0 %v1476
        %2233 = vmatpush.bf16.xpose.msra.mxu0 %v1475
        %2234 = vmatpush.bf16.xpose.msra.mxu0 %v1474
        %2235 = vmatpush.bf16.xpose.msra.mxu0 %v1473
        %2236 = vmatpush.bf16.xpose.msra.mxu0 %v1472
        %2237 = vmatmul.bf16.gmra.mxu0 %v2098
        %v2238 = vpop.f32.mrf.mxu0
        %v2239 = vadd.f32 0.0, %v2238
        %v2240 = vpop.f32.mrf.mxu0
        %2241 = vdwg.mxu0
        %2242 = vmatpush.bf16.xpose.msra.mxu0 %v1487
        %2243 = vmatpush.bf16.xpose.msra.mxu0 %v1486
        %2244 = vmatpush.bf16.xpose.msra.mxu0 %v1485
        %2245 = vmatpush.bf16.xpose.msra.mxu0 %v1484
        %2246 = vmatpush.bf16.xpose.msra.mxu0 %v1483
        %2247 = vmatpush.bf16.xpose.msra.mxu0 %v1482
        %2248 = vmatpush.bf16.xpose.msra.mxu0 %v1481
        %2249 = vmatpush.bf16.xpose.msra.mxu0 %v1480
        %2250 = vmatmul.bf16.gmra.mxu0 %v2098
        %v2251 = vpop.f32.mrf.mxu0
        %v2252 = vadd.f32 0.0, %v2251
        %v2253 = vpop.f32.mrf.mxu0
        %2254 = vdwg.mxu0
        %2255 = vmatpush.bf16.xpose.msra.mxu0 %v1495
        %2256 = vmatpush.bf16.xpose.msra.mxu0 %v1494
        %2257 = vmatpush.bf16.xpose.msra.mxu0 %v1493
        %2258 = vmatpush.bf16.xpose.msra.mxu0 %v1492
        %2259 = vmatpush.bf16.xpose.msra.mxu0 %v1491
        %2260 = vmatpush.bf16.xpose.msra.mxu0 %v1490
        %2261 = vmatpush.bf16.xpose.msra.mxu0 %v1489
        %2262 = vmatpush.bf16.xpose.msra.mxu0 %v1488
        %2263 = vmatmul.bf16.gmra.mxu0 %v2098
        %v2264 = vpop.f32.mrf.mxu0
        %v2265 = vadd.f32 0.0, %v2264
        %v2266 = vpop.f32.mrf.mxu0
        %2267 = vdwg.mxu0
        %2268 = vmatpush.bf16.xpose.msra.mxu0 %v1503
        %2269 = vmatpush.bf16.xpose.msra.mxu0 %v1502
        %2270 = vmatpush.bf16.xpose.msra.mxu0 %v1501
        %2271 = vmatpush.bf16.xpose.msra.mxu0 %v1500
        %2272 = vmatpush.bf16.xpose.msra.mxu0 %v1499
        %2273 = vmatpush.bf16.xpose.msra.mxu0 %v1498
        %2274 = vmatpush.bf16.xpose.msra.mxu0 %v1497
        %2275 = vmatpush.bf16.xpose.msra.mxu0 %v1496
        %2276 = vmatmul.bf16.gmra.mxu0 %v2098
        %v2277 = vpop.f32.mrf.mxu0
        %v2278 = vadd.f32 0.0, %v2277
        %v2279 = vpop.f32.mrf.mxu0
        %2280 = vdwg.mxu0
        %v2281 = vadd.f32 %v2225, %v2239
        %v2282 = vadd.f32 %v2226, %v2252
        %v2283 = vadd.f32 %v2227, %v2265
        %v2284 = vadd.f32 %v2228, %v2278
        %v2285 = vxor.u32 %v2281, 2147483648
        %v2286 = vmul.f32 %v2285, 1.442695
        %v2287 = vpow.pop %v2286
        %v2288 = vadd.f32 %v2287, 1.0
        %v2289 = vrcp.pop %v2288
        %v2290 = vmul.f32 %v2288, %v2289
        %v2291 = vsub.f32 1.0, %v2290
        %v2292 = vmul.f32 %v2289, %v2291
        %v2293 = vadd.f32 %v2289, %v2292
        %vm2294 = vweird.f32 %v2288
        %vm2295 = vweird.f32 %v2289
        %vm2296 = vmor %vm2294, %vm2295
        %v2297 = vsel %vm2296, %v2289, %v2293
        %v2298 = vand.u32 2147483647, %v2288
        %vm2299 = vcmp.eq.f32.partialorder %v2298, 8.507059e+37
        %v2300 = vand.u32 %v2288, 2147483648
        %v2301 = vor.u32 1.1754944e-38, %v2300
        %v2302 = vsel %vm2299, %v2301, %v2297
        %v2303 = vmul.f32 1.0, %v2302
        %v2304 = vxor.u32 %v2282, 2147483648
        %v2305 = vmul.f32 %v2304, 1.442695
        %v2306 = vpow.pop %v2305
        %v2307 = vadd.f32 %v2306, 1.0
        %v2308 = vrcp.pop %v2307
        %v2309 = vmul.f32 %v2307, %v2308
        %v2310 = vsub.f32 1.0, %v2309
        %v2311 = vmul.f32 %v2308, %v2310
        %v2312 = vadd.f32 %v2308, %v2311
        %vm2313 = vweird.f32 %v2307
        %vm2314 = vweird.f32 %v2308
        %vm2315 = vmor %vm2313, %vm2314
        %v2316 = vsel %vm2315, %v2308, %v2312
        %v2317 = vand.u32 2147483647, %v2307
        %vm2318 = vcmp.eq.f32.partialorder %v2317, 8.507059e+37
        %v2319 = vand.u32 %v2307, 2147483648
        %v2320 = vor.u32 1.1754944e-38, %v2319
        %v2321 = vsel %vm2318, %v2320, %v2316
        %v2322 = vmul.f32 1.0, %v2321
        %v2323 = vtanh.pop %v2283
        %v2324 = vxor.u32 %v2284, 2147483648
        %v2325 = vmul.f32 %v2324, 1.442695
        %v2326 = vpow.pop %v2325
        %v2327 = vadd.f32 %v2326, 1.0
        %v2328 = vrcp.pop %v2327
        %v2329 = vmul.f32 %v2327, %v2328
        %v2330 = vsub.f32 1.0, %v2329
        %v2331 = vmul.f32 %v2328, %v2330
        %v2332 = vadd.f32 %v2328, %v2331
        %vm2333 = vweird.f32 %v2327
        %vm2334 = vweird.f32 %v2328
        %vm2335 = vmor %vm2333, %vm2334
        %v2336 = vsel %vm2335, %v2328, %v2332
        %v2337 = vand.u32 2147483647, %v2327
        %vm2338 = vcmp.eq.f32.partialorder %v2337, 8.507059e+37
        %v2339 = vand.u32 %v2327, 2147483648
        %v2340 = vor.u32 1.1754944e-38, %v2339
        %v2341 = vsel %vm2338, %v2340, %v2336
        %v2342 = vmul.f32 1.0, %v2341
        %v2343 = vmul.f32 %v2322, %v2095
        %v2344 = vmul.f32 %v2303, %v2323
        %v2345 = vadd.f32 %v2343, %v2344
        %v2346 = vtanh.pop %v2345
        %v2347 = vmul.f32 %v2342, %v2346
        %v2348 = vpack.c.bf16 %v2347, %v2347
        %2349 = vst [vmem:[%s441 + $0x8] sm:$0xf] %v2348
        %v2350 = vld [vmem:[#allocation3 + $0x20] sm:$0xff]
        %v2351 = vld [vmem:[#allocation3 + $0x28] sm:$0xff]
        %v2352 = vld [vmem:[#allocation3 + $0x30] sm:$0xff]
        %v2353 = vld [vmem:[#allocation3 + $0x38] sm:$0xff]
        %2354 = vmatpush.bf16.xpose.msra.mxu0 %v1797
        %2355 = vmatpush.bf16.xpose.msra.mxu0 %v1796
        %2356 = vmatpush.bf16.xpose.msra.mxu0 %v1795
        %2357 = vmatpush.bf16.xpose.msra.mxu0 %v1794
        %2358 = vmatpush.bf16.xpose.msra.mxu0 %v1793
        %2359 = vmatpush.bf16.xpose.msra.mxu0 %v1792
        %2360 = vmatpush.bf16.xpose.msra.mxu0 %v1791
        %2361 = vmatpush.bf16.xpose.msra.mxu0 %v1790
        %2362 = vmatmul.bf16.gmra.mxu0 %v2223
        %v2363 = vpop.f32.mrf.mxu0
        %v2364 = vadd.f32 0.0, %v2363
        %v2365 = vpop.f32.mrf.mxu0
        %2366 = vdwg.mxu0
        %2367 = vmatpush.bf16.xpose.msra.mxu0 %v1805
        %2368 = vmatpush.bf16.xpose.msra.mxu0 %v1804
        %2369 = vmatpush.bf16.xpose.msra.mxu0 %v1803
        %2370 = vmatpush.bf16.xpose.msra.mxu0 %v1802
        %2371 = vmatpush.bf16.xpose.msra.mxu0 %v1801
        %2372 = vmatpush.bf16.xpose.msra.mxu0 %v1800
        %2373 = vmatpush.bf16.xpose.msra.mxu0 %v1799
        %2374 = vmatpush.bf16.xpose.msra.mxu0 %v1798
        %2375 = vmatmul.bf16.gmra.mxu0 %v2223
        %v2376 = vpop.f32.mrf.mxu0
        %v2377 = vadd.f32 0.0, %v2376
        %v2378 = vpop.f32.mrf.mxu0
        %2379 = vdwg.mxu0
        %2380 = vmatpush.bf16.xpose.msra.mxu0 %v1813
        %2381 = vmatpush.bf16.xpose.msra.mxu0 %v1812
        %2382 = vmatpush.bf16.xpose.msra.mxu0 %v1811
        %2383 = vmatpush.bf16.xpose.msra.mxu0 %v1810
        %2384 = vmatpush.bf16.xpose.msra.mxu0 %v1809
        %2385 = vmatpush.bf16.xpose.msra.mxu0 %v1808
        %2386 = vmatpush.bf16.xpose.msra.mxu0 %v1807
        %2387 = vmatpush.bf16.xpose.msra.mxu0 %v1806
        %2388 = vmatmul.bf16.gmra.mxu0 %v2223
        %v2389 = vpop.f32.mrf.mxu0
        %v2390 = vadd.f32 0.0, %v2389
        %v2391 = vpop.f32.mrf.mxu0
        %2392 = vdwg.mxu0
        %2393 = vmatpush.bf16.xpose.msra.mxu0 %v1821
        %2394 = vmatpush.bf16.xpose.msra.mxu0 %v1820
        %2395 = vmatpush.bf16.xpose.msra.mxu0 %v1819
        %2396 = vmatpush.bf16.xpose.msra.mxu0 %v1818
        %2397 = vmatpush.bf16.xpose.msra.mxu0 %v1817
        %2398 = vmatpush.bf16.xpose.msra.mxu0 %v1816
        %2399 = vmatpush.bf16.xpose.msra.mxu0 %v1815
        %2400 = vmatpush.bf16.xpose.msra.mxu0 %v1814
        %2401 = vmatmul.bf16.gmra.mxu0 %v2223
        %v2402 = vpop.f32.mrf.mxu0
        %v2403 = vadd.f32 0.0, %v2402
        %v2404 = vpop.f32.mrf.mxu0
        %2405 = vdwg.mxu0
        %v2406 = vadd.f32 %v2350, %v2364
        %v2407 = vadd.f32 %v2351, %v2377
        %v2408 = vadd.f32 %v2352, %v2390
        %v2409 = vadd.f32 %v2353, %v2403
        %v2410 = vxor.u32 %v2406, 2147483648
        %v2411 = vmul.f32 %v2410, 1.442695
        %v2412 = vpow.pop %v2411
        %v2413 = vadd.f32 %v2412, 1.0
        %v2414 = vrcp.pop %v2413
        %v2415 = vmul.f32 %v2413, %v2414
        %v2416 = vsub.f32 1.0, %v2415
        %v2417 = vmul.f32 %v2414, %v2416
        %v2418 = vadd.f32 %v2414, %v2417
        %vm2419 = vweird.f32 %v2413
        %vm2420 = vweird.f32 %v2414
        %vm2421 = vmor %vm2419, %vm2420
        %v2422 = vsel %vm2421, %v2414, %v2418
        %v2423 = vand.u32 2147483647, %v2413
        %vm2424 = vcmp.eq.f32.partialorder %v2423, 8.507059e+37
        %v2425 = vand.u32 %v2413, 2147483648
        %v2426 = vor.u32 1.1754944e-38, %v2425
        %v2427 = vsel %vm2424, %v2426, %v2422
        %v2428 = vmul.f32 1.0, %v2427
        %v2429 = vxor.u32 %v2407, 2147483648
        %v2430 = vmul.f32 %v2429, 1.442695
        %v2431 = vpow.pop %v2430
        %v2432 = vadd.f32 %v2431, 1.0
        %v2433 = vrcp.pop %v2432
        %v2434 = vmul.f32 %v2432, %v2433
        %v2435 = vsub.f32 1.0, %v2434
        %v2436 = vmul.f32 %v2433, %v2435
        %v2437 = vadd.f32 %v2433, %v2436
        %vm2438 = vweird.f32 %v2432
        %vm2439 = vweird.f32 %v2433
        %vm2440 = vmor %vm2438, %vm2439
        %v2441 = vsel %vm2440, %v2433, %v2437
        %v2442 = vand.u32 2147483647, %v2432
        %vm2443 = vcmp.eq.f32.partialorder %v2442, 8.507059e+37
        %v2444 = vand.u32 %v2432, 2147483648
        %v2445 = vor.u32 1.1754944e-38, %v2444
        %v2446 = vsel %vm2443, %v2445, %v2441
        %v2447 = vmul.f32 1.0, %v2446
        %v2448 = vtanh.pop %v2408
        %v2449 = vxor.u32 %v2409, 2147483648
        %v2450 = vmul.f32 %v2449, 1.442695
        %v2451 = vpow.pop %v2450
        %v2452 = vadd.f32 %v2451, 1.0
        %v2453 = vrcp.pop %v2452
        %v2454 = vmul.f32 %v2452, %v2453
        %v2455 = vsub.f32 1.0, %v2454
        %v2456 = vmul.f32 %v2453, %v2455
        %v2457 = vadd.f32 %v2453, %v2456
        %vm2458 = vweird.f32 %v2452
        %vm2459 = vweird.f32 %v2453
        %vm2460 = vmor %vm2458, %vm2459
        %v2461 = vsel %vm2460, %v2453, %v2457
        %v2462 = vand.u32 2147483647, %v2452
        %vm2463 = vcmp.eq.f32.partialorder %v2462, 8.507059e+37
        %v2464 = vand.u32 %v2452, 2147483648
        %v2465 = vor.u32 1.1754944e-38, %v2464
        %v2466 = vsel %vm2463, %v2465, %v2461
        %v2467 = vmul.f32 1.0, %v2466
        %v2468 = vmul.f32 %v2447, %v2220
        %v2469 = vmul.f32 %v2428, %v2448
        %v2470 = vadd.f32 %v2468, %v2469
        %v2471 = vtanh.pop %v2470
        %v2472 = vmul.f32 %v2467, %v2471
        %v2473 = vpack.c.bf16 %v2472, %v2472
        %2474 = vst [vmem:[%s448 + $0x4] sm:$0xf] %v2473
        %v2475 = vld [vmem:[#allocation2 + $0x60] sm:$0xff]
        %v2476 = vld [vmem:[#allocation2 + $0x68] sm:$0xff]
        %v2477 = vld [vmem:[#allocation2 + $0x70] sm:$0xff]
        %v2478 = vld [vmem:[#allocation2 + $0x78] sm:$0xff]
        %2479 = vmatpush.bf16.xpose.msra.mxu0 %v1479
        %2480 = vmatpush.bf16.xpose.msra.mxu0 %v1478
        %2481 = vmatpush.bf16.xpose.msra.mxu0 %v1477
        %2482 = vmatpush.bf16.xpose.msra.mxu0 %v1476
        %2483 = vmatpush.bf16.xpose.msra.mxu0 %v1475
        %2484 = vmatpush.bf16.xpose.msra.mxu0 %v1474
        %2485 = vmatpush.bf16.xpose.msra.mxu0 %v1473
        %2486 = vmatpush.bf16.xpose.msra.mxu0 %v1472
        %2487 = vmatmul.bf16.gmra.mxu0 %v2348
        %v2488 = vpop.f32.mrf.mxu0
        %v2489 = vadd.f32 0.0, %v2488
        %v2490 = vpop.f32.mrf.mxu0
        %2491 = vdwg.mxu0
        %2492 = vmatpush.bf16.xpose.msra.mxu0 %v1487
        %2493 = vmatpush.bf16.xpose.msra.mxu0 %v1486
        %2494 = vmatpush.bf16.xpose.msra.mxu0 %v1485
        %2495 = vmatpush.bf16.xpose.msra.mxu0 %v1484
        %2496 = vmatpush.bf16.xpose.msra.mxu0 %v1483
        %2497 = vmatpush.bf16.xpose.msra.mxu0 %v1482
        %2498 = vmatpush.bf16.xpose.msra.mxu0 %v1481
        %2499 = vmatpush.bf16.xpose.msra.mxu0 %v1480
        %2500 = vmatmul.bf16.gmra.mxu0 %v2348
        %v2501 = vpop.f32.mrf.mxu0
        %v2502 = vadd.f32 0.0, %v2501
        %v2503 = vpop.f32.mrf.mxu0
        %2504 = vdwg.mxu0
        %2505 = vmatpush.bf16.xpose.msra.mxu0 %v1495
        %2506 = vmatpush.bf16.xpose.msra.mxu0 %v1494
        %2507 = vmatpush.bf16.xpose.msra.mxu0 %v1493
        %2508 = vmatpush.bf16.xpose.msra.mxu0 %v1492
        %2509 = vmatpush.bf16.xpose.msra.mxu0 %v1491
        %2510 = vmatpush.bf16.xpose.msra.mxu0 %v1490
        %2511 = vmatpush.bf16.xpose.msra.mxu0 %v1489
        %2512 = vmatpush.bf16.xpose.msra.mxu0 %v1488
        %2513 = vmatmul.bf16.gmra.mxu0 %v2348
        %v2514 = vpop.f32.mrf.mxu0
        %v2515 = vadd.f32 0.0, %v2514
        %v2516 = vpop.f32.mrf.mxu0
        %2517 = vdwg.mxu0
        %2518 = vmatpush.bf16.xpose.msra.mxu0 %v1503
        %2519 = vmatpush.bf16.xpose.msra.mxu0 %v1502
        %2520 = vmatpush.bf16.xpose.msra.mxu0 %v1501
        %2521 = vmatpush.bf16.xpose.msra.mxu0 %v1500
        %2522 = vmatpush.bf16.xpose.msra.mxu0 %v1499
        %2523 = vmatpush.bf16.xpose.msra.mxu0 %v1498
        %2524 = vmatpush.bf16.xpose.msra.mxu0 %v1497
        %2525 = vmatpush.bf16.xpose.msra.mxu0 %v1496
        %2526 = vmatmul.bf16.gmra.mxu0 %v2348
        %v2527 = vpop.f32.mrf.mxu0
        %v2528 = vadd.f32 0.0, %v2527
        %v2529 = vpop.f32.mrf.mxu0
        %2530 = vdwg.mxu0
        %v2531 = vadd.f32 %v2475, %v2489
        %v2532 = vadd.f32 %v2476, %v2502
        %v2533 = vadd.f32 %v2477, %v2515
        %v2534 = vadd.f32 %v2478, %v2528
        %v2535 = vxor.u32 %v2531, 2147483648
        %v2536 = vmul.f32 %v2535, 1.442695
        %v2537 = vpow.pop %v2536
        %v2538 = vadd.f32 %v2537, 1.0
        %v2539 = vrcp.pop %v2538
        %v2540 = vmul.f32 %v2538, %v2539
        %v2541 = vsub.f32 1.0, %v2540
        %v2542 = vmul.f32 %v2539, %v2541
        %v2543 = vadd.f32 %v2539, %v2542
        %vm2544 = vweird.f32 %v2538
        %vm2545 = vweird.f32 %v2539
        %vm2546 = vmor %vm2544, %vm2545
        %v2547 = vsel %vm2546, %v2539, %v2543
        %v2548 = vand.u32 2147483647, %v2538
        %vm2549 = vcmp.eq.f32.partialorder %v2548, 8.507059e+37
        %v2550 = vand.u32 %v2538, 2147483648
        %v2551 = vor.u32 1.1754944e-38, %v2550
        %v2552 = vsel %vm2549, %v2551, %v2547
        %v2553 = vmul.f32 1.0, %v2552
        %v2554 = vxor.u32 %v2532, 2147483648
        %v2555 = vmul.f32 %v2554, 1.442695
        %v2556 = vpow.pop %v2555
        %v2557 = vadd.f32 %v2556, 1.0
        %v2558 = vrcp.pop %v2557
        %v2559 = vmul.f32 %v2557, %v2558
        %v2560 = vsub.f32 1.0, %v2559
        %v2561 = vmul.f32 %v2558, %v2560
        %v2562 = vadd.f32 %v2558, %v2561
        %vm2563 = vweird.f32 %v2557
        %vm2564 = vweird.f32 %v2558
        %vm2565 = vmor %vm2563, %vm2564
        %v2566 = vsel %vm2565, %v2558, %v2562
        %v2567 = vand.u32 2147483647, %v2557
        %vm2568 = vcmp.eq.f32.partialorder %v2567, 8.507059e+37
        %v2569 = vand.u32 %v2557, 2147483648
        %v2570 = vor.u32 1.1754944e-38, %v2569
        %v2571 = vsel %vm2568, %v2570, %v2566
        %v2572 = vmul.f32 1.0, %v2571
        %v2573 = vtanh.pop %v2533
        %v2574 = vxor.u32 %v2534, 2147483648
        %v2575 = vmul.f32 %v2574, 1.442695
        %v2576 = vpow.pop %v2575
        %v2577 = vadd.f32 %v2576, 1.0
        %v2578 = vrcp.pop %v2577
        %v2579 = vmul.f32 %v2577, %v2578
        %v2580 = vsub.f32 1.0, %v2579
        %v2581 = vmul.f32 %v2578, %v2580
        %v2582 = vadd.f32 %v2578, %v2581
        %vm2583 = vweird.f32 %v2577
        %vm2584 = vweird.f32 %v2578
        %vm2585 = vmor %vm2583, %vm2584
        %v2586 = vsel %vm2585, %v2578, %v2582
        %v2587 = vand.u32 2147483647, %v2577
        %vm2588 = vcmp.eq.f32.partialorder %v2587, 8.507059e+37
        %v2589 = vand.u32 %v2577, 2147483648
        %v2590 = vor.u32 1.1754944e-38, %v2589
        %v2591 = vsel %vm2588, %v2590, %v2586
        %v2592 = vmul.f32 1.0, %v2591
        %v2593 = vmul.f32 %v2572, %v2345
        %v2594 = vmul.f32 %v2553, %v2573
        %v2595 = vadd.f32 %v2593, %v2594
        %v2596 = vtanh.pop %v2595
        %v2597 = vmul.f32 %v2592, %v2596
        %v2598 = vpack.c.bf16 %v2597, %v2597
        %2599 = vst [vmem:[%s441 + $0xc] sm:$0xf] %v2598
        %v2600 = vld [vmem:[#allocation3] sm:$0xff]
        %v2601 = vld [vmem:[#allocation3 + $0x8] sm:$0xff]
        %v2602 = vld [vmem:[#allocation3 + $0x10] sm:$0xff]
        %v2603 = vld [vmem:[#allocation3 + $0x18] sm:$0xff]
        %2604 = vmatpush.bf16.xpose.msra.mxu0 %v1797
        %2605 = vmatpush.bf16.xpose.msra.mxu0 %v1796
        %2606 = vmatpush.bf16.xpose.msra.mxu0 %v1795
        %2607 = vmatpush.bf16.xpose.msra.mxu0 %v1794
        %2608 = vmatpush.bf16.xpose.msra.mxu0 %v1793
        %2609 = vmatpush.bf16.xpose.msra.mxu0 %v1792
        %2610 = vmatpush.bf16.xpose.msra.mxu0 %v1791
        %2611 = vmatpush.bf16.xpose.msra.mxu0 %v1790
        %2612 = vmatmul.bf16.gmra.mxu0 %v2473
        %v2613 = vpop.f32.mrf.mxu0
        %v2614 = vadd.f32 0.0, %v2613
        %v2615 = vpop.f32.mrf.mxu0
        %2616 = vdwg.mxu0
        %2617 = vmatpush.bf16.xpose.msra.mxu0 %v1805
        %2618 = vmatpush.bf16.xpose.msra.mxu0 %v1804
        %2619 = vmatpush.bf16.xpose.msra.mxu0 %v1803
        %2620 = vmatpush.bf16.xpose.msra.mxu0 %v1802
        %2621 = vmatpush.bf16.xpose.msra.mxu0 %v1801
        %2622 = vmatpush.bf16.xpose.msra.mxu0 %v1800
        %2623 = vmatpush.bf16.xpose.msra.mxu0 %v1799
        %2624 = vmatpush.bf16.xpose.msra.mxu0 %v1798
        %2625 = vmatmul.bf16.gmra.mxu0 %v2473
        %v2626 = vpop.f32.mrf.mxu0
        %v2627 = vadd.f32 0.0, %v2626
        %v2628 = vpop.f32.mrf.mxu0
        %2629 = vdwg.mxu0
        %2630 = vmatpush.bf16.xpose.msra.mxu0 %v1813
        %2631 = vmatpush.bf16.xpose.msra.mxu0 %v1812
        %2632 = vmatpush.bf16.xpose.msra.mxu0 %v1811
        %2633 = vmatpush.bf16.xpose.msra.mxu0 %v1810
        %2634 = vmatpush.bf16.xpose.msra.mxu0 %v1809
        %2635 = vmatpush.bf16.xpose.msra.mxu0 %v1808
        %2636 = vmatpush.bf16.xpose.msra.mxu0 %v1807
        %2637 = vmatpush.bf16.xpose.msra.mxu0 %v1806
        %2638 = vmatmul.bf16.gmra.mxu0 %v2473
        %v2639 = vpop.f32.mrf.mxu0
        %v2640 = vadd.f32 0.0, %v2639
        %v2641 = vpop.f32.mrf.mxu0
        %2642 = vdwg.mxu0
        %2643 = vmatpush.bf16.xpose.msra.mxu0 %v1821
        %2644 = vmatpush.bf16.xpose.msra.mxu0 %v1820
        %2645 = vmatpush.bf16.xpose.msra.mxu0 %v1819
        %2646 = vmatpush.bf16.xpose.msra.mxu0 %v1818
        %2647 = vmatpush.bf16.xpose.msra.mxu0 %v1817
        %2648 = vmatpush.bf16.xpose.msra.mxu0 %v1816
        %2649 = vmatpush.bf16.xpose.msra.mxu0 %v1815
        %2650 = vmatpush.bf16.xpose.msra.mxu0 %v1814
        %2651 = vmatmul.bf16.gmra.mxu0 %v2473
        %v2652 = vpop.f32.mrf.mxu0
        %v2653 = vadd.f32 0.0, %v2652
        %v2654 = vpop.f32.mrf.mxu0
        %2655 = vdwg.mxu0
        %v2656 = vadd.f32 %v2600, %v2614
        %v2657 = vadd.f32 %v2601, %v2627
        %v2658 = vadd.f32 %v2602, %v2640
        %v2659 = vadd.f32 %v2603, %v2653
        %v2660 = vxor.u32 %v2656, 2147483648
        %v2661 = vmul.f32 %v2660, 1.442695
        %v2662 = vpow.pop %v2661
        %v2663 = vadd.f32 %v2662, 1.0
        %v2664 = vrcp.pop %v2663
        %v2665 = vmul.f32 %v2663, %v2664
        %v2666 = vsub.f32 1.0, %v2665
        %v2667 = vmul.f32 %v2664, %v2666
        %v2668 = vadd.f32 %v2664, %v2667
        %vm2669 = vweird.f32 %v2663
        %vm2670 = vweird.f32 %v2664
        %vm2671 = vmor %vm2669, %vm2670
        %v2672 = vsel %vm2671, %v2664, %v2668
        %v2673 = vand.u32 2147483647, %v2663
        %vm2674 = vcmp.eq.f32.partialorder %v2673, 8.507059e+37
        %v2675 = vand.u32 %v2663, 2147483648
        %v2676 = vor.u32 1.1754944e-38, %v2675
        %v2677 = vsel %vm2674, %v2676, %v2672
        %v2678 = vmul.f32 1.0, %v2677
        %v2679 = vxor.u32 %v2657, 2147483648
        %v2680 = vmul.f32 %v2679, 1.442695
        %v2681 = vpow.pop %v2680
        %v2682 = vadd.f32 %v2681, 1.0
        %v2683 = vrcp.pop %v2682
        %v2684 = vmul.f32 %v2682, %v2683
        %v2685 = vsub.f32 1.0, %v2684
        %v2686 = vmul.f32 %v2683, %v2685
        %v2687 = vadd.f32 %v2683, %v2686
        %vm2688 = vweird.f32 %v2682
        %vm2689 = vweird.f32 %v2683
        %vm2690 = vmor %vm2688, %vm2689
        %v2691 = vsel %vm2690, %v2683, %v2687
        %v2692 = vand.u32 2147483647, %v2682
        %vm2693 = vcmp.eq.f32.partialorder %v2692, 8.507059e+37
        %v2694 = vand.u32 %v2682, 2147483648
        %v2695 = vor.u32 1.1754944e-38, %v2694
        %v2696 = vsel %vm2693, %v2695, %v2691
        %v2697 = vmul.f32 1.0, %v2696
        %v2698 = vtanh.pop %v2658
        %v2699 = vxor.u32 %v2659, 2147483648
        %v2700 = vmul.f32 %v2699, 1.442695
        %v2701 = vpow.pop %v2700
        %v2702 = vadd.f32 %v2701, 1.0
        %v2703 = vrcp.pop %v2702
        %v2704 = vmul.f32 %v2702, %v2703
        %v2705 = vsub.f32 1.0, %v2704
        %v2706 = vmul.f32 %v2703, %v2705
        %v2707 = vadd.f32 %v2703, %v2706
        %vm2708 = vweird.f32 %v2702
        %vm2709 = vweird.f32 %v2703
        %vm2710 = vmor %vm2708, %vm2709
        %v2711 = vsel %vm2710, %v2703, %v2707
        %v2712 = vand.u32 2147483647, %v2702
        %vm2713 = vcmp.eq.f32.partialorder %v2712, 8.507059e+37
        %v2714 = vand.u32 %v2702, 2147483648
        %v2715 = vor.u32 1.1754944e-38, %v2714
        %v2716 = vsel %vm2713, %v2715, %v2711
        %v2717 = vmul.f32 1.0, %v2716
        %v2718 = vmul.f32 %v2697, %v2470
        %v2719 = vmul.f32 %v2678, %v2698
        %v2720 = vadd.f32 %v2718, %v2719
        %v2721 = vtanh.pop %v2720
        %v2722 = vmul.f32 %v2717, %v2721
        %v2723 = vpack.c.bf16 %v2722, %v2722
        %2724 = vst [vmem:[%s448] sm:$0xf] %v2723
        %2725 = vst [vmem:[#allocation4] sm:$0xff] %v2597
        %2726 = vst [vmem:[#allocation5] sm:$0xff] %v2595
        %2727 = vst [vmem:[#allocation6] sm:$0xff] %v2722
        %2728 = vst [vmem:[#allocation7] sm:$0xff] %v2720
        %s2729 = smul.u32 4, %s24
        %p2730 = scmp.lt.s32.totalorder %s2729, 7
        %s2731 = scalar_select %p2730, %s2729, 7
        %s2732 = smul.addr %s2731, 4
        %s2733 = scalar_lea.vmem %s8, %s2732
        %s2734 = ssub.s32 1, %s24
        %s2735 = smul.u32 4, %s2734
        %p2736 = scmp.lt.s32.totalorder %s2735, 7
        %s2737 = scalar_select %p2736, %s2735, 7
        %s2738 = smul.addr %s2737, 4
        %s2739 = scalar_lea.vmem %s9, %s2738
        // Predicated region
        $region73: #{transcription_forward.3} parent=51 // pred_check
          %p2740 = pneg %p222
        $region74: #{transcription_forward.3} parent=51 // pred_check_branch
          %2742 = sbr.rel (%p2740) target = $region76
        $region75: #{transcription_forward.3} parent=51 // pred_region
          %s2743 = smul.u32 4, %s24
        $region76: #{transcription_forward.3} parent=51 // pred_fallthru
          _
        // Predicated region
        $region77: #{transcription_forward.3} parent=51 // pred_check
          %p2744 = pneg %p250
        $region78: #{transcription_forward.3} parent=51 // pred_check_branch
          %2746 = sbr.rel (%p2744) target = $region80
        $region79: #{transcription_forward.3} parent=51 // pred_region
          %s2747 = ssub.s32 1, %s24
          %s2748 = smul.u32 4, %s2747
        $region80: #{transcription_forward.3} parent=51 // pred_fallthru
          _
      $region52: #{transcription_forward.3} parent=5 // pred_fallthru
        _
      %p2749 = scmp.le.s32.totalorder 2, %s19
      // Predicated region
      $region81: #{transcription_forward.3} parent=5 // pred_check
        %p2750 = pneg %p2749
      $region82: #{transcription_forward.3} parent=5 // pred_check_branch
        %2752 = sbr.rel (%p2750) target = $region84
      $region83: #{transcription_forward.3} parent=5 // pred_region
        %s2753 = ssub.s32 %s19, 2
        // Predicated region
        $region85: #{transcription_forward.3} parent=83 // pred_check
          %p2754 = pneg %p228
        $region86: #{transcription_forward.3} parent=83 // pred_check_branch
          %2756 = sbr.rel (%p2754) target = $region88
        $region87: #{transcription_forward.3} parent=83 // pred_region
          %s2757 = smul.u32 4, %s25
          %p2758 = scmp.lt.s32.totalorder %s2757, 7
          %s2759 = scalar_select %p2758, %s2757, 7
          %s2760 = smul.addr %s2759, 4
          %s2761 = scalar_lea.vmem %s8, %s2760
        $region88: #{transcription_forward.3} parent=83 // pred_fallthru
          _
        // Predicated region
        $region89: #{transcription_forward.3} parent=83 // pred_check
          %p2762 = pneg %p256
        $region90: #{transcription_forward.3} parent=83 // pred_check_branch
          %2764 = sbr.rel (%p2762) target = $region92
        $region91: #{transcription_forward.3} parent=83 // pred_region
          %s2765 = ssub.s32 1, %s25
          %s2766 = smul.u32 4, %s2765
          %p2767 = scmp.lt.s32.totalorder %s2766, 7
          %s2768 = scalar_select %p2767, %s2766, 7
          %s2769 = smul.addr %s2768, 4
          %s2770 = scalar_lea.vmem %s9, %s2769
        $region92: #{transcription_forward.3} parent=83 // pred_fallthru
          _
      $region84: #{transcription_forward.3} parent=5 // pred_fallthru
        _
    $region6: #{transcription_forward.3} parent=1 // loop_footer
      %s23 = sadd.s32 1, %s19
    $region7: #{transcription_forward.3} parent=1 // loop_footer_branch
      %18 = sbr.rel target = $region3
    $region8: #{transcription_forward.3} parent=1 // loop_exit
      _
    %2771 = vsyncpa [#allocation9], 1
    %s2772 = scalar_lea.sflag [#allocation9], 1
    %2773 = vsyncpa %s2772, 1
    %2774 = vsyncpa [#allocation11], 1
    %2775 = vsyncpa [#allocation14], 1

// kernel: transcription_forward.4
$region0: #{transcription_forward.4}
  #allocation0 [shape = 'u32[]', space=smem, size = 0x4, offset = 0x4, fixed_abs, tag = 'smem constant byte address 0x4 - core index']
  #allocation1 [shape = 'u32[72,128]{1,0:T(1,128)}', space=vmem, size = 0x9000, scoped, tag = 'internal scratch']
  #allocation2 [shape = 'f32[32,512]{1,0:T(8,128)}', space=vmem, size = 0x10000, scoped, tag = 'scratch operand']
  #allocation3 [shape = 'f32[32,512]{1,0:T(8,128)}', space=vmem, size = 0x10000, scoped, tag = 'scratch operand']
  #allocation4 [shape = 'f32[8,128]{1,0:T(8,128)}', space=vmem, size = 0x1000, scoped, tag = 'scratch operand']
  #allocation5 [shape = 'f32[8,128]{1,0:T(8,128)}', space=vmem, size = 0x1000, scoped, tag = 'scratch operand']
  #allocation6 [shape = 'f32[8,128]{1,0:T(8,128)}', space=vmem, size = 0x1000, scoped, tag = 'scratch operand']
  #allocation7 [shape = 'f32[8,128]{1,0:T(8,128)}', space=vmem, size = 0x1000, scoped, tag = 'scratch operand']
  %s0 = inlined_call_operand.vmem [shape: bf16[64,128], index: 0, kind: input, shape index: {}, may-alias: {0,2}]
  %s1 = inlined_call_operand.vmem [shape: bf16[64,128], index: 1, kind: input, shape index: {}, may-alias: {1,3}]
  %s2 = inlined_call_operand.vmem [shape: bf16[64,128], index: 2, kind: input, shape index: {}, may-alias: {0,2}]
  %s3 = inlined_call_operand.vmem [shape: bf16[64,128], index: 3, kind: input, shape index: {}, may-alias: {1,3}]
  %s4 = inlined_call_operand.hbm [shape: bf16[512,128], index: 4, kind: input, shape index: {}]
  %s5 = inlined_call_operand.hbm [shape: bf16[512,128], index: 5, kind: input, shape index: {}]
  %s6 = inlined_call_operand.hbm [shape: bf16[512,128], index: 6, kind: input, shape index: {}]
  %s7 = inlined_call_operand.hbm [shape: bf16[512,128], index: 7, kind: input, shape index: {}]
  %s8 = inlined_call_operand.hbm [shape: bf16[512,128], index: 8, kind: input, shape index: {}]
  %s9 = inlined_call_operand.hbm [shape: bf16[512,128], index: 9, kind: input, shape index: {}]
  %s10 = inlined_call_operand.vmem [shape: f32[1,512], index: 10, kind: input, shape index: {}]
  %s11 = inlined_call_operand.vmem [shape: f32[1,512], index: 11, kind: input, shape index: {}]
  %s12 = inlined_call_operand.vmem [shape: bf16[64,128], index: 12, kind: output, shape index: {0}]
  %s13 = inlined_call_operand.vmem [shape: bf16[64,128], index: 13, kind: output, shape index: {1}]
  %14 = xla_tuple %s12, %s13
  %s15 = sld [smem:[#allocation0]]
  $region117: #{transcription_forward.4} parent=0
    _
  %s17 = ssub.s32 1, %s15
  %s18 = scalar_select 0, %s17, %s15
  $region1: #{transcription_forward.4} parent=0
    #allocation8 [shape = 'u8[131072]{0}', space=vmem, size = 0x20000, scoped, tag = 'input window, operand 4, single buffered']
    #allocation9 [shape = 's32[2]{0}', space=sflag, size = 0x8, scoped, tag = 'scoped memory for transcription_forward.4']
    #allocation10 [shape = 'u8[131072]{0}', space=vmem, size = 0x20000, scoped, tag = 'input window, operand 5, single buffered']
    #allocation11 [shape = 's32[1]{0}', space=sflag, size = 0x4, scoped, tag = 'scoped memory for transcription_forward.4']
    #allocation12 [shape = 'u8[131072]{0}', space=vmem, size = 0x20000, scoped, tag = 'input window, operand 6, single buffered']
    #allocation13 [shape = 'u8[131072]{0}', space=vmem, size = 0x20000, scoped, tag = 'input window, operand 7, single buffered']
    #allocation14 [shape = 's32[1]{0}', space=sflag, size = 0x4, scoped, tag = 'scoped memory for transcription_forward.4']
    #allocation15 [shape = 'u8[131072]{0}', space=vmem, size = 0x20000, scoped, tag = 'input window, operand 8, single buffered']
    #allocation16 [shape = 'u8[131072]{0}', space=vmem, size = 0x20000, scoped, tag = 'input window, operand 9, single buffered']
    #allocation17 [shape = 's32[1]{0}', space=sflag, size = 0x4, scoped, tag = 'scoped memory for transcription_forward.4']
    %19 = vsyncpa [#allocation9], 0
    %20 = vsyncpa [#allocation11], 0
    %21 = vsyncpa [#allocation14], 0
    %22 = vsyncpa [#allocation17], 0
    loop: start=0, step=1, limit=4
    $region2: #{transcription_forward.4} parent=1 // loop_pre_header
      _
    $region3: #{transcription_forward.4} parent=1 // loop_header
      %s24 = sphi 0, %s28
      %p25 = scmp.ge.s32.totalorder %s24, 4
      %s34 = sphi 0, %s36
      %s37 = sphi 0, %s34
      %s38 = sphi 0, %s37
      %s54 = sphi 0, %s38
      %s60 = sphi 0, %s62
      %s63 = sphi 0, %s60
      %s64 = sphi 0, %s63
      %s80 = sphi 0, %s64
      %s88 = sphi 0, %s90
      %s91 = sphi 0, %s88
      %s92 = sphi 0, %s91
      %s108 = sphi 0, %s92
      %s116 = sphi 0, %s118
      %s119 = sphi 0, %s116
      %s120 = sphi 0, %s119
      %s136 = sphi 0, %s120
      %s140 = sphi 0, %s140
      %s142 = sphi 0, %s140
      %s143 = sphi 0, %s142
      %s157 = sphi 0, %s143
      %s161 = sphi 0, %s161
      %s163 = sphi 0, %s161
      %s164 = sphi 0, %s163
      %s178 = sphi 0, %s164
      %s182 = sphi 0, %s182
      %s184 = sphi 0, %s182
      %s185 = sphi 0, %s184
      %s199 = sphi 0, %s185
      %s203 = sphi 0, %s203
      %s205 = sphi 0, %s203
      %s206 = sphi 0, %s205
      %s220 = sphi 0, %s206
      %s224 = sphi 0, %s224
      %s226 = sphi 0, %s224
      %s227 = sphi 0, %s226
      %s241 = sphi 0, %s227
      %s245 = sphi 0, %s245
      %s247 = sphi 0, %s245
      %s248 = sphi 0, %s247
      %s262 = sphi 0, %s248
      %s266 = sphi 0, %s266
      %s268 = sphi 0, %s266
      %s269 = sphi 0, %s268
      %s283 = sphi 0, %s269
      %s287 = sphi 0, %s287
      %s289 = sphi 0, %s287
      %s290 = sphi 0, %s289
      %s304 = sphi 0, %s290
      %s310 = sphi 0, %s312
      %s313 = sphi 0, %s310
      %s314 = sphi 0, %s313
      %s330 = sphi 0, %s314
      %s338 = sphi 0, %s340
      %s341 = sphi 0, %s338
      %s342 = sphi 0, %s341
      %s358 = sphi 0, %s342
    $region4: #{transcription_forward.4} parent=1 // loop_header_branch
      %27 = sbr.rel (%p25) target = $region8
    $region5: #{transcription_forward.4} parent=1 // loop_body
      %s29 = ssub.s32 %s24, 1
      %s30 = ssub.s32 %s24, 2
      %s31 = sadd.s32 %s24, 1
      %s32 = ssub.s32 %s24, %s31
      %p33 = scmp.eq.s32.totalorder %s32, 0
      %s35 = sadd.s32 %s34, 1
      %s36 = scalar_select %p33, %s34, %s35
      %p39 = pneg %p33
      %p40 = scmp.eq.s32.totalorder %s24, 1
      %p41 = por %p39, %p40
      %p42 = scmp.ne.s32.totalorder %s34, %s37
      %p43 = scmp.eq.s32.totalorder %s24, 0
      %p44 = por %p42, %p43
      %p45 = scmp.ne.s32.totalorder %s34, %s37
      %p46 = scmp.eq.s32.totalorder %s29, 1
      %p47 = por %p45, %p46
      %p48 = scmp.ne.s32.totalorder %s37, %s38
      %p49 = scmp.eq.s32.totalorder %s29, 0
      %p50 = por %p48, %p49
      %p51 = scmp.ne.s32.totalorder %s37, %s38
      %p52 = scmp.eq.s32.totalorder %s30, 1
      %p53 = por %p51, %p52
      %p55 = scmp.ne.s32.totalorder %s38, %s54
      %p56 = scmp.eq.s32.totalorder %s30, 0
      %p57 = por %p55, %p56
      %s58 = ssub.s32 %s24, %s31
      %p59 = scmp.eq.s32.totalorder %s58, 0
      %s61 = sadd.s32 %s60, 1
      %s62 = scalar_select %p59, %s60, %s61
      %p65 = pneg %p59
      %p66 = scmp.eq.s32.totalorder %s24, 1
      %p67 = por %p65, %p66
      %p68 = scmp.ne.s32.totalorder %s60, %s63
      %p69 = scmp.eq.s32.totalorder %s24, 0
      %p70 = por %p68, %p69
      %p71 = scmp.ne.s32.totalorder %s60, %s63
      %p72 = scmp.eq.s32.totalorder %s29, 1
      %p73 = por %p71, %p72
      %p74 = scmp.ne.s32.totalorder %s63, %s64
      %p75 = scmp.eq.s32.totalorder %s29, 0
      %p76 = por %p74, %p75
      %p77 = scmp.ne.s32.totalorder %s63, %s64
      %p78 = scmp.eq.s32.totalorder %s30, 1
      %p79 = por %p77, %p78
      %p81 = scmp.ne.s32.totalorder %s64, %s80
      %p82 = scmp.eq.s32.totalorder %s30, 0
      %p83 = por %p81, %p82
      %s84 = ssub.s32 1, %s24
      %s85 = ssub.s32 1, %s31
      %s86 = ssub.s32 %s84, %s85
      %p87 = scmp.eq.s32.totalorder %s86, 0
      %s89 = sadd.s32 %s88, 1
      %s90 = scalar_select %p87, %s88, %s89
      %p93 = pneg %p87
      %p94 = scmp.eq.s32.totalorder %s24, 1
      %p95 = por %p93, %p94
      %p96 = scmp.ne.s32.totalorder %s88, %s91
      %p97 = scmp.eq.s32.totalorder %s24, 0
      %p98 = por %p96, %p97
      %p99 = scmp.ne.s32.totalorder %s88, %s91
      %p100 = scmp.eq.s32.totalorder %s29, 1
      %p101 = por %p99, %p100
      %p102 = scmp.ne.s32.totalorder %s91, %s92
      %p103 = scmp.eq.s32.totalorder %s29, 0
      %p104 = por %p102, %p103
      %p105 = scmp.ne.s32.totalorder %s91, %s92
      %p106 = scmp.eq.s32.totalorder %s30, 1
      %p107 = por %p105, %p106
      %p109 = scmp.ne.s32.totalorder %s92, %s108
      %p110 = scmp.eq.s32.totalorder %s30, 0
      %p111 = por %p109, %p110
      %s112 = ssub.s32 1, %s24
      %s113 = ssub.s32 1, %s31
      %s114 = ssub.s32 %s112, %s113
      %p115 = scmp.eq.s32.totalorder %s114, 0
      %s117 = sadd.s32 %s116, 1
      %s118 = scalar_select %p115, %s116, %s117
      %p121 = pneg %p115
      %p122 = scmp.eq.s32.totalorder %s24, 1
      %p123 = por %p121, %p122
      %p124 = scmp.ne.s32.totalorder %s116, %s119
      %p125 = scmp.eq.s32.totalorder %s24, 0
      %p126 = por %p124, %p125
      %p127 = scmp.ne.s32.totalorder %s116, %s119
      %p128 = scmp.eq.s32.totalorder %s29, 1
      %p129 = por %p127, %p128
      %p130 = scmp.ne.s32.totalorder %s119, %s120
      %p131 = scmp.eq.s32.totalorder %s29, 0
      %p132 = por %p130, %p131
      %p133 = scmp.ne.s32.totalorder %s119, %s120
      %p134 = scmp.eq.s32.totalorder %s30, 1
      %p135 = por %p133, %p134
      %p137 = scmp.ne.s32.totalorder %s120, %s136
      %p138 = scmp.eq.s32.totalorder %s30, 0
      %p139 = por %p137, %p138
      %s141 = sadd.s32 %s140, 1
      %p144 = scmp.eq.s32.totalorder %s24, 1
      %p145 = scmp.ne.s32.totalorder %s140, %s142
      %p146 = scmp.eq.s32.totalorder %s24, 0
      %p147 = por %p145, %p146
      %p148 = scmp.ne.s32.totalorder %s140, %s142
      %p149 = scmp.eq.s32.totalorder %s29, 1
      %p150 = por %p148, %p149
      %p151 = scmp.ne.s32.totalorder %s142, %s143
      %p152 = scmp.eq.s32.totalorder %s29, 0
      %p153 = por %p151, %p152
      %p154 = scmp.ne.s32.totalorder %s142, %s143
      %p155 = scmp.eq.s32.totalorder %s30, 1
      %p156 = por %p154, %p155
      %p158 = scmp.ne.s32.totalorder %s143, %s157
      %p159 = scmp.eq.s32.totalorder %s30, 0
      %p160 = por %p158, %p159
      %s162 = sadd.s32 %s161, 1
      %p165 = scmp.eq.s32.totalorder %s24, 1
      %p166 = scmp.ne.s32.totalorder %s161, %s163
      %p167 = scmp.eq.s32.totalorder %s24, 0
      %p168 = por %p166, %p167
      %p169 = scmp.ne.s32.totalorder %s161, %s163
      %p170 = scmp.eq.s32.totalorder %s29, 1
      %p171 = por %p169, %p170
      %p172 = scmp.ne.s32.totalorder %s163, %s164
      %p173 = scmp.eq.s32.totalorder %s29, 0
      %p174 = por %p172, %p173
      %p175 = scmp.ne.s32.totalorder %s163, %s164
      %p176 = scmp.eq.s32.totalorder %s30, 1
      %p177 = por %p175, %p176
      %p179 = scmp.ne.s32.totalorder %s164, %s178
      %p180 = scmp.eq.s32.totalorder %s30, 0
      %p181 = por %p179, %p180
      %s183 = sadd.s32 %s182, 1
      %p186 = scmp.eq.s32.totalorder %s24, 1
      %p187 = scmp.ne.s32.totalorder %s182, %s184
      %p188 = scmp.eq.s32.totalorder %s24, 0
      %p189 = por %p187, %p188
      %p190 = scmp.ne.s32.totalorder %s182, %s184
      %p191 = scmp.eq.s32.totalorder %s29, 1
      %p192 = por %p190, %p191
      %p193 = scmp.ne.s32.totalorder %s184, %s185
      %p194 = scmp.eq.s32.totalorder %s29, 0
      %p195 = por %p193, %p194
      %p196 = scmp.ne.s32.totalorder %s184, %s185
      %p197 = scmp.eq.s32.totalorder %s30, 1
      %p198 = por %p196, %p197
      %p200 = scmp.ne.s32.totalorder %s185, %s199
      %p201 = scmp.eq.s32.totalorder %s30, 0
      %p202 = por %p200, %p201
      %s204 = sadd.s32 %s203, 1
      %p207 = scmp.eq.s32.totalorder %s24, 1
      %p208 = scmp.ne.s32.totalorder %s203, %s205
      %p209 = scmp.eq.s32.totalorder %s24, 0
      %p210 = por %p208, %p209
      %p211 = scmp.ne.s32.totalorder %s203, %s205
      %p212 = scmp.eq.s32.totalorder %s29, 1
      %p213 = por %p211, %p212
      %p214 = scmp.ne.s32.totalorder %s205, %s206
      %p215 = scmp.eq.s32.totalorder %s29, 0
      %p216 = por %p214, %p215
      %p217 = scmp.ne.s32.totalorder %s205, %s206
      %p218 = scmp.eq.s32.totalorder %s30, 1
      %p219 = por %p217, %p218
      %p221 = scmp.ne.s32.totalorder %s206, %s220
      %p222 = scmp.eq.s32.totalorder %s30, 0
      %p223 = por %p221, %p222
      %s225 = sadd.s32 %s224, 1
      %p228 = scmp.eq.s32.totalorder %s24, 1
      %p229 = scmp.ne.s32.totalorder %s224, %s226
      %p230 = scmp.eq.s32.totalorder %s24, 0
      %p231 = por %p229, %p230
      %p232 = scmp.ne.s32.totalorder %s224, %s226
      %p233 = scmp.eq.s32.totalorder %s29, 1
      %p234 = por %p232, %p233
      %p235 = scmp.ne.s32.totalorder %s226, %s227
      %p236 = scmp.eq.s32.totalorder %s29, 0
      %p237 = por %p235, %p236
      %p238 = scmp.ne.s32.totalorder %s226, %s227
      %p239 = scmp.eq.s32.totalorder %s30, 1
      %p240 = por %p238, %p239
      %p242 = scmp.ne.s32.totalorder %s227, %s241
      %p243 = scmp.eq.s32.totalorder %s30, 0
      %p244 = por %p242, %p243
      %s246 = sadd.s32 %s245, 1
      %p249 = scmp.eq.s32.totalorder %s24, 1
      %p250 = scmp.ne.s32.totalorder %s245, %s247
      %p251 = scmp.eq.s32.totalorder %s24, 0
      %p252 = por %p250, %p251
      %p253 = scmp.ne.s32.totalorder %s245, %s247
      %p254 = scmp.eq.s32.totalorder %s29, 1
      %p255 = por %p253, %p254
      %p256 = scmp.ne.s32.totalorder %s247, %s248
      %p257 = scmp.eq.s32.totalorder %s29, 0
      %p258 = por %p256, %p257
      %p259 = scmp.ne.s32.totalorder %s247, %s248
      %p260 = scmp.eq.s32.totalorder %s30, 1
      %p261 = por %p259, %p260
      %p263 = scmp.ne.s32.totalorder %s248, %s262
      %p264 = scmp.eq.s32.totalorder %s30, 0
      %p265 = por %p263, %p264
      %s267 = sadd.s32 %s266, 1
      %p270 = scmp.eq.s32.totalorder %s24, 1
      %p271 = scmp.ne.s32.totalorder %s266, %s268
      %p272 = scmp.eq.s32.totalorder %s24, 0
      %p273 = por %p271, %p272
      %p274 = scmp.ne.s32.totalorder %s266, %s268
      %p275 = scmp.eq.s32.totalorder %s29, 1
      %p276 = por %p274, %p275
      %p277 = scmp.ne.s32.totalorder %s268, %s269
      %p278 = scmp.eq.s32.totalorder %s29, 0
      %p279 = por %p277, %p278
      %p280 = scmp.ne.s32.totalorder %s268, %s269
      %p281 = scmp.eq.s32.totalorder %s30, 1
      %p282 = por %p280, %p281
      %p284 = scmp.ne.s32.totalorder %s269, %s283
      %p285 = scmp.eq.s32.totalorder %s30, 0
      %p286 = por %p284, %p285
      %s288 = sadd.s32 %s287, 1
      %p291 = scmp.eq.s32.totalorder %s24, 1
      %p292 = scmp.ne.s32.totalorder %s287, %s289
      %p293 = scmp.eq.s32.totalorder %s24, 0
      %p294 = por %p292, %p293
      %p295 = scmp.ne.s32.totalorder %s287, %s289
      %p296 = scmp.eq.s32.totalorder %s29, 1
      %p297 = por %p295, %p296
      %p298 = scmp.ne.s32.totalorder %s289, %s290
      %p299 = scmp.eq.s32.totalorder %s29, 0
      %p300 = por %p298, %p299
      %p301 = scmp.ne.s32.totalorder %s289, %s290
      %p302 = scmp.eq.s32.totalorder %s30, 1
      %p303 = por %p301, %p302
      %p305 = scmp.ne.s32.totalorder %s290, %s304
      %p306 = scmp.eq.s32.totalorder %s30, 0
      %p307 = por %p305, %p306
      %s308 = ssub.s32 %s24, %s31
      %p309 = scmp.eq.s32.totalorder %s308, 0
      %s311 = sadd.s32 %s310, 1
      %s312 = scalar_select %p309, %s310, %s311
      %p315 = pneg %p309
      %p316 = scmp.eq.s32.totalorder %s24, 1
      %p317 = por %p315, %p316
      %p318 = scmp.ne.s32.totalorder %s310, %s313
      %p319 = scmp.eq.s32.totalorder %s24, 0
      %p320 = por %p318, %p319
      %p321 = scmp.ne.s32.totalorder %s310, %s313
      %p322 = scmp.eq.s32.totalorder %s29, 1
      %p323 = por %p321, %p322
      %p324 = scmp.ne.s32.totalorder %s313, %s314
      %p325 = scmp.eq.s32.totalorder %s29, 0
      %p326 = por %p324, %p325
      %p327 = scmp.ne.s32.totalorder %s313, %s314
      %p328 = scmp.eq.s32.totalorder %s30, 1
      %p329 = por %p327, %p328
      %p331 = scmp.ne.s32.totalorder %s314, %s330
      %p332 = scmp.eq.s32.totalorder %s30, 0
      %p333 = por %p331, %p332
      %s334 = ssub.s32 1, %s24
      %s335 = ssub.s32 1, %s31
      %s336 = ssub.s32 %s334, %s335
      %p337 = scmp.eq.s32.totalorder %s336, 0
      %s339 = sadd.s32 %s338, 1
      %s340 = scalar_select %p337, %s338, %s339
      %p343 = pneg %p337
      %p344 = scmp.eq.s32.totalorder %s24, 1
      %p345 = por %p343, %p344
      %p346 = scmp.ne.s32.totalorder %s338, %s341
      %p347 = scmp.eq.s32.totalorder %s24, 0
      %p348 = por %p346, %p347
      %p349 = scmp.ne.s32.totalorder %s338, %s341
      %p350 = scmp.eq.s32.totalorder %s29, 1
      %p351 = por %p349, %p350
      %p352 = scmp.ne.s32.totalorder %s341, %s342
      %p353 = scmp.eq.s32.totalorder %s29, 0
      %p354 = por %p352, %p353
      %p355 = scmp.ne.s32.totalorder %s341, %s342
      %p356 = scmp.eq.s32.totalorder %s30, 1
      %p357 = por %p355, %p356
      %p359 = scmp.ne.s32.totalorder %s342, %s358
      %p360 = scmp.eq.s32.totalorder %s30, 0
      %p361 = por %p359, %p360
      %p362 = scmp.le.s32.totalorder 1, %s24
      %p363 = scmp.lt.s32.totalorder %s24, 3
      %p364 = pnand %p362, %p363
      %p365 = pneg %p364
      // Predicated region
      $region9: #{transcription_forward.4} parent=5 // pred_check
        _
      $region10: #{transcription_forward.4} parent=5 // pred_check_branch
        %367 = sbr.rel (%p364) target = $region12
      $region11: #{transcription_forward.4} parent=5 // pred_region
        %s368 = ssub.s32 %s24, 1
        // Predicated region
        $region13: #{transcription_forward.4} parent=11 // pred_check
          %p369 = pneg %p153
        $region14: #{transcription_forward.4} parent=11 // pred_check_branch
          %371 = sbr.rel (%p369) target = $region16
        $region15: #{transcription_forward.4} parent=11 // pred_region
          %373 = vsyncadd [#allocation9], 0
          %s374 = sshll.u32 %s4, 4
          %s375 = int_to_ptr.hbm [resolvable:$true] %s374
          %s376 = sshll.u32 [#allocation8], 4
          %s377 = int_to_ptr.vmem [resolvable:$true] %s376
          %382 = dma.hbm_to_vmem [thread:$0]  %s375, 4096, %s377, [#allocation9], 64, 64, 4
        $region16: #{transcription_forward.4} parent=11 // pred_fallthru
          _
        // Predicated region
        $region17: #{transcription_forward.4} parent=11 // pred_check
          %p383 = pneg %p174
        $region18: #{transcription_forward.4} parent=11 // pred_check_branch
          %385 = sbr.rel (%p383) target = $region20
        $region19: #{transcription_forward.4} parent=11 // pred_region
          %387 = vsyncadd [#allocation11], 0
          %s388 = sshll.u32 %s5, 4
          %s389 = int_to_ptr.hbm [resolvable:$true] %s388
          %s390 = sshll.u32 [#allocation10], 4
          %s391 = int_to_ptr.vmem [resolvable:$true] %s390
          %396 = dma.hbm_to_vmem [thread:$0]  %s389, 4096, %s391, [#allocation11], 64, 64, 4
        $region20: #{transcription_forward.4} parent=11 // pred_fallthru
          _
        // Predicated region
        $region21: #{transcription_forward.4} parent=11 // pred_check
          %p397 = pneg %p195
        $region22: #{transcription_forward.4} parent=11 // pred_check_branch
          %399 = sbr.rel (%p397) target = $region24
        $region23: #{transcription_forward.4} parent=11 // pred_region
          %401 = vsyncadd [#allocation11], 0
          %s402 = sshll.u32 %s6, 4
          %s403 = int_to_ptr.hbm [resolvable:$true] %s402
          %s404 = sshll.u32 [#allocation12], 4
          %s405 = int_to_ptr.vmem [resolvable:$true] %s404
          %410 = dma.hbm_to_vmem [thread:$0]  %s403, 4096, %s405, [#allocation11], 64, 64, 4
        $region24: #{transcription_forward.4} parent=11 // pred_fallthru
          _
        // Predicated region
        $region25: #{transcription_forward.4} parent=11 // pred_check
          %p411 = pneg %p216
        $region26: #{transcription_forward.4} parent=11 // pred_check_branch
          %413 = sbr.rel (%p411) target = $region28
        $region27: #{transcription_forward.4} parent=11 // pred_region
          %415 = vsyncadd [#allocation14], 0
          %s416 = sshll.u32 %s7, 4
          %s417 = int_to_ptr.hbm [resolvable:$true] %s416
          %s418 = sshll.u32 [#allocation13], 4
          %s419 = int_to_ptr.vmem [resolvable:$true] %s418
          %424 = dma.hbm_to_vmem [thread:$0]  %s417, 4096, %s419, [#allocation14], 64, 64, 4
        $region28: #{transcription_forward.4} parent=11 // pred_fallthru
          _
        // Predicated region
        $region29: #{transcription_forward.4} parent=11 // pred_check
          %p425 = pneg %p237
        $region30: #{transcription_forward.4} parent=11 // pred_check_branch
          %427 = sbr.rel (%p425) target = $region32
        $region31: #{transcription_forward.4} parent=11 // pred_region
          %429 = vsyncadd [#allocation14], 0
          %s430 = sshll.u32 %s8, 4
          %s431 = int_to_ptr.hbm [resolvable:$true] %s430
          %s432 = sshll.u32 [#allocation15], 4
          %s433 = int_to_ptr.vmem [resolvable:$true] %s432
          %438 = dma.hbm_to_vmem [thread:$0]  %s431, 4096, %s433, [#allocation14], 64, 64, 4
        $region32: #{transcription_forward.4} parent=11 // pred_fallthru
          _
        // Predicated region
        $region33: #{transcription_forward.4} parent=11 // pred_check
          %p439 = pneg %p258
        $region34: #{transcription_forward.4} parent=11 // pred_check_branch
          %441 = sbr.rel (%p439) target = $region36
        $region35: #{transcription_forward.4} parent=11 // pred_region
          %443 = vsyncadd [#allocation17], 0
          %s444 = sshll.u32 %s9, 4
          %s445 = int_to_ptr.hbm [resolvable:$true] %s444
          %s446 = sshll.u32 [#allocation16], 4
          %s447 = int_to_ptr.vmem [resolvable:$true] %s446
          %452 = dma.hbm_to_vmem [thread:$0]  %s445, 4096, %s447, [#allocation17], 64, 64, 4
        $region36: #{transcription_forward.4} parent=11 // pred_fallthru
          _
        // Predicated region
        $region37: #{transcription_forward.4} parent=11 // pred_check
          %p453 = pneg %p279
        $region38: #{transcription_forward.4} parent=11 // pred_check_branch
          %455 = sbr.rel (%p453) target = $region40
        $region39: #{transcription_forward.4} parent=11 // pred_region
          _
        $region40: #{transcription_forward.4} parent=11 // pred_fallthru
          _
        // Predicated region
        $region41: #{transcription_forward.4} parent=11 // pred_check
          %p456 = pneg %p300
        $region42: #{transcription_forward.4} parent=11 // pred_check_branch
          %458 = sbr.rel (%p456) target = $region44
        $region43: #{transcription_forward.4} parent=11 // pred_region
          _
        $region44: #{transcription_forward.4} parent=11 // pred_fallthru
          _
      $region12: #{transcription_forward.4} parent=5 // pred_fallthru
        _
      %p459 = scmp.lt.s32.totalorder %s24, 2
      // Predicated region
      $region45: #{transcription_forward.4} parent=5 // pred_check
        %p460 = pneg %p459
      $region46: #{transcription_forward.4} parent=5 // pred_check_branch
        %462 = sbr.rel (%p460) target = $region48
      $region47: #{transcription_forward.4} parent=5 // pred_region
        // Predicated region
        $region49: #{transcription_forward.4} parent=47 // pred_check
          %p463 = pneg %p44
        $region50: #{transcription_forward.4} parent=47 // pred_check_branch
          %465 = sbr.rel (%p463) target = $region52
        $region51: #{transcription_forward.4} parent=47 // pred_region
          %s466 = smul.u32 4, %s24
          %p467 = scmp.lt.s32.totalorder %s466, 7
          %s468 = scalar_select %p467, %s466, 7
          %s469 = smul.addr %s468, 4
          %s470 = scalar_lea.vmem %s0, %s469
          %s471 = smul.u32 4, %s24
        $region52: #{transcription_forward.4} parent=47 // pred_fallthru
          _
        // Predicated region
        $region53: #{transcription_forward.4} parent=47 // pred_check
          %p472 = pneg %p70
        $region54: #{transcription_forward.4} parent=47 // pred_check_branch
          %474 = sbr.rel (%p472) target = $region56
        $region55: #{transcription_forward.4} parent=47 // pred_region
          %s475 = smul.u32 4, %s24
          %p476 = scmp.lt.s32.totalorder %s475, 7
          %s477 = scalar_select %p476, %s475, 7
          %s478 = smul.addr %s477, 4
          %s479 = scalar_lea.vmem %s1, %s478
          %s480 = smul.u32 4, %s24
        $region56: #{transcription_forward.4} parent=47 // pred_fallthru
          _
        // Predicated region
        $region57: #{transcription_forward.4} parent=47 // pred_check
          %p481 = pneg %p98
        $region58: #{transcription_forward.4} parent=47 // pred_check_branch
          %483 = sbr.rel (%p481) target = $region60
        $region59: #{transcription_forward.4} parent=47 // pred_region
          %s484 = ssub.s32 1, %s24
          %s485 = smul.u32 4, %s484
          %p486 = scmp.lt.s32.totalorder %s485, 7
          %s487 = scalar_select %p486, %s485, 7
          %s488 = smul.addr %s487, 4
          %s489 = scalar_lea.vmem %s2, %s488
          %s490 = ssub.s32 1, %s24
          %s491 = smul.u32 4, %s490
        $region60: #{transcription_forward.4} parent=47 // pred_fallthru
          _
        // Predicated region
        $region61: #{transcription_forward.4} parent=47 // pred_check
          %p492 = pneg %p126
        $region62: #{transcription_forward.4} parent=47 // pred_check_branch
          %494 = sbr.rel (%p492) target = $region64
        $region63: #{transcription_forward.4} parent=47 // pred_region
          %s495 = ssub.s32 1, %s24
          %s496 = smul.u32 4, %s495
          %p497 = scmp.lt.s32.totalorder %s496, 7
          %s498 = scalar_select %p497, %s496, 7
          %s499 = smul.addr %s498, 4
          %s500 = scalar_lea.vmem %s3, %s499
          %s501 = ssub.s32 1, %s24
          %s502 = smul.u32 4, %s501
        $region64: #{transcription_forward.4} parent=47 // pred_fallthru
          _
      $region48: #{transcription_forward.4} parent=5 // pred_fallthru
        _
      %p503 = scmp.le.s32.totalorder 1, %s24
      %p504 = scmp.lt.s32.totalorder %s24, 3
      %p505 = pnand %p503, %p504
      %p506 = pneg %p505
      // Predicated region
      $region65: #{transcription_forward.4} parent=5 // pred_check
        _
      $region66: #{transcription_forward.4} parent=5 // pred_check_branch
        %508 = sbr.rel (%p505) target = $region68
      $region67: #{transcription_forward.4} parent=5 // pred_region
        %s509 = ssub.s32 %s24, 1
        // Predicated region
        $region69: #{transcription_forward.4} parent=67 // pred_check
          %p510 = pneg %p153
        $region70: #{transcription_forward.4} parent=67 // pred_check_branch
          %512 = sbr.rel (%p510) target = $region72
        $region71: #{transcription_forward.4} parent=67 // pred_region
          %514 = dma.done [#allocation9], 4096
        $region72: #{transcription_forward.4} parent=67 // pred_fallthru
          _
        // Predicated region
        $region73: #{transcription_forward.4} parent=67 // pred_check
          %p515 = pneg %p174
        $region74: #{transcription_forward.4} parent=67 // pred_check_branch
          %517 = sbr.rel (%p515) target = $region76
        $region75: #{transcription_forward.4} parent=67 // pred_region
          %519 = dma.done [#allocation11], 4096
        $region76: #{transcription_forward.4} parent=67 // pred_fallthru
          _
        // Predicated region
        $region77: #{transcription_forward.4} parent=67 // pred_check
          %p520 = pneg %p195
        $region78: #{transcription_forward.4} parent=67 // pred_check_branch
          %522 = sbr.rel (%p520) target = $region80
        $region79: #{transcription_forward.4} parent=67 // pred_region
          %524 = dma.done [#allocation11], 4096
        $region80: #{transcription_forward.4} parent=67 // pred_fallthru
          _
        // Predicated region
        $region81: #{transcription_forward.4} parent=67 // pred_check
          %p525 = pneg %p216
        $region82: #{transcription_forward.4} parent=67 // pred_check_branch
          %527 = sbr.rel (%p525) target = $region84
        $region83: #{transcription_forward.4} parent=67 // pred_region
          %529 = dma.done [#allocation14], 4096
        $region84: #{transcription_forward.4} parent=67 // pred_fallthru
          _
        // Predicated region
        $region85: #{transcription_forward.4} parent=67 // pred_check
          %p530 = pneg %p237
        $region86: #{transcription_forward.4} parent=67 // pred_check_branch
          %532 = sbr.rel (%p530) target = $region88
        $region87: #{transcription_forward.4} parent=67 // pred_region
          %534 = dma.done [#allocation14], 4096
        $region88: #{transcription_forward.4} parent=67 // pred_fallthru
          _
        // Predicated region
        $region89: #{transcription_forward.4} parent=67 // pred_check
          %p535 = pneg %p258
        $region90: #{transcription_forward.4} parent=67 // pred_check_branch
          %537 = sbr.rel (%p535) target = $region92
        $region91: #{transcription_forward.4} parent=67 // pred_region
          %539 = dma.done [#allocation17], 4096
        $region92: #{transcription_forward.4} parent=67 // pred_fallthru
          _
        %s540 = smul.u32 4, %s29
        %p541 = scmp.lt.s32.totalorder %s540, 7
        %s542 = scalar_select %p541, %s540, 7
        %s543 = smul.addr %s542, 4
        %s544 = scalar_lea.vmem %s0, %s543
        %p545 = pneg %p50
        %p546 = pneg %p47
        %s547 = smul.u32 4, %s29
        %p548 = scmp.lt.s32.totalorder %s547, 7
        %s549 = scalar_select %p548, %s547, 7
        %s550 = smul.addr %s549, 4
        %s551 = scalar_lea.vmem %s1, %s550
        %p552 = pneg %p76
        %p553 = pneg %p73
        %s554 = ssub.s32 1, %s29
        %s555 = smul.u32 4, %s554
        %p556 = scmp.lt.s32.totalorder %s555, 7
        %s557 = scalar_select %p556, %s555, 7
        %s558 = smul.addr %s557, 4
        %s559 = scalar_lea.vmem %s2, %s558
        %p560 = pneg %p104
        %p561 = pneg %p101
        %s562 = ssub.s32 1, %s29
        %s563 = smul.u32 4, %s562
        %p564 = scmp.lt.s32.totalorder %s563, 7
        %s565 = scalar_select %p564, %s563, 7
        %s566 = smul.addr %s565, 4
        %s567 = scalar_lea.vmem %s3, %s566
        %p568 = pneg %p132
        %p569 = pneg %p129
        %p570 = pneg %p153
        %p571 = pneg %p150
        %p572 = pneg %p174
        %p573 = pneg %p171
        %p574 = pneg %p195
        %p575 = pneg %p192
        %p576 = pneg %p216
        %p577 = pneg %p213
        %p578 = pneg %p237
        %p579 = pneg %p234
        %p580 = pneg %p258
        %p581 = pneg %p255
        %p582 = pneg %p279
        %p583 = pneg %p276
        %p584 = pneg %p300
        %p585 = pneg %p297
        %p586 = pneg %p326
        %p587 = pneg %p323
        %s588 = smul.u32 4, %s29
        %p589 = scmp.lt.s32.totalorder %s588, 7
        %s590 = scalar_select %p589, %s588, 7
        %s591 = smul.addr %s590, 4
        %s592 = scalar_lea.vmem %s12, %s591
        %p593 = pneg %p354
        %p594 = pneg %p351
        %s595 = ssub.s32 1, %s29
        %s596 = smul.u32 4, %s595
        %p597 = scmp.lt.s32.totalorder %s596, 7
        %s598 = scalar_select %p597, %s596, 7
        %s599 = smul.addr %s598, 4
        %s600 = scalar_lea.vmem %s13, %s599
        %s601 = smul.u32 4, %s29
        %p602 = scmp.lt.s32.totalorder %s601, 7
        %s603 = scalar_select %p602, %s601, 7
        %s604 = smul.addr %s603, 4
        %s605 = scalar_lea.vmem %s0, %s604
        %s606 = smul.u32 4, %s29
        %s607 = smul.u32 4, %s29
        %p608 = scmp.lt.s32.totalorder %s607, 7
        %s609 = scalar_select %p608, %s607, 7
        %s610 = smul.addr %s609, 4
        %s611 = scalar_lea.vmem %s1, %s610
        %s612 = smul.u32 4, %s29
        %s613 = ssub.s32 1, %s29
        %s614 = smul.u32 4, %s613
        %p615 = scmp.lt.s32.totalorder %s614, 7
        %s616 = scalar_select %p615, %s614, 7
        %s617 = smul.addr %s616, 4
        %s618 = scalar_lea.vmem %s2, %s617
        %s619 = ssub.s32 1, %s29
        %s620 = smul.u32 4, %s619
        %s621 = ssub.s32 1, %s29
        %s622 = smul.u32 4, %s621
        %p623 = scmp.lt.s32.totalorder %s622, 7
        %s624 = scalar_select %p623, %s622, 7
        %s625 = smul.addr %s624, 4
        %s626 = scalar_lea.vmem %s3, %s625
        %s627 = ssub.s32 1, %s29
        %s628 = smul.u32 4, %s627
        %s629 = smul.u32 4, %s29
        %p630 = scmp.lt.s32.totalorder %s629, 7
        %s631 = scalar_select %p630, %s629, 7
        %s632 = smul.addr %s631, 4
        %s633 = scalar_lea.vmem %s12, %s632
        %s634 = smul.u32 4, %s29
        %s635 = ssub.s32 1, %s29
        %s636 = smul.u32 4, %s635
        %p637 = scmp.lt.s32.totalorder %s636, 7
        %s638 = scalar_select %p637, %s636, 7
        %s639 = smul.addr %s638, 4
        %s640 = scalar_lea.vmem %s13, %s639
        %s641 = ssub.s32 1, %s29
        %s642 = smul.u32 4, %s641
        %p643 = scmp.eq.s32.totalorder %s29, 0
        // Predicated region
        $region93: #{transcription_forward.4} parent=67 // pred_check
          %p644 = pneg %p643
        $region94: #{transcription_forward.4} parent=67 // pred_check_branch
          %646 = sbr.rel (%p644) target = $region96
        $region95: #{transcription_forward.4} parent=67 // pred_region
          %647 = vst [vmem:[#allocation4] sm:$0xff] 0.0
          %648 = vst [vmem:[#allocation5] sm:$0xff] 0.0
          %649 = vst [vmem:[#allocation6] sm:$0xff] 0.0
          %650 = vst [vmem:[#allocation7] sm:$0xff] 0.0
        $region96: #{transcription_forward.4} parent=67 // pred_fallthru
          _
        %v651 = vld [vmem:[%s605] sm:$0xf]
        %v652 = vld [vmem:[%s605 + $0x4] sm:$0xf]
        %v653 = vld [vmem:[%s605 + $0x8] sm:$0xf]
        %v654 = vld [vmem:[%s605 + $0xc] sm:$0xf]
        %v655 = vld [vmem:[#allocation8] sm:$0xf]
        %v656 = vld [vmem:[#allocation8 + $0x4] sm:$0xf]
        %v657 = vld [vmem:[#allocation8 + $0x8] sm:$0xf]
        %v658 = vld [vmem:[#allocation8 + $0xc] sm:$0xf]
        %v659 = vld [vmem:[#allocation8 + $0x10] sm:$0xf]
        %v660 = vld [vmem:[#allocation8 + $0x14] sm:$0xf]
        %v661 = vld [vmem:[#allocation8 + $0x18] sm:$0xf]
        %v662 = vld [vmem:[#allocation8 + $0x1c] sm:$0xf]
        %v663 = vld [vmem:[#allocation8 + $0x20] sm:$0xf]
        %v664 = vld [vmem:[#allocation8 + $0x24] sm:$0xf]
        %v665 = vld [vmem:[#allocation8 + $0x28] sm:$0xf]
        %v666 = vld [vmem:[#allocation8 + $0x2c] sm:$0xf]
        %v667 = vld [vmem:[#allocation8 + $0x30] sm:$0xf]
        %v668 = vld [vmem:[#allocation8 + $0x34] sm:$0xf]
        %v669 = vld [vmem:[#allocation8 + $0x38] sm:$0xf]
        %v670 = vld [vmem:[#allocation8 + $0x3c] sm:$0xf]
        %v671 = vld [vmem:[#allocation8 + $0x40] sm:$0xf]
        %v672 = vld [vmem:[#allocation8 + $0x44] sm:$0xf]
        %v673 = vld [vmem:[#allocation8 + $0x48] sm:$0xf]
        %v674 = vld [vmem:[#allocation8 + $0x4c] sm:$0xf]
        %v675 = vld [vmem:[#allocation8 + $0x50] sm:$0xf]
        %v676 = vld [vmem:[#allocation8 + $0x54] sm:$0xf]
        %v677 = vld [vmem:[#allocation8 + $0x58] sm:$0xf]
        %v678 = vld [vmem:[#allocation8 + $0x5c] sm:$0xf]
        %v679 = vld [vmem:[#allocation8 + $0x60] sm:$0xf]
        %v680 = vld [vmem:[#allocation8 + $0x64] sm:$0xf]
        %v681 = vld [vmem:[#allocation8 + $0x68] sm:$0xf]
        %v682 = vld [vmem:[#allocation8 + $0x6c] sm:$0xf]
        %v683 = vld [vmem:[#allocation8 + $0x70] sm:$0xf]
        %v684 = vld [vmem:[#allocation8 + $0x74] sm:$0xf]
        %v685 = vld [vmem:[#allocation8 + $0x78] sm:$0xf]
        %v686 = vld [vmem:[#allocation8 + $0x7c] sm:$0xf]
        %v687 = vld [vmem:[#allocation8 + $0x80] sm:$0xf]
        %v688 = vld [vmem:[#allocation8 + $0x84] sm:$0xf]
        %v689 = vld [vmem:[#allocation8 + $0x88] sm:$0xf]
        %v690 = vld [vmem:[#allocation8 + $0x8c] sm:$0xf]
        %v691 = vld [vmem:[#allocation8 + $0x90] sm:$0xf]
        %v692 = vld [vmem:[#allocation8 + $0x94] sm:$0xf]
        %v693 = vld [vmem:[#allocation8 + $0x98] sm:$0xf]
        %v694 = vld [vmem:[#allocation8 + $0x9c] sm:$0xf]
        %v695 = vld [vmem:[#allocation8 + $0xa0] sm:$0xf]
        %v696 = vld [vmem:[#allocation8 + $0xa4] sm:$0xf]
        %v697 = vld [vmem:[#allocation8 + $0xa8] sm:$0xf]
        %v698 = vld [vmem:[#allocation8 + $0xac] sm:$0xf]
        %v699 = vld [vmem:[#allocation8 + $0xb0] sm:$0xf]
        %v700 = vld [vmem:[#allocation8 + $0xb4] sm:$0xf]
        %v701 = vld [vmem:[#allocation8 + $0xb8] sm:$0xf]
        %v702 = vld [vmem:[#allocation8 + $0xbc] sm:$0xf]
        %v703 = vld [vmem:[#allocation8 + $0xc0] sm:$0xf]
        %v704 = vld [vmem:[#allocation8 + $0xc4] sm:$0xf]
        %v705 = vld [vmem:[#allocation8 + $0xc8] sm:$0xf]
        %v706 = vld [vmem:[#allocation8 + $0xcc] sm:$0xf]
        %v707 = vld [vmem:[#allocation8 + $0xd0] sm:$0xf]
        %v708 = vld [vmem:[#allocation8 + $0xd4] sm:$0xf]
        %v709 = vld [vmem:[#allocation8 + $0xd8] sm:$0xf]
        %v710 = vld [vmem:[#allocation8 + $0xdc] sm:$0xf]
        %v711 = vld [vmem:[#allocation8 + $0xe0] sm:$0xf]
        %v712 = vld [vmem:[#allocation8 + $0xe4] sm:$0xf]
        %v713 = vld [vmem:[#allocation8 + $0xe8] sm:$0xf]
        %v714 = vld [vmem:[#allocation8 + $0xec] sm:$0xf]
        %v715 = vld [vmem:[#allocation8 + $0xf0] sm:$0xf]
        %v716 = vld [vmem:[#allocation8 + $0xf4] sm:$0xf]
        %v717 = vld [vmem:[#allocation8 + $0xf8] sm:$0xf]
        %v718 = vld [vmem:[#allocation8 + $0xfc] sm:$0xf]
        %v719 = vld [vmem:[%s611] sm:$0xf]
        %v720 = vld [vmem:[%s611 + $0x4] sm:$0xf]
        %v721 = vld [vmem:[%s611 + $0x8] sm:$0xf]
        %v722 = vld [vmem:[%s611 + $0xc] sm:$0xf]
        %v723 = vld [vmem:[#allocation10] sm:$0xf]
        %v724 = vld [vmem:[#allocation10 + $0x4] sm:$0xf]
        %v725 = vld [vmem:[#allocation10 + $0x8] sm:$0xf]
        %v726 = vld [vmem:[#allocation10 + $0xc] sm:$0xf]
        %v727 = vld [vmem:[#allocation10 + $0x10] sm:$0xf]
        %v728 = vld [vmem:[#allocation10 + $0x14] sm:$0xf]
        %v729 = vld [vmem:[#allocation10 + $0x18] sm:$0xf]
        %v730 = vld [vmem:[#allocation10 + $0x1c] sm:$0xf]
        %v731 = vld [vmem:[#allocation10 + $0x20] sm:$0xf]
        %v732 = vld [vmem:[#allocation10 + $0x24] sm:$0xf]
        %v733 = vld [vmem:[#allocation10 + $0x28] sm:$0xf]
        %v734 = vld [vmem:[#allocation10 + $0x2c] sm:$0xf]
        %v735 = vld [vmem:[#allocation10 + $0x30] sm:$0xf]
        %v736 = vld [vmem:[#allocation10 + $0x34] sm:$0xf]
        %v737 = vld [vmem:[#allocation10 + $0x38] sm:$0xf]
        %v738 = vld [vmem:[#allocation10 + $0x3c] sm:$0xf]
        %v739 = vld [vmem:[#allocation10 + $0x40] sm:$0xf]
        %v740 = vld [vmem:[#allocation10 + $0x44] sm:$0xf]
        %v741 = vld [vmem:[#allocation10 + $0x48] sm:$0xf]
        %v742 = vld [vmem:[#allocation10 + $0x4c] sm:$0xf]
        %v743 = vld [vmem:[#allocation10 + $0x50] sm:$0xf]
        %v744 = vld [vmem:[#allocation10 + $0x54] sm:$0xf]
        %v745 = vld [vmem:[#allocation10 + $0x58] sm:$0xf]
        %v746 = vld [vmem:[#allocation10 + $0x5c] sm:$0xf]
        %v747 = vld [vmem:[#allocation10 + $0x60] sm:$0xf]
        %v748 = vld [vmem:[#allocation10 + $0x64] sm:$0xf]
        %v749 = vld [vmem:[#allocation10 + $0x68] sm:$0xf]
        %v750 = vld [vmem:[#allocation10 + $0x6c] sm:$0xf]
        %v751 = vld [vmem:[#allocation10 + $0x70] sm:$0xf]
        %v752 = vld [vmem:[#allocation10 + $0x74] sm:$0xf]
        %v753 = vld [vmem:[#allocation10 + $0x78] sm:$0xf]
        %v754 = vld [vmem:[#allocation10 + $0x7c] sm:$0xf]
        %v755 = vld [vmem:[#allocation10 + $0x80] sm:$0xf]
        %v756 = vld [vmem:[#allocation10 + $0x84] sm:$0xf]
        %v757 = vld [vmem:[#allocation10 + $0x88] sm:$0xf]
        %v758 = vld [vmem:[#allocation10 + $0x8c] sm:$0xf]
        %v759 = vld [vmem:[#allocation10 + $0x90] sm:$0xf]
        %v760 = vld [vmem:[#allocation10 + $0x94] sm:$0xf]
        %v761 = vld [vmem:[#allocation10 + $0x98] sm:$0xf]
        %v762 = vld [vmem:[#allocation10 + $0x9c] sm:$0xf]
        %v763 = vld [vmem:[#allocation10 + $0xa0] sm:$0xf]
        %v764 = vld [vmem:[#allocation10 + $0xa4] sm:$0xf]
        %v765 = vld [vmem:[#allocation10 + $0xa8] sm:$0xf]
        %v766 = vld [vmem:[#allocation10 + $0xac] sm:$0xf]
        %v767 = vld [vmem:[#allocation10 + $0xb0] sm:$0xf]
        %v768 = vld [vmem:[#allocation10 + $0xb4] sm:$0xf]
        %v769 = vld [vmem:[#allocation10 + $0xb8] sm:$0xf]
        %v770 = vld [vmem:[#allocation10 + $0xbc] sm:$0xf]
        %v771 = vld [vmem:[#allocation10 + $0xc0] sm:$0xf]
        %v772 = vld [vmem:[#allocation10 + $0xc4] sm:$0xf]
        %v773 = vld [vmem:[#allocation10 + $0xc8] sm:$0xf]
        %v774 = vld [vmem:[#allocation10 + $0xcc] sm:$0xf]
        %v775 = vld [vmem:[#allocation10 + $0xd0] sm:$0xf]
        %v776 = vld [vmem:[#allocation10 + $0xd4] sm:$0xf]
        %v777 = vld [vmem:[#allocation10 + $0xd8] sm:$0xf]
        %v778 = vld [vmem:[#allocation10 + $0xdc] sm:$0xf]
        %v779 = vld [vmem:[#allocation10 + $0xe0] sm:$0xf]
        %v780 = vld [vmem:[#allocation10 + $0xe4] sm:$0xf]
        %v781 = vld [vmem:[#allocation10 + $0xe8] sm:$0xf]
        %v782 = vld [vmem:[#allocation10 + $0xec] sm:$0xf]
        %v783 = vld [vmem:[#allocation10 + $0xf0] sm:$0xf]
        %v784 = vld [vmem:[#allocation10 + $0xf4] sm:$0xf]
        %v785 = vld [vmem:[#allocation10 + $0xf8] sm:$0xf]
        %v786 = vld [vmem:[#allocation10 + $0xfc] sm:$0xf]
        %v791 = vunpack.c.l.b16 %v719
        %v792 = vunpack.c.l.b16 %v720
        %v793 = vunpack.c.l.b16 %v721
        %v794 = vunpack.c.l.b16 %v722
        %v795 = vpack.c.b16 %v792, %v791
        %v796 = vpack.c.b16 %v794, %v793
        %v863 = vunpack.c.l.b16 %v723
        %v864 = vunpack.c.l.b16 %v724
        %v865 = vunpack.c.l.b16 %v725
        %v866 = vunpack.c.l.b16 %v726
        %v867 = vunpack.c.l.b16 %v727
        %v868 = vunpack.c.l.b16 %v728
        %v869 = vunpack.c.l.b16 %v729
        %v870 = vunpack.c.l.b16 %v730
        %v871 = vunpack.c.l.b16 %v731
        %v872 = vunpack.c.l.b16 %v732
        %v873 = vunpack.c.l.b16 %v733
        %v874 = vunpack.c.l.b16 %v734
        %v875 = vunpack.c.l.b16 %v735
        %v876 = vunpack.c.l.b16 %v736
        %v877 = vunpack.c.l.b16 %v737
        %v878 = vunpack.c.l.b16 %v738
        %v879 = vunpack.c.l.b16 %v739
        %v880 = vunpack.c.l.b16 %v740
        %v881 = vunpack.c.l.b16 %v741
        %v882 = vunpack.c.l.b16 %v742
        %v883 = vunpack.c.l.b16 %v743
        %v884 = vunpack.c.l.b16 %v744
        %v885 = vunpack.c.l.b16 %v745
        %v886 = vunpack.c.l.b16 %v746
        %v887 = vunpack.c.l.b16 %v747
        %v888 = vunpack.c.l.b16 %v748
        %v889 = vunpack.c.l.b16 %v749
        %v890 = vunpack.c.l.b16 %v750
        %v891 = vunpack.c.l.b16 %v751
        %v892 = vunpack.c.l.b16 %v752
        %v893 = vunpack.c.l.b16 %v753
        %v894 = vunpack.c.l.b16 %v754
        %v895 = vunpack.c.l.b16 %v755
        %v896 = vunpack.c.l.b16 %v756
        %v897 = vunpack.c.l.b16 %v757
        %v898 = vunpack.c.l.b16 %v758
        %v899 = vunpack.c.l.b16 %v759
        %v900 = vunpack.c.l.b16 %v760
        %v901 = vunpack.c.l.b16 %v761
        %v902 = vunpack.c.l.b16 %v762
        %v903 = vunpack.c.l.b16 %v763
        %v904 = vunpack.c.l.b16 %v764
        %v905 = vunpack.c.l.b16 %v765
        %v906 = vunpack.c.l.b16 %v766
        %v907 = vunpack.c.l.b16 %v767
        %v908 = vunpack.c.l.b16 %v768
        %v909 = vunpack.c.l.b16 %v769
        %v910 = vunpack.c.l.b16 %v770
        %v911 = vunpack.c.l.b16 %v771
        %v912 = vunpack.c.l.b16 %v772
        %v913 = vunpack.c.l.b16 %v773
        %v914 = vunpack.c.l.b16 %v774
        %v915 = vunpack.c.l.b16 %v775
        %v916 = vunpack.c.l.b16 %v776
        %v917 = vunpack.c.l.b16 %v777
        %v918 = vunpack.c.l.b16 %v778
        %v919 = vunpack.c.l.b16 %v779
        %v920 = vunpack.c.l.b16 %v780
        %v921 = vunpack.c.l.b16 %v781
        %v922 = vunpack.c.l.b16 %v782
        %v923 = vunpack.c.l.b16 %v783
        %v924 = vunpack.c.l.b16 %v784
        %v925 = vunpack.c.l.b16 %v785
        %v926 = vunpack.c.l.b16 %v786
        %v927 = vpack.c.b16 %v864, %v863
        %v928 = vpack.c.b16 %v866, %v865
        %v929 = vpack.c.b16 %v868, %v867
        %v930 = vpack.c.b16 %v870, %v869
        %v931 = vpack.c.b16 %v872, %v871
        %v932 = vpack.c.b16 %v874, %v873
        %v933 = vpack.c.b16 %v876, %v875
        %v934 = vpack.c.b16 %v878, %v877
        %v935 = vpack.c.b16 %v880, %v879
        %v936 = vpack.c.b16 %v882, %v881
        %v937 = vpack.c.b16 %v884, %v883
        %v938 = vpack.c.b16 %v886, %v885
        %v939 = vpack.c.b16 %v888, %v887
        %v940 = vpack.c.b16 %v890, %v889
        %v941 = vpack.c.b16 %v892, %v891
        %v942 = vpack.c.b16 %v894, %v893
        %v943 = vpack.c.b16 %v896, %v895
        %v944 = vpack.c.b16 %v898, %v897
        %v945 = vpack.c.b16 %v900, %v899
        %v946 = vpack.c.b16 %v902, %v901
        %v947 = vpack.c.b16 %v904, %v903
        %v948 = vpack.c.b16 %v906, %v905
        %v949 = vpack.c.b16 %v908, %v907
        %v950 = vpack.c.b16 %v910, %v909
        %v951 = vpack.c.b16 %v912, %v911
        %v952 = vpack.c.b16 %v914, %v913
        %v953 = vpack.c.b16 %v916, %v915
        %v954 = vpack.c.b16 %v918, %v917
        %v955 = vpack.c.b16 %v920, %v919
        %v956 = vpack.c.b16 %v922, %v921
        %v957 = vpack.c.b16 %v924, %v923
        %v958 = vpack.c.b16 %v926, %v925
        %991 = vmatpush.bf16.xpose.msra.mxu0 %v934
        %992 = vmatpush.bf16.xpose.msra.mxu0 %v933
        %993 = vmatpush.bf16.xpose.msra.mxu0 %v932
        %994 = vmatpush.bf16.xpose.msra.mxu0 %v931
        %995 = vmatpush.bf16.xpose.msra.mxu0 %v930
        %996 = vmatpush.bf16.xpose.msra.mxu0 %v929
        %997 = vmatpush.bf16.xpose.msra.mxu0 %v928
        %998 = vmatpush.bf16.xpose.msra.mxu0 %v927
        %999 = vmatmul.bf16.gmra.mxu0 %v795
        %v1000 = vpop.f32.mrf.mxu0
        %v1001 = vadd.f32 0.0, %v1000
        %v1002 = vpop.f32.mrf.mxu0
        %v1003 = vadd.f32 0.0, %v1002
        %1004 = vmatmul.bf16.gmra.mxu0 %v796
        %v1005 = vpop.f32.mrf.mxu0
        %v1006 = vadd.f32 0.0, %v1005
        %v1007 = vpop.f32.mrf.mxu0
        %v1008 = vadd.f32 0.0, %v1007
        %1009 = vdwg.mxu0
        %1010 = vmatpush.bf16.xpose.msra.mxu0 %v942
        %1011 = vmatpush.bf16.xpose.msra.mxu0 %v941
        %1012 = vmatpush.bf16.xpose.msra.mxu0 %v940
        %1013 = vmatpush.bf16.xpose.msra.mxu0 %v939
        %1014 = vmatpush.bf16.xpose.msra.mxu0 %v938
        %1015 = vmatpush.bf16.xpose.msra.mxu0 %v937
        %1016 = vmatpush.bf16.xpose.msra.mxu0 %v936
        %1017 = vmatpush.bf16.xpose.msra.mxu0 %v935
        %1018 = vmatmul.bf16.gmra.mxu0 %v795
        %v1019 = vpop.f32.mrf.mxu0
        %v1020 = vadd.f32 0.0, %v1019
        %v1021 = vpop.f32.mrf.mxu0
        %v1022 = vadd.f32 0.0, %v1021
        %1023 = vmatmul.bf16.gmra.mxu0 %v796
        %v1024 = vpop.f32.mrf.mxu0
        %v1025 = vadd.f32 0.0, %v1024
        %v1026 = vpop.f32.mrf.mxu0
        %v1027 = vadd.f32 0.0, %v1026
        %1028 = vdwg.mxu0
        %1029 = vmatpush.bf16.xpose.msra.mxu0 %v950
        %1030 = vmatpush.bf16.xpose.msra.mxu0 %v949
        %1031 = vmatpush.bf16.xpose.msra.mxu0 %v948
        %1032 = vmatpush.bf16.xpose.msra.mxu0 %v947
        %1033 = vmatpush.bf16.xpose.msra.mxu0 %v946
        %1034 = vmatpush.bf16.xpose.msra.mxu0 %v945
        %1035 = vmatpush.bf16.xpose.msra.mxu0 %v944
        %1036 = vmatpush.bf16.xpose.msra.mxu0 %v943
        %1037 = vmatmul.bf16.gmra.mxu0 %v795
        %v1038 = vpop.f32.mrf.mxu0
        %v1039 = vadd.f32 0.0, %v1038
        %v1040 = vpop.f32.mrf.mxu0
        %v1041 = vadd.f32 0.0, %v1040
        %1042 = vmatmul.bf16.gmra.mxu0 %v796
        %v1043 = vpop.f32.mrf.mxu0
        %v1044 = vadd.f32 0.0, %v1043
        %v1045 = vpop.f32.mrf.mxu0
        %v1046 = vadd.f32 0.0, %v1045
        %1047 = vdwg.mxu0
        %1048 = vmatpush.bf16.xpose.msra.mxu0 %v958
        %1049 = vmatpush.bf16.xpose.msra.mxu0 %v957
        %1050 = vmatpush.bf16.xpose.msra.mxu0 %v956
        %1051 = vmatpush.bf16.xpose.msra.mxu0 %v955
        %1052 = vmatpush.bf16.xpose.msra.mxu0 %v954
        %1053 = vmatpush.bf16.xpose.msra.mxu0 %v953
        %1054 = vmatpush.bf16.xpose.msra.mxu0 %v952
        %1055 = vmatpush.bf16.xpose.msra.mxu0 %v951
        %1056 = vmatmul.bf16.gmra.mxu0 %v795
        %v1057 = vpop.f32.mrf.mxu0
        %v1058 = vadd.f32 0.0, %v1057
        %v1059 = vpop.f32.mrf.mxu0
        %v1060 = vadd.f32 0.0, %v1059
        %1061 = vmatmul.bf16.gmra.mxu0 %v796
        %v1062 = vpop.f32.mrf.mxu0
        %v1063 = vadd.f32 0.0, %v1062
        %v1064 = vpop.f32.mrf.mxu0
        %v1065 = vadd.f32 0.0, %v1064
        %1066 = vdwg.mxu0
        %v1071 = vunpack.c.l.b16 %v651
        %v1072 = vunpack.c.l.b16 %v652
        %v1073 = vunpack.c.l.b16 %v653
        %v1074 = vunpack.c.l.b16 %v654
        %v1075 = vpack.c.b16 %v1072, %v1071
        %v1076 = vpack.c.b16 %v1074, %v1073
        %v1143 = vunpack.c.l.b16 %v655
        %v1144 = vunpack.c.l.b16 %v656
        %v1145 = vunpack.c.l.b16 %v657
        %v1146 = vunpack.c.l.b16 %v658
        %v1147 = vunpack.c.l.b16 %v659
        %v1148 = vunpack.c.l.b16 %v660
        %v1149 = vunpack.c.l.b16 %v661
        %v1150 = vunpack.c.l.b16 %v662
        %v1151 = vunpack.c.l.b16 %v663
        %v1152 = vunpack.c.l.b16 %v664
        %v1153 = vunpack.c.l.b16 %v665
        %v1154 = vunpack.c.l.b16 %v666
        %v1155 = vunpack.c.l.b16 %v667
        %v1156 = vunpack.c.l.b16 %v668
        %v1157 = vunpack.c.l.b16 %v669
        %v1158 = vunpack.c.l.b16 %v670
        %v1159 = vunpack.c.l.b16 %v671
        %v1160 = vunpack.c.l.b16 %v672
        %v1161 = vunpack.c.l.b16 %v673
        %v1162 = vunpack.c.l.b16 %v674
        %v1163 = vunpack.c.l.b16 %v675
        %v1164 = vunpack.c.l.b16 %v676
        %v1165 = vunpack.c.l.b16 %v677
        %v1166 = vunpack.c.l.b16 %v678
        %v1167 = vunpack.c.l.b16 %v679
        %v1168 = vunpack.c.l.b16 %v680
        %v1169 = vunpack.c.l.b16 %v681
        %v1170 = vunpack.c.l.b16 %v682
        %v1171 = vunpack.c.l.b16 %v683
        %v1172 = vunpack.c.l.b16 %v684
        %v1173 = vunpack.c.l.b16 %v685
        %v1174 = vunpack.c.l.b16 %v686
        %v1175 = vunpack.c.l.b16 %v687
        %v1176 = vunpack.c.l.b16 %v688
        %v1177 = vunpack.c.l.b16 %v689
        %v1178 = vunpack.c.l.b16 %v690
        %v1179 = vunpack.c.l.b16 %v691
        %v1180 = vunpack.c.l.b16 %v692
        %v1181 = vunpack.c.l.b16 %v693
        %v1182 = vunpack.c.l.b16 %v694
        %v1183 = vunpack.c.l.b16 %v695
        %v1184 = vunpack.c.l.b16 %v696
        %v1185 = vunpack.c.l.b16 %v697
        %v1186 = vunpack.c.l.b16 %v698
        %v1187 = vunpack.c.l.b16 %v699
        %v1188 = vunpack.c.l.b16 %v700
        %v1189 = vunpack.c.l.b16 %v701
        %v1190 = vunpack.c.l.b16 %v702
        %v1191 = vunpack.c.l.b16 %v703
        %v1192 = vunpack.c.l.b16 %v704
        %v1193 = vunpack.c.l.b16 %v705
        %v1194 = vunpack.c.l.b16 %v706
        %v1195 = vunpack.c.l.b16 %v707
        %v1196 = vunpack.c.l.b16 %v708
        %v1197 = vunpack.c.l.b16 %v709
        %v1198 = vunpack.c.l.b16 %v710
        %v1199 = vunpack.c.l.b16 %v711
        %v1200 = vunpack.c.l.b16 %v712
        %v1201 = vunpack.c.l.b16 %v713
        %v1202 = vunpack.c.l.b16 %v714
        %v1203 = vunpack.c.l.b16 %v715
        %v1204 = vunpack.c.l.b16 %v716
        %v1205 = vunpack.c.l.b16 %v717
        %v1206 = vunpack.c.l.b16 %v718
        %v1207 = vpack.c.b16 %v1144, %v1143
        %v1208 = vpack.c.b16 %v1146, %v1145
        %v1209 = vpack.c.b16 %v1148, %v1147
        %v1210 = vpack.c.b16 %v1150, %v1149
        %v1211 = vpack.c.b16 %v1152, %v1151
        %v1212 = vpack.c.b16 %v1154, %v1153
        %v1213 = vpack.c.b16 %v1156, %v1155
        %v1214 = vpack.c.b16 %v1158, %v1157
        %v1215 = vpack.c.b16 %v1160, %v1159
        %v1216 = vpack.c.b16 %v1162, %v1161
        %v1217 = vpack.c.b16 %v1164, %v1163
        %v1218 = vpack.c.b16 %v1166, %v1165
        %v1219 = vpack.c.b16 %v1168, %v1167
        %v1220 = vpack.c.b16 %v1170, %v1169
        %v1221 = vpack.c.b16 %v1172, %v1171
        %v1222 = vpack.c.b16 %v1174, %v1173
        %v1223 = vpack.c.b16 %v1176, %v1175
        %v1224 = vpack.c.b16 %v1178, %v1177
        %v1225 = vpack.c.b16 %v1180, %v1179
        %v1226 = vpack.c.b16 %v1182, %v1181
        %v1227 = vpack.c.b16 %v1184, %v1183
        %v1228 = vpack.c.b16 %v1186, %v1185
        %v1229 = vpack.c.b16 %v1188, %v1187
        %v1230 = vpack.c.b16 %v1190, %v1189
        %v1231 = vpack.c.b16 %v1192, %v1191
        %v1232 = vpack.c.b16 %v1194, %v1193
        %v1233 = vpack.c.b16 %v1196, %v1195
        %v1234 = vpack.c.b16 %v1198, %v1197
        %v1235 = vpack.c.b16 %v1200, %v1199
        %v1236 = vpack.c.b16 %v1202, %v1201
        %v1237 = vpack.c.b16 %v1204, %v1203
        %v1238 = vpack.c.b16 %v1206, %v1205
        %1271 = vmatpush.bf16.xpose.msra.mxu0 %v1214
        %1272 = vmatpush.bf16.xpose.msra.mxu0 %v1213
        %1273 = vmatpush.bf16.xpose.msra.mxu0 %v1212
        %1274 = vmatpush.bf16.xpose.msra.mxu0 %v1211
        %1275 = vmatpush.bf16.xpose.msra.mxu0 %v1210
        %1276 = vmatpush.bf16.xpose.msra.mxu0 %v1209
        %1277 = vmatpush.bf16.xpose.msra.mxu0 %v1208
        %1278 = vmatpush.bf16.xpose.msra.mxu0 %v1207
        %1279 = vmatmul.bf16.gmra.mxu0 %v1075
        %v1280 = vpop.f32.mrf.mxu0
        %v1281 = vadd.f32 %v1001, %v1280
        %v1282 = vpop.f32.mrf.mxu0
        %v1283 = vadd.f32 %v1003, %v1282
        %1284 = vmatmul.bf16.gmra.mxu0 %v1076
        %v1285 = vpop.f32.mrf.mxu0
        %v1286 = vadd.f32 %v1006, %v1285
        %v1287 = vpop.f32.mrf.mxu0
        %v1288 = vadd.f32 %v1008, %v1287
        %1289 = vdwg.mxu0
        %1290 = vmatpush.bf16.xpose.msra.mxu0 %v1222
        %1291 = vmatpush.bf16.xpose.msra.mxu0 %v1221
        %1292 = vmatpush.bf16.xpose.msra.mxu0 %v1220
        %1293 = vmatpush.bf16.xpose.msra.mxu0 %v1219
        %1294 = vmatpush.bf16.xpose.msra.mxu0 %v1218
        %1295 = vmatpush.bf16.xpose.msra.mxu0 %v1217
        %1296 = vmatpush.bf16.xpose.msra.mxu0 %v1216
        %1297 = vmatpush.bf16.xpose.msra.mxu0 %v1215
        %1298 = vmatmul.bf16.gmra.mxu0 %v1075
        %v1299 = vpop.f32.mrf.mxu0
        %v1300 = vadd.f32 %v1020, %v1299
        %v1301 = vpop.f32.mrf.mxu0
        %v1302 = vadd.f32 %v1022, %v1301
        %1303 = vmatmul.bf16.gmra.mxu0 %v1076
        %v1304 = vpop.f32.mrf.mxu0
        %v1305 = vadd.f32 %v1025, %v1304
        %v1306 = vpop.f32.mrf.mxu0
        %v1307 = vadd.f32 %v1027, %v1306
        %1308 = vdwg.mxu0
        %1309 = vmatpush.bf16.xpose.msra.mxu0 %v1230
        %1310 = vmatpush.bf16.xpose.msra.mxu0 %v1229
        %1311 = vmatpush.bf16.xpose.msra.mxu0 %v1228
        %1312 = vmatpush.bf16.xpose.msra.mxu0 %v1227
        %1313 = vmatpush.bf16.xpose.msra.mxu0 %v1226
        %1314 = vmatpush.bf16.xpose.msra.mxu0 %v1225
        %1315 = vmatpush.bf16.xpose.msra.mxu0 %v1224
        %1316 = vmatpush.bf16.xpose.msra.mxu0 %v1223
        %1317 = vmatmul.bf16.gmra.mxu0 %v1075
        %v1318 = vpop.f32.mrf.mxu0
        %v1319 = vadd.f32 %v1039, %v1318
        %v1320 = vpop.f32.mrf.mxu0
        %v1321 = vadd.f32 %v1041, %v1320
        %1322 = vmatmul.bf16.gmra.mxu0 %v1076
        %v1323 = vpop.f32.mrf.mxu0
        %v1324 = vadd.f32 %v1044, %v1323
        %v1325 = vpop.f32.mrf.mxu0
        %v1326 = vadd.f32 %v1046, %v1325
        %1327 = vdwg.mxu0
        %1328 = vmatpush.bf16.xpose.msra.mxu0 %v1238
        %1329 = vmatpush.bf16.xpose.msra.mxu0 %v1237
        %1330 = vmatpush.bf16.xpose.msra.mxu0 %v1236
        %1331 = vmatpush.bf16.xpose.msra.mxu0 %v1235
        %1332 = vmatpush.bf16.xpose.msra.mxu0 %v1234
        %1333 = vmatpush.bf16.xpose.msra.mxu0 %v1233
        %1334 = vmatpush.bf16.xpose.msra.mxu0 %v1232
        %1335 = vmatpush.bf16.xpose.msra.mxu0 %v1231
        %1336 = vmatmul.bf16.gmra.mxu0 %v1075
        %v1337 = vpop.f32.mrf.mxu0
        %v1338 = vadd.f32 %v1058, %v1337
        %v1339 = vpop.f32.mrf.mxu0
        %v1340 = vadd.f32 %v1060, %v1339
        %1341 = vmatmul.bf16.gmra.mxu0 %v1076
        %v1342 = vpop.f32.mrf.mxu0
        %v1343 = vadd.f32 %v1063, %v1342
        %v1344 = vpop.f32.mrf.mxu0
        %v1345 = vadd.f32 %v1065, %v1344
        %1346 = vdwg.mxu0
        %v1347 = vld [vmem:[%s10] sm:$0xf]
        %v1349 = vperm.slane %v1347, 0
        %v1350 = vperm.slane %v1347, 1
        %v1351 = vperm.slane %v1347, 2
        %v1352 = vperm.slane %v1347, 3
        %v1357 = vadd.f32 %v1281, %v1349
        %v1358 = vadd.f32 %v1300, %v1350
        %v1359 = vadd.f32 %v1319, %v1351
        %v1360 = vadd.f32 %v1338, %v1352
        %v1361 = vadd.f32 %v1283, %v1349
        %v1362 = vadd.f32 %v1302, %v1350
        %v1363 = vadd.f32 %v1321, %v1351
        %v1364 = vadd.f32 %v1340, %v1352
        %v1365 = vadd.f32 %v1286, %v1349
        %v1366 = vadd.f32 %v1305, %v1350
        %v1367 = vadd.f32 %v1324, %v1351
        %v1368 = vadd.f32 %v1343, %v1352
        %v1369 = vadd.f32 %v1288, %v1349
        %v1370 = vadd.f32 %v1307, %v1350
        %v1371 = vadd.f32 %v1326, %v1351
        %v1372 = vadd.f32 %v1345, %v1352
        %1373 = vst [vmem:[#allocation2] sm:$0xff] %v1357
        %1374 = vst [vmem:[#allocation2 + $0x8] sm:$0xff] %v1358
        %1375 = vst [vmem:[#allocation2 + $0x10] sm:$0xff] %v1359
        %1376 = vst [vmem:[#allocation2 + $0x18] sm:$0xff] %v1360
        %1377 = vst [vmem:[#allocation2 + $0x20] sm:$0xff] %v1361
        %1378 = vst [vmem:[#allocation2 + $0x28] sm:$0xff] %v1362
        %1379 = vst [vmem:[#allocation2 + $0x30] sm:$0xff] %v1363
        %1380 = vst [vmem:[#allocation2 + $0x38] sm:$0xff] %v1364
        %1381 = vst [vmem:[#allocation2 + $0x40] sm:$0xff] %v1365
        %1382 = vst [vmem:[#allocation2 + $0x48] sm:$0xff] %v1366
        %1383 = vst [vmem:[#allocation2 + $0x50] sm:$0xff] %v1367
        %1384 = vst [vmem:[#allocation2 + $0x58] sm:$0xff] %v1368
        %1385 = vst [vmem:[#allocation2 + $0x60] sm:$0xff] %v1369
        %1386 = vst [vmem:[#allocation2 + $0x68] sm:$0xff] %v1370
        %1387 = vst [vmem:[#allocation2 + $0x70] sm:$0xff] %v1371
        %1388 = vst [vmem:[#allocation2 + $0x78] sm:$0xff] %v1372
        %v1389 = vld [vmem:[%s618] sm:$0xf]
        %v1390 = vld [vmem:[%s618 + $0x4] sm:$0xf]
        %v1391 = vld [vmem:[%s618 + $0x8] sm:$0xf]
        %v1392 = vld [vmem:[%s618 + $0xc] sm:$0xf]
        %v1393 = vld [vmem:[#allocation12] sm:$0xf]
        %v1394 = vld [vmem:[#allocation12 + $0x4] sm:$0xf]
        %v1395 = vld [vmem:[#allocation12 + $0x8] sm:$0xf]
        %v1396 = vld [vmem:[#allocation12 + $0xc] sm:$0xf]
        %v1397 = vld [vmem:[#allocation12 + $0x10] sm:$0xf]
        %v1398 = vld [vmem:[#allocation12 + $0x14] sm:$0xf]
        %v1399 = vld [vmem:[#allocation12 + $0x18] sm:$0xf]
        %v1400 = vld [vmem:[#allocation12 + $0x1c] sm:$0xf]
        %v1401 = vld [vmem:[#allocation12 + $0x20] sm:$0xf]
        %v1402 = vld [vmem:[#allocation12 + $0x24] sm:$0xf]
        %v1403 = vld [vmem:[#allocation12 + $0x28] sm:$0xf]
        %v1404 = vld [vmem:[#allocation12 + $0x2c] sm:$0xf]
        %v1405 = vld [vmem:[#allocation12 + $0x30] sm:$0xf]
        %v1406 = vld [vmem:[#allocation12 + $0x34] sm:$0xf]
        %v1407 = vld [vmem:[#allocation12 + $0x38] sm:$0xf]
        %v1408 = vld [vmem:[#allocation12 + $0x3c] sm:$0xf]
        %v1409 = vld [vmem:[#allocation12 + $0x40] sm:$0xf]
        %v1410 = vld [vmem:[#allocation12 + $0x44] sm:$0xf]
        %v1411 = vld [vmem:[#allocation12 + $0x48] sm:$0xf]
        %v1412 = vld [vmem:[#allocation12 + $0x4c] sm:$0xf]
        %v1413 = vld [vmem:[#allocation12 + $0x50] sm:$0xf]
        %v1414 = vld [vmem:[#allocation12 + $0x54] sm:$0xf]
        %v1415 = vld [vmem:[#allocation12 + $0x58] sm:$0xf]
        %v1416 = vld [vmem:[#allocation12 + $0x5c] sm:$0xf]
        %v1417 = vld [vmem:[#allocation12 + $0x60] sm:$0xf]
        %v1418 = vld [vmem:[#allocation12 + $0x64] sm:$0xf]
        %v1419 = vld [vmem:[#allocation12 + $0x68] sm:$0xf]
        %v1420 = vld [vmem:[#allocation12 + $0x6c] sm:$0xf]
        %v1421 = vld [vmem:[#allocation12 + $0x70] sm:$0xf]
        %v1422 = vld [vmem:[#allocation12 + $0x74] sm:$0xf]
        %v1423 = vld [vmem:[#allocation12 + $0x78] sm:$0xf]
        %v1424 = vld [vmem:[#allocation12 + $0x7c] sm:$0xf]
        %v1425 = vld [vmem:[#allocation12 + $0x80] sm:$0xf]
        %v1426 = vld [vmem:[#allocation12 + $0x84] sm:$0xf]
        %v1427 = vld [vmem:[#allocation12 + $0x88] sm:$0xf]
        %v1428 = vld [vmem:[#allocation12 + $0x8c] sm:$0xf]
        %v1429 = vld [vmem:[#allocation12 + $0x90] sm:$0xf]
        %v1430 = vld [vmem:[#allocation12 + $0x94] sm:$0xf]
        %v1431 = vld [vmem:[#allocation12 + $0x98] sm:$0xf]
        %v1432 = vld [vmem:[#allocation12 + $0x9c] sm:$0xf]
        %v1433 = vld [vmem:[#allocation12 + $0xa0] sm:$0xf]
        %v1434 = vld [vmem:[#allocation12 + $0xa4] sm:$0xf]
        %v1435 = vld [vmem:[#allocation12 + $0xa8] sm:$0xf]
        %v1436 = vld [vmem:[#allocation12 + $0xac] sm:$0xf]
        %v1437 = vld [vmem:[#allocation12 + $0xb0] sm:$0xf]
        %v1438 = vld [vmem:[#allocation12 + $0xb4] sm:$0xf]
        %v1439 = vld [vmem:[#allocation12 + $0xb8] sm:$0xf]
        %v1440 = vld [vmem:[#allocation12 + $0xbc] sm:$0xf]
        %v1441 = vld [vmem:[#allocation12 + $0xc0] sm:$0xf]
        %v1442 = vld [vmem:[#allocation12 + $0xc4] sm:$0xf]
        %v1443 = vld [vmem:[#allocation12 + $0xc8] sm:$0xf]
        %v1444 = vld [vmem:[#allocation12 + $0xcc] sm:$0xf]
        %v1445 = vld [vmem:[#allocation12 + $0xd0] sm:$0xf]
        %v1446 = vld [vmem:[#allocation12 + $0xd4] sm:$0xf]
        %v1447 = vld [vmem:[#allocation12 + $0xd8] sm:$0xf]
        %v1448 = vld [vmem:[#allocation12 + $0xdc] sm:$0xf]
        %v1449 = vld [vmem:[#allocation12 + $0xe0] sm:$0xf]
        %v1450 = vld [vmem:[#allocation12 + $0xe4] sm:$0xf]
        %v1451 = vld [vmem:[#allocation12 + $0xe8] sm:$0xf]
        %v1452 = vld [vmem:[#allocation12 + $0xec] sm:$0xf]
        %v1453 = vld [vmem:[#allocation12 + $0xf0] sm:$0xf]
        %v1454 = vld [vmem:[#allocation12 + $0xf4] sm:$0xf]
        %v1455 = vld [vmem:[#allocation12 + $0xf8] sm:$0xf]
        %v1456 = vld [vmem:[#allocation12 + $0xfc] sm:$0xf]
        %v1457 = vld [vmem:[%s626] sm:$0xf]
        %v1458 = vld [vmem:[%s626 + $0x4] sm:$0xf]
        %v1459 = vld [vmem:[%s626 + $0x8] sm:$0xf]
        %v1460 = vld [vmem:[%s626 + $0xc] sm:$0xf]
        %v1461 = vld [vmem:[#allocation13] sm:$0xf]
        %v1462 = vld [vmem:[#allocation13 + $0x4] sm:$0xf]
        %v1463 = vld [vmem:[#allocation13 + $0x8] sm:$0xf]
        %v1464 = vld [vmem:[#allocation13 + $0xc] sm:$0xf]
        %v1465 = vld [vmem:[#allocation13 + $0x10] sm:$0xf]
        %v1466 = vld [vmem:[#allocation13 + $0x14] sm:$0xf]
        %v1467 = vld [vmem:[#allocation13 + $0x18] sm:$0xf]
        %v1468 = vld [vmem:[#allocation13 + $0x1c] sm:$0xf]
        %v1469 = vld [vmem:[#allocation13 + $0x20] sm:$0xf]
        %v1470 = vld [vmem:[#allocation13 + $0x24] sm:$0xf]
        %v1471 = vld [vmem:[#allocation13 + $0x28] sm:$0xf]
        %v1472 = vld [vmem:[#allocation13 + $0x2c] sm:$0xf]
        %v1473 = vld [vmem:[#allocation13 + $0x30] sm:$0xf]
        %v1474 = vld [vmem:[#allocation13 + $0x34] sm:$0xf]
        %v1475 = vld [vmem:[#allocation13 + $0x38] sm:$0xf]
        %v1476 = vld [vmem:[#allocation13 + $0x3c] sm:$0xf]
        %v1477 = vld [vmem:[#allocation13 + $0x40] sm:$0xf]
        %v1478 = vld [vmem:[#allocation13 + $0x44] sm:$0xf]
        %v1479 = vld [vmem:[#allocation13 + $0x48] sm:$0xf]
        %v1480 = vld [vmem:[#allocation13 + $0x4c] sm:$0xf]
        %v1481 = vld [vmem:[#allocation13 + $0x50] sm:$0xf]
        %v1482 = vld [vmem:[#allocation13 + $0x54] sm:$0xf]
        %v1483 = vld [vmem:[#allocation13 + $0x58] sm:$0xf]
        %v1484 = vld [vmem:[#allocation13 + $0x5c] sm:$0xf]
        %v1485 = vld [vmem:[#allocation13 + $0x60] sm:$0xf]
        %v1486 = vld [vmem:[#allocation13 + $0x64] sm:$0xf]
        %v1487 = vld [vmem:[#allocation13 + $0x68] sm:$0xf]
        %v1488 = vld [vmem:[#allocation13 + $0x6c] sm:$0xf]
        %v1489 = vld [vmem:[#allocation13 + $0x70] sm:$0xf]
        %v1490 = vld [vmem:[#allocation13 + $0x74] sm:$0xf]
        %v1491 = vld [vmem:[#allocation13 + $0x78] sm:$0xf]
        %v1492 = vld [vmem:[#allocation13 + $0x7c] sm:$0xf]
        %v1493 = vld [vmem:[#allocation13 + $0x80] sm:$0xf]
        %v1494 = vld [vmem:[#allocation13 + $0x84] sm:$0xf]
        %v1495 = vld [vmem:[#allocation13 + $0x88] sm:$0xf]
        %v1496 = vld [vmem:[#allocation13 + $0x8c] sm:$0xf]
        %v1497 = vld [vmem:[#allocation13 + $0x90] sm:$0xf]
        %v1498 = vld [vmem:[#allocation13 + $0x94] sm:$0xf]
        %v1499 = vld [vmem:[#allocation13 + $0x98] sm:$0xf]
        %v1500 = vld [vmem:[#allocation13 + $0x9c] sm:$0xf]
        %v1501 = vld [vmem:[#allocation13 + $0xa0] sm:$0xf]
        %v1502 = vld [vmem:[#allocation13 + $0xa4] sm:$0xf]
        %v1503 = vld [vmem:[#allocation13 + $0xa8] sm:$0xf]
        %v1504 = vld [vmem:[#allocation13 + $0xac] sm:$0xf]
        %v1505 = vld [vmem:[#allocation13 + $0xb0] sm:$0xf]
        %v1506 = vld [vmem:[#allocation13 + $0xb4] sm:$0xf]
        %v1507 = vld [vmem:[#allocation13 + $0xb8] sm:$0xf]
        %v1508 = vld [vmem:[#allocation13 + $0xbc] sm:$0xf]
        %v1509 = vld [vmem:[#allocation13 + $0xc0] sm:$0xf]
        %v1510 = vld [vmem:[#allocation13 + $0xc4] sm:$0xf]
        %v1511 = vld [vmem:[#allocation13 + $0xc8] sm:$0xf]
        %v1512 = vld [vmem:[#allocation13 + $0xcc] sm:$0xf]
        %v1513 = vld [vmem:[#allocation13 + $0xd0] sm:$0xf]
        %v1514 = vld [vmem:[#allocation13 + $0xd4] sm:$0xf]
        %v1515 = vld [vmem:[#allocation13 + $0xd8] sm:$0xf]
        %v1516 = vld [vmem:[#allocation13 + $0xdc] sm:$0xf]
        %v1517 = vld [vmem:[#allocation13 + $0xe0] sm:$0xf]
        %v1518 = vld [vmem:[#allocation13 + $0xe4] sm:$0xf]
        %v1519 = vld [vmem:[#allocation13 + $0xe8] sm:$0xf]
        %v1520 = vld [vmem:[#allocation13 + $0xec] sm:$0xf]
        %v1521 = vld [vmem:[#allocation13 + $0xf0] sm:$0xf]
        %v1522 = vld [vmem:[#allocation13 + $0xf4] sm:$0xf]
        %v1523 = vld [vmem:[#allocation13 + $0xf8] sm:$0xf]
        %v1524 = vld [vmem:[#allocation13 + $0xfc] sm:$0xf]
        %v1529 = vunpack.c.l.b16 %v1457
        %v1530 = vunpack.c.l.b16 %v1458
        %v1531 = vunpack.c.l.b16 %v1459
        %v1532 = vunpack.c.l.b16 %v1460
        %v1533 = vpack.c.b16 %v1530, %v1529
        %v1534 = vpack.c.b16 %v1532, %v1531
        %v1601 = vunpack.c.l.b16 %v1461
        %v1602 = vunpack.c.l.b16 %v1462
        %v1603 = vunpack.c.l.b16 %v1463
        %v1604 = vunpack.c.l.b16 %v1464
        %v1605 = vunpack.c.l.b16 %v1465
        %v1606 = vunpack.c.l.b16 %v1466
        %v1607 = vunpack.c.l.b16 %v1467
        %v1608 = vunpack.c.l.b16 %v1468
        %v1609 = vunpack.c.l.b16 %v1469
        %v1610 = vunpack.c.l.b16 %v1470
        %v1611 = vunpack.c.l.b16 %v1471
        %v1612 = vunpack.c.l.b16 %v1472
        %v1613 = vunpack.c.l.b16 %v1473
        %v1614 = vunpack.c.l.b16 %v1474
        %v1615 = vunpack.c.l.b16 %v1475
        %v1616 = vunpack.c.l.b16 %v1476
        %v1617 = vunpack.c.l.b16 %v1477
        %v1618 = vunpack.c.l.b16 %v1478
        %v1619 = vunpack.c.l.b16 %v1479
        %v1620 = vunpack.c.l.b16 %v1480
        %v1621 = vunpack.c.l.b16 %v1481
        %v1622 = vunpack.c.l.b16 %v1482
        %v1623 = vunpack.c.l.b16 %v1483
        %v1624 = vunpack.c.l.b16 %v1484
        %v1625 = vunpack.c.l.b16 %v1485
        %v1626 = vunpack.c.l.b16 %v1486
        %v1627 = vunpack.c.l.b16 %v1487
        %v1628 = vunpack.c.l.b16 %v1488
        %v1629 = vunpack.c.l.b16 %v1489
        %v1630 = vunpack.c.l.b16 %v1490
        %v1631 = vunpack.c.l.b16 %v1491
        %v1632 = vunpack.c.l.b16 %v1492
        %v1633 = vunpack.c.l.b16 %v1493
        %v1634 = vunpack.c.l.b16 %v1494
        %v1635 = vunpack.c.l.b16 %v1495
        %v1636 = vunpack.c.l.b16 %v1496
        %v1637 = vunpack.c.l.b16 %v1497
        %v1638 = vunpack.c.l.b16 %v1498
        %v1639 = vunpack.c.l.b16 %v1499
        %v1640 = vunpack.c.l.b16 %v1500
        %v1641 = vunpack.c.l.b16 %v1501
        %v1642 = vunpack.c.l.b16 %v1502
        %v1643 = vunpack.c.l.b16 %v1503
        %v1644 = vunpack.c.l.b16 %v1504
        %v1645 = vunpack.c.l.b16 %v1505
        %v1646 = vunpack.c.l.b16 %v1506
        %v1647 = vunpack.c.l.b16 %v1507
        %v1648 = vunpack.c.l.b16 %v1508
        %v1649 = vunpack.c.l.b16 %v1509
        %v1650 = vunpack.c.l.b16 %v1510
        %v1651 = vunpack.c.l.b16 %v1511
        %v1652 = vunpack.c.l.b16 %v1512
        %v1653 = vunpack.c.l.b16 %v1513
        %v1654 = vunpack.c.l.b16 %v1514
        %v1655 = vunpack.c.l.b16 %v1515
        %v1656 = vunpack.c.l.b16 %v1516
        %v1657 = vunpack.c.l.b16 %v1517
        %v1658 = vunpack.c.l.b16 %v1518
        %v1659 = vunpack.c.l.b16 %v1519
        %v1660 = vunpack.c.l.b16 %v1520
        %v1661 = vunpack.c.l.b16 %v1521
        %v1662 = vunpack.c.l.b16 %v1522
        %v1663 = vunpack.c.l.b16 %v1523
        %v1664 = vunpack.c.l.b16 %v1524
        %v1665 = vpack.c.b16 %v1602, %v1601
        %v1666 = vpack.c.b16 %v1604, %v1603
        %v1667 = vpack.c.b16 %v1606, %v1605
        %v1668 = vpack.c.b16 %v1608, %v1607
        %v1669 = vpack.c.b16 %v1610, %v1609
        %v1670 = vpack.c.b16 %v1612, %v1611
        %v1671 = vpack.c.b16 %v1614, %v1613
        %v1672 = vpack.c.b16 %v1616, %v1615
        %v1673 = vpack.c.b16 %v1618, %v1617
        %v1674 = vpack.c.b16 %v1620, %v1619
        %v1675 = vpack.c.b16 %v1622, %v1621
        %v1676 = vpack.c.b16 %v1624, %v1623
        %v1677 = vpack.c.b16 %v1626, %v1625
        %v1678 = vpack.c.b16 %v1628, %v1627
        %v1679 = vpack.c.b16 %v1630, %v1629
        %v1680 = vpack.c.b16 %v1632, %v1631
        %v1681 = vpack.c.b16 %v1634, %v1633
        %v1682 = vpack.c.b16 %v1636, %v1635
        %v1683 = vpack.c.b16 %v1638, %v1637
        %v1684 = vpack.c.b16 %v1640, %v1639
        %v1685 = vpack.c.b16 %v1642, %v1641
        %v1686 = vpack.c.b16 %v1644, %v1643
        %v1687 = vpack.c.b16 %v1646, %v1645
        %v1688 = vpack.c.b16 %v1648, %v1647
        %v1689 = vpack.c.b16 %v1650, %v1649
        %v1690 = vpack.c.b16 %v1652, %v1651
        %v1691 = vpack.c.b16 %v1654, %v1653
        %v1692 = vpack.c.b16 %v1656, %v1655
        %v1693 = vpack.c.b16 %v1658, %v1657
        %v1694 = vpack.c.b16 %v1660, %v1659
        %v1695 = vpack.c.b16 %v1662, %v1661
        %v1696 = vpack.c.b16 %v1664, %v1663
        %1729 = vmatpush.bf16.xpose.msra.mxu0 %v1672
        %1730 = vmatpush.bf16.xpose.msra.mxu0 %v1671
        %1731 = vmatpush.bf16.xpose.msra.mxu0 %v1670
        %1732 = vmatpush.bf16.xpose.msra.mxu0 %v1669
        %1733 = vmatpush.bf16.xpose.msra.mxu0 %v1668
        %1734 = vmatpush.bf16.xpose.msra.mxu0 %v1667
        %1735 = vmatpush.bf16.xpose.msra.mxu0 %v1666
        %1736 = vmatpush.bf16.xpose.msra.mxu0 %v1665
        %1737 = vmatmul.bf16.gmra.mxu0 %v1533
        %v1738 = vpop.f32.mrf.mxu0
        %v1739 = vadd.f32 0.0, %v1738
        %v1740 = vpop.f32.mrf.mxu0
        %v1741 = vadd.f32 0.0, %v1740
        %1742 = vmatmul.bf16.gmra.mxu0 %v1534
        %v1743 = vpop.f32.mrf.mxu0
        %v1744 = vadd.f32 0.0, %v1743
        %v1745 = vpop.f32.mrf.mxu0
        %v1746 = vadd.f32 0.0, %v1745
        %1747 = vdwg.mxu0
        %1748 = vmatpush.bf16.xpose.msra.mxu0 %v1680
        %1749 = vmatpush.bf16.xpose.msra.mxu0 %v1679
        %1750 = vmatpush.bf16.xpose.msra.mxu0 %v1678
        %1751 = vmatpush.bf16.xpose.msra.mxu0 %v1677
        %1752 = vmatpush.bf16.xpose.msra.mxu0 %v1676
        %1753 = vmatpush.bf16.xpose.msra.mxu0 %v1675
        %1754 = vmatpush.bf16.xpose.msra.mxu0 %v1674
        %1755 = vmatpush.bf16.xpose.msra.mxu0 %v1673
        %1756 = vmatmul.bf16.gmra.mxu0 %v1533
        %v1757 = vpop.f32.mrf.mxu0
        %v1758 = vadd.f32 0.0, %v1757
        %v1759 = vpop.f32.mrf.mxu0
        %v1760 = vadd.f32 0.0, %v1759
        %1761 = vmatmul.bf16.gmra.mxu0 %v1534
        %v1762 = vpop.f32.mrf.mxu0
        %v1763 = vadd.f32 0.0, %v1762
        %v1764 = vpop.f32.mrf.mxu0
        %v1765 = vadd.f32 0.0, %v1764
        %1766 = vdwg.mxu0
        %1767 = vmatpush.bf16.xpose.msra.mxu0 %v1688
        %1768 = vmatpush.bf16.xpose.msra.mxu0 %v1687
        %1769 = vmatpush.bf16.xpose.msra.mxu0 %v1686
        %1770 = vmatpush.bf16.xpose.msra.mxu0 %v1685
        %1771 = vmatpush.bf16.xpose.msra.mxu0 %v1684
        %1772 = vmatpush.bf16.xpose.msra.mxu0 %v1683
        %1773 = vmatpush.bf16.xpose.msra.mxu0 %v1682
        %1774 = vmatpush.bf16.xpose.msra.mxu0 %v1681
        %1775 = vmatmul.bf16.gmra.mxu0 %v1533
        %v1776 = vpop.f32.mrf.mxu0
        %v1777 = vadd.f32 0.0, %v1776
        %v1778 = vpop.f32.mrf.mxu0
        %v1779 = vadd.f32 0.0, %v1778
        %1780 = vmatmul.bf16.gmra.mxu0 %v1534
        %v1781 = vpop.f32.mrf.mxu0
        %v1782 = vadd.f32 0.0, %v1781
        %v1783 = vpop.f32.mrf.mxu0
        %v1784 = vadd.f32 0.0, %v1783
        %1785 = vdwg.mxu0
        %1786 = vmatpush.bf16.xpose.msra.mxu0 %v1696
        %1787 = vmatpush.bf16.xpose.msra.mxu0 %v1695
        %1788 = vmatpush.bf16.xpose.msra.mxu0 %v1694
        %1789 = vmatpush.bf16.xpose.msra.mxu0 %v1693
        %1790 = vmatpush.bf16.xpose.msra.mxu0 %v1692
        %1791 = vmatpush.bf16.xpose.msra.mxu0 %v1691
        %1792 = vmatpush.bf16.xpose.msra.mxu0 %v1690
        %1793 = vmatpush.bf16.xpose.msra.mxu0 %v1689
        %1794 = vmatmul.bf16.gmra.mxu0 %v1533
        %v1795 = vpop.f32.mrf.mxu0
        %v1796 = vadd.f32 0.0, %v1795
        %v1797 = vpop.f32.mrf.mxu0
        %v1798 = vadd.f32 0.0, %v1797
        %1799 = vmatmul.bf16.gmra.mxu0 %v1534
        %v1800 = vpop.f32.mrf.mxu0
        %v1801 = vadd.f32 0.0, %v1800
        %v1802 = vpop.f32.mrf.mxu0
        %v1803 = vadd.f32 0.0, %v1802
        %1804 = vdwg.mxu0
        %v1809 = vunpack.c.l.b16 %v1389
        %v1810 = vunpack.c.l.b16 %v1390
        %v1811 = vunpack.c.l.b16 %v1391
        %v1812 = vunpack.c.l.b16 %v1392
        %v1813 = vpack.c.b16 %v1810, %v1809
        %v1814 = vpack.c.b16 %v1812, %v1811
        %v1881 = vunpack.c.l.b16 %v1393
        %v1882 = vunpack.c.l.b16 %v1394
        %v1883 = vunpack.c.l.b16 %v1395
        %v1884 = vunpack.c.l.b16 %v1396
        %v1885 = vunpack.c.l.b16 %v1397
        %v1886 = vunpack.c.l.b16 %v1398
        %v1887 = vunpack.c.l.b16 %v1399
        %v1888 = vunpack.c.l.b16 %v1400
        %v1889 = vunpack.c.l.b16 %v1401
        %v1890 = vunpack.c.l.b16 %v1402
        %v1891 = vunpack.c.l.b16 %v1403
        %v1892 = vunpack.c.l.b16 %v1404
        %v1893 = vunpack.c.l.b16 %v1405
        %v1894 = vunpack.c.l.b16 %v1406
        %v1895 = vunpack.c.l.b16 %v1407
        %v1896 = vunpack.c.l.b16 %v1408
        %v1897 = vunpack.c.l.b16 %v1409
        %v1898 = vunpack.c.l.b16 %v1410
        %v1899 = vunpack.c.l.b16 %v1411
        %v1900 = vunpack.c.l.b16 %v1412
        %v1901 = vunpack.c.l.b16 %v1413
        %v1902 = vunpack.c.l.b16 %v1414
        %v1903 = vunpack.c.l.b16 %v1415
        %v1904 = vunpack.c.l.b16 %v1416
        %v1905 = vunpack.c.l.b16 %v1417
        %v1906 = vunpack.c.l.b16 %v1418
        %v1907 = vunpack.c.l.b16 %v1419
        %v1908 = vunpack.c.l.b16 %v1420
        %v1909 = vunpack.c.l.b16 %v1421
        %v1910 = vunpack.c.l.b16 %v1422
        %v1911 = vunpack.c.l.b16 %v1423
        %v1912 = vunpack.c.l.b16 %v1424
        %v1913 = vunpack.c.l.b16 %v1425
        %v1914 = vunpack.c.l.b16 %v1426
        %v1915 = vunpack.c.l.b16 %v1427
        %v1916 = vunpack.c.l.b16 %v1428
        %v1917 = vunpack.c.l.b16 %v1429
        %v1918 = vunpack.c.l.b16 %v1430
        %v1919 = vunpack.c.l.b16 %v1431
        %v1920 = vunpack.c.l.b16 %v1432
        %v1921 = vunpack.c.l.b16 %v1433
        %v1922 = vunpack.c.l.b16 %v1434
        %v1923 = vunpack.c.l.b16 %v1435
        %v1924 = vunpack.c.l.b16 %v1436
        %v1925 = vunpack.c.l.b16 %v1437
        %v1926 = vunpack.c.l.b16 %v1438
        %v1927 = vunpack.c.l.b16 %v1439
        %v1928 = vunpack.c.l.b16 %v1440
        %v1929 = vunpack.c.l.b16 %v1441
        %v1930 = vunpack.c.l.b16 %v1442
        %v1931 = vunpack.c.l.b16 %v1443
        %v1932 = vunpack.c.l.b16 %v1444
        %v1933 = vunpack.c.l.b16 %v1445
        %v1934 = vunpack.c.l.b16 %v1446
        %v1935 = vunpack.c.l.b16 %v1447
        %v1936 = vunpack.c.l.b16 %v1448
        %v1937 = vunpack.c.l.b16 %v1449
        %v1938 = vunpack.c.l.b16 %v1450
        %v1939 = vunpack.c.l.b16 %v1451
        %v1940 = vunpack.c.l.b16 %v1452
        %v1941 = vunpack.c.l.b16 %v1453
        %v1942 = vunpack.c.l.b16 %v1454
        %v1943 = vunpack.c.l.b16 %v1455
        %v1944 = vunpack.c.l.b16 %v1456
        %v1945 = vpack.c.b16 %v1882, %v1881
        %v1946 = vpack.c.b16 %v1884, %v1883
        %v1947 = vpack.c.b16 %v1886, %v1885
        %v1948 = vpack.c.b16 %v1888, %v1887
        %v1949 = vpack.c.b16 %v1890, %v1889
        %v1950 = vpack.c.b16 %v1892, %v1891
        %v1951 = vpack.c.b16 %v1894, %v1893
        %v1952 = vpack.c.b16 %v1896, %v1895
        %v1953 = vpack.c.b16 %v1898, %v1897
        %v1954 = vpack.c.b16 %v1900, %v1899
        %v1955 = vpack.c.b16 %v1902, %v1901
        %v1956 = vpack.c.b16 %v1904, %v1903
        %v1957 = vpack.c.b16 %v1906, %v1905
        %v1958 = vpack.c.b16 %v1908, %v1907
        %v1959 = vpack.c.b16 %v1910, %v1909
        %v1960 = vpack.c.b16 %v1912, %v1911
        %v1961 = vpack.c.b16 %v1914, %v1913
        %v1962 = vpack.c.b16 %v1916, %v1915
        %v1963 = vpack.c.b16 %v1918, %v1917
        %v1964 = vpack.c.b16 %v1920, %v1919
        %v1965 = vpack.c.b16 %v1922, %v1921
        %v1966 = vpack.c.b16 %v1924, %v1923
        %v1967 = vpack.c.b16 %v1926, %v1925
        %v1968 = vpack.c.b16 %v1928, %v1927
        %v1969 = vpack.c.b16 %v1930, %v1929
        %v1970 = vpack.c.b16 %v1932, %v1931
        %v1971 = vpack.c.b16 %v1934, %v1933
        %v1972 = vpack.c.b16 %v1936, %v1935
        %v1973 = vpack.c.b16 %v1938, %v1937
        %v1974 = vpack.c.b16 %v1940, %v1939
        %v1975 = vpack.c.b16 %v1942, %v1941
        %v1976 = vpack.c.b16 %v1944, %v1943
        %2009 = vmatpush.bf16.xpose.msra.mxu0 %v1952
        %2010 = vmatpush.bf16.xpose.msra.mxu0 %v1951
        %2011 = vmatpush.bf16.xpose.msra.mxu0 %v1950
        %2012 = vmatpush.bf16.xpose.msra.mxu0 %v1949
        %2013 = vmatpush.bf16.xpose.msra.mxu0 %v1948
        %2014 = vmatpush.bf16.xpose.msra.mxu0 %v1947
        %2015 = vmatpush.bf16.xpose.msra.mxu0 %v1946
        %2016 = vmatpush.bf16.xpose.msra.mxu0 %v1945
        %2017 = vmatmul.bf16.gmra.mxu0 %v1813
        %v2018 = vpop.f32.mrf.mxu0
        %v2019 = vadd.f32 %v1739, %v2018
        %v2020 = vpop.f32.mrf.mxu0
        %v2021 = vadd.f32 %v1741, %v2020
        %2022 = vmatmul.bf16.gmra.mxu0 %v1814
        %v2023 = vpop.f32.mrf.mxu0
        %v2024 = vadd.f32 %v1744, %v2023
        %v2025 = vpop.f32.mrf.mxu0
        %v2026 = vadd.f32 %v1746, %v2025
        %2027 = vdwg.mxu0
        %2028 = vmatpush.bf16.xpose.msra.mxu0 %v1960
        %2029 = vmatpush.bf16.xpose.msra.mxu0 %v1959
        %2030 = vmatpush.bf16.xpose.msra.mxu0 %v1958
        %2031 = vmatpush.bf16.xpose.msra.mxu0 %v1957
        %2032 = vmatpush.bf16.xpose.msra.mxu0 %v1956
        %2033 = vmatpush.bf16.xpose.msra.mxu0 %v1955
        %2034 = vmatpush.bf16.xpose.msra.mxu0 %v1954
        %2035 = vmatpush.bf16.xpose.msra.mxu0 %v1953
        %2036 = vmatmul.bf16.gmra.mxu0 %v1813
        %v2037 = vpop.f32.mrf.mxu0
        %v2038 = vadd.f32 %v1758, %v2037
        %v2039 = vpop.f32.mrf.mxu0
        %v2040 = vadd.f32 %v1760, %v2039
        %2041 = vmatmul.bf16.gmra.mxu0 %v1814
        %v2042 = vpop.f32.mrf.mxu0
        %v2043 = vadd.f32 %v1763, %v2042
        %v2044 = vpop.f32.mrf.mxu0
        %v2045 = vadd.f32 %v1765, %v2044
        %2046 = vdwg.mxu0
        %2047 = vmatpush.bf16.xpose.msra.mxu0 %v1968
        %2048 = vmatpush.bf16.xpose.msra.mxu0 %v1967
        %2049 = vmatpush.bf16.xpose.msra.mxu0 %v1966
        %2050 = vmatpush.bf16.xpose.msra.mxu0 %v1965
        %2051 = vmatpush.bf16.xpose.msra.mxu0 %v1964
        %2052 = vmatpush.bf16.xpose.msra.mxu0 %v1963
        %2053 = vmatpush.bf16.xpose.msra.mxu0 %v1962
        %2054 = vmatpush.bf16.xpose.msra.mxu0 %v1961
        %2055 = vmatmul.bf16.gmra.mxu0 %v1813
        %v2056 = vpop.f32.mrf.mxu0
        %v2057 = vadd.f32 %v1777, %v2056
        %v2058 = vpop.f32.mrf.mxu0
        %v2059 = vadd.f32 %v1779, %v2058
        %2060 = vmatmul.bf16.gmra.mxu0 %v1814
        %v2061 = vpop.f32.mrf.mxu0
        %v2062 = vadd.f32 %v1782, %v2061
        %v2063 = vpop.f32.mrf.mxu0
        %v2064 = vadd.f32 %v1784, %v2063
        %2065 = vdwg.mxu0
        %2066 = vmatpush.bf16.xpose.msra.mxu0 %v1976
        %2067 = vmatpush.bf16.xpose.msra.mxu0 %v1975
        %2068 = vmatpush.bf16.xpose.msra.mxu0 %v1974
        %2069 = vmatpush.bf16.xpose.msra.mxu0 %v1973
        %2070 = vmatpush.bf16.xpose.msra.mxu0 %v1972
        %2071 = vmatpush.bf16.xpose.msra.mxu0 %v1971
        %2072 = vmatpush.bf16.xpose.msra.mxu0 %v1970
        %2073 = vmatpush.bf16.xpose.msra.mxu0 %v1969
        %2074 = vmatmul.bf16.gmra.mxu0 %v1813
        %v2075 = vpop.f32.mrf.mxu0
        %v2076 = vadd.f32 %v1796, %v2075
        %v2077 = vpop.f32.mrf.mxu0
        %v2078 = vadd.f32 %v1798, %v2077
        %2079 = vmatmul.bf16.gmra.mxu0 %v1814
        %v2080 = vpop.f32.mrf.mxu0
        %v2081 = vadd.f32 %v1801, %v2080
        %v2082 = vpop.f32.mrf.mxu0
        %v2083 = vadd.f32 %v1803, %v2082
        %2084 = vdwg.mxu0
        %v2085 = vld [vmem:[%s11] sm:$0xf]
        %v2087 = vperm.slane %v2085, 0
        %v2088 = vperm.slane %v2085, 1
        %v2089 = vperm.slane %v2085, 2
        %v2090 = vperm.slane %v2085, 3
        %v2095 = vadd.f32 %v2019, %v2087
        %v2096 = vadd.f32 %v2038, %v2088
        %v2097 = vadd.f32 %v2057, %v2089
        %v2098 = vadd.f32 %v2076, %v2090
        %v2099 = vadd.f32 %v2021, %v2087
        %v2100 = vadd.f32 %v2040, %v2088
        %v2101 = vadd.f32 %v2059, %v2089
        %v2102 = vadd.f32 %v2078, %v2090
        %v2103 = vadd.f32 %v2024, %v2087
        %v2104 = vadd.f32 %v2043, %v2088
        %v2105 = vadd.f32 %v2062, %v2089
        %v2106 = vadd.f32 %v2081, %v2090
        %v2107 = vadd.f32 %v2026, %v2087
        %v2108 = vadd.f32 %v2045, %v2088
        %v2109 = vadd.f32 %v2064, %v2089
        %v2110 = vadd.f32 %v2083, %v2090
        %2111 = vst [vmem:[#allocation3] sm:$0xff] %v2095
        %2112 = vst [vmem:[#allocation3 + $0x8] sm:$0xff] %v2096
        %2113 = vst [vmem:[#allocation3 + $0x10] sm:$0xff] %v2097
        %2114 = vst [vmem:[#allocation3 + $0x18] sm:$0xff] %v2098
        %2115 = vst [vmem:[#allocation3 + $0x20] sm:$0xff] %v2099
        %2116 = vst [vmem:[#allocation3 + $0x28] sm:$0xff] %v2100
        %2117 = vst [vmem:[#allocation3 + $0x30] sm:$0xff] %v2101
        %2118 = vst [vmem:[#allocation3 + $0x38] sm:$0xff] %v2102
        %2119 = vst [vmem:[#allocation3 + $0x40] sm:$0xff] %v2103
        %2120 = vst [vmem:[#allocation3 + $0x48] sm:$0xff] %v2104
        %2121 = vst [vmem:[#allocation3 + $0x50] sm:$0xff] %v2105
        %2122 = vst [vmem:[#allocation3 + $0x58] sm:$0xff] %v2106
        %2123 = vst [vmem:[#allocation3 + $0x60] sm:$0xff] %v2107
        %2124 = vst [vmem:[#allocation3 + $0x68] sm:$0xff] %v2108
        %2125 = vst [vmem:[#allocation3 + $0x70] sm:$0xff] %v2109
        %2126 = vst [vmem:[#allocation3 + $0x78] sm:$0xff] %v2110
        %v2127 = vld [vmem:[#allocation15] sm:$0xf]
        %v2128 = vld [vmem:[#allocation15 + $0x4] sm:$0xf]
        %v2129 = vld [vmem:[#allocation15 + $0x8] sm:$0xf]
        %v2130 = vld [vmem:[#allocation15 + $0xc] sm:$0xf]
        %v2131 = vld [vmem:[#allocation15 + $0x10] sm:$0xf]
        %v2132 = vld [vmem:[#allocation15 + $0x14] sm:$0xf]
        %v2133 = vld [vmem:[#allocation15 + $0x18] sm:$0xf]
        %v2134 = vld [vmem:[#allocation15 + $0x1c] sm:$0xf]
        %v2135 = vld [vmem:[#allocation15 + $0x20] sm:$0xf]
        %v2136 = vld [vmem:[#allocation15 + $0x24] sm:$0xf]
        %v2137 = vld [vmem:[#allocation15 + $0x28] sm:$0xf]
        %v2138 = vld [vmem:[#allocation15 + $0x2c] sm:$0xf]
        %v2139 = vld [vmem:[#allocation15 + $0x30] sm:$0xf]
        %v2140 = vld [vmem:[#allocation15 + $0x34] sm:$0xf]
        %v2141 = vld [vmem:[#allocation15 + $0x38] sm:$0xf]
        %v2142 = vld [vmem:[#allocation15 + $0x3c] sm:$0xf]
        %v2143 = vld [vmem:[#allocation15 + $0x40] sm:$0xf]
        %v2144 = vld [vmem:[#allocation15 + $0x44] sm:$0xf]
        %v2145 = vld [vmem:[#allocation15 + $0x48] sm:$0xf]
        %v2146 = vld [vmem:[#allocation15 + $0x4c] sm:$0xf]
        %v2147 = vld [vmem:[#allocation15 + $0x50] sm:$0xf]
        %v2148 = vld [vmem:[#allocation15 + $0x54] sm:$0xf]
        %v2149 = vld [vmem:[#allocation15 + $0x58] sm:$0xf]
        %v2150 = vld [vmem:[#allocation15 + $0x5c] sm:$0xf]
        %v2151 = vld [vmem:[#allocation15 + $0x60] sm:$0xf]
        %v2152 = vld [vmem:[#allocation15 + $0x64] sm:$0xf]
        %v2153 = vld [vmem:[#allocation15 + $0x68] sm:$0xf]
        %v2154 = vld [vmem:[#allocation15 + $0x6c] sm:$0xf]
        %v2155 = vld [vmem:[#allocation15 + $0x70] sm:$0xf]
        %v2156 = vld [vmem:[#allocation15 + $0x74] sm:$0xf]
        %v2157 = vld [vmem:[#allocation15 + $0x78] sm:$0xf]
        %v2158 = vld [vmem:[#allocation15 + $0x7c] sm:$0xf]
        %v2159 = vld [vmem:[#allocation15 + $0x80] sm:$0xf]
        %v2160 = vld [vmem:[#allocation15 + $0x84] sm:$0xf]
        %v2161 = vld [vmem:[#allocation15 + $0x88] sm:$0xf]
        %v2162 = vld [vmem:[#allocation15 + $0x8c] sm:$0xf]
        %v2163 = vld [vmem:[#allocation15 + $0x90] sm:$0xf]
        %v2164 = vld [vmem:[#allocation15 + $0x94] sm:$0xf]
        %v2165 = vld [vmem:[#allocation15 + $0x98] sm:$0xf]
        %v2166 = vld [vmem:[#allocation15 + $0x9c] sm:$0xf]
        %v2167 = vld [vmem:[#allocation15 + $0xa0] sm:$0xf]
        %v2168 = vld [vmem:[#allocation15 + $0xa4] sm:$0xf]
        %v2169 = vld [vmem:[#allocation15 + $0xa8] sm:$0xf]
        %v2170 = vld [vmem:[#allocation15 + $0xac] sm:$0xf]
        %v2171 = vld [vmem:[#allocation15 + $0xb0] sm:$0xf]
        %v2172 = vld [vmem:[#allocation15 + $0xb4] sm:$0xf]
        %v2173 = vld [vmem:[#allocation15 + $0xb8] sm:$0xf]
        %v2174 = vld [vmem:[#allocation15 + $0xbc] sm:$0xf]
        %v2175 = vld [vmem:[#allocation15 + $0xc0] sm:$0xf]
        %v2176 = vld [vmem:[#allocation15 + $0xc4] sm:$0xf]
        %v2177 = vld [vmem:[#allocation15 + $0xc8] sm:$0xf]
        %v2178 = vld [vmem:[#allocation15 + $0xcc] sm:$0xf]
        %v2179 = vld [vmem:[#allocation15 + $0xd0] sm:$0xf]
        %v2180 = vld [vmem:[#allocation15 + $0xd4] sm:$0xf]
        %v2181 = vld [vmem:[#allocation15 + $0xd8] sm:$0xf]
        %v2182 = vld [vmem:[#allocation15 + $0xdc] sm:$0xf]
        %v2183 = vld [vmem:[#allocation15 + $0xe0] sm:$0xf]
        %v2184 = vld [vmem:[#allocation15 + $0xe4] sm:$0xf]
        %v2185 = vld [vmem:[#allocation15 + $0xe8] sm:$0xf]
        %v2186 = vld [vmem:[#allocation15 + $0xec] sm:$0xf]
        %v2187 = vld [vmem:[#allocation15 + $0xf0] sm:$0xf]
        %v2188 = vld [vmem:[#allocation15 + $0xf4] sm:$0xf]
        %v2189 = vld [vmem:[#allocation15 + $0xf8] sm:$0xf]
        %v2190 = vld [vmem:[#allocation15 + $0xfc] sm:$0xf]
        %v2191 = vld [vmem:[#allocation16] sm:$0xf]
        %v2192 = vld [vmem:[#allocation16 + $0x4] sm:$0xf]
        %v2193 = vld [vmem:[#allocation16 + $0x8] sm:$0xf]
        %v2194 = vld [vmem:[#allocation16 + $0xc] sm:$0xf]
        %v2195 = vld [vmem:[#allocation16 + $0x10] sm:$0xf]
        %v2196 = vld [vmem:[#allocation16 + $0x14] sm:$0xf]
        %v2197 = vld [vmem:[#allocation16 + $0x18] sm:$0xf]
        %v2198 = vld [vmem:[#allocation16 + $0x1c] sm:$0xf]
        %v2199 = vld [vmem:[#allocation16 + $0x20] sm:$0xf]
        %v2200 = vld [vmem:[#allocation16 + $0x24] sm:$0xf]
        %v2201 = vld [vmem:[#allocation16 + $0x28] sm:$0xf]
        %v2202 = vld [vmem:[#allocation16 + $0x2c] sm:$0xf]
        %v2203 = vld [vmem:[#allocation16 + $0x30] sm:$0xf]
        %v2204 = vld [vmem:[#allocation16 + $0x34] sm:$0xf]
        %v2205 = vld [vmem:[#allocation16 + $0x38] sm:$0xf]
        %v2206 = vld [vmem:[#allocation16 + $0x3c] sm:$0xf]
        %v2207 = vld [vmem:[#allocation16 + $0x40] sm:$0xf]
        %v2208 = vld [vmem:[#allocation16 + $0x44] sm:$0xf]
        %v2209 = vld [vmem:[#allocation16 + $0x48] sm:$0xf]
        %v2210 = vld [vmem:[#allocation16 + $0x4c] sm:$0xf]
        %v2211 = vld [vmem:[#allocation16 + $0x50] sm:$0xf]
        %v2212 = vld [vmem:[#allocation16 + $0x54] sm:$0xf]
        %v2213 = vld [vmem:[#allocation16 + $0x58] sm:$0xf]
        %v2214 = vld [vmem:[#allocation16 + $0x5c] sm:$0xf]
        %v2215 = vld [vmem:[#allocation16 + $0x60] sm:$0xf]
        %v2216 = vld [vmem:[#allocation16 + $0x64] sm:$0xf]
        %v2217 = vld [vmem:[#allocation16 + $0x68] sm:$0xf]
        %v2218 = vld [vmem:[#allocation16 + $0x6c] sm:$0xf]
        %v2219 = vld [vmem:[#allocation16 + $0x70] sm:$0xf]
        %v2220 = vld [vmem:[#allocation16 + $0x74] sm:$0xf]
        %v2221 = vld [vmem:[#allocation16 + $0x78] sm:$0xf]
        %v2222 = vld [vmem:[#allocation16 + $0x7c] sm:$0xf]
        %v2223 = vld [vmem:[#allocation16 + $0x80] sm:$0xf]
        %v2224 = vld [vmem:[#allocation16 + $0x84] sm:$0xf]
        %v2225 = vld [vmem:[#allocation16 + $0x88] sm:$0xf]
        %v2226 = vld [vmem:[#allocation16 + $0x8c] sm:$0xf]
        %v2227 = vld [vmem:[#allocation16 + $0x90] sm:$0xf]
        %v2228 = vld [vmem:[#allocation16 + $0x94] sm:$0xf]
        %v2229 = vld [vmem:[#allocation16 + $0x98] sm:$0xf]
        %v2230 = vld [vmem:[#allocation16 + $0x9c] sm:$0xf]
        %v2231 = vld [vmem:[#allocation16 + $0xa0] sm:$0xf]
        %v2232 = vld [vmem:[#allocation16 + $0xa4] sm:$0xf]
        %v2233 = vld [vmem:[#allocation16 + $0xa8] sm:$0xf]
        %v2234 = vld [vmem:[#allocation16 + $0xac] sm:$0xf]
        %v2235 = vld [vmem:[#allocation16 + $0xb0] sm:$0xf]
        %v2236 = vld [vmem:[#allocation16 + $0xb4] sm:$0xf]
        %v2237 = vld [vmem:[#allocation16 + $0xb8] sm:$0xf]
        %v2238 = vld [vmem:[#allocation16 + $0xbc] sm:$0xf]
        %v2239 = vld [vmem:[#allocation16 + $0xc0] sm:$0xf]
        %v2240 = vld [vmem:[#allocation16 + $0xc4] sm:$0xf]
        %v2241 = vld [vmem:[#allocation16 + $0xc8] sm:$0xf]
        %v2242 = vld [vmem:[#allocation16 + $0xcc] sm:$0xf]
        %v2243 = vld [vmem:[#allocation16 + $0xd0] sm:$0xf]
        %v2244 = vld [vmem:[#allocation16 + $0xd4] sm:$0xf]
        %v2245 = vld [vmem:[#allocation16 + $0xd8] sm:$0xf]
        %v2246 = vld [vmem:[#allocation16 + $0xdc] sm:$0xf]
        %v2247 = vld [vmem:[#allocation16 + $0xe0] sm:$0xf]
        %v2248 = vld [vmem:[#allocation16 + $0xe4] sm:$0xf]
        %v2249 = vld [vmem:[#allocation16 + $0xe8] sm:$0xf]
        %v2250 = vld [vmem:[#allocation16 + $0xec] sm:$0xf]
        %v2251 = vld [vmem:[#allocation16 + $0xf0] sm:$0xf]
        %v2252 = vld [vmem:[#allocation16 + $0xf4] sm:$0xf]
        %v2253 = vld [vmem:[#allocation16 + $0xf8] sm:$0xf]
        %v2254 = vld [vmem:[#allocation16 + $0xfc] sm:$0xf]
        %v2255 = vld [vmem:[#allocation4] sm:$0xff]
        %v2256 = vld [vmem:[#allocation5] sm:$0xff]
        %v2257 = vld [vmem:[#allocation6] sm:$0xff]
        %v2258 = vld [vmem:[#allocation7] sm:$0xff]
        %v2259 = vld [vmem:[#allocation2] sm:$0xff]
        %v2260 = vld [vmem:[#allocation2 + $0x8] sm:$0xff]
        %v2261 = vld [vmem:[#allocation2 + $0x10] sm:$0xff]
        %v2262 = vld [vmem:[#allocation2 + $0x18] sm:$0xff]
        %v2263 = vpack.c.bf16 %v2255, %v2255
        %v2328 = vunpack.c.l.b16 %v2127
        %v2329 = vunpack.c.l.b16 %v2128
        %v2330 = vunpack.c.l.b16 %v2129
        %v2331 = vunpack.c.l.b16 %v2130
        %v2332 = vunpack.c.l.b16 %v2131
        %v2333 = vunpack.c.l.b16 %v2132
        %v2334 = vunpack.c.l.b16 %v2133
        %v2335 = vunpack.c.l.b16 %v2134
        %v2336 = vunpack.c.l.b16 %v2135
        %v2337 = vunpack.c.l.b16 %v2136
        %v2338 = vunpack.c.l.b16 %v2137
        %v2339 = vunpack.c.l.b16 %v2138
        %v2340 = vunpack.c.l.b16 %v2139
        %v2341 = vunpack.c.l.b16 %v2140
        %v2342 = vunpack.c.l.b16 %v2141
        %v2343 = vunpack.c.l.b16 %v2142
        %v2344 = vunpack.c.l.b16 %v2143
        %v2345 = vunpack.c.l.b16 %v2144
        %v2346 = vunpack.c.l.b16 %v2145
        %v2347 = vunpack.c.l.b16 %v2146
        %v2348 = vunpack.c.l.b16 %v2147
        %v2349 = vunpack.c.l.b16 %v2148
        %v2350 = vunpack.c.l.b16 %v2149
        %v2351 = vunpack.c.l.b16 %v2150
        %v2352 = vunpack.c.l.b16 %v2151
        %v2353 = vunpack.c.l.b16 %v2152
        %v2354 = vunpack.c.l.b16 %v2153
        %v2355 = vunpack.c.l.b16 %v2154
        %v2356 = vunpack.c.l.b16 %v2155
        %v2357 = vunpack.c.l.b16 %v2156
        %v2358 = vunpack.c.l.b16 %v2157
        %v2359 = vunpack.c.l.b16 %v2158
        %v2360 = vunpack.c.l.b16 %v2159
        %v2361 = vunpack.c.l.b16 %v2160
        %v2362 = vunpack.c.l.b16 %v2161
        %v2363 = vunpack.c.l.b16 %v2162
        %v2364 = vunpack.c.l.b16 %v2163
        %v2365 = vunpack.c.l.b16 %v2164
        %v2366 = vunpack.c.l.b16 %v2165
        %v2367 = vunpack.c.l.b16 %v2166
        %v2368 = vunpack.c.l.b16 %v2167
        %v2369 = vunpack.c.l.b16 %v2168
        %v2370 = vunpack.c.l.b16 %v2169
        %v2371 = vunpack.c.l.b16 %v2170
        %v2372 = vunpack.c.l.b16 %v2171
        %v2373 = vunpack.c.l.b16 %v2172
        %v2374 = vunpack.c.l.b16 %v2173
        %v2375 = vunpack.c.l.b16 %v2174
        %v2376 = vunpack.c.l.b16 %v2175
        %v2377 = vunpack.c.l.b16 %v2176
        %v2378 = vunpack.c.l.b16 %v2177
        %v2379 = vunpack.c.l.b16 %v2178
        %v2380 = vunpack.c.l.b16 %v2179
        %v2381 = vunpack.c.l.b16 %v2180
        %v2382 = vunpack.c.l.b16 %v2181
        %v2383 = vunpack.c.l.b16 %v2182
        %v2384 = vunpack.c.l.b16 %v2183
        %v2385 = vunpack.c.l.b16 %v2184
        %v2386 = vunpack.c.l.b16 %v2185
        %v2387 = vunpack.c.l.b16 %v2186
        %v2388 = vunpack.c.l.b16 %v2187
        %v2389 = vunpack.c.l.b16 %v2188
        %v2390 = vunpack.c.l.b16 %v2189
        %v2391 = vunpack.c.l.b16 %v2190
        %v2392 = vpack.c.b16 %v2329, %v2328
        %v2393 = vpack.c.b16 %v2331, %v2330
        %v2394 = vpack.c.b16 %v2333, %v2332
        %v2395 = vpack.c.b16 %v2335, %v2334
        %v2396 = vpack.c.b16 %v2337, %v2336
        %v2397 = vpack.c.b16 %v2339, %v2338
        %v2398 = vpack.c.b16 %v2341, %v2340
        %v2399 = vpack.c.b16 %v2343, %v2342
        %v2400 = vpack.c.b16 %v2345, %v2344
        %v2401 = vpack.c.b16 %v2347, %v2346
        %v2402 = vpack.c.b16 %v2349, %v2348
        %v2403 = vpack.c.b16 %v2351, %v2350
        %v2404 = vpack.c.b16 %v2353, %v2352
        %v2405 = vpack.c.b16 %v2355, %v2354
        %v2406 = vpack.c.b16 %v2357, %v2356
        %v2407 = vpack.c.b16 %v2359, %v2358
        %v2408 = vpack.c.b16 %v2361, %v2360
        %v2409 = vpack.c.b16 %v2363, %v2362
        %v2410 = vpack.c.b16 %v2365, %v2364
        %v2411 = vpack.c.b16 %v2367, %v2366
        %v2412 = vpack.c.b16 %v2369, %v2368
        %v2413 = vpack.c.b16 %v2371, %v2370
        %v2414 = vpack.c.b16 %v2373, %v2372
        %v2415 = vpack.c.b16 %v2375, %v2374
        %v2416 = vpack.c.b16 %v2377, %v2376
        %v2417 = vpack.c.b16 %v2379, %v2378
        %v2418 = vpack.c.b16 %v2381, %v2380
        %v2419 = vpack.c.b16 %v2383, %v2382
        %v2420 = vpack.c.b16 %v2385, %v2384
        %v2421 = vpack.c.b16 %v2387, %v2386
        %v2422 = vpack.c.b16 %v2389, %v2388
        %v2423 = vpack.c.b16 %v2391, %v2390
        %2456 = vmatpush.bf16.xpose.msra.mxu0 %v2399
        %2457 = vmatpush.bf16.xpose.msra.mxu0 %v2398
        %2458 = vmatpush.bf16.xpose.msra.mxu0 %v2397
        %2459 = vmatpush.bf16.xpose.msra.mxu0 %v2396
        %2460 = vmatpush.bf16.xpose.msra.mxu0 %v2395
        %2461 = vmatpush.bf16.xpose.msra.mxu0 %v2394
        %2462 = vmatpush.bf16.xpose.msra.mxu0 %v2393
        %2463 = vmatpush.bf16.xpose.msra.mxu0 %v2392
        %2464 = vmatmul.bf16.gmra.mxu0 %v2263
        %v2465 = vpop.f32.mrf.mxu0
        %v2466 = vadd.f32 0.0, %v2465
        %v2467 = vpop.f32.mrf.mxu0
        %2468 = vdwg.mxu0
        %2469 = vmatpush.bf16.xpose.msra.mxu0 %v2407
        %2470 = vmatpush.bf16.xpose.msra.mxu0 %v2406
        %2471 = vmatpush.bf16.xpose.msra.mxu0 %v2405
        %2472 = vmatpush.bf16.xpose.msra.mxu0 %v2404
        %2473 = vmatpush.bf16.xpose.msra.mxu0 %v2403
        %2474 = vmatpush.bf16.xpose.msra.mxu0 %v2402
        %2475 = vmatpush.bf16.xpose.msra.mxu0 %v2401
        %2476 = vmatpush.bf16.xpose.msra.mxu0 %v2400
        %2477 = vmatmul.bf16.gmra.mxu0 %v2263
        %v2478 = vpop.f32.mrf.mxu0
        %v2479 = vadd.f32 0.0, %v2478
        %v2480 = vpop.f32.mrf.mxu0
        %2481 = vdwg.mxu0
        %2482 = vmatpush.bf16.xpose.msra.mxu0 %v2415
        %2483 = vmatpush.bf16.xpose.msra.mxu0 %v2414
        %2484 = vmatpush.bf16.xpose.msra.mxu0 %v2413
        %2485 = vmatpush.bf16.xpose.msra.mxu0 %v2412
        %2486 = vmatpush.bf16.xpose.msra.mxu0 %v2411
        %2487 = vmatpush.bf16.xpose.msra.mxu0 %v2410
        %2488 = vmatpush.bf16.xpose.msra.mxu0 %v2409
        %2489 = vmatpush.bf16.xpose.msra.mxu0 %v2408
        %2490 = vmatmul.bf16.gmra.mxu0 %v2263
        %v2491 = vpop.f32.mrf.mxu0
        %v2492 = vadd.f32 0.0, %v2491
        %v2493 = vpop.f32.mrf.mxu0
        %2494 = vdwg.mxu0
        %2495 = vmatpush.bf16.xpose.msra.mxu0 %v2423
        %2496 = vmatpush.bf16.xpose.msra.mxu0 %v2422
        %2497 = vmatpush.bf16.xpose.msra.mxu0 %v2421
        %2498 = vmatpush.bf16.xpose.msra.mxu0 %v2420
        %2499 = vmatpush.bf16.xpose.msra.mxu0 %v2419
        %2500 = vmatpush.bf16.xpose.msra.mxu0 %v2418
        %2501 = vmatpush.bf16.xpose.msra.mxu0 %v2417
        %2502 = vmatpush.bf16.xpose.msra.mxu0 %v2416
        %2503 = vmatmul.bf16.gmra.mxu0 %v2263
        %v2504 = vpop.f32.mrf.mxu0
        %v2505 = vadd.f32 0.0, %v2504
        %v2506 = vpop.f32.mrf.mxu0
        %2507 = vdwg.mxu0
        %v2508 = vadd.f32 %v2259, %v2466
        %v2509 = vadd.f32 %v2260, %v2479
        %v2510 = vadd.f32 %v2261, %v2492
        %v2511 = vadd.f32 %v2262, %v2505
        %v2512 = vxor.u32 %v2508, 2147483648
        %v2513 = vmul.f32 %v2512, 1.442695
        %v2514 = vpow.pop %v2513
        %v2515 = vadd.f32 %v2514, 1.0
        %v2516 = vrcp.pop %v2515
        %v2517 = vmul.f32 %v2515, %v2516
        %v2518 = vsub.f32 1.0, %v2517
        %v2519 = vmul.f32 %v2516, %v2518
        %v2520 = vadd.f32 %v2516, %v2519
        %vm2521 = vweird.f32 %v2515
        %vm2522 = vweird.f32 %v2516
        %vm2523 = vmor %vm2521, %vm2522
        %v2524 = vsel %vm2523, %v2516, %v2520
        %v2525 = vand.u32 2147483647, %v2515
        %vm2526 = vcmp.eq.f32.partialorder %v2525, 8.507059e+37
        %v2527 = vand.u32 %v2515, 2147483648
        %v2528 = vor.u32 1.1754944e-38, %v2527
        %v2529 = vsel %vm2526, %v2528, %v2524
        %v2530 = vmul.f32 1.0, %v2529
        %v2531 = vxor.u32 %v2509, 2147483648
        %v2532 = vmul.f32 %v2531, 1.442695
        %v2533 = vpow.pop %v2532
        %v2534 = vadd.f32 %v2533, 1.0
        %v2535 = vrcp.pop %v2534
        %v2536 = vmul.f32 %v2534, %v2535
        %v2537 = vsub.f32 1.0, %v2536
        %v2538 = vmul.f32 %v2535, %v2537
        %v2539 = vadd.f32 %v2535, %v2538
        %vm2540 = vweird.f32 %v2534
        %vm2541 = vweird.f32 %v2535
        %vm2542 = vmor %vm2540, %vm2541
        %v2543 = vsel %vm2542, %v2535, %v2539
        %v2544 = vand.u32 2147483647, %v2534
        %vm2545 = vcmp.eq.f32.partialorder %v2544, 8.507059e+37
        %v2546 = vand.u32 %v2534, 2147483648
        %v2547 = vor.u32 1.1754944e-38, %v2546
        %v2548 = vsel %vm2545, %v2547, %v2543
        %v2549 = vmul.f32 1.0, %v2548
        %v2550 = vtanh.pop %v2510
        %v2551 = vxor.u32 %v2511, 2147483648
        %v2552 = vmul.f32 %v2551, 1.442695
        %v2553 = vpow.pop %v2552
        %v2554 = vadd.f32 %v2553, 1.0
        %v2555 = vrcp.pop %v2554
        %v2556 = vmul.f32 %v2554, %v2555
        %v2557 = vsub.f32 1.0, %v2556
        %v2558 = vmul.f32 %v2555, %v2557
        %v2559 = vadd.f32 %v2555, %v2558
        %vm2560 = vweird.f32 %v2554
        %vm2561 = vweird.f32 %v2555
        %vm2562 = vmor %vm2560, %vm2561
        %v2563 = vsel %vm2562, %v2555, %v2559
        %v2564 = vand.u32 2147483647, %v2554
        %vm2565 = vcmp.eq.f32.partialorder %v2564, 8.507059e+37
        %v2566 = vand.u32 %v2554, 2147483648
        %v2567 = vor.u32 1.1754944e-38, %v2566
        %v2568 = vsel %vm2565, %v2567, %v2563
        %v2569 = vmul.f32 1.0, %v2568
        %v2570 = vmul.f32 %v2549, %v2256
        %v2571 = vmul.f32 %v2530, %v2550
        %v2572 = vadd.f32 %v2570, %v2571
        %v2573 = vtanh.pop %v2572
        %v2574 = vmul.f32 %v2569, %v2573
        %v2575 = vpack.c.bf16 %v2574, %v2574
        %2576 = vst [vmem:[%s633] sm:$0xf] %v2575
        %v2577 = vld [vmem:[#allocation3 + $0x60] sm:$0xff]
        %v2578 = vld [vmem:[#allocation3 + $0x68] sm:$0xff]
        %v2579 = vld [vmem:[#allocation3 + $0x70] sm:$0xff]
        %v2580 = vld [vmem:[#allocation3 + $0x78] sm:$0xff]
        %v2581 = vpack.c.bf16 %v2257, %v2257
        %v2646 = vunpack.c.l.b16 %v2191
        %v2647 = vunpack.c.l.b16 %v2192
        %v2648 = vunpack.c.l.b16 %v2193
        %v2649 = vunpack.c.l.b16 %v2194
        %v2650 = vunpack.c.l.b16 %v2195
        %v2651 = vunpack.c.l.b16 %v2196
        %v2652 = vunpack.c.l.b16 %v2197
        %v2653 = vunpack.c.l.b16 %v2198
        %v2654 = vunpack.c.l.b16 %v2199
        %v2655 = vunpack.c.l.b16 %v2200
        %v2656 = vunpack.c.l.b16 %v2201
        %v2657 = vunpack.c.l.b16 %v2202
        %v2658 = vunpack.c.l.b16 %v2203
        %v2659 = vunpack.c.l.b16 %v2204
        %v2660 = vunpack.c.l.b16 %v2205
        %v2661 = vunpack.c.l.b16 %v2206
        %v2662 = vunpack.c.l.b16 %v2207
        %v2663 = vunpack.c.l.b16 %v2208
        %v2664 = vunpack.c.l.b16 %v2209
        %v2665 = vunpack.c.l.b16 %v2210
        %v2666 = vunpack.c.l.b16 %v2211
        %v2667 = vunpack.c.l.b16 %v2212
        %v2668 = vunpack.c.l.b16 %v2213
        %v2669 = vunpack.c.l.b16 %v2214
        %v2670 = vunpack.c.l.b16 %v2215
        %v2671 = vunpack.c.l.b16 %v2216
        %v2672 = vunpack.c.l.b16 %v2217
        %v2673 = vunpack.c.l.b16 %v2218
        %v2674 = vunpack.c.l.b16 %v2219
        %v2675 = vunpack.c.l.b16 %v2220
        %v2676 = vunpack.c.l.b16 %v2221
        %v2677 = vunpack.c.l.b16 %v2222
        %v2678 = vunpack.c.l.b16 %v2223
        %v2679 = vunpack.c.l.b16 %v2224
        %v2680 = vunpack.c.l.b16 %v2225
        %v2681 = vunpack.c.l.b16 %v2226
        %v2682 = vunpack.c.l.b16 %v2227
        %v2683 = vunpack.c.l.b16 %v2228
        %v2684 = vunpack.c.l.b16 %v2229
        %v2685 = vunpack.c.l.b16 %v2230
        %v2686 = vunpack.c.l.b16 %v2231
        %v2687 = vunpack.c.l.b16 %v2232
        %v2688 = vunpack.c.l.b16 %v2233
        %v2689 = vunpack.c.l.b16 %v2234
        %v2690 = vunpack.c.l.b16 %v2235
        %v2691 = vunpack.c.l.b16 %v2236
        %v2692 = vunpack.c.l.b16 %v2237
        %v2693 = vunpack.c.l.b16 %v2238
        %v2694 = vunpack.c.l.b16 %v2239
        %v2695 = vunpack.c.l.b16 %v2240
        %v2696 = vunpack.c.l.b16 %v2241
        %v2697 = vunpack.c.l.b16 %v2242
        %v2698 = vunpack.c.l.b16 %v2243
        %v2699 = vunpack.c.l.b16 %v2244
        %v2700 = vunpack.c.l.b16 %v2245
        %v2701 = vunpack.c.l.b16 %v2246
        %v2702 = vunpack.c.l.b16 %v2247
        %v2703 = vunpack.c.l.b16 %v2248
        %v2704 = vunpack.c.l.b16 %v2249
        %v2705 = vunpack.c.l.b16 %v2250
        %v2706 = vunpack.c.l.b16 %v2251
        %v2707 = vunpack.c.l.b16 %v2252
        %v2708 = vunpack.c.l.b16 %v2253
        %v2709 = vunpack.c.l.b16 %v2254
        %v2710 = vpack.c.b16 %v2647, %v2646
        %v2711 = vpack.c.b16 %v2649, %v2648
        %v2712 = vpack.c.b16 %v2651, %v2650
        %v2713 = vpack.c.b16 %v2653, %v2652
        %v2714 = vpack.c.b16 %v2655, %v2654
        %v2715 = vpack.c.b16 %v2657, %v2656
        %v2716 = vpack.c.b16 %v2659, %v2658
        %v2717 = vpack.c.b16 %v2661, %v2660
        %v2718 = vpack.c.b16 %v2663, %v2662
        %v2719 = vpack.c.b16 %v2665, %v2664
        %v2720 = vpack.c.b16 %v2667, %v2666
        %v2721 = vpack.c.b16 %v2669, %v2668
        %v2722 = vpack.c.b16 %v2671, %v2670
        %v2723 = vpack.c.b16 %v2673, %v2672
        %v2724 = vpack.c.b16 %v2675, %v2674
        %v2725 = vpack.c.b16 %v2677, %v2676
        %v2726 = vpack.c.b16 %v2679, %v2678
        %v2727 = vpack.c.b16 %v2681, %v2680
        %v2728 = vpack.c.b16 %v2683, %v2682
        %v2729 = vpack.c.b16 %v2685, %v2684
        %v2730 = vpack.c.b16 %v2687, %v2686
        %v2731 = vpack.c.b16 %v2689, %v2688
        %v2732 = vpack.c.b16 %v2691, %v2690
        %v2733 = vpack.c.b16 %v2693, %v2692
        %v2734 = vpack.c.b16 %v2695, %v2694
        %v2735 = vpack.c.b16 %v2697, %v2696
        %v2736 = vpack.c.b16 %v2699, %v2698
        %v2737 = vpack.c.b16 %v2701, %v2700
        %v2738 = vpack.c.b16 %v2703, %v2702
        %v2739 = vpack.c.b16 %v2705, %v2704
        %v2740 = vpack.c.b16 %v2707, %v2706
        %v2741 = vpack.c.b16 %v2709, %v2708
        %2774 = vmatpush.bf16.xpose.msra.mxu0 %v2717
        %2775 = vmatpush.bf16.xpose.msra.mxu0 %v2716
        %2776 = vmatpush.bf16.xpose.msra.mxu0 %v2715
        %2777 = vmatpush.bf16.xpose.msra.mxu0 %v2714
        %2778 = vmatpush.bf16.xpose.msra.mxu0 %v2713
        %2779 = vmatpush.bf16.xpose.msra.mxu0 %v2712
        %2780 = vmatpush.bf16.xpose.msra.mxu0 %v2711
        %2781 = vmatpush.bf16.xpose.msra.mxu0 %v2710
        %2782 = vmatmul.bf16.gmra.mxu0 %v2581
        %v2783 = vpop.f32.mrf.mxu0
        %v2784 = vadd.f32 0.0, %v2783
        %v2785 = vpop.f32.mrf.mxu0
        %2786 = vdwg.mxu0
        %2787 = vmatpush.bf16.xpose.msra.mxu0 %v2725
        %2788 = vmatpush.bf16.xpose.msra.mxu0 %v2724
        %2789 = vmatpush.bf16.xpose.msra.mxu0 %v2723
        %2790 = vmatpush.bf16.xpose.msra.mxu0 %v2722
        %2791 = vmatpush.bf16.xpose.msra.mxu0 %v2721
        %2792 = vmatpush.bf16.xpose.msra.mxu0 %v2720
        %2793 = vmatpush.bf16.xpose.msra.mxu0 %v2719
        %2794 = vmatpush.bf16.xpose.msra.mxu0 %v2718
        %2795 = vmatmul.bf16.gmra.mxu0 %v2581
        %v2796 = vpop.f32.mrf.mxu0
        %v2797 = vadd.f32 0.0, %v2796
        %v2798 = vpop.f32.mrf.mxu0
        %2799 = vdwg.mxu0
        %2800 = vmatpush.bf16.xpose.msra.mxu0 %v2733
        %2801 = vmatpush.bf16.xpose.msra.mxu0 %v2732
        %2802 = vmatpush.bf16.xpose.msra.mxu0 %v2731
        %2803 = vmatpush.bf16.xpose.msra.mxu0 %v2730
        %2804 = vmatpush.bf16.xpose.msra.mxu0 %v2729
        %2805 = vmatpush.bf16.xpose.msra.mxu0 %v2728
        %2806 = vmatpush.bf16.xpose.msra.mxu0 %v2727
        %2807 = vmatpush.bf16.xpose.msra.mxu0 %v2726
        %2808 = vmatmul.bf16.gmra.mxu0 %v2581
        %v2809 = vpop.f32.mrf.mxu0
        %v2810 = vadd.f32 0.0, %v2809
        %v2811 = vpop.f32.mrf.mxu0
        %2812 = vdwg.mxu0
        %2813 = vmatpush.bf16.xpose.msra.mxu0 %v2741
        %2814 = vmatpush.bf16.xpose.msra.mxu0 %v2740
        %2815 = vmatpush.bf16.xpose.msra.mxu0 %v2739
        %2816 = vmatpush.bf16.xpose.msra.mxu0 %v2738
        %2817 = vmatpush.bf16.xpose.msra.mxu0 %v2737
        %2818 = vmatpush.bf16.xpose.msra.mxu0 %v2736
        %2819 = vmatpush.bf16.xpose.msra.mxu0 %v2735
        %2820 = vmatpush.bf16.xpose.msra.mxu0 %v2734
        %2821 = vmatmul.bf16.gmra.mxu0 %v2581
        %v2822 = vpop.f32.mrf.mxu0
        %v2823 = vadd.f32 0.0, %v2822
        %v2824 = vpop.f32.mrf.mxu0
        %2825 = vdwg.mxu0
        %v2826 = vadd.f32 %v2577, %v2784
        %v2827 = vadd.f32 %v2578, %v2797
        %v2828 = vadd.f32 %v2579, %v2810
        %v2829 = vadd.f32 %v2580, %v2823
        %v2830 = vxor.u32 %v2826, 2147483648
        %v2831 = vmul.f32 %v2830, 1.442695
        %v2832 = vpow.pop %v2831
        %v2833 = vadd.f32 %v2832, 1.0
        %v2834 = vrcp.pop %v2833
        %v2835 = vmul.f32 %v2833, %v2834
        %v2836 = vsub.f32 1.0, %v2835
        %v2837 = vmul.f32 %v2834, %v2836
        %v2838 = vadd.f32 %v2834, %v2837
        %vm2839 = vweird.f32 %v2833
        %vm2840 = vweird.f32 %v2834
        %vm2841 = vmor %vm2839, %vm2840
        %v2842 = vsel %vm2841, %v2834, %v2838
        %v2843 = vand.u32 2147483647, %v2833
        %vm2844 = vcmp.eq.f32.partialorder %v2843, 8.507059e+37
        %v2845 = vand.u32 %v2833, 2147483648
        %v2846 = vor.u32 1.1754944e-38, %v2845
        %v2847 = vsel %vm2844, %v2846, %v2842
        %v2848 = vmul.f32 1.0, %v2847
        %v2849 = vxor.u32 %v2827, 2147483648
        %v2850 = vmul.f32 %v2849, 1.442695
        %v2851 = vpow.pop %v2850
        %v2852 = vadd.f32 %v2851, 1.0
        %v2853 = vrcp.pop %v2852
        %v2854 = vmul.f32 %v2852, %v2853
        %v2855 = vsub.f32 1.0, %v2854
        %v2856 = vmul.f32 %v2853, %v2855
        %v2857 = vadd.f32 %v2853, %v2856
        %vm2858 = vweird.f32 %v2852
        %vm2859 = vweird.f32 %v2853
        %vm2860 = vmor %vm2858, %vm2859
        %v2861 = vsel %vm2860, %v2853, %v2857
        %v2862 = vand.u32 2147483647, %v2852
        %vm2863 = vcmp.eq.f32.partialorder %v2862, 8.507059e+37
        %v2864 = vand.u32 %v2852, 2147483648
        %v2865 = vor.u32 1.1754944e-38, %v2864
        %v2866 = vsel %vm2863, %v2865, %v2861
        %v2867 = vmul.f32 1.0, %v2866
        %v2868 = vtanh.pop %v2828
        %v2869 = vxor.u32 %v2829, 2147483648
        %v2870 = vmul.f32 %v2869, 1.442695
        %v2871 = vpow.pop %v2870
        %v2872 = vadd.f32 %v2871, 1.0
        %v2873 = vrcp.pop %v2872
        %v2874 = vmul.f32 %v2872, %v2873
        %v2875 = vsub.f32 1.0, %v2874
        %v2876 = vmul.f32 %v2873, %v2875
        %v2877 = vadd.f32 %v2873, %v2876
        %vm2878 = vweird.f32 %v2872
        %vm2879 = vweird.f32 %v2873
        %vm2880 = vmor %vm2878, %vm2879
        %v2881 = vsel %vm2880, %v2873, %v2877
        %v2882 = vand.u32 2147483647, %v2872
        %vm2883 = vcmp.eq.f32.partialorder %v2882, 8.507059e+37
        %v2884 = vand.u32 %v2872, 2147483648
        %v2885 = vor.u32 1.1754944e-38, %v2884
        %v2886 = vsel %vm2883, %v2885, %v2881
        %v2887 = vmul.f32 1.0, %v2886
        %v2888 = vmul.f32 %v2867, %v2258
        %v2889 = vmul.f32 %v2848, %v2868
        %v2890 = vadd.f32 %v2888, %v2889
        %v2891 = vtanh.pop %v2890
        %v2892 = vmul.f32 %v2887, %v2891
        %v2893 = vpack.c.bf16 %v2892, %v2892
        %2894 = vst [vmem:[%s640 + $0xc] sm:$0xf] %v2893
        %v2895 = vld [vmem:[#allocation2 + $0x20] sm:$0xff]
        %v2896 = vld [vmem:[#allocation2 + $0x28] sm:$0xff]
        %v2897 = vld [vmem:[#allocation2 + $0x30] sm:$0xff]
        %v2898 = vld [vmem:[#allocation2 + $0x38] sm:$0xff]
        %2899 = vmatpush.bf16.xpose.msra.mxu0 %v2399
        %2900 = vmatpush.bf16.xpose.msra.mxu0 %v2398
        %2901 = vmatpush.bf16.xpose.msra.mxu0 %v2397
        %2902 = vmatpush.bf16.xpose.msra.mxu0 %v2396
        %2903 = vmatpush.bf16.xpose.msra.mxu0 %v2395
        %2904 = vmatpush.bf16.xpose.msra.mxu0 %v2394
        %2905 = vmatpush.bf16.xpose.msra.mxu0 %v2393
        %2906 = vmatpush.bf16.xpose.msra.mxu0 %v2392
        %2907 = vmatmul.bf16.gmra.mxu0 %v2575
        %v2908 = vpop.f32.mrf.mxu0
        %v2909 = vadd.f32 0.0, %v2908
        %v2910 = vpop.f32.mrf.mxu0
        %2911 = vdwg.mxu0
        %2912 = vmatpush.bf16.xpose.msra.mxu0 %v2407
        %2913 = vmatpush.bf16.xpose.msra.mxu0 %v2406
        %2914 = vmatpush.bf16.xpose.msra.mxu0 %v2405
        %2915 = vmatpush.bf16.xpose.msra.mxu0 %v2404
        %2916 = vmatpush.bf16.xpose.msra.mxu0 %v2403
        %2917 = vmatpush.bf16.xpose.msra.mxu0 %v2402
        %2918 = vmatpush.bf16.xpose.msra.mxu0 %v2401
        %2919 = vmatpush.bf16.xpose.msra.mxu0 %v2400
        %2920 = vmatmul.bf16.gmra.mxu0 %v2575
        %v2921 = vpop.f32.mrf.mxu0
        %v2922 = vadd.f32 0.0, %v2921
        %v2923 = vpop.f32.mrf.mxu0
        %2924 = vdwg.mxu0
        %2925 = vmatpush.bf16.xpose.msra.mxu0 %v2415
        %2926 = vmatpush.bf16.xpose.msra.mxu0 %v2414
        %2927 = vmatpush.bf16.xpose.msra.mxu0 %v2413
        %2928 = vmatpush.bf16.xpose.msra.mxu0 %v2412
        %2929 = vmatpush.bf16.xpose.msra.mxu0 %v2411
        %2930 = vmatpush.bf16.xpose.msra.mxu0 %v2410
        %2931 = vmatpush.bf16.xpose.msra.mxu0 %v2409
        %2932 = vmatpush.bf16.xpose.msra.mxu0 %v2408
        %2933 = vmatmul.bf16.gmra.mxu0 %v2575
        %v2934 = vpop.f32.mrf.mxu0
        %v2935 = vadd.f32 0.0, %v2934
        %v2936 = vpop.f32.mrf.mxu0
        %2937 = vdwg.mxu0
        %2938 = vmatpush.bf16.xpose.msra.mxu0 %v2423
        %2939 = vmatpush.bf16.xpose.msra.mxu0 %v2422
        %2940 = vmatpush.bf16.xpose.msra.mxu0 %v2421
        %2941 = vmatpush.bf16.xpose.msra.mxu0 %v2420
        %2942 = vmatpush.bf16.xpose.msra.mxu0 %v2419
        %2943 = vmatpush.bf16.xpose.msra.mxu0 %v2418
        %2944 = vmatpush.bf16.xpose.msra.mxu0 %v2417
        %2945 = vmatpush.bf16.xpose.msra.mxu0 %v2416
        %2946 = vmatmul.bf16.gmra.mxu0 %v2575
        %v2947 = vpop.f32.mrf.mxu0
        %v2948 = vadd.f32 0.0, %v2947
        %v2949 = vpop.f32.mrf.mxu0
        %2950 = vdwg.mxu0
        %v2951 = vadd.f32 %v2895, %v2909
        %v2952 = vadd.f32 %v2896, %v2922
        %v2953 = vadd.f32 %v2897, %v2935
        %v2954 = vadd.f32 %v2898, %v2948
        %v2955 = vxor.u32 %v2951, 2147483648
        %v2956 = vmul.f32 %v2955, 1.442695
        %v2957 = vpow.pop %v2956
        %v2958 = vadd.f32 %v2957, 1.0
        %v2959 = vrcp.pop %v2958
        %v2960 = vmul.f32 %v2958, %v2959
        %v2961 = vsub.f32 1.0, %v2960
        %v2962 = vmul.f32 %v2959, %v2961
        %v2963 = vadd.f32 %v2959, %v2962
        %vm2964 = vweird.f32 %v2958
        %vm2965 = vweird.f32 %v2959
        %vm2966 = vmor %vm2964, %vm2965
        %v2967 = vsel %vm2966, %v2959, %v2963
        %v2968 = vand.u32 2147483647, %v2958
        %vm2969 = vcmp.eq.f32.partialorder %v2968, 8.507059e+37
        %v2970 = vand.u32 %v2958, 2147483648
        %v2971 = vor.u32 1.1754944e-38, %v2970
        %v2972 = vsel %vm2969, %v2971, %v2967
        %v2973 = vmul.f32 1.0, %v2972
        %v2974 = vxor.u32 %v2952, 2147483648
        %v2975 = vmul.f32 %v2974, 1.442695
        %v2976 = vpow.pop %v2975
        %v2977 = vadd.f32 %v2976, 1.0
        %v2978 = vrcp.pop %v2977
        %v2979 = vmul.f32 %v2977, %v2978
        %v2980 = vsub.f32 1.0, %v2979
        %v2981 = vmul.f32 %v2978, %v2980
        %v2982 = vadd.f32 %v2978, %v2981
        %vm2983 = vweird.f32 %v2977
        %vm2984 = vweird.f32 %v2978
        %vm2985 = vmor %vm2983, %vm2984
        %v2986 = vsel %vm2985, %v2978, %v2982
        %v2987 = vand.u32 2147483647, %v2977
        %vm2988 = vcmp.eq.f32.partialorder %v2987, 8.507059e+37
        %v2989 = vand.u32 %v2977, 2147483648
        %v2990 = vor.u32 1.1754944e-38, %v2989
        %v2991 = vsel %vm2988, %v2990, %v2986
        %v2992 = vmul.f32 1.0, %v2991
        %v2993 = vtanh.pop %v2953
        %v2994 = vxor.u32 %v2954, 2147483648
        %v2995 = vmul.f32 %v2994, 1.442695
        %v2996 = vpow.pop %v2995
        %v2997 = vadd.f32 %v2996, 1.0
        %v2998 = vrcp.pop %v2997
        %v2999 = vmul.f32 %v2997, %v2998
        %v3000 = vsub.f32 1.0, %v2999
        %v3001 = vmul.f32 %v2998, %v3000
        %v3002 = vadd.f32 %v2998, %v3001
        %vm3003 = vweird.f32 %v2997
        %vm3004 = vweird.f32 %v2998
        %vm3005 = vmor %vm3003, %vm3004
        %v3006 = vsel %vm3005, %v2998, %v3002
        %v3007 = vand.u32 2147483647, %v2997
        %vm3008 = vcmp.eq.f32.partialorder %v3007, 8.507059e+37
        %v3009 = vand.u32 %v2997, 2147483648
        %v3010 = vor.u32 1.1754944e-38, %v3009
        %v3011 = vsel %vm3008, %v3010, %v3006
        %v3012 = vmul.f32 1.0, %v3011
        %v3013 = vmul.f32 %v2992, %v2572
        %v3014 = vmul.f32 %v2973, %v2993
        %v3015 = vadd.f32 %v3013, %v3014
        %v3016 = vtanh.pop %v3015
        %v3017 = vmul.f32 %v3012, %v3016
        %v3018 = vpack.c.bf16 %v3017, %v3017
        %3019 = vst [vmem:[%s633 + $0x4] sm:$0xf] %v3018
        %v3020 = vld [vmem:[#allocation3 + $0x40] sm:$0xff]
        %v3021 = vld [vmem:[#allocation3 + $0x48] sm:$0xff]
        %v3022 = vld [vmem:[#allocation3 + $0x50] sm:$0xff]
        %v3023 = vld [vmem:[#allocation3 + $0x58] sm:$0xff]
        %3024 = vmatpush.bf16.xpose.msra.mxu0 %v2717
        %3025 = vmatpush.bf16.xpose.msra.mxu0 %v2716
        %3026 = vmatpush.bf16.xpose.msra.mxu0 %v2715
        %3027 = vmatpush.bf16.xpose.msra.mxu0 %v2714
        %3028 = vmatpush.bf16.xpose.msra.mxu0 %v2713
        %3029 = vmatpush.bf16.xpose.msra.mxu0 %v2712
        %3030 = vmatpush.bf16.xpose.msra.mxu0 %v2711
        %3031 = vmatpush.bf16.xpose.msra.mxu0 %v2710
        %3032 = vmatmul.bf16.gmra.mxu0 %v2893
        %v3033 = vpop.f32.mrf.mxu0
        %v3034 = vadd.f32 0.0, %v3033
        %v3035 = vpop.f32.mrf.mxu0
        %3036 = vdwg.mxu0
        %3037 = vmatpush.bf16.xpose.msra.mxu0 %v2725
        %3038 = vmatpush.bf16.xpose.msra.mxu0 %v2724
        %3039 = vmatpush.bf16.xpose.msra.mxu0 %v2723
        %3040 = vmatpush.bf16.xpose.msra.mxu0 %v2722
        %3041 = vmatpush.bf16.xpose.msra.mxu0 %v2721
        %3042 = vmatpush.bf16.xpose.msra.mxu0 %v2720
        %3043 = vmatpush.bf16.xpose.msra.mxu0 %v2719
        %3044 = vmatpush.bf16.xpose.msra.mxu0 %v2718
        %3045 = vmatmul.bf16.gmra.mxu0 %v2893
        %v3046 = vpop.f32.mrf.mxu0
        %v3047 = vadd.f32 0.0, %v3046
        %v3048 = vpop.f32.mrf.mxu0
        %3049 = vdwg.mxu0
        %3050 = vmatpush.bf16.xpose.msra.mxu0 %v2733
        %3051 = vmatpush.bf16.xpose.msra.mxu0 %v2732
        %3052 = vmatpush.bf16.xpose.msra.mxu0 %v2731
        %3053 = vmatpush.bf16.xpose.msra.mxu0 %v2730
        %3054 = vmatpush.bf16.xpose.msra.mxu0 %v2729
        %3055 = vmatpush.bf16.xpose.msra.mxu0 %v2728
        %3056 = vmatpush.bf16.xpose.msra.mxu0 %v2727
        %3057 = vmatpush.bf16.xpose.msra.mxu0 %v2726
        %3058 = vmatmul.bf16.gmra.mxu0 %v2893
        %v3059 = vpop.f32.mrf.mxu0
        %v3060 = vadd.f32 0.0, %v3059
        %v3061 = vpop.f32.mrf.mxu0
        %3062 = vdwg.mxu0
        %3063 = vmatpush.bf16.xpose.msra.mxu0 %v2741
        %3064 = vmatpush.bf16.xpose.msra.mxu0 %v2740
        %3065 = vmatpush.bf16.xpose.msra.mxu0 %v2739
        %3066 = vmatpush.bf16.xpose.msra.mxu0 %v2738
        %3067 = vmatpush.bf16.xpose.msra.mxu0 %v2737
        %3068 = vmatpush.bf16.xpose.msra.mxu0 %v2736
        %3069 = vmatpush.bf16.xpose.msra.mxu0 %v2735
        %3070 = vmatpush.bf16.xpose.msra.mxu0 %v2734
        %3071 = vmatmul.bf16.gmra.mxu0 %v2893
        %v3072 = vpop.f32.mrf.mxu0
        %v3073 = vadd.f32 0.0, %v3072
        %v3074 = vpop.f32.mrf.mxu0
        %3075 = vdwg.mxu0
        %v3076 = vadd.f32 %v3020, %v3034
        %v3077 = vadd.f32 %v3021, %v3047
        %v3078 = vadd.f32 %v3022, %v3060
        %v3079 = vadd.f32 %v3023, %v3073
        %v3080 = vxor.u32 %v3076, 2147483648
        %v3081 = vmul.f32 %v3080, 1.442695
        %v3082 = vpow.pop %v3081
        %v3083 = vadd.f32 %v3082, 1.0
        %v3084 = vrcp.pop %v3083
        %v3085 = vmul.f32 %v3083, %v3084
        %v3086 = vsub.f32 1.0, %v3085
        %v3087 = vmul.f32 %v3084, %v3086
        %v3088 = vadd.f32 %v3084, %v3087
        %vm3089 = vweird.f32 %v3083
        %vm3090 = vweird.f32 %v3084
        %vm3091 = vmor %vm3089, %vm3090
        %v3092 = vsel %vm3091, %v3084, %v3088
        %v3093 = vand.u32 2147483647, %v3083
        %vm3094 = vcmp.eq.f32.partialorder %v3093, 8.507059e+37
        %v3095 = vand.u32 %v3083, 2147483648
        %v3096 = vor.u32 1.1754944e-38, %v3095
        %v3097 = vsel %vm3094, %v3096, %v3092
        %v3098 = vmul.f32 1.0, %v3097
        %v3099 = vxor.u32 %v3077, 2147483648
        %v3100 = vmul.f32 %v3099, 1.442695
        %v3101 = vpow.pop %v3100
        %v3102 = vadd.f32 %v3101, 1.0
        %v3103 = vrcp.pop %v3102
        %v3104 = vmul.f32 %v3102, %v3103
        %v3105 = vsub.f32 1.0, %v3104
        %v3106 = vmul.f32 %v3103, %v3105
        %v3107 = vadd.f32 %v3103, %v3106
        %vm3108 = vweird.f32 %v3102
        %vm3109 = vweird.f32 %v3103
        %vm3110 = vmor %vm3108, %vm3109
        %v3111 = vsel %vm3110, %v3103, %v3107
        %v3112 = vand.u32 2147483647, %v3102
        %vm3113 = vcmp.eq.f32.partialorder %v3112, 8.507059e+37
        %v3114 = vand.u32 %v3102, 2147483648
        %v3115 = vor.u32 1.1754944e-38, %v3114
        %v3116 = vsel %vm3113, %v3115, %v3111
        %v3117 = vmul.f32 1.0, %v3116
        %v3118 = vtanh.pop %v3078
        %v3119 = vxor.u32 %v3079, 2147483648
        %v3120 = vmul.f32 %v3119, 1.442695
        %v3121 = vpow.pop %v3120
        %v3122 = vadd.f32 %v3121, 1.0
        %v3123 = vrcp.pop %v3122
        %v3124 = vmul.f32 %v3122, %v3123
        %v3125 = vsub.f32 1.0, %v3124
        %v3126 = vmul.f32 %v3123, %v3125
        %v3127 = vadd.f32 %v3123, %v3126
        %vm3128 = vweird.f32 %v3122
        %vm3129 = vweird.f32 %v3123
        %vm3130 = vmor %vm3128, %vm3129
        %v3131 = vsel %vm3130, %v3123, %v3127
        %v3132 = vand.u32 2147483647, %v3122
        %vm3133 = vcmp.eq.f32.partialorder %v3132, 8.507059e+37
        %v3134 = vand.u32 %v3122, 2147483648
        %v3135 = vor.u32 1.1754944e-38, %v3134
        %v3136 = vsel %vm3133, %v3135, %v3131
        %v3137 = vmul.f32 1.0, %v3136
        %v3138 = vmul.f32 %v3117, %v2890
        %v3139 = vmul.f32 %v3098, %v3118
        %v3140 = vadd.f32 %v3138, %v3139
        %v3141 = vtanh.pop %v3140
        %v3142 = vmul.f32 %v3137, %v3141
        %v3143 = vpack.c.bf16 %v3142, %v3142
        %3144 = vst [vmem:[%s640 + $0x8] sm:$0xf] %v3143
        %v3145 = vld [vmem:[#allocation2 + $0x40] sm:$0xff]
        %v3146 = vld [vmem:[#allocation2 + $0x48] sm:$0xff]
        %v3147 = vld [vmem:[#allocation2 + $0x50] sm:$0xff]
        %v3148 = vld [vmem:[#allocation2 + $0x58] sm:$0xff]
        %3149 = vmatpush.bf16.xpose.msra.mxu0 %v2399
        %3150 = vmatpush.bf16.xpose.msra.mxu0 %v2398
        %3151 = vmatpush.bf16.xpose.msra.mxu0 %v2397
        %3152 = vmatpush.bf16.xpose.msra.mxu0 %v2396
        %3153 = vmatpush.bf16.xpose.msra.mxu0 %v2395
        %3154 = vmatpush.bf16.xpose.msra.mxu0 %v2394
        %3155 = vmatpush.bf16.xpose.msra.mxu0 %v2393
        %3156 = vmatpush.bf16.xpose.msra.mxu0 %v2392
        %3157 = vmatmul.bf16.gmra.mxu0 %v3018
        %v3158 = vpop.f32.mrf.mxu0
        %v3159 = vadd.f32 0.0, %v3158
        %v3160 = vpop.f32.mrf.mxu0
        %3161 = vdwg.mxu0
        %3162 = vmatpush.bf16.xpose.msra.mxu0 %v2407
        %3163 = vmatpush.bf16.xpose.msra.mxu0 %v2406
        %3164 = vmatpush.bf16.xpose.msra.mxu0 %v2405
        %3165 = vmatpush.bf16.xpose.msra.mxu0 %v2404
        %3166 = vmatpush.bf16.xpose.msra.mxu0 %v2403
        %3167 = vmatpush.bf16.xpose.msra.mxu0 %v2402
        %3168 = vmatpush.bf16.xpose.msra.mxu0 %v2401
        %3169 = vmatpush.bf16.xpose.msra.mxu0 %v2400
        %3170 = vmatmul.bf16.gmra.mxu0 %v3018
        %v3171 = vpop.f32.mrf.mxu0
        %v3172 = vadd.f32 0.0, %v3171
        %v3173 = vpop.f32.mrf.mxu0
        %3174 = vdwg.mxu0
        %3175 = vmatpush.bf16.xpose.msra.mxu0 %v2415
        %3176 = vmatpush.bf16.xpose.msra.mxu0 %v2414
        %3177 = vmatpush.bf16.xpose.msra.mxu0 %v2413
        %3178 = vmatpush.bf16.xpose.msra.mxu0 %v2412
        %3179 = vmatpush.bf16.xpose.msra.mxu0 %v2411
        %3180 = vmatpush.bf16.xpose.msra.mxu0 %v2410
        %3181 = vmatpush.bf16.xpose.msra.mxu0 %v2409
        %3182 = vmatpush.bf16.xpose.msra.mxu0 %v2408
        %3183 = vmatmul.bf16.gmra.mxu0 %v3018
        %v3184 = vpop.f32.mrf.mxu0
        %v3185 = vadd.f32 0.0, %v3184
        %v3186 = vpop.f32.mrf.mxu0
        %3187 = vdwg.mxu0
        %3188 = vmatpush.bf16.xpose.msra.mxu0 %v2423
        %3189 = vmatpush.bf16.xpose.msra.mxu0 %v2422
        %3190 = vmatpush.bf16.xpose.msra.mxu0 %v2421
        %3191 = vmatpush.bf16.xpose.msra.mxu0 %v2420
        %3192 = vmatpush.bf16.xpose.msra.mxu0 %v2419
        %3193 = vmatpush.bf16.xpose.msra.mxu0 %v2418
        %3194 = vmatpush.bf16.xpose.msra.mxu0 %v2417
        %3195 = vmatpush.bf16.xpose.msra.mxu0 %v2416
        %3196 = vmatmul.bf16.gmra.mxu0 %v3018
        %v3197 = vpop.f32.mrf.mxu0
        %v3198 = vadd.f32 0.0, %v3197
        %v3199 = vpop.f32.mrf.mxu0
        %3200 = vdwg.mxu0
        %v3201 = vadd.f32 %v3145, %v3159
        %v3202 = vadd.f32 %v3146, %v3172
        %v3203 = vadd.f32 %v3147, %v3185
        %v3204 = vadd.f32 %v3148, %v3198
        %v3205 = vxor.u32 %v3201, 2147483648
        %v3206 = vmul.f32 %v3205, 1.442695
        %v3207 = vpow.pop %v3206
        %v3208 = vadd.f32 %v3207, 1.0
        %v3209 = vrcp.pop %v3208
        %v3210 = vmul.f32 %v3208, %v3209
        %v3211 = vsub.f32 1.0, %v3210
        %v3212 = vmul.f32 %v3209, %v3211
        %v3213 = vadd.f32 %v3209, %v3212
        %vm3214 = vweird.f32 %v3208
        %vm3215 = vweird.f32 %v3209
        %vm3216 = vmor %vm3214, %vm3215
        %v3217 = vsel %vm3216, %v3209, %v3213
        %v3218 = vand.u32 2147483647, %v3208
        %vm3219 = vcmp.eq.f32.partialorder %v3218, 8.507059e+37
        %v3220 = vand.u32 %v3208, 2147483648
        %v3221 = vor.u32 1.1754944e-38, %v3220
        %v3222 = vsel %vm3219, %v3221, %v3217
        %v3223 = vmul.f32 1.0, %v3222
        %v3224 = vxor.u32 %v3202, 2147483648
        %v3225 = vmul.f32 %v3224, 1.442695
        %v3226 = vpow.pop %v3225
        %v3227 = vadd.f32 %v3226, 1.0
        %v3228 = vrcp.pop %v3227
        %v3229 = vmul.f32 %v3227, %v3228
        %v3230 = vsub.f32 1.0, %v3229
        %v3231 = vmul.f32 %v3228, %v3230
        %v3232 = vadd.f32 %v3228, %v3231
        %vm3233 = vweird.f32 %v3227
        %vm3234 = vweird.f32 %v3228
        %vm3235 = vmor %vm3233, %vm3234
        %v3236 = vsel %vm3235, %v3228, %v3232
        %v3237 = vand.u32 2147483647, %v3227
        %vm3238 = vcmp.eq.f32.partialorder %v3237, 8.507059e+37
        %v3239 = vand.u32 %v3227, 2147483648
        %v3240 = vor.u32 1.1754944e-38, %v3239
        %v3241 = vsel %vm3238, %v3240, %v3236
        %v3242 = vmul.f32 1.0, %v3241
        %v3243 = vtanh.pop %v3203
        %v3244 = vxor.u32 %v3204, 2147483648
        %v3245 = vmul.f32 %v3244, 1.442695
        %v3246 = vpow.pop %v3245
        %v3247 = vadd.f32 %v3246, 1.0
        %v3248 = vrcp.pop %v3247
        %v3249 = vmul.f32 %v3247, %v3248
        %v3250 = vsub.f32 1.0, %v3249
        %v3251 = vmul.f32 %v3248, %v3250
        %v3252 = vadd.f32 %v3248, %v3251
        %vm3253 = vweird.f32 %v3247
        %vm3254 = vweird.f32 %v3248
        %vm3255 = vmor %vm3253, %vm3254
        %v3256 = vsel %vm3255, %v3248, %v3252
        %v3257 = vand.u32 2147483647, %v3247
        %vm3258 = vcmp.eq.f32.partialorder %v3257, 8.507059e+37
        %v3259 = vand.u32 %v3247, 2147483648
        %v3260 = vor.u32 1.1754944e-38, %v3259
        %v3261 = vsel %vm3258, %v3260, %v3256
        %v3262 = vmul.f32 1.0, %v3261
        %v3263 = vmul.f32 %v3242, %v3015
        %v3264 = vmul.f32 %v3223, %v3243
        %v3265 = vadd.f32 %v3263, %v3264
        %v3266 = vtanh.pop %v3265
        %v3267 = vmul.f32 %v3262, %v3266
        %v3268 = vpack.c.bf16 %v3267, %v3267
        %3269 = vst [vmem:[%s633 + $0x8] sm:$0xf] %v3268
        %v3270 = vld [vmem:[#allocation3 + $0x20] sm:$0xff]
        %v3271 = vld [vmem:[#allocation3 + $0x28] sm:$0xff]
        %v3272 = vld [vmem:[#allocation3 + $0x30] sm:$0xff]
        %v3273 = vld [vmem:[#allocation3 + $0x38] sm:$0xff]
        %3274 = vmatpush.bf16.xpose.msra.mxu0 %v2717
        %3275 = vmatpush.bf16.xpose.msra.mxu0 %v2716
        %3276 = vmatpush.bf16.xpose.msra.mxu0 %v2715
        %3277 = vmatpush.bf16.xpose.msra.mxu0 %v2714
        %3278 = vmatpush.bf16.xpose.msra.mxu0 %v2713
        %3279 = vmatpush.bf16.xpose.msra.mxu0 %v2712
        %3280 = vmatpush.bf16.xpose.msra.mxu0 %v2711
        %3281 = vmatpush.bf16.xpose.msra.mxu0 %v2710
        %3282 = vmatmul.bf16.gmra.mxu0 %v3143
        %v3283 = vpop.f32.mrf.mxu0
        %v3284 = vadd.f32 0.0, %v3283
        %v3285 = vpop.f32.mrf.mxu0
        %3286 = vdwg.mxu0
        %3287 = vmatpush.bf16.xpose.msra.mxu0 %v2725
        %3288 = vmatpush.bf16.xpose.msra.mxu0 %v2724
        %3289 = vmatpush.bf16.xpose.msra.mxu0 %v2723
        %3290 = vmatpush.bf16.xpose.msra.mxu0 %v2722
        %3291 = vmatpush.bf16.xpose.msra.mxu0 %v2721
        %3292 = vmatpush.bf16.xpose.msra.mxu0 %v2720
        %3293 = vmatpush.bf16.xpose.msra.mxu0 %v2719
        %3294 = vmatpush.bf16.xpose.msra.mxu0 %v2718
        %3295 = vmatmul.bf16.gmra.mxu0 %v3143
        %v3296 = vpop.f32.mrf.mxu0
        %v3297 = vadd.f32 0.0, %v3296
        %v3298 = vpop.f32.mrf.mxu0
        %3299 = vdwg.mxu0
        %3300 = vmatpush.bf16.xpose.msra.mxu0 %v2733
        %3301 = vmatpush.bf16.xpose.msra.mxu0 %v2732
        %3302 = vmatpush.bf16.xpose.msra.mxu0 %v2731
        %3303 = vmatpush.bf16.xpose.msra.mxu0 %v2730
        %3304 = vmatpush.bf16.xpose.msra.mxu0 %v2729
        %3305 = vmatpush.bf16.xpose.msra.mxu0 %v2728
        %3306 = vmatpush.bf16.xpose.msra.mxu0 %v2727
        %3307 = vmatpush.bf16.xpose.msra.mxu0 %v2726
        %3308 = vmatmul.bf16.gmra.mxu0 %v3143
        %v3309 = vpop.f32.mrf.mxu0
        %v3310 = vadd.f32 0.0, %v3309
        %v3311 = vpop.f32.mrf.mxu0
        %3312 = vdwg.mxu0
        %3313 = vmatpush.bf16.xpose.msra.mxu0 %v2741
        %3314 = vmatpush.bf16.xpose.msra.mxu0 %v2740
        %3315 = vmatpush.bf16.xpose.msra.mxu0 %v2739
        %3316 = vmatpush.bf16.xpose.msra.mxu0 %v2738
        %3317 = vmatpush.bf16.xpose.msra.mxu0 %v2737
        %3318 = vmatpush.bf16.xpose.msra.mxu0 %v2736
        %3319 = vmatpush.bf16.xpose.msra.mxu0 %v2735
        %3320 = vmatpush.bf16.xpose.msra.mxu0 %v2734
        %3321 = vmatmul.bf16.gmra.mxu0 %v3143
        %v3322 = vpop.f32.mrf.mxu0
        %v3323 = vadd.f32 0.0, %v3322
        %v3324 = vpop.f32.mrf.mxu0
        %3325 = vdwg.mxu0
        %v3326 = vadd.f32 %v3270, %v3284
        %v3327 = vadd.f32 %v3271, %v3297
        %v3328 = vadd.f32 %v3272, %v3310
        %v3329 = vadd.f32 %v3273, %v3323
        %v3330 = vxor.u32 %v3326, 2147483648
        %v3331 = vmul.f32 %v3330, 1.442695
        %v3332 = vpow.pop %v3331
        %v3333 = vadd.f32 %v3332, 1.0
        %v3334 = vrcp.pop %v3333
        %v3335 = vmul.f32 %v3333, %v3334
        %v3336 = vsub.f32 1.0, %v3335
        %v3337 = vmul.f32 %v3334, %v3336
        %v3338 = vadd.f32 %v3334, %v3337
        %vm3339 = vweird.f32 %v3333
        %vm3340 = vweird.f32 %v3334
        %vm3341 = vmor %vm3339, %vm3340
        %v3342 = vsel %vm3341, %v3334, %v3338
        %v3343 = vand.u32 2147483647, %v3333
        %vm3344 = vcmp.eq.f32.partialorder %v3343, 8.507059e+37
        %v3345 = vand.u32 %v3333, 2147483648
        %v3346 = vor.u32 1.1754944e-38, %v3345
        %v3347 = vsel %vm3344, %v3346, %v3342
        %v3348 = vmul.f32 1.0, %v3347
        %v3349 = vxor.u32 %v3327, 2147483648
        %v3350 = vmul.f32 %v3349, 1.442695
        %v3351 = vpow.pop %v3350
        %v3352 = vadd.f32 %v3351, 1.0
        %v3353 = vrcp.pop %v3352
        %v3354 = vmul.f32 %v3352, %v3353
        %v3355 = vsub.f32 1.0, %v3354
        %v3356 = vmul.f32 %v3353, %v3355
        %v3357 = vadd.f32 %v3353, %v3356
        %vm3358 = vweird.f32 %v3352
        %vm3359 = vweird.f32 %v3353
        %vm3360 = vmor %vm3358, %vm3359
        %v3361 = vsel %vm3360, %v3353, %v3357
        %v3362 = vand.u32 2147483647, %v3352
        %vm3363 = vcmp.eq.f32.partialorder %v3362, 8.507059e+37
        %v3364 = vand.u32 %v3352, 2147483648
        %v3365 = vor.u32 1.1754944e-38, %v3364
        %v3366 = vsel %vm3363, %v3365, %v3361
        %v3367 = vmul.f32 1.0, %v3366
        %v3368 = vtanh.pop %v3328
        %v3369 = vxor.u32 %v3329, 2147483648
        %v3370 = vmul.f32 %v3369, 1.442695
        %v3371 = vpow.pop %v3370
        %v3372 = vadd.f32 %v3371, 1.0
        %v3373 = vrcp.pop %v3372
        %v3374 = vmul.f32 %v3372, %v3373
        %v3375 = vsub.f32 1.0, %v3374
        %v3376 = vmul.f32 %v3373, %v3375
        %v3377 = vadd.f32 %v3373, %v3376
        %vm3378 = vweird.f32 %v3372
        %vm3379 = vweird.f32 %v3373
        %vm3380 = vmor %vm3378, %vm3379
        %v3381 = vsel %vm3380, %v3373, %v3377
        %v3382 = vand.u32 2147483647, %v3372
        %vm3383 = vcmp.eq.f32.partialorder %v3382, 8.507059e+37
        %v3384 = vand.u32 %v3372, 2147483648
        %v3385 = vor.u32 1.1754944e-38, %v3384
        %v3386 = vsel %vm3383, %v3385, %v3381
        %v3387 = vmul.f32 1.0, %v3386
        %v3388 = vmul.f32 %v3367, %v3140
        %v3389 = vmul.f32 %v3348, %v3368
        %v3390 = vadd.f32 %v3388, %v3389
        %v3391 = vtanh.pop %v3390
        %v3392 = vmul.f32 %v3387, %v3391
        %v3393 = vpack.c.bf16 %v3392, %v3392
        %3394 = vst [vmem:[%s640 + $0x4] sm:$0xf] %v3393
        %v3395 = vld [vmem:[#allocation2 + $0x60] sm:$0xff]
        %v3396 = vld [vmem:[#allocation2 + $0x68] sm:$0xff]
        %v3397 = vld [vmem:[#allocation2 + $0x70] sm:$0xff]
        %v3398 = vld [vmem:[#allocation2 + $0x78] sm:$0xff]
        %3399 = vmatpush.bf16.xpose.msra.mxu0 %v2399
        %3400 = vmatpush.bf16.xpose.msra.mxu0 %v2398
        %3401 = vmatpush.bf16.xpose.msra.mxu0 %v2397
        %3402 = vmatpush.bf16.xpose.msra.mxu0 %v2396
        %3403 = vmatpush.bf16.xpose.msra.mxu0 %v2395
        %3404 = vmatpush.bf16.xpose.msra.mxu0 %v2394
        %3405 = vmatpush.bf16.xpose.msra.mxu0 %v2393
        %3406 = vmatpush.bf16.xpose.msra.mxu0 %v2392
        %3407 = vmatmul.bf16.gmra.mxu0 %v3268
        %v3408 = vpop.f32.mrf.mxu0
        %v3409 = vadd.f32 0.0, %v3408
        %v3410 = vpop.f32.mrf.mxu0
        %3411 = vdwg.mxu0
        %3412 = vmatpush.bf16.xpose.msra.mxu0 %v2407
        %3413 = vmatpush.bf16.xpose.msra.mxu0 %v2406
        %3414 = vmatpush.bf16.xpose.msra.mxu0 %v2405
        %3415 = vmatpush.bf16.xpose.msra.mxu0 %v2404
        %3416 = vmatpush.bf16.xpose.msra.mxu0 %v2403
        %3417 = vmatpush.bf16.xpose.msra.mxu0 %v2402
        %3418 = vmatpush.bf16.xpose.msra.mxu0 %v2401
        %3419 = vmatpush.bf16.xpose.msra.mxu0 %v2400
        %3420 = vmatmul.bf16.gmra.mxu0 %v3268
        %v3421 = vpop.f32.mrf.mxu0
        %v3422 = vadd.f32 0.0, %v3421
        %v3423 = vpop.f32.mrf.mxu0
        %3424 = vdwg.mxu0
        %3425 = vmatpush.bf16.xpose.msra.mxu0 %v2415
        %3426 = vmatpush.bf16.xpose.msra.mxu0 %v2414
        %3427 = vmatpush.bf16.xpose.msra.mxu0 %v2413
        %3428 = vmatpush.bf16.xpose.msra.mxu0 %v2412
        %3429 = vmatpush.bf16.xpose.msra.mxu0 %v2411
        %3430 = vmatpush.bf16.xpose.msra.mxu0 %v2410
        %3431 = vmatpush.bf16.xpose.msra.mxu0 %v2409
        %3432 = vmatpush.bf16.xpose.msra.mxu0 %v2408
        %3433 = vmatmul.bf16.gmra.mxu0 %v3268
        %v3434 = vpop.f32.mrf.mxu0
        %v3435 = vadd.f32 0.0, %v3434
        %v3436 = vpop.f32.mrf.mxu0
        %3437 = vdwg.mxu0
        %3438 = vmatpush.bf16.xpose.msra.mxu0 %v2423
        %3439 = vmatpush.bf16.xpose.msra.mxu0 %v2422
        %3440 = vmatpush.bf16.xpose.msra.mxu0 %v2421
        %3441 = vmatpush.bf16.xpose.msra.mxu0 %v2420
        %3442 = vmatpush.bf16.xpose.msra.mxu0 %v2419
        %3443 = vmatpush.bf16.xpose.msra.mxu0 %v2418
        %3444 = vmatpush.bf16.xpose.msra.mxu0 %v2417
        %3445 = vmatpush.bf16.xpose.msra.mxu0 %v2416
        %3446 = vmatmul.bf16.gmra.mxu0 %v3268
        %v3447 = vpop.f32.mrf.mxu0
        %v3448 = vadd.f32 0.0, %v3447
        %v3449 = vpop.f32.mrf.mxu0
        %3450 = vdwg.mxu0
        %v3451 = vadd.f32 %v3395, %v3409
        %v3452 = vadd.f32 %v3396, %v3422
        %v3453 = vadd.f32 %v3397, %v3435
        %v3454 = vadd.f32 %v3398, %v3448
        %v3455 = vxor.u32 %v3451, 2147483648
        %v3456 = vmul.f32 %v3455, 1.442695
        %v3457 = vpow.pop %v3456
        %v3458 = vadd.f32 %v3457, 1.0
        %v3459 = vrcp.pop %v3458
        %v3460 = vmul.f32 %v3458, %v3459
        %v3461 = vsub.f32 1.0, %v3460
        %v3462 = vmul.f32 %v3459, %v3461
        %v3463 = vadd.f32 %v3459, %v3462
        %vm3464 = vweird.f32 %v3458
        %vm3465 = vweird.f32 %v3459
        %vm3466 = vmor %vm3464, %vm3465
        %v3467 = vsel %vm3466, %v3459, %v3463
        %v3468 = vand.u32 2147483647, %v3458
        %vm3469 = vcmp.eq.f32.partialorder %v3468, 8.507059e+37
        %v3470 = vand.u32 %v3458, 2147483648
        %v3471 = vor.u32 1.1754944e-38, %v3470
        %v3472 = vsel %vm3469, %v3471, %v3467
        %v3473 = vmul.f32 1.0, %v3472
        %v3474 = vxor.u32 %v3452, 2147483648
        %v3475 = vmul.f32 %v3474, 1.442695
        %v3476 = vpow.pop %v3475
        %v3477 = vadd.f32 %v3476, 1.0
        %v3478 = vrcp.pop %v3477
        %v3479 = vmul.f32 %v3477, %v3478
        %v3480 = vsub.f32 1.0, %v3479
        %v3481 = vmul.f32 %v3478, %v3480
        %v3482 = vadd.f32 %v3478, %v3481
        %vm3483 = vweird.f32 %v3477
        %vm3484 = vweird.f32 %v3478
        %vm3485 = vmor %vm3483, %vm3484
        %v3486 = vsel %vm3485, %v3478, %v3482
        %v3487 = vand.u32 2147483647, %v3477
        %vm3488 = vcmp.eq.f32.partialorder %v3487, 8.507059e+37
        %v3489 = vand.u32 %v3477, 2147483648
        %v3490 = vor.u32 1.1754944e-38, %v3489
        %v3491 = vsel %vm3488, %v3490, %v3486
        %v3492 = vmul.f32 1.0, %v3491
        %v3493 = vtanh.pop %v3453
        %v3494 = vxor.u32 %v3454, 2147483648
        %v3495 = vmul.f32 %v3494, 1.442695
        %v3496 = vpow.pop %v3495
        %v3497 = vadd.f32 %v3496, 1.0
        %v3498 = vrcp.pop %v3497
        %v3499 = vmul.f32 %v3497, %v3498
        %v3500 = vsub.f32 1.0, %v3499
        %v3501 = vmul.f32 %v3498, %v3500
        %v3502 = vadd.f32 %v3498, %v3501
        %vm3503 = vweird.f32 %v3497
        %vm3504 = vweird.f32 %v3498
        %vm3505 = vmor %vm3503, %vm3504
        %v3506 = vsel %vm3505, %v3498, %v3502
        %v3507 = vand.u32 2147483647, %v3497
        %vm3508 = vcmp.eq.f32.partialorder %v3507, 8.507059e+37
        %v3509 = vand.u32 %v3497, 2147483648
        %v3510 = vor.u32 1.1754944e-38, %v3509
        %v3511 = vsel %vm3508, %v3510, %v3506
        %v3512 = vmul.f32 1.0, %v3511
        %v3513 = vmul.f32 %v3492, %v3265
        %v3514 = vmul.f32 %v3473, %v3493
        %v3515 = vadd.f32 %v3513, %v3514
        %v3516 = vtanh.pop %v3515
        %v3517 = vmul.f32 %v3512, %v3516
        %v3518 = vpack.c.bf16 %v3517, %v3517
        %3519 = vst [vmem:[%s633 + $0xc] sm:$0xf] %v3518
        %v3520 = vld [vmem:[#allocation3] sm:$0xff]
        %v3521 = vld [vmem:[#allocation3 + $0x8] sm:$0xff]
        %v3522 = vld [vmem:[#allocation3 + $0x10] sm:$0xff]
        %v3523 = vld [vmem:[#allocation3 + $0x18] sm:$0xff]
        %3524 = vmatpush.bf16.xpose.msra.mxu0 %v2717
        %3525 = vmatpush.bf16.xpose.msra.mxu0 %v2716
        %3526 = vmatpush.bf16.xpose.msra.mxu0 %v2715
        %3527 = vmatpush.bf16.xpose.msra.mxu0 %v2714
        %3528 = vmatpush.bf16.xpose.msra.mxu0 %v2713
        %3529 = vmatpush.bf16.xpose.msra.mxu0 %v2712
        %3530 = vmatpush.bf16.xpose.msra.mxu0 %v2711
        %3531 = vmatpush.bf16.xpose.msra.mxu0 %v2710
        %3532 = vmatmul.bf16.gmra.mxu0 %v3393
        %v3533 = vpop.f32.mrf.mxu0
        %v3534 = vadd.f32 0.0, %v3533
        %v3535 = vpop.f32.mrf.mxu0
        %3536 = vdwg.mxu0
        %3537 = vmatpush.bf16.xpose.msra.mxu0 %v2725
        %3538 = vmatpush.bf16.xpose.msra.mxu0 %v2724
        %3539 = vmatpush.bf16.xpose.msra.mxu0 %v2723
        %3540 = vmatpush.bf16.xpose.msra.mxu0 %v2722
        %3541 = vmatpush.bf16.xpose.msra.mxu0 %v2721
        %3542 = vmatpush.bf16.xpose.msra.mxu0 %v2720
        %3543 = vmatpush.bf16.xpose.msra.mxu0 %v2719
        %3544 = vmatpush.bf16.xpose.msra.mxu0 %v2718
        %3545 = vmatmul.bf16.gmra.mxu0 %v3393
        %v3546 = vpop.f32.mrf.mxu0
        %v3547 = vadd.f32 0.0, %v3546
        %v3548 = vpop.f32.mrf.mxu0
        %3549 = vdwg.mxu0
        %3550 = vmatpush.bf16.xpose.msra.mxu0 %v2733
        %3551 = vmatpush.bf16.xpose.msra.mxu0 %v2732
        %3552 = vmatpush.bf16.xpose.msra.mxu0 %v2731
        %3553 = vmatpush.bf16.xpose.msra.mxu0 %v2730
        %3554 = vmatpush.bf16.xpose.msra.mxu0 %v2729
        %3555 = vmatpush.bf16.xpose.msra.mxu0 %v2728
        %3556 = vmatpush.bf16.xpose.msra.mxu0 %v2727
        %3557 = vmatpush.bf16.xpose.msra.mxu0 %v2726
        %3558 = vmatmul.bf16.gmra.mxu0 %v3393
        %v3559 = vpop.f32.mrf.mxu0
        %v3560 = vadd.f32 0.0, %v3559
        %v3561 = vpop.f32.mrf.mxu0
        %3562 = vdwg.mxu0
        %3563 = vmatpush.bf16.xpose.msra.mxu0 %v2741
        %3564 = vmatpush.bf16.xpose.msra.mxu0 %v2740
        %3565 = vmatpush.bf16.xpose.msra.mxu0 %v2739
        %3566 = vmatpush.bf16.xpose.msra.mxu0 %v2738
        %3567 = vmatpush.bf16.xpose.msra.mxu0 %v2737
        %3568 = vmatpush.bf16.xpose.msra.mxu0 %v2736
        %3569 = vmatpush.bf16.xpose.msra.mxu0 %v2735
        %3570 = vmatpush.bf16.xpose.msra.mxu0 %v2734
        %3571 = vmatmul.bf16.gmra.mxu0 %v3393
        %v3572 = vpop.f32.mrf.mxu0
        %v3573 = vadd.f32 0.0, %v3572
        %v3574 = vpop.f32.mrf.mxu0
        %3575 = vdwg.mxu0
        %v3576 = vadd.f32 %v3520, %v3534
        %v3577 = vadd.f32 %v3521, %v3547
        %v3578 = vadd.f32 %v3522, %v3560
        %v3579 = vadd.f32 %v3523, %v3573
        %v3580 = vxor.u32 %v3576, 2147483648
        %v3581 = vmul.f32 %v3580, 1.442695
        %v3582 = vpow.pop %v3581
        %v3583 = vadd.f32 %v3582, 1.0
        %v3584 = vrcp.pop %v3583
        %v3585 = vmul.f32 %v3583, %v3584
        %v3586 = vsub.f32 1.0, %v3585
        %v3587 = vmul.f32 %v3584, %v3586
        %v3588 = vadd.f32 %v3584, %v3587
        %vm3589 = vweird.f32 %v3583
        %vm3590 = vweird.f32 %v3584
        %vm3591 = vmor %vm3589, %vm3590
        %v3592 = vsel %vm3591, %v3584, %v3588
        %v3593 = vand.u32 2147483647, %v3583
        %vm3594 = vcmp.eq.f32.partialorder %v3593, 8.507059e+37
        %v3595 = vand.u32 %v3583, 2147483648
        %v3596 = vor.u32 1.1754944e-38, %v3595
        %v3597 = vsel %vm3594, %v3596, %v3592
        %v3598 = vmul.f32 1.0, %v3597
        %v3599 = vxor.u32 %v3577, 2147483648
        %v3600 = vmul.f32 %v3599, 1.442695
        %v3601 = vpow.pop %v3600
        %v3602 = vadd.f32 %v3601, 1.0
        %v3603 = vrcp.pop %v3602
        %v3604 = vmul.f32 %v3602, %v3603
        %v3605 = vsub.f32 1.0, %v3604
        %v3606 = vmul.f32 %v3603, %v3605
        %v3607 = vadd.f32 %v3603, %v3606
        %vm3608 = vweird.f32 %v3602
        %vm3609 = vweird.f32 %v3603
        %vm3610 = vmor %vm3608, %vm3609
        %v3611 = vsel %vm3610, %v3603, %v3607
        %v3612 = vand.u32 2147483647, %v3602
        %vm3613 = vcmp.eq.f32.partialorder %v3612, 8.507059e+37
        %v3614 = vand.u32 %v3602, 2147483648
        %v3615 = vor.u32 1.1754944e-38, %v3614
        %v3616 = vsel %vm3613, %v3615, %v3611
        %v3617 = vmul.f32 1.0, %v3616
        %v3618 = vtanh.pop %v3578
        %v3619 = vxor.u32 %v3579, 2147483648
        %v3620 = vmul.f32 %v3619, 1.442695
        %v3621 = vpow.pop %v3620
        %v3622 = vadd.f32 %v3621, 1.0
        %v3623 = vrcp.pop %v3622
        %v3624 = vmul.f32 %v3622, %v3623
        %v3625 = vsub.f32 1.0, %v3624
        %v3626 = vmul.f32 %v3623, %v3625
        %v3627 = vadd.f32 %v3623, %v3626
        %vm3628 = vweird.f32 %v3622
        %vm3629 = vweird.f32 %v3623
        %vm3630 = vmor %vm3628, %vm3629
        %v3631 = vsel %vm3630, %v3623, %v3627
        %v3632 = vand.u32 2147483647, %v3622
        %vm3633 = vcmp.eq.f32.partialorder %v3632, 8.507059e+37
        %v3634 = vand.u32 %v3622, 2147483648
        %v3635 = vor.u32 1.1754944e-38, %v3634
        %v3636 = vsel %vm3633, %v3635, %v3631
        %v3637 = vmul.f32 1.0, %v3636
        %v3638 = vmul.f32 %v3617, %v3390
        %v3639 = vmul.f32 %v3598, %v3618
        %v3640 = vadd.f32 %v3638, %v3639
        %v3641 = vtanh.pop %v3640
        %v3642 = vmul.f32 %v3637, %v3641
        %v3643 = vpack.c.bf16 %v3642, %v3642
        %3644 = vst [vmem:[%s640] sm:$0xf] %v3643
        %3645 = vst [vmem:[#allocation4] sm:$0xff] %v3517
        %3646 = vst [vmem:[#allocation5] sm:$0xff] %v3515
        %3647 = vst [vmem:[#allocation6] sm:$0xff] %v3642
        %3648 = vst [vmem:[#allocation7] sm:$0xff] %v3640
        %s3649 = smul.u32 4, %s29
        %p3650 = scmp.lt.s32.totalorder %s3649, 7
        %s3651 = scalar_select %p3650, %s3649, 7
        %s3652 = smul.addr %s3651, 4
        %s3653 = scalar_lea.vmem %s12, %s3652
        %s3654 = ssub.s32 1, %s29
        %s3655 = smul.u32 4, %s3654
        %p3656 = scmp.lt.s32.totalorder %s3655, 7
        %s3657 = scalar_select %p3656, %s3655, 7
        %s3658 = smul.addr %s3657, 4
        %s3659 = scalar_lea.vmem %s13, %s3658
        // Predicated region
        $region97: #{transcription_forward.4} parent=67 // pred_check
          %p3660 = pneg %p323
        $region98: #{transcription_forward.4} parent=67 // pred_check_branch
          %3662 = sbr.rel (%p3660) target = $region100
        $region99: #{transcription_forward.4} parent=67 // pred_region
          %s3663 = smul.u32 4, %s29
        $region100: #{transcription_forward.4} parent=67 // pred_fallthru
          _
        // Predicated region
        $region101: #{transcription_forward.4} parent=67 // pred_check
          %p3664 = pneg %p351
        $region102: #{transcription_forward.4} parent=67 // pred_check_branch
          %3666 = sbr.rel (%p3664) target = $region104
        $region103: #{transcription_forward.4} parent=67 // pred_region
          %s3667 = ssub.s32 1, %s29
          %s3668 = smul.u32 4, %s3667
        $region104: #{transcription_forward.4} parent=67 // pred_fallthru
          _
      $region68: #{transcription_forward.4} parent=5 // pred_fallthru
        _
      %p3669 = scmp.le.s32.totalorder 2, %s24
      // Predicated region
      $region105: #{transcription_forward.4} parent=5 // pred_check
        %p3670 = pneg %p3669
      $region106: #{transcription_forward.4} parent=5 // pred_check_branch
        %3672 = sbr.rel (%p3670) target = $region108
      $region107: #{transcription_forward.4} parent=5 // pred_region
        %s3673 = ssub.s32 %s24, 2
        // Predicated region
        $region109: #{transcription_forward.4} parent=107 // pred_check
          %p3674 = pneg %p329
        $region110: #{transcription_forward.4} parent=107 // pred_check_branch
          %3676 = sbr.rel (%p3674) target = $region112
        $region111: #{transcription_forward.4} parent=107 // pred_region
          %s3677 = smul.u32 4, %s30
          %p3678 = scmp.lt.s32.totalorder %s3677, 7
          %s3679 = scalar_select %p3678, %s3677, 7
          %s3680 = smul.addr %s3679, 4
          %s3681 = scalar_lea.vmem %s12, %s3680
        $region112: #{transcription_forward.4} parent=107 // pred_fallthru
          _
        // Predicated region
        $region113: #{transcription_forward.4} parent=107 // pred_check
          %p3682 = pneg %p357
        $region114: #{transcription_forward.4} parent=107 // pred_check_branch
          %3684 = sbr.rel (%p3682) target = $region116
        $region115: #{transcription_forward.4} parent=107 // pred_region
          %s3685 = ssub.s32 1, %s30
          %s3686 = smul.u32 4, %s3685
          %p3687 = scmp.lt.s32.totalorder %s3686, 7
          %s3688 = scalar_select %p3687, %s3686, 7
          %s3689 = smul.addr %s3688, 4
          %s3690 = scalar_lea.vmem %s13, %s3689
        $region116: #{transcription_forward.4} parent=107 // pred_fallthru
          _
      $region108: #{transcription_forward.4} parent=5 // pred_fallthru
        _
    $region6: #{transcription_forward.4} parent=1 // loop_footer
      %s28 = sadd.s32 1, %s24
    $region7: #{transcription_forward.4} parent=1 // loop_footer_branch
      %23 = sbr.rel target = $region3
    $region8: #{transcription_forward.4} parent=1 // loop_exit
      _
    %3691 = vsyncpa [#allocation9], 1
    %s3692 = scalar_lea.sflag [#allocation9], 1
    %3693 = vsyncpa %s3692, 1
    %3694 = vsyncpa [#allocation11], 1
    %3695 = vsyncpa [#allocation14], 1
    %3696 = vsyncpa [#allocation17], 1

</llo_original>
